<compile_context>
chip_gen: v5e
topology: v5e:2x2
jax: 0.10.0
libtpu: 0.0.40
codegen_flags: <defaults>
</compile_context>

<pallas_src>
import functools

import jax
import jax.numpy as jnp
from jax.experimental import pallas as pl
from jax.experimental.pallas import tpu as pltpu


def _upsample_kernel(x_ref, o_ref, *, s):
    # x_ref: (bc, bh, W)   o_ref: (bc, bh*s, W*s)
    x = x_ref[...]
    # Width (lane) replication first, on the smaller array, then height
    # (sublane) replication.  jnp.repeat lowers to broadcast + reshape on the
    # VPU/XLU; no MXU work, no dtype promotion.
    y = jnp.repeat(x, s, axis=2)          # (bc, bh, W*s)
    y = jnp.repeat(y, s, axis=1)          # (bc, bh*s, W*s)
    o_ref[...] = y


def _choose_blocks(nc, h, w, s, itemsize,
                   budget_bytes=4 * 1024 * 1024, min_steps=2):
    """Pick (channels_per_block, rows_per_block) under a VMEM budget.

    Budget counts the double-buffered input + output blocks per grid step.
    """
    per_chan = h * w * itemsize * (1 + s * s) * 2  # in + out, double buffered
    if per_chan <= budget_bytes:
        # Whole channels fit: tile only the fused N*C axis.
        max_bc = max(1, budget_bytes // per_chan)
        divisors = [d for d in range(1, nc + 1) if nc % d == 0 and d <= max_bc]
        preferred = [d for d in divisors if nc // d >= min_steps]
        bc = max(preferred) if preferred else max(divisors)
        return bc, h
    # A single channel is too large: tile rows in multiples of 8.
    per_row = w * itemsize * (1 + s * s) * 2
    max_bh = max(8, (budget_bytes // per_row) // 8 * 8)
    bh_candidates = [d for d in range(8, h + 1, 8) if h % d == 0 and d <= max_bh]
    bh = max(bh_candidates) if bh_candidates else h
    return 1, bh


@functools.partial(jax.jit, static_argnames=("scale_factor",))
def upsample_nearest(x, scale_factor):
    """Nearest-neighbor upsample of an NCHW tensor by an integer scale factor."""
    # TODO(synk): non-integer scale_factor and modes other than 'nearest' are
    # not supported by this kernel.
    s_f = float(scale_factor)
    s = int(s_f)
    assert s == s_f and s >= 1, "only integer scale_factor is supported"

    N, C, H, W = x.shape
    Hs, Ws = H * s, W * s
    NC = N * C

    # Merging/splitting leading dims is a layout-preserving (free) reshape.
    x3 = x.reshape(NC, H, W)

    itemsize = x.dtype.itemsize
    bc, bh = _choose_blocks(NC, H, W, s, itemsize)
    grid = (NC // bc, H // bh)

    in_bytes = NC * H * W * itemsize
    out_bytes = in_bytes * s * s
    cost = pl.CostEstimate(flops=0, transcendentals=0,
                           bytes_accessed=in_bytes + out_bytes)

    y3 = pl.pallas_call(
        functools.partial(_upsample_kernel, s=s),
        out_shape=jax.ShapeDtypeStruct((NC, Hs, Ws), x.dtype),
        grid_spec=pltpu.PrefetchScalarGridSpec(
            num_scalar_prefetch=0,
            grid=grid,
            in_specs=[
                pl.BlockSpec((bc, bh, W), lambda i, j: (i, j, 0)),
            ],
            out_specs=pl.BlockSpec((bc, bh * s, Ws), lambda i, j: (i, j, 0)),
        ),
        compiler_params=pltpu.CompilerParams(
            dimension_semantics=("parallel", "parallel"),
            vmem_limit_bytes=32 * 1024 * 1024,
        ),
        cost_estimate=cost,
    )(x3)

    return y3.reshape(N, C, Hs, Ws)


def _reference_upsample_nearest(x, scale_factor):
    s = int(scale_factor)
    return jnp.repeat(jnp.repeat(x, s, axis=2), s, axis=3)


if __name__ == "__main__":
    key = jax.random.PRNGKey(0)
    N, C, H, W = 2, 4, 16, 16
    scale_factor = 2

    x = jax.random.normal(key, (N, C, H, W), dtype=jnp.float32)

    y = upsample_nearest(x, scale_factor)
    y = jax.block_until_ready(y)

    y_ref = _reference_upsample_nearest(x, scale_factor)
    assert y.shape == (N, C, H * scale_factor, W * scale_factor), y.shape
    assert jnp.array_equal(y, y_ref), "Pallas upsample does not match reference"

    print("KERNEL_OK")
</pallas_src>

<mosaic_0001>
module attributes {stable_mosaic.version = 11 : i64} {
  func.func @_upsample_kernel(%arg0: i32, %arg1: i32, %arg2: memref<4x16x16xf32, #tpu.memory_space<vmem>>, %arg3: memref<4x32x32xf32, #tpu.memory_space<vmem>>) attributes {dimension_semantics = [#tpu.dimension_semantics<parallel>, #tpu.dimension_semantics<parallel>], iteration_bounds = array<i64: 2, 1>, scalar_prefetch = 0 : i64, scratch_operands = 0 : i64, tpu.core_type = #tpu.core_type<tc>, window_params = [{transform_indices = @transform_0, window_bounds = array<i64: 4, 16, 16>}, {transform_indices = @transform_1, window_bounds = array<i64: 4, 32, 32>}]} {
    %c0 = arith.constant 0 : index
    %c0_0 = arith.constant 0 : index
    %c0_1 = arith.constant 0 : index
    %0 = vector.load %arg2[%c0, %c0_0, %c0_1] : memref<4x16x16xf32, #tpu.memory_space<vmem>>, vector<4x16x16xf32>
    %1 = vector.shape_cast %0 : vector<4x16x16xf32> to vector<4x16x16x1xf32>
    %2 = vector.broadcast %1 : vector<4x16x16x1xf32> to vector<4x16x16x2xf32>
    %3 = vector.shape_cast %2 : vector<4x16x16x2xf32> to vector<4x16x32xf32>
    %4 = vector.shape_cast %3 : vector<4x16x32xf32> to vector<4x16x1x32xf32>
    %5 = vector.broadcast %4 : vector<4x16x1x32xf32> to vector<4x16x2x32xf32>
    %6 = vector.shape_cast %5 : vector<4x16x2x32xf32> to vector<4x32x32xf32>
    %c0_2 = arith.constant 0 : index
    %c0_3 = arith.constant 0 : index
    %c0_4 = arith.constant 0 : index
    %7 = vector.load %arg3[%c0_2, %c0_3, %c0_4] : memref<4x32x32xf32, #tpu.memory_space<vmem>>, vector<4x32x32xf32>
    tpu.vector_store %arg3[%c0_2, %c0_3, %c0_4], %6 {strides = array<i32>} : memref<4x32x32xf32, #tpu.memory_space<vmem>>, vector<4x32x32xf32>,
    return
  }
  func.func @transform_0(%arg0: i32, %arg1: i32) -> (i32, i32, i32) {
    %c0_i32 = arith.constant 0 : i32
    %c0_i32_0 = arith.constant 0 : i32
    return %arg0, %arg1, %c0_i32 : i32, i32, i32
  }
  func.func @transform_1(%arg0: i32, %arg1: i32) -> (i32, i32, i32) {
    %c0_i32 = arith.constant 0 : i32
    %c0_i32_0 = arith.constant 0 : i32
    return %arg0, %arg1, %c0_i32 : i32, i32, i32
  }
}

</mosaic_0001>

<llo_original>
// kernel: upsample_nearest.1
$region0: #{upsample_nearest.1}
  #allocation0 [shape = 'u32[]', space=smem, size = 0x4, offset = 0x4, fixed_abs, tag = 'smem constant byte address 0x4 - core index']
  #allocation1 [shape = 'u32[72,128]{1,0:T(1,128)}', space=vmem, size = 0x9000, scoped, tag = 'internal scratch']
  %s0 = inlined_call_operand.hbm [shape: f32[8,16,16], index: 0, kind: input, shape index: {}]
  %s1 = inlined_call_operand.hbm [shape: f32[8,32,32], index: 1, kind: output, shape index: {}]
  %s2 = sld [smem:[#allocation0]]
  $region41: #{upsample_nearest.1} parent=0
    _
  %s4 = ssub.s32 1, %s2
  %s5 = scalar_select 0, %s4, %s2
  $region1: #{upsample_nearest.1} parent=0
    #allocation2 [shape = 'u8[65536]{0}', space=vmem, size = 0x10000, scoped, tag = 'input window, operand 0']
    #allocation3 [shape = 's32[2]{0}', space=sflag, size = 0x8, scoped, tag = 'scoped memory for upsample_nearest.1']
    #allocation4 [shape = 's32[2]{0}', space=sflag, size = 0x8, scoped, tag = 'scoped memory for upsample_nearest.1']
    #allocation5 [shape = 'u8[131072]{0}', space=vmem, size = 0x20000, scoped, tag = 'output window, operand 0']
    %6 = vsyncpa [#allocation3], 0
    %s7 = scalar_lea.sflag [#allocation3], 1
    %8 = vsyncpa %s7, 0
    %9 = vsyncpa [#allocation4], 0
    %s10 = scalar_lea.sflag [#allocation4], 1
    %11 = vsyncpa %s10, 0
    loop: start=0, step=1, limit=4
    $region2: #{upsample_nearest.1} parent=1 // loop_pre_header
      _
    $region3: #{upsample_nearest.1} parent=1 // loop_header
      %s13 = sphi 0, %s17
      %p14 = scmp.ge.s32.totalorder %s13, 4
      %s20 = sphi 0, %s32
      %s21 = sphi 0, %s28
      %s22 = sphi 0, %s20
      %s23 = sphi 0, %s21
      %s24 = sphi 0, %s22
      %s25 = sphi 0, %s23
      %s37 = sphi 0, %s39
      %s40 = sphi 0, %s37
      %s41 = sphi 0, %s40
      %s57 = sphi 0, %s41
      %s65 = sphi 0, %s67
      %s68 = sphi 0, %s65
      %s69 = sphi 0, %s68
      %s85 = sphi 0, %s69
    $region4: #{upsample_nearest.1} parent=1 // loop_header_branch
      %16 = sbr.rel (%p14) target = $region8
    $region5: #{upsample_nearest.1} parent=1 // loop_body
      %s18 = ssub.s32 %s13, 1
      %s19 = ssub.s32 %s13, 2
      %s26 = sadd.s32 1, %s21
      %p27 = scmp.ge.s32.totalorder %s26, 1
      %s28 = scalar_select %p27, 0, %s26
      %s29 = sadd.s32 1, %s20
      %s30 = scalar_select %p27, %s29, %s20
      %p31 = scmp.ge.s32.totalorder %s30, 2
      %s32 = scalar_select %p31, 0, %s30
      %s33 = ssub.s32 %s20, %s32
      %s34 = ssub.s32 %s21, %s28
      %s35 = sor.u32 %s33, %s34
      %p36 = scmp.eq.s32.totalorder %s35, 0
      %s38 = sadd.s32 %s37, 1
      %s39 = scalar_select %p36, %s37, %s38
      %p42 = pneg %p36
      %p43 = scmp.eq.s32.totalorder %s13, 1
      %p44 = por %p42, %p43
      %p45 = scmp.ne.s32.totalorder %s37, %s40
      %p46 = scmp.eq.s32.totalorder %s13, 0
      %p47 = por %p45, %p46
      %p48 = scmp.ne.s32.totalorder %s37, %s40
      %p49 = scmp.eq.s32.totalorder %s18, 1
      %p50 = por %p48, %p49
      %p51 = scmp.ne.s32.totalorder %s40, %s41
      %p52 = scmp.eq.s32.totalorder %s18, 0
      %p53 = por %p51, %p52
      %p54 = scmp.ne.s32.totalorder %s40, %s41
      %p55 = scmp.eq.s32.totalorder %s19, 1
      %p56 = por %p54, %p55
      %p58 = scmp.ne.s32.totalorder %s41, %s57
      %p59 = scmp.eq.s32.totalorder %s19, 0
      %p60 = por %p58, %p59
      %s61 = ssub.s32 %s20, %s32
      %s62 = ssub.s32 %s21, %s28
      %s63 = sor.u32 %s61, %s62
      %p64 = scmp.eq.s32.totalorder %s63, 0
      %s66 = sadd.s32 %s65, 1
      %s67 = scalar_select %p64, %s65, %s66
      %p70 = pneg %p64
      %p71 = scmp.eq.s32.totalorder %s13, 1
      %p72 = por %p70, %p71
      %p73 = scmp.ne.s32.totalorder %s65, %s68
      %p74 = scmp.eq.s32.totalorder %s13, 0
      %p75 = por %p73, %p74
      %p76 = scmp.ne.s32.totalorder %s65, %s68
      %p77 = scmp.eq.s32.totalorder %s18, 1
      %p78 = por %p76, %p77
      %p79 = scmp.ne.s32.totalorder %s68, %s69
      %p80 = scmp.eq.s32.totalorder %s18, 0
      %p81 = por %p79, %p80
      %p82 = scmp.ne.s32.totalorder %s68, %s69
      %p83 = scmp.eq.s32.totalorder %s19, 1
      %p84 = por %p82, %p83
      %p86 = scmp.ne.s32.totalorder %s69, %s85
      %p87 = scmp.eq.s32.totalorder %s19, 0
      %p88 = por %p86, %p87
      %p89 = scmp.le.s32.totalorder 1, %s13
      %p90 = scmp.lt.s32.totalorder %s13, 3
      %p91 = pnand %p89, %p90
      %p92 = pneg %p91
      // Predicated region
      $region9: #{upsample_nearest.1} parent=5 // pred_check
        _
      $region10: #{upsample_nearest.1} parent=5 // pred_check_branch
        %94 = sbr.rel (%p91) target = $region12
      $region11: #{upsample_nearest.1} parent=5 // pred_region
        %s95 = ssub.s32 %s13, 1
      $region12: #{upsample_nearest.1} parent=5 // pred_fallthru
        _
      %p96 = scmp.lt.s32.totalorder %s13, 2
      // Predicated region
      $region13: #{upsample_nearest.1} parent=5 // pred_check
        %p97 = pneg %p96
      $region14: #{upsample_nearest.1} parent=5 // pred_check_branch
        %99 = sbr.rel (%p97) target = $region16
      $region15: #{upsample_nearest.1} parent=5 // pred_region
        // Predicated region
        $region17: #{upsample_nearest.1} parent=15 // pred_check
          %p100 = pneg %p47
        $region18: #{upsample_nearest.1} parent=15 // pred_check_branch
          %102 = sbr.rel (%p100) target = $region20
        $region19: #{upsample_nearest.1} parent=15 // pred_region
          %s103 = sand.u32 %s37, 1
          %s104 = scalar_lea.sflag [#allocation3], %s103
          %s105 = sand.u32 %s37, 1
          %s106 = smul.addr %s105, 64
          %s107 = scalar_lea.vmem [#allocation2], %s106
          %s108 = smul.u32 4, %s20
          %s109 = smul.u32 2, %s21
          %111 = vsyncadd %s104, 0
          %s112 = smul.addr %s108, 2
          %s113 = sadd.s32 %s109, %s112
          %s114 = smul.addr %s113, 8
          %s115 = scalar_lea.hbm %s0, %s114
          %s116 = sshll.u32 %s115, 4
          %s117 = int_to_ptr.hbm [resolvable:$true] %s116
          %s118 = sshll.u32 %s107, 4
          %s119 = int_to_ptr.vmem [resolvable:$true] %s118
          %124 = dma.hbm_to_vmem [thread:$0]  %s117, 1024, %s119, %s104, 128, 128, 8
        $region20: #{upsample_nearest.1} parent=15 // pred_fallthru
          _
      $region16: #{upsample_nearest.1} parent=5 // pred_fallthru
        _
      %p125 = scmp.le.s32.totalorder 1, %s13
      %p126 = scmp.lt.s32.totalorder %s13, 3
      %p127 = pnand %p125, %p126
      %p128 = pneg %p127
      // Predicated region
      $region21: #{upsample_nearest.1} parent=5 // pred_check
        _
      $region22: #{upsample_nearest.1} parent=5 // pred_check_branch
        %130 = sbr.rel (%p127) target = $region24
      $region23: #{upsample_nearest.1} parent=5 // pred_region
        %s131 = ssub.s32 %s13, 1
        %s132 = sand.u32 %s40, 1
        %s133 = scalar_lea.sflag [#allocation3], %s132
        %s134 = sand.u32 %s40, 1
        %s135 = smul.addr %s134, 64
        %s136 = scalar_lea.vmem [#allocation2], %s135
        // Predicated region
        $region25: #{upsample_nearest.1} parent=23 // pred_check
          %p137 = pneg %p53
        $region26: #{upsample_nearest.1} parent=23 // pred_check_branch
          %139 = sbr.rel (%p137) target = $region28
        $region27: #{upsample_nearest.1} parent=23 // pred_region
          %141 = dma.done %s133, 1024
        $region28: #{upsample_nearest.1} parent=23 // pred_fallthru
          _
        %s142 = sand.u32 %s40, 1
        %s143 = scalar_lea.sflag [#allocation3], %s142
        %s144 = sand.u32 %s40, 1
        %s145 = smul.addr %s144, 64
        %s146 = scalar_lea.vmem [#allocation2], %s145
        %p147 = pneg %p53
        %p148 = pneg %p50
        %p149 = pneg %p81
        %p150 = pneg %p78
        %s151 = sand.u32 %s68, 1
        %s152 = scalar_lea.sflag [#allocation4], %s151
        %s153 = sand.u32 %s68, 1
        %s154 = smul.addr %s153, 128
        %s155 = scalar_lea.vmem [#allocation5], %s154
        %s156 = smul.u32 4, %s22
        %s157 = smul.u32 2, %s23
        %s158 = smul.u32 4, %s22
        %s159 = smul.u32 4, %s23
        %v160 = vld [vmem:[%s136] sm:$0xff]
        %v161 = vld [vmem:[%s136 + $0x8] sm:$0xff]
        %v162 = vld [vmem:[%s136 + $0x10] sm:$0xff]
        %v163 = vld [vmem:[%s136 + $0x18] sm:$0xff]
        %v164 = vld [vmem:[%s136 + $0x20] sm:$0xff]
        %v165 = vld [vmem:[%s136 + $0x28] sm:$0xff]
        %v166 = vld [vmem:[%s136 + $0x30] sm:$0xff]
        %v167 = vld [vmem:[%s136 + $0x38] sm:$0xff]
        %v168 = vperm.slane %v160, 0
        %v169 = vlaneseq
        %v170 = vshrl.u32 %v169, 7
        %172 = vset.pattern.permute.xlu0 %v170
        %173 = vperm.xlu0 %172, %v168
        %v174 = vpop.permute.xlu0 %173
        %v175 = vlaneseq
        %v176 = vshrl.u32 %v175, 7
        %v177 = vadd.s32 %v176, 8
        %178 = vset.pattern.permute.xlu0 %v177
        %179 = vperm.xlu0 %178, %v168
        %v180 = vpop.permute.xlu0 %179
        %v181 = vperm.slane %v160, 1
        %v182 = vlaneseq
        %v183 = vshrl.u32 %v182, 7
        %185 = vset.pattern.permute.xlu0 %v183
        %186 = vperm.xlu0 %185, %v181
        %v187 = vpop.permute.xlu0 %186
        %v188 = vlaneseq
        %v189 = vshrl.u32 %v188, 7
        %v190 = vadd.s32 %v189, 8
        %191 = vset.pattern.permute.xlu0 %v190
        %192 = vperm.xlu0 %191, %v181
        %v193 = vpop.permute.xlu0 %192
        %v194 = vperm.slane %v160, 2
        %v195 = vlaneseq
        %v196 = vshrl.u32 %v195, 7
        %198 = vset.pattern.permute.xlu0 %v196
        %199 = vperm.xlu0 %198, %v194
        %v200 = vpop.permute.xlu0 %199
        %v201 = vlaneseq
        %v202 = vshrl.u32 %v201, 7
        %v203 = vadd.s32 %v202, 8
        %204 = vset.pattern.permute.xlu0 %v203
        %205 = vperm.xlu0 %204, %v194
        %v206 = vpop.permute.xlu0 %205
        %v207 = vperm.slane %v160, 3
        %v208 = vlaneseq
        %v209 = vshrl.u32 %v208, 7
        %211 = vset.pattern.permute.xlu0 %v209
        %212 = vperm.xlu0 %211, %v207
        %v213 = vpop.permute.xlu0 %212
        %v214 = vlaneseq
        %v215 = vshrl.u32 %v214, 7
        %v216 = vadd.s32 %v215, 8
        %217 = vset.pattern.permute.xlu0 %v216
        %218 = vperm.xlu0 %217, %v207
        %v219 = vpop.permute.xlu0 %218
        %v220 = vperm.slane %v160, 4
        %v221 = vlaneseq
        %v222 = vshrl.u32 %v221, 7
        %224 = vset.pattern.permute.xlu0 %v222
        %225 = vperm.xlu0 %224, %v220
        %v226 = vpop.permute.xlu0 %225
        %v227 = vlaneseq
        %v228 = vshrl.u32 %v227, 7
        %v229 = vadd.s32 %v228, 8
        %230 = vset.pattern.permute.xlu0 %v229
        %231 = vperm.xlu0 %230, %v220
        %v232 = vpop.permute.xlu0 %231
        %v233 = vperm.slane %v160, 5
        %v234 = vlaneseq
        %v235 = vshrl.u32 %v234, 7
        %237 = vset.pattern.permute.xlu0 %v235
        %238 = vperm.xlu0 %237, %v233
        %v239 = vpop.permute.xlu0 %238
        %v240 = vlaneseq
        %v241 = vshrl.u32 %v240, 7
        %v242 = vadd.s32 %v241, 8
        %243 = vset.pattern.permute.xlu0 %v242
        %244 = vperm.xlu0 %243, %v233
        %v245 = vpop.permute.xlu0 %244
        %v246 = vperm.slane %v160, 6
        %v247 = vlaneseq
        %v248 = vshrl.u32 %v247, 7
        %250 = vset.pattern.permute.xlu0 %v248
        %251 = vperm.xlu0 %250, %v246
        %v252 = vpop.permute.xlu0 %251
        %v253 = vlaneseq
        %v254 = vshrl.u32 %v253, 7
        %v255 = vadd.s32 %v254, 8
        %256 = vset.pattern.permute.xlu0 %v255
        %257 = vperm.xlu0 %256, %v246
        %v258 = vpop.permute.xlu0 %257
        %v259 = vperm.slane %v160, 7
        %v260 = vlaneseq
        %v261 = vshrl.u32 %v260, 7
        %263 = vset.pattern.permute.xlu0 %v261
        %264 = vperm.xlu0 %263, %v259
        %v265 = vpop.permute.xlu0 %264
        %v266 = vlaneseq
        %v267 = vshrl.u32 %v266, 7
        %v268 = vadd.s32 %v267, 8
        %269 = vset.pattern.permute.xlu0 %v268
        %270 = vperm.xlu0 %269, %v259
        %v271 = vpop.permute.xlu0 %270
        %v272 = vperm.slane %v161, 0
        %v273 = vlaneseq
        %v274 = vshrl.u32 %v273, 7
        %276 = vset.pattern.permute.xlu0 %v274
        %277 = vperm.xlu0 %276, %v272
        %v278 = vpop.permute.xlu0 %277
        %v279 = vlaneseq
        %v280 = vshrl.u32 %v279, 7
        %v281 = vadd.s32 %v280, 8
        %282 = vset.pattern.permute.xlu0 %v281
        %283 = vperm.xlu0 %282, %v272
        %v284 = vpop.permute.xlu0 %283
        %v285 = vperm.slane %v161, 1
        %v286 = vlaneseq
        %v287 = vshrl.u32 %v286, 7
        %289 = vset.pattern.permute.xlu0 %v287
        %290 = vperm.xlu0 %289, %v285
        %v291 = vpop.permute.xlu0 %290
        %v292 = vlaneseq
        %v293 = vshrl.u32 %v292, 7
        %v294 = vadd.s32 %v293, 8
        %295 = vset.pattern.permute.xlu0 %v294
        %296 = vperm.xlu0 %295, %v285
        %v297 = vpop.permute.xlu0 %296
        %v298 = vperm.slane %v161, 2
        %v299 = vlaneseq
        %v300 = vshrl.u32 %v299, 7
        %302 = vset.pattern.permute.xlu0 %v300
        %303 = vperm.xlu0 %302, %v298
        %v304 = vpop.permute.xlu0 %303
        %v305 = vlaneseq
        %v306 = vshrl.u32 %v305, 7
        %v307 = vadd.s32 %v306, 8
        %308 = vset.pattern.permute.xlu0 %v307
        %309 = vperm.xlu0 %308, %v298
        %v310 = vpop.permute.xlu0 %309
        %v311 = vperm.slane %v161, 3
        %v312 = vlaneseq
        %v313 = vshrl.u32 %v312, 7
        %315 = vset.pattern.permute.xlu0 %v313
        %316 = vperm.xlu0 %315, %v311
        %v317 = vpop.permute.xlu0 %316
        %v318 = vlaneseq
        %v319 = vshrl.u32 %v318, 7
        %v320 = vadd.s32 %v319, 8
        %321 = vset.pattern.permute.xlu0 %v320
        %322 = vperm.xlu0 %321, %v311
        %v323 = vpop.permute.xlu0 %322
        %v324 = vperm.slane %v161, 4
        %v325 = vlaneseq
        %v326 = vshrl.u32 %v325, 7
        %328 = vset.pattern.permute.xlu0 %v326
        %329 = vperm.xlu0 %328, %v324
        %v330 = vpop.permute.xlu0 %329
        %v331 = vlaneseq
        %v332 = vshrl.u32 %v331, 7
        %v333 = vadd.s32 %v332, 8
        %334 = vset.pattern.permute.xlu0 %v333
        %335 = vperm.xlu0 %334, %v324
        %v336 = vpop.permute.xlu0 %335
        %v337 = vperm.slane %v161, 5
        %v338 = vlaneseq
        %v339 = vshrl.u32 %v338, 7
        %341 = vset.pattern.permute.xlu0 %v339
        %342 = vperm.xlu0 %341, %v337
        %v343 = vpop.permute.xlu0 %342
        %v344 = vlaneseq
        %v345 = vshrl.u32 %v344, 7
        %v346 = vadd.s32 %v345, 8
        %347 = vset.pattern.permute.xlu0 %v346
        %348 = vperm.xlu0 %347, %v337
        %v349 = vpop.permute.xlu0 %348
        %v350 = vperm.slane %v161, 6
        %v351 = vlaneseq
        %v352 = vshrl.u32 %v351, 7
        %354 = vset.pattern.permute.xlu0 %v352
        %355 = vperm.xlu0 %354, %v350
        %v356 = vpop.permute.xlu0 %355
        %v357 = vlaneseq
        %v358 = vshrl.u32 %v357, 7
        %v359 = vadd.s32 %v358, 8
        %360 = vset.pattern.permute.xlu0 %v359
        %361 = vperm.xlu0 %360, %v350
        %v362 = vpop.permute.xlu0 %361
        %v363 = vperm.slane %v161, 7
        %v364 = vlaneseq
        %v365 = vshrl.u32 %v364, 7
        %367 = vset.pattern.permute.xlu0 %v365
        %368 = vperm.xlu0 %367, %v363
        %v369 = vpop.permute.xlu0 %368
        %v370 = vlaneseq
        %v371 = vshrl.u32 %v370, 7
        %v372 = vadd.s32 %v371, 8
        %373 = vset.pattern.permute.xlu0 %v372
        %374 = vperm.xlu0 %373, %v363
        %v375 = vpop.permute.xlu0 %374
        %v376 = vperm.slane %v162, 0
        %v377 = vlaneseq
        %v378 = vshrl.u32 %v377, 7
        %380 = vset.pattern.permute.xlu0 %v378
        %381 = vperm.xlu0 %380, %v376
        %v382 = vpop.permute.xlu0 %381
        %v383 = vlaneseq
        %v384 = vshrl.u32 %v383, 7
        %v385 = vadd.s32 %v384, 8
        %386 = vset.pattern.permute.xlu0 %v385
        %387 = vperm.xlu0 %386, %v376
        %v388 = vpop.permute.xlu0 %387
        %v389 = vperm.slane %v162, 1
        %v390 = vlaneseq
        %v391 = vshrl.u32 %v390, 7
        %393 = vset.pattern.permute.xlu0 %v391
        %394 = vperm.xlu0 %393, %v389
        %v395 = vpop.permute.xlu0 %394
        %v396 = vlaneseq
        %v397 = vshrl.u32 %v396, 7
        %v398 = vadd.s32 %v397, 8
        %399 = vset.pattern.permute.xlu0 %v398
        %400 = vperm.xlu0 %399, %v389
        %v401 = vpop.permute.xlu0 %400
        %v402 = vperm.slane %v162, 2
        %v403 = vlaneseq
        %v404 = vshrl.u32 %v403, 7
        %406 = vset.pattern.permute.xlu0 %v404
        %407 = vperm.xlu0 %406, %v402
        %v408 = vpop.permute.xlu0 %407
        %v409 = vlaneseq
        %v410 = vshrl.u32 %v409, 7
        %v411 = vadd.s32 %v410, 8
        %412 = vset.pattern.permute.xlu0 %v411
        %413 = vperm.xlu0 %412, %v402
        %v414 = vpop.permute.xlu0 %413
        %v415 = vperm.slane %v162, 3
        %v416 = vlaneseq
        %v417 = vshrl.u32 %v416, 7
        %419 = vset.pattern.permute.xlu0 %v417
        %420 = vperm.xlu0 %419, %v415
        %v421 = vpop.permute.xlu0 %420
        %v422 = vlaneseq
        %v423 = vshrl.u32 %v422, 7
        %v424 = vadd.s32 %v423, 8
        %425 = vset.pattern.permute.xlu0 %v424
        %426 = vperm.xlu0 %425, %v415
        %v427 = vpop.permute.xlu0 %426
        %v428 = vperm.slane %v162, 4
        %v429 = vlaneseq
        %v430 = vshrl.u32 %v429, 7
        %432 = vset.pattern.permute.xlu0 %v430
        %433 = vperm.xlu0 %432, %v428
        %v434 = vpop.permute.xlu0 %433
        %v435 = vlaneseq
        %v436 = vshrl.u32 %v435, 7
        %v437 = vadd.s32 %v436, 8
        %438 = vset.pattern.permute.xlu0 %v437
        %439 = vperm.xlu0 %438, %v428
        %v440 = vpop.permute.xlu0 %439
        %v441 = vperm.slane %v162, 5
        %v442 = vlaneseq
        %v443 = vshrl.u32 %v442, 7
        %445 = vset.pattern.permute.xlu0 %v443
        %446 = vperm.xlu0 %445, %v441
        %v447 = vpop.permute.xlu0 %446
        %v448 = vlaneseq
        %v449 = vshrl.u32 %v448, 7
        %v450 = vadd.s32 %v449, 8
        %451 = vset.pattern.permute.xlu0 %v450
        %452 = vperm.xlu0 %451, %v441
        %v453 = vpop.permute.xlu0 %452
        %v454 = vperm.slane %v162, 6
        %v455 = vlaneseq
        %v456 = vshrl.u32 %v455, 7
        %458 = vset.pattern.permute.xlu0 %v456
        %459 = vperm.xlu0 %458, %v454
        %v460 = vpop.permute.xlu0 %459
        %v461 = vlaneseq
        %v462 = vshrl.u32 %v461, 7
        %v463 = vadd.s32 %v462, 8
        %464 = vset.pattern.permute.xlu0 %v463
        %465 = vperm.xlu0 %464, %v454
        %v466 = vpop.permute.xlu0 %465
        %v467 = vperm.slane %v162, 7
        %v468 = vlaneseq
        %v469 = vshrl.u32 %v468, 7
        %471 = vset.pattern.permute.xlu0 %v469
        %472 = vperm.xlu0 %471, %v467
        %v473 = vpop.permute.xlu0 %472
        %v474 = vlaneseq
        %v475 = vshrl.u32 %v474, 7
        %v476 = vadd.s32 %v475, 8
        %477 = vset.pattern.permute.xlu0 %v476
        %478 = vperm.xlu0 %477, %v467
        %v479 = vpop.permute.xlu0 %478
        %v480 = vperm.slane %v163, 0
        %v481 = vlaneseq
        %v482 = vshrl.u32 %v481, 7
        %484 = vset.pattern.permute.xlu0 %v482
        %485 = vperm.xlu0 %484, %v480
        %v486 = vpop.permute.xlu0 %485
        %v487 = vlaneseq
        %v488 = vshrl.u32 %v487, 7
        %v489 = vadd.s32 %v488, 8
        %490 = vset.pattern.permute.xlu0 %v489
        %491 = vperm.xlu0 %490, %v480
        %v492 = vpop.permute.xlu0 %491
        %v493 = vperm.slane %v163, 1
        %v494 = vlaneseq
        %v495 = vshrl.u32 %v494, 7
        %497 = vset.pattern.permute.xlu0 %v495
        %498 = vperm.xlu0 %497, %v493
        %v499 = vpop.permute.xlu0 %498
        %v500 = vlaneseq
        %v501 = vshrl.u32 %v500, 7
        %v502 = vadd.s32 %v501, 8
        %503 = vset.pattern.permute.xlu0 %v502
        %504 = vperm.xlu0 %503, %v493
        %v505 = vpop.permute.xlu0 %504
        %v506 = vperm.slane %v163, 2
        %v507 = vlaneseq
        %v508 = vshrl.u32 %v507, 7
        %510 = vset.pattern.permute.xlu0 %v508
        %511 = vperm.xlu0 %510, %v506
        %v512 = vpop.permute.xlu0 %511
        %v513 = vlaneseq
        %v514 = vshrl.u32 %v513, 7
        %v515 = vadd.s32 %v514, 8
        %516 = vset.pattern.permute.xlu0 %v515
        %517 = vperm.xlu0 %516, %v506
        %v518 = vpop.permute.xlu0 %517
        %v519 = vperm.slane %v163, 3
        %v520 = vlaneseq
        %v521 = vshrl.u32 %v520, 7
        %523 = vset.pattern.permute.xlu0 %v521
        %524 = vperm.xlu0 %523, %v519
        %v525 = vpop.permute.xlu0 %524
        %v526 = vlaneseq
        %v527 = vshrl.u32 %v526, 7
        %v528 = vadd.s32 %v527, 8
        %529 = vset.pattern.permute.xlu0 %v528
        %530 = vperm.xlu0 %529, %v519
        %v531 = vpop.permute.xlu0 %530
        %v532 = vperm.slane %v163, 4
        %v533 = vlaneseq
        %v534 = vshrl.u32 %v533, 7
        %536 = vset.pattern.permute.xlu0 %v534
        %537 = vperm.xlu0 %536, %v532
        %v538 = vpop.permute.xlu0 %537
        %v539 = vlaneseq
        %v540 = vshrl.u32 %v539, 7
        %v541 = vadd.s32 %v540, 8
        %542 = vset.pattern.permute.xlu0 %v541
        %543 = vperm.xlu0 %542, %v532
        %v544 = vpop.permute.xlu0 %543
        %v545 = vperm.slane %v163, 5
        %v546 = vlaneseq
        %v547 = vshrl.u32 %v546, 7
        %549 = vset.pattern.permute.xlu0 %v547
        %550 = vperm.xlu0 %549, %v545
        %v551 = vpop.permute.xlu0 %550
        %v552 = vlaneseq
        %v553 = vshrl.u32 %v552, 7
        %v554 = vadd.s32 %v553, 8
        %555 = vset.pattern.permute.xlu0 %v554
        %556 = vperm.xlu0 %555, %v545
        %v557 = vpop.permute.xlu0 %556
        %v558 = vperm.slane %v163, 6
        %v559 = vlaneseq
        %v560 = vshrl.u32 %v559, 7
        %562 = vset.pattern.permute.xlu0 %v560
        %563 = vperm.xlu0 %562, %v558
        %v564 = vpop.permute.xlu0 %563
        %v565 = vlaneseq
        %v566 = vshrl.u32 %v565, 7
        %v567 = vadd.s32 %v566, 8
        %568 = vset.pattern.permute.xlu0 %v567
        %569 = vperm.xlu0 %568, %v558
        %v570 = vpop.permute.xlu0 %569
        %v571 = vperm.slane %v163, 7
        %v572 = vlaneseq
        %v573 = vshrl.u32 %v572, 7
        %575 = vset.pattern.permute.xlu0 %v573
        %576 = vperm.xlu0 %575, %v571
        %v577 = vpop.permute.xlu0 %576
        %v578 = vlaneseq
        %v579 = vshrl.u32 %v578, 7
        %v580 = vadd.s32 %v579, 8
        %581 = vset.pattern.permute.xlu0 %v580
        %582 = vperm.xlu0 %581, %v571
        %v583 = vpop.permute.xlu0 %582
        %v584 = vperm.slane %v164, 0
        %v585 = vlaneseq
        %v586 = vshrl.u32 %v585, 7
        %588 = vset.pattern.permute.xlu0 %v586
        %589 = vperm.xlu0 %588, %v584
        %v590 = vpop.permute.xlu0 %589
        %v591 = vlaneseq
        %v592 = vshrl.u32 %v591, 7
        %v593 = vadd.s32 %v592, 8
        %594 = vset.pattern.permute.xlu0 %v593
        %595 = vperm.xlu0 %594, %v584
        %v596 = vpop.permute.xlu0 %595
        %v597 = vperm.slane %v164, 1
        %v598 = vlaneseq
        %v599 = vshrl.u32 %v598, 7
        %601 = vset.pattern.permute.xlu0 %v599
        %602 = vperm.xlu0 %601, %v597
        %v603 = vpop.permute.xlu0 %602
        %v604 = vlaneseq
        %v605 = vshrl.u32 %v604, 7
        %v606 = vadd.s32 %v605, 8
        %607 = vset.pattern.permute.xlu0 %v606
        %608 = vperm.xlu0 %607, %v597
        %v609 = vpop.permute.xlu0 %608
        %v610 = vperm.slane %v164, 2
        %v611 = vlaneseq
        %v612 = vshrl.u32 %v611, 7
        %614 = vset.pattern.permute.xlu0 %v612
        %615 = vperm.xlu0 %614, %v610
        %v616 = vpop.permute.xlu0 %615
        %v617 = vlaneseq
        %v618 = vshrl.u32 %v617, 7
        %v619 = vadd.s32 %v618, 8
        %620 = vset.pattern.permute.xlu0 %v619
        %621 = vperm.xlu0 %620, %v610
        %v622 = vpop.permute.xlu0 %621
        %v623 = vperm.slane %v164, 3
        %v624 = vlaneseq
        %v625 = vshrl.u32 %v624, 7
        %627 = vset.pattern.permute.xlu0 %v625
        %628 = vperm.xlu0 %627, %v623
        %v629 = vpop.permute.xlu0 %628
        %v630 = vlaneseq
        %v631 = vshrl.u32 %v630, 7
        %v632 = vadd.s32 %v631, 8
        %633 = vset.pattern.permute.xlu0 %v632
        %634 = vperm.xlu0 %633, %v623
        %v635 = vpop.permute.xlu0 %634
        %v636 = vperm.slane %v164, 4
        %v637 = vlaneseq
        %v638 = vshrl.u32 %v637, 7
        %640 = vset.pattern.permute.xlu0 %v638
        %641 = vperm.xlu0 %640, %v636
        %v642 = vpop.permute.xlu0 %641
        %v643 = vlaneseq
        %v644 = vshrl.u32 %v643, 7
        %v645 = vadd.s32 %v644, 8
        %646 = vset.pattern.permute.xlu0 %v645
        %647 = vperm.xlu0 %646, %v636
        %v648 = vpop.permute.xlu0 %647
        %v649 = vperm.slane %v164, 5
        %v650 = vlaneseq
        %v651 = vshrl.u32 %v650, 7
        %653 = vset.pattern.permute.xlu0 %v651
        %654 = vperm.xlu0 %653, %v649
        %v655 = vpop.permute.xlu0 %654
        %v656 = vlaneseq
        %v657 = vshrl.u32 %v656, 7
        %v658 = vadd.s32 %v657, 8
        %659 = vset.pattern.permute.xlu0 %v658
        %660 = vperm.xlu0 %659, %v649
        %v661 = vpop.permute.xlu0 %660
        %v662 = vperm.slane %v164, 6
        %v663 = vlaneseq
        %v664 = vshrl.u32 %v663, 7
        %666 = vset.pattern.permute.xlu0 %v664
        %667 = vperm.xlu0 %666, %v662
        %v668 = vpop.permute.xlu0 %667
        %v669 = vlaneseq
        %v670 = vshrl.u32 %v669, 7
        %v671 = vadd.s32 %v670, 8
        %672 = vset.pattern.permute.xlu0 %v671
        %673 = vperm.xlu0 %672, %v662
        %v674 = vpop.permute.xlu0 %673
        %v675 = vperm.slane %v164, 7
        %v676 = vlaneseq
        %v677 = vshrl.u32 %v676, 7
        %679 = vset.pattern.permute.xlu0 %v677
        %680 = vperm.xlu0 %679, %v675
        %v681 = vpop.permute.xlu0 %680
        %v682 = vlaneseq
        %v683 = vshrl.u32 %v682, 7
        %v684 = vadd.s32 %v683, 8
        %685 = vset.pattern.permute.xlu0 %v684
        %686 = vperm.xlu0 %685, %v675
        %v687 = vpop.permute.xlu0 %686
        %v688 = vperm.slane %v165, 0
        %v689 = vlaneseq
        %v690 = vshrl.u32 %v689, 7
        %692 = vset.pattern.permute.xlu0 %v690
        %693 = vperm.xlu0 %692, %v688
        %v694 = vpop.permute.xlu0 %693
        %v695 = vlaneseq
        %v696 = vshrl.u32 %v695, 7
        %v697 = vadd.s32 %v696, 8
        %698 = vset.pattern.permute.xlu0 %v697
        %699 = vperm.xlu0 %698, %v688
        %v700 = vpop.permute.xlu0 %699
        %v701 = vperm.slane %v165, 1
        %v702 = vlaneseq
        %v703 = vshrl.u32 %v702, 7
        %705 = vset.pattern.permute.xlu0 %v703
        %706 = vperm.xlu0 %705, %v701
        %v707 = vpop.permute.xlu0 %706
        %v708 = vlaneseq
        %v709 = vshrl.u32 %v708, 7
        %v710 = vadd.s32 %v709, 8
        %711 = vset.pattern.permute.xlu0 %v710
        %712 = vperm.xlu0 %711, %v701
        %v713 = vpop.permute.xlu0 %712
        %v714 = vperm.slane %v165, 2
        %v715 = vlaneseq
        %v716 = vshrl.u32 %v715, 7
        %718 = vset.pattern.permute.xlu0 %v716
        %719 = vperm.xlu0 %718, %v714
        %v720 = vpop.permute.xlu0 %719
        %v721 = vlaneseq
        %v722 = vshrl.u32 %v721, 7
        %v723 = vadd.s32 %v722, 8
        %724 = vset.pattern.permute.xlu0 %v723
        %725 = vperm.xlu0 %724, %v714
        %v726 = vpop.permute.xlu0 %725
        %v727 = vperm.slane %v165, 3
        %v728 = vlaneseq
        %v729 = vshrl.u32 %v728, 7
        %731 = vset.pattern.permute.xlu0 %v729
        %732 = vperm.xlu0 %731, %v727
        %v733 = vpop.permute.xlu0 %732
        %v734 = vlaneseq
        %v735 = vshrl.u32 %v734, 7
        %v736 = vadd.s32 %v735, 8
        %737 = vset.pattern.permute.xlu0 %v736
        %738 = vperm.xlu0 %737, %v727
        %v739 = vpop.permute.xlu0 %738
        %v740 = vperm.slane %v165, 4
        %v741 = vlaneseq
        %v742 = vshrl.u32 %v741, 7
        %744 = vset.pattern.permute.xlu0 %v742
        %745 = vperm.xlu0 %744, %v740
        %v746 = vpop.permute.xlu0 %745
        %v747 = vlaneseq
        %v748 = vshrl.u32 %v747, 7
        %v749 = vadd.s32 %v748, 8
        %750 = vset.pattern.permute.xlu0 %v749
        %751 = vperm.xlu0 %750, %v740
        %v752 = vpop.permute.xlu0 %751
        %v753 = vperm.slane %v165, 5
        %v754 = vlaneseq
        %v755 = vshrl.u32 %v754, 7
        %757 = vset.pattern.permute.xlu0 %v755
        %758 = vperm.xlu0 %757, %v753
        %v759 = vpop.permute.xlu0 %758
        %v760 = vlaneseq
        %v761 = vshrl.u32 %v760, 7
        %v762 = vadd.s32 %v761, 8
        %763 = vset.pattern.permute.xlu0 %v762
        %764 = vperm.xlu0 %763, %v753
        %v765 = vpop.permute.xlu0 %764
        %v766 = vperm.slane %v165, 6
        %v767 = vlaneseq
        %v768 = vshrl.u32 %v767, 7
        %770 = vset.pattern.permute.xlu0 %v768
        %771 = vperm.xlu0 %770, %v766
        %v772 = vpop.permute.xlu0 %771
        %v773 = vlaneseq
        %v774 = vshrl.u32 %v773, 7
        %v775 = vadd.s32 %v774, 8
        %776 = vset.pattern.permute.xlu0 %v775
        %777 = vperm.xlu0 %776, %v766
        %v778 = vpop.permute.xlu0 %777
        %v779 = vperm.slane %v165, 7
        %v780 = vlaneseq
        %v781 = vshrl.u32 %v780, 7
        %783 = vset.pattern.permute.xlu0 %v781
        %784 = vperm.xlu0 %783, %v779
        %v785 = vpop.permute.xlu0 %784
        %v786 = vlaneseq
        %v787 = vshrl.u32 %v786, 7
        %v788 = vadd.s32 %v787, 8
        %789 = vset.pattern.permute.xlu0 %v788
        %790 = vperm.xlu0 %789, %v779
        %v791 = vpop.permute.xlu0 %790
        %v792 = vperm.slane %v166, 0
        %v793 = vlaneseq
        %v794 = vshrl.u32 %v793, 7
        %796 = vset.pattern.permute.xlu0 %v794
        %797 = vperm.xlu0 %796, %v792
        %v798 = vpop.permute.xlu0 %797
        %v799 = vlaneseq
        %v800 = vshrl.u32 %v799, 7
        %v801 = vadd.s32 %v800, 8
        %802 = vset.pattern.permute.xlu0 %v801
        %803 = vperm.xlu0 %802, %v792
        %v804 = vpop.permute.xlu0 %803
        %v805 = vperm.slane %v166, 1
        %v806 = vlaneseq
        %v807 = vshrl.u32 %v806, 7
        %809 = vset.pattern.permute.xlu0 %v807
        %810 = vperm.xlu0 %809, %v805
        %v811 = vpop.permute.xlu0 %810
        %v812 = vlaneseq
        %v813 = vshrl.u32 %v812, 7
        %v814 = vadd.s32 %v813, 8
        %815 = vset.pattern.permute.xlu0 %v814
        %816 = vperm.xlu0 %815, %v805
        %v817 = vpop.permute.xlu0 %816
        %v818 = vperm.slane %v166, 2
        %v819 = vlaneseq
        %v820 = vshrl.u32 %v819, 7
        %822 = vset.pattern.permute.xlu0 %v820
        %823 = vperm.xlu0 %822, %v818
        %v824 = vpop.permute.xlu0 %823
        %v825 = vlaneseq
        %v826 = vshrl.u32 %v825, 7
        %v827 = vadd.s32 %v826, 8
        %828 = vset.pattern.permute.xlu0 %v827
        %829 = vperm.xlu0 %828, %v818
        %v830 = vpop.permute.xlu0 %829
        %v831 = vperm.slane %v166, 3
        %v832 = vlaneseq
        %v833 = vshrl.u32 %v832, 7
        %835 = vset.pattern.permute.xlu0 %v833
        %836 = vperm.xlu0 %835, %v831
        %v837 = vpop.permute.xlu0 %836
        %v838 = vlaneseq
        %v839 = vshrl.u32 %v838, 7
        %v840 = vadd.s32 %v839, 8
        %841 = vset.pattern.permute.xlu0 %v840
        %842 = vperm.xlu0 %841, %v831
        %v843 = vpop.permute.xlu0 %842
        %v844 = vperm.slane %v166, 4
        %v845 = vlaneseq
        %v846 = vshrl.u32 %v845, 7
        %848 = vset.pattern.permute.xlu0 %v846
        %849 = vperm.xlu0 %848, %v844
        %v850 = vpop.permute.xlu0 %849
        %v851 = vlaneseq
        %v852 = vshrl.u32 %v851, 7
        %v853 = vadd.s32 %v852, 8
        %854 = vset.pattern.permute.xlu0 %v853
        %855 = vperm.xlu0 %854, %v844
        %v856 = vpop.permute.xlu0 %855
        %v857 = vperm.slane %v166, 5
        %v858 = vlaneseq
        %v859 = vshrl.u32 %v858, 7
        %861 = vset.pattern.permute.xlu0 %v859
        %862 = vperm.xlu0 %861, %v857
        %v863 = vpop.permute.xlu0 %862
        %v864 = vlaneseq
        %v865 = vshrl.u32 %v864, 7
        %v866 = vadd.s32 %v865, 8
        %867 = vset.pattern.permute.xlu0 %v866
        %868 = vperm.xlu0 %867, %v857
        %v869 = vpop.permute.xlu0 %868
        %v870 = vperm.slane %v166, 6
        %v871 = vlaneseq
        %v872 = vshrl.u32 %v871, 7
        %874 = vset.pattern.permute.xlu0 %v872
        %875 = vperm.xlu0 %874, %v870
        %v876 = vpop.permute.xlu0 %875
        %v877 = vlaneseq
        %v878 = vshrl.u32 %v877, 7
        %v879 = vadd.s32 %v878, 8
        %880 = vset.pattern.permute.xlu0 %v879
        %881 = vperm.xlu0 %880, %v870
        %v882 = vpop.permute.xlu0 %881
        %v883 = vperm.slane %v166, 7
        %v884 = vlaneseq
        %v885 = vshrl.u32 %v884, 7
        %887 = vset.pattern.permute.xlu0 %v885
        %888 = vperm.xlu0 %887, %v883
        %v889 = vpop.permute.xlu0 %888
        %v890 = vlaneseq
        %v891 = vshrl.u32 %v890, 7
        %v892 = vadd.s32 %v891, 8
        %893 = vset.pattern.permute.xlu0 %v892
        %894 = vperm.xlu0 %893, %v883
        %v895 = vpop.permute.xlu0 %894
        %v896 = vperm.slane %v167, 0
        %v897 = vlaneseq
        %v898 = vshrl.u32 %v897, 7
        %900 = vset.pattern.permute.xlu0 %v898
        %901 = vperm.xlu0 %900, %v896
        %v902 = vpop.permute.xlu0 %901
        %v903 = vlaneseq
        %v904 = vshrl.u32 %v903, 7
        %v905 = vadd.s32 %v904, 8
        %906 = vset.pattern.permute.xlu0 %v905
        %907 = vperm.xlu0 %906, %v896
        %v908 = vpop.permute.xlu0 %907
        %v909 = vperm.slane %v167, 1
        %v910 = vlaneseq
        %v911 = vshrl.u32 %v910, 7
        %913 = vset.pattern.permute.xlu0 %v911
        %914 = vperm.xlu0 %913, %v909
        %v915 = vpop.permute.xlu0 %914
        %v916 = vlaneseq
        %v917 = vshrl.u32 %v916, 7
        %v918 = vadd.s32 %v917, 8
        %919 = vset.pattern.permute.xlu0 %v918
        %920 = vperm.xlu0 %919, %v909
        %v921 = vpop.permute.xlu0 %920
        %v922 = vperm.slane %v167, 2
        %v923 = vlaneseq
        %v924 = vshrl.u32 %v923, 7
        %926 = vset.pattern.permute.xlu0 %v924
        %927 = vperm.xlu0 %926, %v922
        %v928 = vpop.permute.xlu0 %927
        %v929 = vlaneseq
        %v930 = vshrl.u32 %v929, 7
        %v931 = vadd.s32 %v930, 8
        %932 = vset.pattern.permute.xlu0 %v931
        %933 = vperm.xlu0 %932, %v922
        %v934 = vpop.permute.xlu0 %933
        %v935 = vperm.slane %v167, 3
        %v936 = vlaneseq
        %v937 = vshrl.u32 %v936, 7
        %939 = vset.pattern.permute.xlu0 %v937
        %940 = vperm.xlu0 %939, %v935
        %v941 = vpop.permute.xlu0 %940
        %v942 = vlaneseq
        %v943 = vshrl.u32 %v942, 7
        %v944 = vadd.s32 %v943, 8
        %945 = vset.pattern.permute.xlu0 %v944
        %946 = vperm.xlu0 %945, %v935
        %v947 = vpop.permute.xlu0 %946
        %v948 = vperm.slane %v167, 4
        %v949 = vlaneseq
        %v950 = vshrl.u32 %v949, 7
        %952 = vset.pattern.permute.xlu0 %v950
        %953 = vperm.xlu0 %952, %v948
        %v954 = vpop.permute.xlu0 %953
        %v955 = vlaneseq
        %v956 = vshrl.u32 %v955, 7
        %v957 = vadd.s32 %v956, 8
        %958 = vset.pattern.permute.xlu0 %v957
        %959 = vperm.xlu0 %958, %v948
        %v960 = vpop.permute.xlu0 %959
        %v961 = vperm.slane %v167, 5
        %v962 = vlaneseq
        %v963 = vshrl.u32 %v962, 7
        %965 = vset.pattern.permute.xlu0 %v963
        %966 = vperm.xlu0 %965, %v961
        %v967 = vpop.permute.xlu0 %966
        %v968 = vlaneseq
        %v969 = vshrl.u32 %v968, 7
        %v970 = vadd.s32 %v969, 8
        %971 = vset.pattern.permute.xlu0 %v970
        %972 = vperm.xlu0 %971, %v961
        %v973 = vpop.permute.xlu0 %972
        %v974 = vperm.slane %v167, 6
        %v975 = vlaneseq
        %v976 = vshrl.u32 %v975, 7
        %978 = vset.pattern.permute.xlu0 %v976
        %979 = vperm.xlu0 %978, %v974
        %v980 = vpop.permute.xlu0 %979
        %v981 = vlaneseq
        %v982 = vshrl.u32 %v981, 7
        %v983 = vadd.s32 %v982, 8
        %984 = vset.pattern.permute.xlu0 %v983
        %985 = vperm.xlu0 %984, %v974
        %v986 = vpop.permute.xlu0 %985
        %v987 = vperm.slane %v167, 7
        %v988 = vlaneseq
        %v989 = vshrl.u32 %v988, 7
        %991 = vset.pattern.permute.xlu0 %v989
        %992 = vperm.xlu0 %991, %v987
        %v993 = vpop.permute.xlu0 %992
        %v994 = vlaneseq
        %v995 = vshrl.u32 %v994, 7
        %v996 = vadd.s32 %v995, 8
        %997 = vset.pattern.permute.xlu0 %v996
        %998 = vperm.xlu0 %997, %v987
        %v999 = vpop.permute.xlu0 %998
        %v1000 = vrot.slane %v174, 4
        %vm1001 = vcmask 1047556
        %v1002 = vsel %vm1001, 0.0, %v1000
        %v1004 = vunpack.c.l.s4 1983009808
        %v1005 = vunpack.c.0.s8 %v1004
        %v1006 = vperm.slane %v174, %v1005
        %v1008 = vunpack.c.l.s4 1983009808
        %v1009 = vunpack.c.0.s8 %v1008
        %v1010 = vperm.slane %v1002, %v1009
        %v1011 = vrot.slane %v1006, 4
        %v1012 = vsel %vm1001, 0.0, %v1011
        %v1014 = vunpack.c.l.s4 1934713408
        %v1015 = vunpack.c.0.s8 %v1014
        %v1016 = vperm.slane %v1006, %v1015
        %v1018 = vunpack.c.l.s4 1934713408
        %v1019 = vunpack.c.0.s8 %v1018
        %v1020 = vperm.slane %v1012, %v1019
        %v1021 = vrot.slane %v1010, 4
        %v1022 = vsel %vm1001, 0.0, %v1021
        %v1024 = vunpack.c.l.s4 1934713408
        %v1025 = vunpack.c.0.s8 %v1024
        %v1026 = vperm.slane %v1010, %v1025
        %v1028 = vunpack.c.l.s4 1934713408
        %v1029 = vunpack.c.0.s8 %v1028
        %v1030 = vperm.slane %v1022, %v1029
        %v1031 = vrot.slane %v1016, 4
        %v1032 = vsel %vm1001, 0.0, %v1031
        %v1033 = vrot.slane %v1020, 4
        %v1034 = vsel %vm1001, 0.0, %v1033
        %v1035 = vrot.slane %v1026, 4
        %v1036 = vsel %vm1001, 0.0, %v1035
        %v1037 = vrot.slane %v1030, 4
        %v1038 = vsel %vm1001, 0.0, %v1037
        %v1039 = vrot.slane %v180, 4
        %v1040 = vsel %vm1001, 0.0, %v1039
        %v1042 = vunpack.c.l.s4 1983009808
        %v1043 = vunpack.c.0.s8 %v1042
        %v1044 = vperm.slane %v180, %v1043
        %v1046 = vunpack.c.l.s4 1983009808
        %v1047 = vunpack.c.0.s8 %v1046
        %v1048 = vperm.slane %v1040, %v1047
        %v1049 = vrot.slane %v1044, 4
        %v1050 = vsel %vm1001, 0.0, %v1049
        %v1052 = vunpack.c.l.s4 1934713408
        %v1053 = vunpack.c.0.s8 %v1052
        %v1054 = vperm.slane %v1044, %v1053
        %v1056 = vunpack.c.l.s4 1934713408
        %v1057 = vunpack.c.0.s8 %v1056
        %v1058 = vperm.slane %v1050, %v1057
        %v1059 = vrot.slane %v1048, 4
        %v1060 = vsel %vm1001, 0.0, %v1059
        %v1062 = vunpack.c.l.s4 1934713408
        %v1063 = vunpack.c.0.s8 %v1062
        %v1064 = vperm.slane %v1048, %v1063
        %v1066 = vunpack.c.l.s4 1934713408
        %v1067 = vunpack.c.0.s8 %v1066
        %v1068 = vperm.slane %v1060, %v1067
        %v1069 = vrot.slane %v1054, 4
        %v1070 = vsel %vm1001, 0.0, %v1069
        %v1071 = vrot.slane %v1058, 4
        %v1072 = vsel %vm1001, 0.0, %v1071
        %v1073 = vrot.slane %v1064, 4
        %v1074 = vsel %vm1001, 0.0, %v1073
        %v1075 = vrot.slane %v1068, 4
        %v1076 = vsel %vm1001, 0.0, %v1075
        %v1077 = vrot.slane %v187, 4
        %v1078 = vsel %vm1001, 0.0, %v1077
        %v1080 = vunpack.c.l.s4 1983009808
        %v1081 = vunpack.c.0.s8 %v1080
        %v1082 = vperm.slane %v187, %v1081
        %v1084 = vunpack.c.l.s4 1983009808
        %v1085 = vunpack.c.0.s8 %v1084
        %v1086 = vperm.slane %v1078, %v1085
        %v1087 = vrot.slane %v1082, 4
        %v1088 = vsel %vm1001, 0.0, %v1087
        %v1090 = vunpack.c.l.s4 1934713408
        %v1091 = vunpack.c.0.s8 %v1090
        %v1092 = vperm.slane %v1082, %v1091
        %v1094 = vunpack.c.l.s4 1934713408
        %v1095 = vunpack.c.0.s8 %v1094
        %v1096 = vperm.slane %v1088, %v1095
        %v1097 = vrot.slane %v1086, 4
        %v1098 = vsel %vm1001, 0.0, %v1097
        %v1100 = vunpack.c.l.s4 1934713408
        %v1101 = vunpack.c.0.s8 %v1100
        %v1102 = vperm.slane %v1086, %v1101
        %v1104 = vunpack.c.l.s4 1934713408
        %v1105 = vunpack.c.0.s8 %v1104
        %v1106 = vperm.slane %v1098, %v1105
        %v1107 = vrot.slane %v1092, 4
        %v1108 = vsel %vm1001, 0.0, %v1107
        %v1109 = vrot.slane %v1096, 4
        %v1110 = vsel %vm1001, 0.0, %v1109
        %v1111 = vrot.slane %v1102, 4
        %v1112 = vsel %vm1001, 0.0, %v1111
        %v1113 = vrot.slane %v1106, 4
        %v1114 = vsel %vm1001, 0.0, %v1113
        %v1115 = vrot.slane %v193, 4
        %v1116 = vsel %vm1001, 0.0, %v1115
        %v1118 = vunpack.c.l.s4 1983009808
        %v1119 = vunpack.c.0.s8 %v1118
        %v1120 = vperm.slane %v193, %v1119
        %v1122 = vunpack.c.l.s4 1983009808
        %v1123 = vunpack.c.0.s8 %v1122
        %v1124 = vperm.slane %v1116, %v1123
        %v1125 = vrot.slane %v1120, 4
        %v1126 = vsel %vm1001, 0.0, %v1125
        %v1128 = vunpack.c.l.s4 1934713408
        %v1129 = vunpack.c.0.s8 %v1128
        %v1130 = vperm.slane %v1120, %v1129
        %v1132 = vunpack.c.l.s4 1934713408
        %v1133 = vunpack.c.0.s8 %v1132
        %v1134 = vperm.slane %v1126, %v1133
        %v1135 = vrot.slane %v1124, 4
        %v1136 = vsel %vm1001, 0.0, %v1135
        %v1138 = vunpack.c.l.s4 1934713408
        %v1139 = vunpack.c.0.s8 %v1138
        %v1140 = vperm.slane %v1124, %v1139
        %v1142 = vunpack.c.l.s4 1934713408
        %v1143 = vunpack.c.0.s8 %v1142
        %v1144 = vperm.slane %v1136, %v1143
        %v1145 = vrot.slane %v1130, 4
        %v1146 = vsel %vm1001, 0.0, %v1145
        %v1147 = vrot.slane %v1134, 4
        %v1148 = vsel %vm1001, 0.0, %v1147
        %v1149 = vrot.slane %v1140, 4
        %v1150 = vsel %vm1001, 0.0, %v1149
        %v1151 = vrot.slane %v1144, 4
        %v1152 = vsel %vm1001, 0.0, %v1151
        %v1153 = vrot.slane %v200, 4
        %v1154 = vsel %vm1001, 0.0, %v1153
        %v1156 = vunpack.c.l.s4 1983009808
        %v1157 = vunpack.c.0.s8 %v1156
        %v1158 = vperm.slane %v200, %v1157
        %v1160 = vunpack.c.l.s4 1983009808
        %v1161 = vunpack.c.0.s8 %v1160
        %v1162 = vperm.slane %v1154, %v1161
        %v1163 = vrot.slane %v1158, 4
        %v1164 = vsel %vm1001, 0.0, %v1163
        %v1166 = vunpack.c.l.s4 1934713408
        %v1167 = vunpack.c.0.s8 %v1166
        %v1168 = vperm.slane %v1158, %v1167
        %v1170 = vunpack.c.l.s4 1934713408
        %v1171 = vunpack.c.0.s8 %v1170
        %v1172 = vperm.slane %v1164, %v1171
        %v1173 = vrot.slane %v1162, 4
        %v1174 = vsel %vm1001, 0.0, %v1173
        %v1176 = vunpack.c.l.s4 1934713408
        %v1177 = vunpack.c.0.s8 %v1176
        %v1178 = vperm.slane %v1162, %v1177
        %v1180 = vunpack.c.l.s4 1934713408
        %v1181 = vunpack.c.0.s8 %v1180
        %v1182 = vperm.slane %v1174, %v1181
        %v1183 = vrot.slane %v1168, 4
        %v1184 = vsel %vm1001, 0.0, %v1183
        %v1185 = vrot.slane %v1172, 4
        %v1186 = vsel %vm1001, 0.0, %v1185
        %v1187 = vrot.slane %v1178, 4
        %v1188 = vsel %vm1001, 0.0, %v1187
        %v1189 = vrot.slane %v1182, 4
        %v1190 = vsel %vm1001, 0.0, %v1189
        %v1191 = vrot.slane %v206, 4
        %v1192 = vsel %vm1001, 0.0, %v1191
        %v1194 = vunpack.c.l.s4 1983009808
        %v1195 = vunpack.c.0.s8 %v1194
        %v1196 = vperm.slane %v206, %v1195
        %v1198 = vunpack.c.l.s4 1983009808
        %v1199 = vunpack.c.0.s8 %v1198
        %v1200 = vperm.slane %v1192, %v1199
        %v1201 = vrot.slane %v1196, 4
        %v1202 = vsel %vm1001, 0.0, %v1201
        %v1204 = vunpack.c.l.s4 1934713408
        %v1205 = vunpack.c.0.s8 %v1204
        %v1206 = vperm.slane %v1196, %v1205
        %v1208 = vunpack.c.l.s4 1934713408
        %v1209 = vunpack.c.0.s8 %v1208
        %v1210 = vperm.slane %v1202, %v1209
        %v1211 = vrot.slane %v1200, 4
        %v1212 = vsel %vm1001, 0.0, %v1211
        %v1214 = vunpack.c.l.s4 1934713408
        %v1215 = vunpack.c.0.s8 %v1214
        %v1216 = vperm.slane %v1200, %v1215
        %v1218 = vunpack.c.l.s4 1934713408
        %v1219 = vunpack.c.0.s8 %v1218
        %v1220 = vperm.slane %v1212, %v1219
        %v1221 = vrot.slane %v1206, 4
        %v1222 = vsel %vm1001, 0.0, %v1221
        %v1223 = vrot.slane %v1210, 4
        %v1224 = vsel %vm1001, 0.0, %v1223
        %v1225 = vrot.slane %v1216, 4
        %v1226 = vsel %vm1001, 0.0, %v1225
        %v1227 = vrot.slane %v1220, 4
        %v1228 = vsel %vm1001, 0.0, %v1227
        %v1229 = vrot.slane %v213, 4
        %v1230 = vsel %vm1001, 0.0, %v1229
        %v1232 = vunpack.c.l.s4 1983009808
        %v1233 = vunpack.c.0.s8 %v1232
        %v1234 = vperm.slane %v213, %v1233
        %v1236 = vunpack.c.l.s4 1983009808
        %v1237 = vunpack.c.0.s8 %v1236
        %v1238 = vperm.slane %v1230, %v1237
        %v1239 = vrot.slane %v1234, 4
        %v1240 = vsel %vm1001, 0.0, %v1239
        %v1242 = vunpack.c.l.s4 1934713408
        %v1243 = vunpack.c.0.s8 %v1242
        %v1244 = vperm.slane %v1234, %v1243
        %v1246 = vunpack.c.l.s4 1934713408
        %v1247 = vunpack.c.0.s8 %v1246
        %v1248 = vperm.slane %v1240, %v1247
        %v1249 = vrot.slane %v1238, 4
        %v1250 = vsel %vm1001, 0.0, %v1249
        %v1252 = vunpack.c.l.s4 1934713408
        %v1253 = vunpack.c.0.s8 %v1252
        %v1254 = vperm.slane %v1238, %v1253
        %v1256 = vunpack.c.l.s4 1934713408
        %v1257 = vunpack.c.0.s8 %v1256
        %v1258 = vperm.slane %v1250, %v1257
        %v1259 = vrot.slane %v1244, 4
        %v1260 = vsel %vm1001, 0.0, %v1259
        %v1261 = vrot.slane %v1248, 4
        %v1262 = vsel %vm1001, 0.0, %v1261
        %v1263 = vrot.slane %v1254, 4
        %v1264 = vsel %vm1001, 0.0, %v1263
        %v1265 = vrot.slane %v1258, 4
        %v1266 = vsel %vm1001, 0.0, %v1265
        %v1267 = vrot.slane %v219, 4
        %v1268 = vsel %vm1001, 0.0, %v1267
        %v1270 = vunpack.c.l.s4 1983009808
        %v1271 = vunpack.c.0.s8 %v1270
        %v1272 = vperm.slane %v219, %v1271
        %v1274 = vunpack.c.l.s4 1983009808
        %v1275 = vunpack.c.0.s8 %v1274
        %v1276 = vperm.slane %v1268, %v1275
        %v1277 = vrot.slane %v1272, 4
        %v1278 = vsel %vm1001, 0.0, %v1277
        %v1280 = vunpack.c.l.s4 1934713408
        %v1281 = vunpack.c.0.s8 %v1280
        %v1282 = vperm.slane %v1272, %v1281
        %v1284 = vunpack.c.l.s4 1934713408
        %v1285 = vunpack.c.0.s8 %v1284
        %v1286 = vperm.slane %v1278, %v1285
        %v1287 = vrot.slane %v1276, 4
        %v1288 = vsel %vm1001, 0.0, %v1287
        %v1290 = vunpack.c.l.s4 1934713408
        %v1291 = vunpack.c.0.s8 %v1290
        %v1292 = vperm.slane %v1276, %v1291
        %v1294 = vunpack.c.l.s4 1934713408
        %v1295 = vunpack.c.0.s8 %v1294
        %v1296 = vperm.slane %v1288, %v1295
        %v1297 = vrot.slane %v1282, 4
        %v1298 = vsel %vm1001, 0.0, %v1297
        %v1299 = vrot.slane %v1286, 4
        %v1300 = vsel %vm1001, 0.0, %v1299
        %v1301 = vrot.slane %v1292, 4
        %v1302 = vsel %vm1001, 0.0, %v1301
        %v1303 = vrot.slane %v1296, 4
        %v1304 = vsel %vm1001, 0.0, %v1303
        %v1305 = vrot.slane %v226, 4
        %v1306 = vsel %vm1001, 0.0, %v1305
        %v1308 = vunpack.c.l.s4 1983009808
        %v1309 = vunpack.c.0.s8 %v1308
        %v1310 = vperm.slane %v226, %v1309
        %v1312 = vunpack.c.l.s4 1983009808
        %v1313 = vunpack.c.0.s8 %v1312
        %v1314 = vperm.slane %v1306, %v1313
        %v1315 = vrot.slane %v1310, 4
        %v1316 = vsel %vm1001, 0.0, %v1315
        %v1318 = vunpack.c.l.s4 1934713408
        %v1319 = vunpack.c.0.s8 %v1318
        %v1320 = vperm.slane %v1310, %v1319
        %v1322 = vunpack.c.l.s4 1934713408
        %v1323 = vunpack.c.0.s8 %v1322
        %v1324 = vperm.slane %v1316, %v1323
        %v1325 = vrot.slane %v1314, 4
        %v1326 = vsel %vm1001, 0.0, %v1325
        %v1328 = vunpack.c.l.s4 1934713408
        %v1329 = vunpack.c.0.s8 %v1328
        %v1330 = vperm.slane %v1314, %v1329
        %v1332 = vunpack.c.l.s4 1934713408
        %v1333 = vunpack.c.0.s8 %v1332
        %v1334 = vperm.slane %v1326, %v1333
        %v1335 = vrot.slane %v1320, 4
        %v1336 = vsel %vm1001, 0.0, %v1335
        %v1337 = vrot.slane %v1324, 4
        %v1338 = vsel %vm1001, 0.0, %v1337
        %v1339 = vrot.slane %v1330, 4
        %v1340 = vsel %vm1001, 0.0, %v1339
        %v1341 = vrot.slane %v1334, 4
        %v1342 = vsel %vm1001, 0.0, %v1341
        %v1343 = vrot.slane %v232, 4
        %v1344 = vsel %vm1001, 0.0, %v1343
        %v1346 = vunpack.c.l.s4 1983009808
        %v1347 = vunpack.c.0.s8 %v1346
        %v1348 = vperm.slane %v232, %v1347
        %v1350 = vunpack.c.l.s4 1983009808
        %v1351 = vunpack.c.0.s8 %v1350
        %v1352 = vperm.slane %v1344, %v1351
        %v1353 = vrot.slane %v1348, 4
        %v1354 = vsel %vm1001, 0.0, %v1353
        %v1356 = vunpack.c.l.s4 1934713408
        %v1357 = vunpack.c.0.s8 %v1356
        %v1358 = vperm.slane %v1348, %v1357
        %v1360 = vunpack.c.l.s4 1934713408
        %v1361 = vunpack.c.0.s8 %v1360
        %v1362 = vperm.slane %v1354, %v1361
        %v1363 = vrot.slane %v1352, 4
        %v1364 = vsel %vm1001, 0.0, %v1363
        %v1366 = vunpack.c.l.s4 1934713408
        %v1367 = vunpack.c.0.s8 %v1366
        %v1368 = vperm.slane %v1352, %v1367
        %v1370 = vunpack.c.l.s4 1934713408
        %v1371 = vunpack.c.0.s8 %v1370
        %v1372 = vperm.slane %v1364, %v1371
        %v1373 = vrot.slane %v1358, 4
        %v1374 = vsel %vm1001, 0.0, %v1373
        %v1375 = vrot.slane %v1362, 4
        %v1376 = vsel %vm1001, 0.0, %v1375
        %v1377 = vrot.slane %v1368, 4
        %v1378 = vsel %vm1001, 0.0, %v1377
        %v1379 = vrot.slane %v1372, 4
        %v1380 = vsel %vm1001, 0.0, %v1379
        %v1381 = vrot.slane %v239, 4
        %v1382 = vsel %vm1001, 0.0, %v1381
        %v1384 = vunpack.c.l.s4 1983009808
        %v1385 = vunpack.c.0.s8 %v1384
        %v1386 = vperm.slane %v239, %v1385
        %v1388 = vunpack.c.l.s4 1983009808
        %v1389 = vunpack.c.0.s8 %v1388
        %v1390 = vperm.slane %v1382, %v1389
        %v1391 = vrot.slane %v1386, 4
        %v1392 = vsel %vm1001, 0.0, %v1391
        %v1394 = vunpack.c.l.s4 1934713408
        %v1395 = vunpack.c.0.s8 %v1394
        %v1396 = vperm.slane %v1386, %v1395
        %v1398 = vunpack.c.l.s4 1934713408
        %v1399 = vunpack.c.0.s8 %v1398
        %v1400 = vperm.slane %v1392, %v1399
        %v1401 = vrot.slane %v1390, 4
        %v1402 = vsel %vm1001, 0.0, %v1401
        %v1404 = vunpack.c.l.s4 1934713408
        %v1405 = vunpack.c.0.s8 %v1404
        %v1406 = vperm.slane %v1390, %v1405
        %v1408 = vunpack.c.l.s4 1934713408
        %v1409 = vunpack.c.0.s8 %v1408
        %v1410 = vperm.slane %v1402, %v1409
        %v1411 = vrot.slane %v1396, 4
        %v1412 = vsel %vm1001, 0.0, %v1411
        %v1413 = vrot.slane %v1400, 4
        %v1414 = vsel %vm1001, 0.0, %v1413
        %v1415 = vrot.slane %v1406, 4
        %v1416 = vsel %vm1001, 0.0, %v1415
        %v1417 = vrot.slane %v1410, 4
        %v1418 = vsel %vm1001, 0.0, %v1417
        %v1419 = vrot.slane %v245, 4
        %v1420 = vsel %vm1001, 0.0, %v1419
        %v1422 = vunpack.c.l.s4 1983009808
        %v1423 = vunpack.c.0.s8 %v1422
        %v1424 = vperm.slane %v245, %v1423
        %v1426 = vunpack.c.l.s4 1983009808
        %v1427 = vunpack.c.0.s8 %v1426
        %v1428 = vperm.slane %v1420, %v1427
        %v1429 = vrot.slane %v1424, 4
        %v1430 = vsel %vm1001, 0.0, %v1429
        %v1432 = vunpack.c.l.s4 1934713408
        %v1433 = vunpack.c.0.s8 %v1432
        %v1434 = vperm.slane %v1424, %v1433
        %v1436 = vunpack.c.l.s4 1934713408
        %v1437 = vunpack.c.0.s8 %v1436
        %v1438 = vperm.slane %v1430, %v1437
        %v1439 = vrot.slane %v1428, 4
        %v1440 = vsel %vm1001, 0.0, %v1439
        %v1442 = vunpack.c.l.s4 1934713408
        %v1443 = vunpack.c.0.s8 %v1442
        %v1444 = vperm.slane %v1428, %v1443
        %v1446 = vunpack.c.l.s4 1934713408
        %v1447 = vunpack.c.0.s8 %v1446
        %v1448 = vperm.slane %v1440, %v1447
        %v1449 = vrot.slane %v1434, 4
        %v1450 = vsel %vm1001, 0.0, %v1449
        %v1451 = vrot.slane %v1438, 4
        %v1452 = vsel %vm1001, 0.0, %v1451
        %v1453 = vrot.slane %v1444, 4
        %v1454 = vsel %vm1001, 0.0, %v1453
        %v1455 = vrot.slane %v1448, 4
        %v1456 = vsel %vm1001, 0.0, %v1455
        %v1457 = vrot.slane %v252, 4
        %v1458 = vsel %vm1001, 0.0, %v1457
        %v1460 = vunpack.c.l.s4 1983009808
        %v1461 = vunpack.c.0.s8 %v1460
        %v1462 = vperm.slane %v252, %v1461
        %v1464 = vunpack.c.l.s4 1983009808
        %v1465 = vunpack.c.0.s8 %v1464
        %v1466 = vperm.slane %v1458, %v1465
        %v1467 = vrot.slane %v1462, 4
        %v1468 = vsel %vm1001, 0.0, %v1467
        %v1470 = vunpack.c.l.s4 1934713408
        %v1471 = vunpack.c.0.s8 %v1470
        %v1472 = vperm.slane %v1462, %v1471
        %v1474 = vunpack.c.l.s4 1934713408
        %v1475 = vunpack.c.0.s8 %v1474
        %v1476 = vperm.slane %v1468, %v1475
        %v1477 = vrot.slane %v1466, 4
        %v1478 = vsel %vm1001, 0.0, %v1477
        %v1480 = vunpack.c.l.s4 1934713408
        %v1481 = vunpack.c.0.s8 %v1480
        %v1482 = vperm.slane %v1466, %v1481
        %v1484 = vunpack.c.l.s4 1934713408
        %v1485 = vunpack.c.0.s8 %v1484
        %v1486 = vperm.slane %v1478, %v1485
        %v1487 = vrot.slane %v1472, 4
        %v1488 = vsel %vm1001, 0.0, %v1487
        %v1489 = vrot.slane %v1476, 4
        %v1490 = vsel %vm1001, 0.0, %v1489
        %v1491 = vrot.slane %v1482, 4
        %v1492 = vsel %vm1001, 0.0, %v1491
        %v1493 = vrot.slane %v1486, 4
        %v1494 = vsel %vm1001, 0.0, %v1493
        %v1495 = vrot.slane %v258, 4
        %v1496 = vsel %vm1001, 0.0, %v1495
        %v1498 = vunpack.c.l.s4 1983009808
        %v1499 = vunpack.c.0.s8 %v1498
        %v1500 = vperm.slane %v258, %v1499
        %v1502 = vunpack.c.l.s4 1983009808
        %v1503 = vunpack.c.0.s8 %v1502
        %v1504 = vperm.slane %v1496, %v1503
        %v1505 = vrot.slane %v1500, 4
        %v1506 = vsel %vm1001, 0.0, %v1505
        %v1508 = vunpack.c.l.s4 1934713408
        %v1509 = vunpack.c.0.s8 %v1508
        %v1510 = vperm.slane %v1500, %v1509
        %v1512 = vunpack.c.l.s4 1934713408
        %v1513 = vunpack.c.0.s8 %v1512
        %v1514 = vperm.slane %v1506, %v1513
        %v1515 = vrot.slane %v1504, 4
        %v1516 = vsel %vm1001, 0.0, %v1515
        %v1518 = vunpack.c.l.s4 1934713408
        %v1519 = vunpack.c.0.s8 %v1518
        %v1520 = vperm.slane %v1504, %v1519
        %v1522 = vunpack.c.l.s4 1934713408
        %v1523 = vunpack.c.0.s8 %v1522
        %v1524 = vperm.slane %v1516, %v1523
        %v1525 = vrot.slane %v1510, 4
        %v1526 = vsel %vm1001, 0.0, %v1525
        %v1527 = vrot.slane %v1514, 4
        %v1528 = vsel %vm1001, 0.0, %v1527
        %v1529 = vrot.slane %v1520, 4
        %v1530 = vsel %vm1001, 0.0, %v1529
        %v1531 = vrot.slane %v1524, 4
        %v1532 = vsel %vm1001, 0.0, %v1531
        %v1533 = vrot.slane %v265, 4
        %v1534 = vsel %vm1001, 0.0, %v1533
        %v1536 = vunpack.c.l.s4 1983009808
        %v1537 = vunpack.c.0.s8 %v1536
        %v1538 = vperm.slane %v265, %v1537
        %v1540 = vunpack.c.l.s4 1983009808
        %v1541 = vunpack.c.0.s8 %v1540
        %v1542 = vperm.slane %v1534, %v1541
        %v1543 = vrot.slane %v1538, 4
        %v1544 = vsel %vm1001, 0.0, %v1543
        %v1546 = vunpack.c.l.s4 1934713408
        %v1547 = vunpack.c.0.s8 %v1546
        %v1548 = vperm.slane %v1538, %v1547
        %v1550 = vunpack.c.l.s4 1934713408
        %v1551 = vunpack.c.0.s8 %v1550
        %v1552 = vperm.slane %v1544, %v1551
        %v1553 = vrot.slane %v1542, 4
        %v1554 = vsel %vm1001, 0.0, %v1553
        %v1556 = vunpack.c.l.s4 1934713408
        %v1557 = vunpack.c.0.s8 %v1556
        %v1558 = vperm.slane %v1542, %v1557
        %v1560 = vunpack.c.l.s4 1934713408
        %v1561 = vunpack.c.0.s8 %v1560
        %v1562 = vperm.slane %v1554, %v1561
        %v1563 = vrot.slane %v1548, 4
        %v1564 = vsel %vm1001, 0.0, %v1563
        %v1565 = vrot.slane %v1552, 4
        %v1566 = vsel %vm1001, 0.0, %v1565
        %v1567 = vrot.slane %v1558, 4
        %v1568 = vsel %vm1001, 0.0, %v1567
        %v1569 = vrot.slane %v1562, 4
        %v1570 = vsel %vm1001, 0.0, %v1569
        %v1571 = vrot.slane %v271, 4
        %v1572 = vsel %vm1001, 0.0, %v1571
        %v1574 = vunpack.c.l.s4 1983009808
        %v1575 = vunpack.c.0.s8 %v1574
        %v1576 = vperm.slane %v271, %v1575
        %v1578 = vunpack.c.l.s4 1983009808
        %v1579 = vunpack.c.0.s8 %v1578
        %v1580 = vperm.slane %v1572, %v1579
        %v1581 = vrot.slane %v1576, 4
        %v1582 = vsel %vm1001, 0.0, %v1581
        %v1584 = vunpack.c.l.s4 1934713408
        %v1585 = vunpack.c.0.s8 %v1584
        %v1586 = vperm.slane %v1576, %v1585
        %v1588 = vunpack.c.l.s4 1934713408
        %v1589 = vunpack.c.0.s8 %v1588
        %v1590 = vperm.slane %v1582, %v1589
        %v1591 = vrot.slane %v1580, 4
        %v1592 = vsel %vm1001, 0.0, %v1591
        %v1594 = vunpack.c.l.s4 1934713408
        %v1595 = vunpack.c.0.s8 %v1594
        %v1596 = vperm.slane %v1580, %v1595
        %v1598 = vunpack.c.l.s4 1934713408
        %v1599 = vunpack.c.0.s8 %v1598
        %v1600 = vperm.slane %v1592, %v1599
        %v1601 = vrot.slane %v1586, 4
        %v1602 = vsel %vm1001, 0.0, %v1601
        %v1603 = vrot.slane %v1590, 4
        %v1604 = vsel %vm1001, 0.0, %v1603
        %v1605 = vrot.slane %v1596, 4
        %v1606 = vsel %vm1001, 0.0, %v1605
        %v1607 = vrot.slane %v1600, 4
        %v1608 = vsel %vm1001, 0.0, %v1607
        %v1609 = vrot.slane %v278, 4
        %v1610 = vsel %vm1001, 0.0, %v1609
        %v1612 = vunpack.c.l.s4 1983009808
        %v1613 = vunpack.c.0.s8 %v1612
        %v1614 = vperm.slane %v278, %v1613
        %v1616 = vunpack.c.l.s4 1983009808
        %v1617 = vunpack.c.0.s8 %v1616
        %v1618 = vperm.slane %v1610, %v1617
        %v1619 = vrot.slane %v1614, 4
        %v1620 = vsel %vm1001, 0.0, %v1619
        %v1622 = vunpack.c.l.s4 1934713408
        %v1623 = vunpack.c.0.s8 %v1622
        %v1624 = vperm.slane %v1614, %v1623
        %v1626 = vunpack.c.l.s4 1934713408
        %v1627 = vunpack.c.0.s8 %v1626
        %v1628 = vperm.slane %v1620, %v1627
        %v1629 = vrot.slane %v1618, 4
        %v1630 = vsel %vm1001, 0.0, %v1629
        %v1632 = vunpack.c.l.s4 1934713408
        %v1633 = vunpack.c.0.s8 %v1632
        %v1634 = vperm.slane %v1618, %v1633
        %v1636 = vunpack.c.l.s4 1934713408
        %v1637 = vunpack.c.0.s8 %v1636
        %v1638 = vperm.slane %v1630, %v1637
        %v1639 = vrot.slane %v1624, 4
        %v1640 = vsel %vm1001, 0.0, %v1639
        %v1641 = vrot.slane %v1628, 4
        %v1642 = vsel %vm1001, 0.0, %v1641
        %v1643 = vrot.slane %v1634, 4
        %v1644 = vsel %vm1001, 0.0, %v1643
        %v1645 = vrot.slane %v1638, 4
        %v1646 = vsel %vm1001, 0.0, %v1645
        %v1647 = vrot.slane %v284, 4
        %v1648 = vsel %vm1001, 0.0, %v1647
        %v1650 = vunpack.c.l.s4 1983009808
        %v1651 = vunpack.c.0.s8 %v1650
        %v1652 = vperm.slane %v284, %v1651
        %v1654 = vunpack.c.l.s4 1983009808
        %v1655 = vunpack.c.0.s8 %v1654
        %v1656 = vperm.slane %v1648, %v1655
        %v1657 = vrot.slane %v1652, 4
        %v1658 = vsel %vm1001, 0.0, %v1657
        %v1660 = vunpack.c.l.s4 1934713408
        %v1661 = vunpack.c.0.s8 %v1660
        %v1662 = vperm.slane %v1652, %v1661
        %v1664 = vunpack.c.l.s4 1934713408
        %v1665 = vunpack.c.0.s8 %v1664
        %v1666 = vperm.slane %v1658, %v1665
        %v1667 = vrot.slane %v1656, 4
        %v1668 = vsel %vm1001, 0.0, %v1667
        %v1670 = vunpack.c.l.s4 1934713408
        %v1671 = vunpack.c.0.s8 %v1670
        %v1672 = vperm.slane %v1656, %v1671
        %v1674 = vunpack.c.l.s4 1934713408
        %v1675 = vunpack.c.0.s8 %v1674
        %v1676 = vperm.slane %v1668, %v1675
        %v1677 = vrot.slane %v1662, 4
        %v1678 = vsel %vm1001, 0.0, %v1677
        %v1679 = vrot.slane %v1666, 4
        %v1680 = vsel %vm1001, 0.0, %v1679
        %v1681 = vrot.slane %v1672, 4
        %v1682 = vsel %vm1001, 0.0, %v1681
        %v1683 = vrot.slane %v1676, 4
        %v1684 = vsel %vm1001, 0.0, %v1683
        %v1685 = vrot.slane %v291, 4
        %v1686 = vsel %vm1001, 0.0, %v1685
        %v1688 = vunpack.c.l.s4 1983009808
        %v1689 = vunpack.c.0.s8 %v1688
        %v1690 = vperm.slane %v291, %v1689
        %v1692 = vunpack.c.l.s4 1983009808
        %v1693 = vunpack.c.0.s8 %v1692
        %v1694 = vperm.slane %v1686, %v1693
        %v1695 = vrot.slane %v1690, 4
        %v1696 = vsel %vm1001, 0.0, %v1695
        %v1698 = vunpack.c.l.s4 1934713408
        %v1699 = vunpack.c.0.s8 %v1698
        %v1700 = vperm.slane %v1690, %v1699
        %v1702 = vunpack.c.l.s4 1934713408
        %v1703 = vunpack.c.0.s8 %v1702
        %v1704 = vperm.slane %v1696, %v1703
        %v1705 = vrot.slane %v1694, 4
        %v1706 = vsel %vm1001, 0.0, %v1705
        %v1708 = vunpack.c.l.s4 1934713408
        %v1709 = vunpack.c.0.s8 %v1708
        %v1710 = vperm.slane %v1694, %v1709
        %v1712 = vunpack.c.l.s4 1934713408
        %v1713 = vunpack.c.0.s8 %v1712
        %v1714 = vperm.slane %v1706, %v1713
        %v1715 = vrot.slane %v1700, 4
        %v1716 = vsel %vm1001, 0.0, %v1715
        %v1717 = vrot.slane %v1704, 4
        %v1718 = vsel %vm1001, 0.0, %v1717
        %v1719 = vrot.slane %v1710, 4
        %v1720 = vsel %vm1001, 0.0, %v1719
        %v1721 = vrot.slane %v1714, 4
        %v1722 = vsel %vm1001, 0.0, %v1721
        %v1723 = vrot.slane %v297, 4
        %v1724 = vsel %vm1001, 0.0, %v1723
        %v1726 = vunpack.c.l.s4 1983009808
        %v1727 = vunpack.c.0.s8 %v1726
        %v1728 = vperm.slane %v297, %v1727
        %v1730 = vunpack.c.l.s4 1983009808
        %v1731 = vunpack.c.0.s8 %v1730
        %v1732 = vperm.slane %v1724, %v1731
        %v1733 = vrot.slane %v1728, 4
        %v1734 = vsel %vm1001, 0.0, %v1733
        %v1736 = vunpack.c.l.s4 1934713408
        %v1737 = vunpack.c.0.s8 %v1736
        %v1738 = vperm.slane %v1728, %v1737
        %v1740 = vunpack.c.l.s4 1934713408
        %v1741 = vunpack.c.0.s8 %v1740
        %v1742 = vperm.slane %v1734, %v1741
        %v1743 = vrot.slane %v1732, 4
        %v1744 = vsel %vm1001, 0.0, %v1743
        %v1746 = vunpack.c.l.s4 1934713408
        %v1747 = vunpack.c.0.s8 %v1746
        %v1748 = vperm.slane %v1732, %v1747
        %v1750 = vunpack.c.l.s4 1934713408
        %v1751 = vunpack.c.0.s8 %v1750
        %v1752 = vperm.slane %v1744, %v1751
        %v1753 = vrot.slane %v1738, 4
        %v1754 = vsel %vm1001, 0.0, %v1753
        %v1755 = vrot.slane %v1742, 4
        %v1756 = vsel %vm1001, 0.0, %v1755
        %v1757 = vrot.slane %v1748, 4
        %v1758 = vsel %vm1001, 0.0, %v1757
        %v1759 = vrot.slane %v1752, 4
        %v1760 = vsel %vm1001, 0.0, %v1759
        %v1761 = vrot.slane %v304, 4
        %v1762 = vsel %vm1001, 0.0, %v1761
        %v1764 = vunpack.c.l.s4 1983009808
        %v1765 = vunpack.c.0.s8 %v1764
        %v1766 = vperm.slane %v304, %v1765
        %v1768 = vunpack.c.l.s4 1983009808
        %v1769 = vunpack.c.0.s8 %v1768
        %v1770 = vperm.slane %v1762, %v1769
        %v1771 = vrot.slane %v1766, 4
        %v1772 = vsel %vm1001, 0.0, %v1771
        %v1774 = vunpack.c.l.s4 1934713408
        %v1775 = vunpack.c.0.s8 %v1774
        %v1776 = vperm.slane %v1766, %v1775
        %v1778 = vunpack.c.l.s4 1934713408
        %v1779 = vunpack.c.0.s8 %v1778
        %v1780 = vperm.slane %v1772, %v1779
        %v1781 = vrot.slane %v1770, 4
        %v1782 = vsel %vm1001, 0.0, %v1781
        %v1784 = vunpack.c.l.s4 1934713408
        %v1785 = vunpack.c.0.s8 %v1784
        %v1786 = vperm.slane %v1770, %v1785
        %v1788 = vunpack.c.l.s4 1934713408
        %v1789 = vunpack.c.0.s8 %v1788
        %v1790 = vperm.slane %v1782, %v1789
        %v1791 = vrot.slane %v1776, 4
        %v1792 = vsel %vm1001, 0.0, %v1791
        %v1793 = vrot.slane %v1780, 4
        %v1794 = vsel %vm1001, 0.0, %v1793
        %v1795 = vrot.slane %v1786, 4
        %v1796 = vsel %vm1001, 0.0, %v1795
        %v1797 = vrot.slane %v1790, 4
        %v1798 = vsel %vm1001, 0.0, %v1797
        %v1799 = vrot.slane %v310, 4
        %v1800 = vsel %vm1001, 0.0, %v1799
        %v1802 = vunpack.c.l.s4 1983009808
        %v1803 = vunpack.c.0.s8 %v1802
        %v1804 = vperm.slane %v310, %v1803
        %v1806 = vunpack.c.l.s4 1983009808
        %v1807 = vunpack.c.0.s8 %v1806
        %v1808 = vperm.slane %v1800, %v1807
        %v1809 = vrot.slane %v1804, 4
        %v1810 = vsel %vm1001, 0.0, %v1809
        %v1812 = vunpack.c.l.s4 1934713408
        %v1813 = vunpack.c.0.s8 %v1812
        %v1814 = vperm.slane %v1804, %v1813
        %v1816 = vunpack.c.l.s4 1934713408
        %v1817 = vunpack.c.0.s8 %v1816
        %v1818 = vperm.slane %v1810, %v1817
        %v1819 = vrot.slane %v1808, 4
        %v1820 = vsel %vm1001, 0.0, %v1819
        %v1822 = vunpack.c.l.s4 1934713408
        %v1823 = vunpack.c.0.s8 %v1822
        %v1824 = vperm.slane %v1808, %v1823
        %v1826 = vunpack.c.l.s4 1934713408
        %v1827 = vunpack.c.0.s8 %v1826
        %v1828 = vperm.slane %v1820, %v1827
        %v1829 = vrot.slane %v1814, 4
        %v1830 = vsel %vm1001, 0.0, %v1829
        %v1831 = vrot.slane %v1818, 4
        %v1832 = vsel %vm1001, 0.0, %v1831
        %v1833 = vrot.slane %v1824, 4
        %v1834 = vsel %vm1001, 0.0, %v1833
        %v1835 = vrot.slane %v1828, 4
        %v1836 = vsel %vm1001, 0.0, %v1835
        %v1837 = vrot.slane %v317, 4
        %v1838 = vsel %vm1001, 0.0, %v1837
        %v1840 = vunpack.c.l.s4 1983009808
        %v1841 = vunpack.c.0.s8 %v1840
        %v1842 = vperm.slane %v317, %v1841
        %v1844 = vunpack.c.l.s4 1983009808
        %v1845 = vunpack.c.0.s8 %v1844
        %v1846 = vperm.slane %v1838, %v1845
        %v1847 = vrot.slane %v1842, 4
        %v1848 = vsel %vm1001, 0.0, %v1847
        %v1850 = vunpack.c.l.s4 1934713408
        %v1851 = vunpack.c.0.s8 %v1850
        %v1852 = vperm.slane %v1842, %v1851
        %v1854 = vunpack.c.l.s4 1934713408
        %v1855 = vunpack.c.0.s8 %v1854
        %v1856 = vperm.slane %v1848, %v1855
        %v1857 = vrot.slane %v1846, 4
        %v1858 = vsel %vm1001, 0.0, %v1857
        %v1860 = vunpack.c.l.s4 1934713408
        %v1861 = vunpack.c.0.s8 %v1860
        %v1862 = vperm.slane %v1846, %v1861
        %v1864 = vunpack.c.l.s4 1934713408
        %v1865 = vunpack.c.0.s8 %v1864
        %v1866 = vperm.slane %v1858, %v1865
        %v1867 = vrot.slane %v1852, 4
        %v1868 = vsel %vm1001, 0.0, %v1867
        %v1869 = vrot.slane %v1856, 4
        %v1870 = vsel %vm1001, 0.0, %v1869
        %v1871 = vrot.slane %v1862, 4
        %v1872 = vsel %vm1001, 0.0, %v1871
        %v1873 = vrot.slane %v1866, 4
        %v1874 = vsel %vm1001, 0.0, %v1873
        %v1875 = vrot.slane %v323, 4
        %v1876 = vsel %vm1001, 0.0, %v1875
        %v1878 = vunpack.c.l.s4 1983009808
        %v1879 = vunpack.c.0.s8 %v1878
        %v1880 = vperm.slane %v323, %v1879
        %v1882 = vunpack.c.l.s4 1983009808
        %v1883 = vunpack.c.0.s8 %v1882
        %v1884 = vperm.slane %v1876, %v1883
        %v1885 = vrot.slane %v1880, 4
        %v1886 = vsel %vm1001, 0.0, %v1885
        %v1888 = vunpack.c.l.s4 1934713408
        %v1889 = vunpack.c.0.s8 %v1888
        %v1890 = vperm.slane %v1880, %v1889
        %v1892 = vunpack.c.l.s4 1934713408
        %v1893 = vunpack.c.0.s8 %v1892
        %v1894 = vperm.slane %v1886, %v1893
        %v1895 = vrot.slane %v1884, 4
        %v1896 = vsel %vm1001, 0.0, %v1895
        %v1898 = vunpack.c.l.s4 1934713408
        %v1899 = vunpack.c.0.s8 %v1898
        %v1900 = vperm.slane %v1884, %v1899
        %v1902 = vunpack.c.l.s4 1934713408
        %v1903 = vunpack.c.0.s8 %v1902
        %v1904 = vperm.slane %v1896, %v1903
        %v1905 = vrot.slane %v1890, 4
        %v1906 = vsel %vm1001, 0.0, %v1905
        %v1907 = vrot.slane %v1894, 4
        %v1908 = vsel %vm1001, 0.0, %v1907
        %v1909 = vrot.slane %v1900, 4
        %v1910 = vsel %vm1001, 0.0, %v1909
        %v1911 = vrot.slane %v1904, 4
        %v1912 = vsel %vm1001, 0.0, %v1911
        %v1913 = vrot.slane %v330, 4
        %v1914 = vsel %vm1001, 0.0, %v1913
        %v1916 = vunpack.c.l.s4 1983009808
        %v1917 = vunpack.c.0.s8 %v1916
        %v1918 = vperm.slane %v330, %v1917
        %v1920 = vunpack.c.l.s4 1983009808
        %v1921 = vunpack.c.0.s8 %v1920
        %v1922 = vperm.slane %v1914, %v1921
        %v1923 = vrot.slane %v1918, 4
        %v1924 = vsel %vm1001, 0.0, %v1923
        %v1926 = vunpack.c.l.s4 1934713408
        %v1927 = vunpack.c.0.s8 %v1926
        %v1928 = vperm.slane %v1918, %v1927
        %v1930 = vunpack.c.l.s4 1934713408
        %v1931 = vunpack.c.0.s8 %v1930
        %v1932 = vperm.slane %v1924, %v1931
        %v1933 = vrot.slane %v1922, 4
        %v1934 = vsel %vm1001, 0.0, %v1933
        %v1936 = vunpack.c.l.s4 1934713408
        %v1937 = vunpack.c.0.s8 %v1936
        %v1938 = vperm.slane %v1922, %v1937
        %v1940 = vunpack.c.l.s4 1934713408
        %v1941 = vunpack.c.0.s8 %v1940
        %v1942 = vperm.slane %v1934, %v1941
        %v1943 = vrot.slane %v1928, 4
        %v1944 = vsel %vm1001, 0.0, %v1943
        %v1945 = vrot.slane %v1932, 4
        %v1946 = vsel %vm1001, 0.0, %v1945
        %v1947 = vrot.slane %v1938, 4
        %v1948 = vsel %vm1001, 0.0, %v1947
        %v1949 = vrot.slane %v1942, 4
        %v1950 = vsel %vm1001, 0.0, %v1949
        %v1951 = vrot.slane %v336, 4
        %v1952 = vsel %vm1001, 0.0, %v1951
        %v1954 = vunpack.c.l.s4 1983009808
        %v1955 = vunpack.c.0.s8 %v1954
        %v1956 = vperm.slane %v336, %v1955
        %v1958 = vunpack.c.l.s4 1983009808
        %v1959 = vunpack.c.0.s8 %v1958
        %v1960 = vperm.slane %v1952, %v1959
        %v1961 = vrot.slane %v1956, 4
        %v1962 = vsel %vm1001, 0.0, %v1961
        %v1964 = vunpack.c.l.s4 1934713408
        %v1965 = vunpack.c.0.s8 %v1964
        %v1966 = vperm.slane %v1956, %v1965
        %v1968 = vunpack.c.l.s4 1934713408
        %v1969 = vunpack.c.0.s8 %v1968
        %v1970 = vperm.slane %v1962, %v1969
        %v1971 = vrot.slane %v1960, 4
        %v1972 = vsel %vm1001, 0.0, %v1971
        %v1974 = vunpack.c.l.s4 1934713408
        %v1975 = vunpack.c.0.s8 %v1974
        %v1976 = vperm.slane %v1960, %v1975
        %v1978 = vunpack.c.l.s4 1934713408
        %v1979 = vunpack.c.0.s8 %v1978
        %v1980 = vperm.slane %v1972, %v1979
        %v1981 = vrot.slane %v1966, 4
        %v1982 = vsel %vm1001, 0.0, %v1981
        %v1983 = vrot.slane %v1970, 4
        %v1984 = vsel %vm1001, 0.0, %v1983
        %v1985 = vrot.slane %v1976, 4
        %v1986 = vsel %vm1001, 0.0, %v1985
        %v1987 = vrot.slane %v1980, 4
        %v1988 = vsel %vm1001, 0.0, %v1987
        %v1989 = vrot.slane %v343, 4
        %v1990 = vsel %vm1001, 0.0, %v1989
        %v1992 = vunpack.c.l.s4 1983009808
        %v1993 = vunpack.c.0.s8 %v1992
        %v1994 = vperm.slane %v343, %v1993
        %v1996 = vunpack.c.l.s4 1983009808
        %v1997 = vunpack.c.0.s8 %v1996
        %v1998 = vperm.slane %v1990, %v1997
        %v1999 = vrot.slane %v1994, 4
        %v2000 = vsel %vm1001, 0.0, %v1999
        %v2002 = vunpack.c.l.s4 1934713408
        %v2003 = vunpack.c.0.s8 %v2002
        %v2004 = vperm.slane %v1994, %v2003
        %v2006 = vunpack.c.l.s4 1934713408
        %v2007 = vunpack.c.0.s8 %v2006
        %v2008 = vperm.slane %v2000, %v2007
        %v2009 = vrot.slane %v1998, 4
        %v2010 = vsel %vm1001, 0.0, %v2009
        %v2012 = vunpack.c.l.s4 1934713408
        %v2013 = vunpack.c.0.s8 %v2012
        %v2014 = vperm.slane %v1998, %v2013
        %v2016 = vunpack.c.l.s4 1934713408
        %v2017 = vunpack.c.0.s8 %v2016
        %v2018 = vperm.slane %v2010, %v2017
        %v2019 = vrot.slane %v2004, 4
        %v2020 = vsel %vm1001, 0.0, %v2019
        %v2021 = vrot.slane %v2008, 4
        %v2022 = vsel %vm1001, 0.0, %v2021
        %v2023 = vrot.slane %v2014, 4
        %v2024 = vsel %vm1001, 0.0, %v2023
        %v2025 = vrot.slane %v2018, 4
        %v2026 = vsel %vm1001, 0.0, %v2025
        %v2027 = vrot.slane %v349, 4
        %v2028 = vsel %vm1001, 0.0, %v2027
        %v2030 = vunpack.c.l.s4 1983009808
        %v2031 = vunpack.c.0.s8 %v2030
        %v2032 = vperm.slane %v349, %v2031
        %v2034 = vunpack.c.l.s4 1983009808
        %v2035 = vunpack.c.0.s8 %v2034
        %v2036 = vperm.slane %v2028, %v2035
        %v2037 = vrot.slane %v2032, 4
        %v2038 = vsel %vm1001, 0.0, %v2037
        %v2040 = vunpack.c.l.s4 1934713408
        %v2041 = vunpack.c.0.s8 %v2040
        %v2042 = vperm.slane %v2032, %v2041
        %v2044 = vunpack.c.l.s4 1934713408
        %v2045 = vunpack.c.0.s8 %v2044
        %v2046 = vperm.slane %v2038, %v2045
        %v2047 = vrot.slane %v2036, 4
        %v2048 = vsel %vm1001, 0.0, %v2047
        %v2050 = vunpack.c.l.s4 1934713408
        %v2051 = vunpack.c.0.s8 %v2050
        %v2052 = vperm.slane %v2036, %v2051
        %v2054 = vunpack.c.l.s4 1934713408
        %v2055 = vunpack.c.0.s8 %v2054
        %v2056 = vperm.slane %v2048, %v2055
        %v2057 = vrot.slane %v2042, 4
        %v2058 = vsel %vm1001, 0.0, %v2057
        %v2059 = vrot.slane %v2046, 4
        %v2060 = vsel %vm1001, 0.0, %v2059
        %v2061 = vrot.slane %v2052, 4
        %v2062 = vsel %vm1001, 0.0, %v2061
        %v2063 = vrot.slane %v2056, 4
        %v2064 = vsel %vm1001, 0.0, %v2063
        %v2065 = vrot.slane %v356, 4
        %v2066 = vsel %vm1001, 0.0, %v2065
        %v2068 = vunpack.c.l.s4 1983009808
        %v2069 = vunpack.c.0.s8 %v2068
        %v2070 = vperm.slane %v356, %v2069
        %v2072 = vunpack.c.l.s4 1983009808
        %v2073 = vunpack.c.0.s8 %v2072
        %v2074 = vperm.slane %v2066, %v2073
        %v2075 = vrot.slane %v2070, 4
        %v2076 = vsel %vm1001, 0.0, %v2075
        %v2078 = vunpack.c.l.s4 1934713408
        %v2079 = vunpack.c.0.s8 %v2078
        %v2080 = vperm.slane %v2070, %v2079
        %v2082 = vunpack.c.l.s4 1934713408
        %v2083 = vunpack.c.0.s8 %v2082
        %v2084 = vperm.slane %v2076, %v2083
        %v2085 = vrot.slane %v2074, 4
        %v2086 = vsel %vm1001, 0.0, %v2085
        %v2088 = vunpack.c.l.s4 1934713408
        %v2089 = vunpack.c.0.s8 %v2088
        %v2090 = vperm.slane %v2074, %v2089
        %v2092 = vunpack.c.l.s4 1934713408
        %v2093 = vunpack.c.0.s8 %v2092
        %v2094 = vperm.slane %v2086, %v2093
        %v2095 = vrot.slane %v2080, 4
        %v2096 = vsel %vm1001, 0.0, %v2095
        %v2097 = vrot.slane %v2084, 4
        %v2098 = vsel %vm1001, 0.0, %v2097
        %v2099 = vrot.slane %v2090, 4
        %v2100 = vsel %vm1001, 0.0, %v2099
        %v2101 = vrot.slane %v2094, 4
        %v2102 = vsel %vm1001, 0.0, %v2101
        %v2103 = vrot.slane %v362, 4
        %v2104 = vsel %vm1001, 0.0, %v2103
        %v2106 = vunpack.c.l.s4 1983009808
        %v2107 = vunpack.c.0.s8 %v2106
        %v2108 = vperm.slane %v362, %v2107
        %v2110 = vunpack.c.l.s4 1983009808
        %v2111 = vunpack.c.0.s8 %v2110
        %v2112 = vperm.slane %v2104, %v2111
        %v2113 = vrot.slane %v2108, 4
        %v2114 = vsel %vm1001, 0.0, %v2113
        %v2116 = vunpack.c.l.s4 1934713408
        %v2117 = vunpack.c.0.s8 %v2116
        %v2118 = vperm.slane %v2108, %v2117
        %v2120 = vunpack.c.l.s4 1934713408
        %v2121 = vunpack.c.0.s8 %v2120
        %v2122 = vperm.slane %v2114, %v2121
        %v2123 = vrot.slane %v2112, 4
        %v2124 = vsel %vm1001, 0.0, %v2123
        %v2126 = vunpack.c.l.s4 1934713408
        %v2127 = vunpack.c.0.s8 %v2126
        %v2128 = vperm.slane %v2112, %v2127
        %v2130 = vunpack.c.l.s4 1934713408
        %v2131 = vunpack.c.0.s8 %v2130
        %v2132 = vperm.slane %v2124, %v2131
        %v2133 = vrot.slane %v2118, 4
        %v2134 = vsel %vm1001, 0.0, %v2133
        %v2135 = vrot.slane %v2122, 4
        %v2136 = vsel %vm1001, 0.0, %v2135
        %v2137 = vrot.slane %v2128, 4
        %v2138 = vsel %vm1001, 0.0, %v2137
        %v2139 = vrot.slane %v2132, 4
        %v2140 = vsel %vm1001, 0.0, %v2139
        %v2141 = vrot.slane %v369, 4
        %v2142 = vsel %vm1001, 0.0, %v2141
        %v2144 = vunpack.c.l.s4 1983009808
        %v2145 = vunpack.c.0.s8 %v2144
        %v2146 = vperm.slane %v369, %v2145
        %v2148 = vunpack.c.l.s4 1983009808
        %v2149 = vunpack.c.0.s8 %v2148
        %v2150 = vperm.slane %v2142, %v2149
        %v2151 = vrot.slane %v2146, 4
        %v2152 = vsel %vm1001, 0.0, %v2151
        %v2154 = vunpack.c.l.s4 1934713408
        %v2155 = vunpack.c.0.s8 %v2154
        %v2156 = vperm.slane %v2146, %v2155
        %v2158 = vunpack.c.l.s4 1934713408
        %v2159 = vunpack.c.0.s8 %v2158
        %v2160 = vperm.slane %v2152, %v2159
        %v2161 = vrot.slane %v2150, 4
        %v2162 = vsel %vm1001, 0.0, %v2161
        %v2164 = vunpack.c.l.s4 1934713408
        %v2165 = vunpack.c.0.s8 %v2164
        %v2166 = vperm.slane %v2150, %v2165
        %v2168 = vunpack.c.l.s4 1934713408
        %v2169 = vunpack.c.0.s8 %v2168
        %v2170 = vperm.slane %v2162, %v2169
        %v2171 = vrot.slane %v2156, 4
        %v2172 = vsel %vm1001, 0.0, %v2171
        %v2173 = vrot.slane %v2160, 4
        %v2174 = vsel %vm1001, 0.0, %v2173
        %v2175 = vrot.slane %v2166, 4
        %v2176 = vsel %vm1001, 0.0, %v2175
        %v2177 = vrot.slane %v2170, 4
        %v2178 = vsel %vm1001, 0.0, %v2177
        %v2179 = vrot.slane %v375, 4
        %v2180 = vsel %vm1001, 0.0, %v2179
        %v2182 = vunpack.c.l.s4 1983009808
        %v2183 = vunpack.c.0.s8 %v2182
        %v2184 = vperm.slane %v375, %v2183
        %v2186 = vunpack.c.l.s4 1983009808
        %v2187 = vunpack.c.0.s8 %v2186
        %v2188 = vperm.slane %v2180, %v2187
        %v2189 = vrot.slane %v2184, 4
        %v2190 = vsel %vm1001, 0.0, %v2189
        %v2192 = vunpack.c.l.s4 1934713408
        %v2193 = vunpack.c.0.s8 %v2192
        %v2194 = vperm.slane %v2184, %v2193
        %v2196 = vunpack.c.l.s4 1934713408
        %v2197 = vunpack.c.0.s8 %v2196
        %v2198 = vperm.slane %v2190, %v2197
        %v2199 = vrot.slane %v2188, 4
        %v2200 = vsel %vm1001, 0.0, %v2199
        %v2202 = vunpack.c.l.s4 1934713408
        %v2203 = vunpack.c.0.s8 %v2202
        %v2204 = vperm.slane %v2188, %v2203
        %v2206 = vunpack.c.l.s4 1934713408
        %v2207 = vunpack.c.0.s8 %v2206
        %v2208 = vperm.slane %v2200, %v2207
        %v2209 = vrot.slane %v2194, 4
        %v2210 = vsel %vm1001, 0.0, %v2209
        %v2211 = vrot.slane %v2198, 4
        %v2212 = vsel %vm1001, 0.0, %v2211
        %v2213 = vrot.slane %v2204, 4
        %v2214 = vsel %vm1001, 0.0, %v2213
        %v2215 = vrot.slane %v2208, 4
        %v2216 = vsel %vm1001, 0.0, %v2215
        %v2217 = vrot.slane %v382, 4
        %v2218 = vsel %vm1001, 0.0, %v2217
        %v2220 = vunpack.c.l.s4 1983009808
        %v2221 = vunpack.c.0.s8 %v2220
        %v2222 = vperm.slane %v382, %v2221
        %v2224 = vunpack.c.l.s4 1983009808
        %v2225 = vunpack.c.0.s8 %v2224
        %v2226 = vperm.slane %v2218, %v2225
        %v2227 = vrot.slane %v2222, 4
        %v2228 = vsel %vm1001, 0.0, %v2227
        %v2230 = vunpack.c.l.s4 1934713408
        %v2231 = vunpack.c.0.s8 %v2230
        %v2232 = vperm.slane %v2222, %v2231
        %v2234 = vunpack.c.l.s4 1934713408
        %v2235 = vunpack.c.0.s8 %v2234
        %v2236 = vperm.slane %v2228, %v2235
        %v2237 = vrot.slane %v2226, 4
        %v2238 = vsel %vm1001, 0.0, %v2237
        %v2240 = vunpack.c.l.s4 1934713408
        %v2241 = vunpack.c.0.s8 %v2240
        %v2242 = vperm.slane %v2226, %v2241
        %v2244 = vunpack.c.l.s4 1934713408
        %v2245 = vunpack.c.0.s8 %v2244
        %v2246 = vperm.slane %v2238, %v2245
        %v2247 = vrot.slane %v2232, 4
        %v2248 = vsel %vm1001, 0.0, %v2247
        %v2249 = vrot.slane %v2236, 4
        %v2250 = vsel %vm1001, 0.0, %v2249
        %v2251 = vrot.slane %v2242, 4
        %v2252 = vsel %vm1001, 0.0, %v2251
        %v2253 = vrot.slane %v2246, 4
        %v2254 = vsel %vm1001, 0.0, %v2253
        %v2255 = vrot.slane %v388, 4
        %v2256 = vsel %vm1001, 0.0, %v2255
        %v2258 = vunpack.c.l.s4 1983009808
        %v2259 = vunpack.c.0.s8 %v2258
        %v2260 = vperm.slane %v388, %v2259
        %v2262 = vunpack.c.l.s4 1983009808
        %v2263 = vunpack.c.0.s8 %v2262
        %v2264 = vperm.slane %v2256, %v2263
        %v2265 = vrot.slane %v2260, 4
        %v2266 = vsel %vm1001, 0.0, %v2265
        %v2268 = vunpack.c.l.s4 1934713408
        %v2269 = vunpack.c.0.s8 %v2268
        %v2270 = vperm.slane %v2260, %v2269
        %v2272 = vunpack.c.l.s4 1934713408
        %v2273 = vunpack.c.0.s8 %v2272
        %v2274 = vperm.slane %v2266, %v2273
        %v2275 = vrot.slane %v2264, 4
        %v2276 = vsel %vm1001, 0.0, %v2275
        %v2278 = vunpack.c.l.s4 1934713408
        %v2279 = vunpack.c.0.s8 %v2278
        %v2280 = vperm.slane %v2264, %v2279
        %v2282 = vunpack.c.l.s4 1934713408
        %v2283 = vunpack.c.0.s8 %v2282
        %v2284 = vperm.slane %v2276, %v2283
        %v2285 = vrot.slane %v2270, 4
        %v2286 = vsel %vm1001, 0.0, %v2285
        %v2287 = vrot.slane %v2274, 4
        %v2288 = vsel %vm1001, 0.0, %v2287
        %v2289 = vrot.slane %v2280, 4
        %v2290 = vsel %vm1001, 0.0, %v2289
        %v2291 = vrot.slane %v2284, 4
        %v2292 = vsel %vm1001, 0.0, %v2291
        %v2293 = vrot.slane %v395, 4
        %v2294 = vsel %vm1001, 0.0, %v2293
        %v2296 = vunpack.c.l.s4 1983009808
        %v2297 = vunpack.c.0.s8 %v2296
        %v2298 = vperm.slane %v395, %v2297
        %v2300 = vunpack.c.l.s4 1983009808
        %v2301 = vunpack.c.0.s8 %v2300
        %v2302 = vperm.slane %v2294, %v2301
        %v2303 = vrot.slane %v2298, 4
        %v2304 = vsel %vm1001, 0.0, %v2303
        %v2306 = vunpack.c.l.s4 1934713408
        %v2307 = vunpack.c.0.s8 %v2306
        %v2308 = vperm.slane %v2298, %v2307
        %v2310 = vunpack.c.l.s4 1934713408
        %v2311 = vunpack.c.0.s8 %v2310
        %v2312 = vperm.slane %v2304, %v2311
        %v2313 = vrot.slane %v2302, 4
        %v2314 = vsel %vm1001, 0.0, %v2313
        %v2316 = vunpack.c.l.s4 1934713408
        %v2317 = vunpack.c.0.s8 %v2316
        %v2318 = vperm.slane %v2302, %v2317
        %v2320 = vunpack.c.l.s4 1934713408
        %v2321 = vunpack.c.0.s8 %v2320
        %v2322 = vperm.slane %v2314, %v2321
        %v2323 = vrot.slane %v2308, 4
        %v2324 = vsel %vm1001, 0.0, %v2323
        %v2325 = vrot.slane %v2312, 4
        %v2326 = vsel %vm1001, 0.0, %v2325
        %v2327 = vrot.slane %v2318, 4
        %v2328 = vsel %vm1001, 0.0, %v2327
        %v2329 = vrot.slane %v2322, 4
        %v2330 = vsel %vm1001, 0.0, %v2329
        %v2331 = vrot.slane %v401, 4
        %v2332 = vsel %vm1001, 0.0, %v2331
        %v2334 = vunpack.c.l.s4 1983009808
        %v2335 = vunpack.c.0.s8 %v2334
        %v2336 = vperm.slane %v401, %v2335
        %v2338 = vunpack.c.l.s4 1983009808
        %v2339 = vunpack.c.0.s8 %v2338
        %v2340 = vperm.slane %v2332, %v2339
        %v2341 = vrot.slane %v2336, 4
        %v2342 = vsel %vm1001, 0.0, %v2341
        %v2344 = vunpack.c.l.s4 1934713408
        %v2345 = vunpack.c.0.s8 %v2344
        %v2346 = vperm.slane %v2336, %v2345
        %v2348 = vunpack.c.l.s4 1934713408
        %v2349 = vunpack.c.0.s8 %v2348
        %v2350 = vperm.slane %v2342, %v2349
        %v2351 = vrot.slane %v2340, 4
        %v2352 = vsel %vm1001, 0.0, %v2351
        %v2354 = vunpack.c.l.s4 1934713408
        %v2355 = vunpack.c.0.s8 %v2354
        %v2356 = vperm.slane %v2340, %v2355
        %v2358 = vunpack.c.l.s4 1934713408
        %v2359 = vunpack.c.0.s8 %v2358
        %v2360 = vperm.slane %v2352, %v2359
        %v2361 = vrot.slane %v2346, 4
        %v2362 = vsel %vm1001, 0.0, %v2361
        %v2363 = vrot.slane %v2350, 4
        %v2364 = vsel %vm1001, 0.0, %v2363
        %v2365 = vrot.slane %v2356, 4
        %v2366 = vsel %vm1001, 0.0, %v2365
        %v2367 = vrot.slane %v2360, 4
        %v2368 = vsel %vm1001, 0.0, %v2367
        %v2369 = vrot.slane %v408, 4
        %v2370 = vsel %vm1001, 0.0, %v2369
        %v2372 = vunpack.c.l.s4 1983009808
        %v2373 = vunpack.c.0.s8 %v2372
        %v2374 = vperm.slane %v408, %v2373
        %v2376 = vunpack.c.l.s4 1983009808
        %v2377 = vunpack.c.0.s8 %v2376
        %v2378 = vperm.slane %v2370, %v2377
        %v2379 = vrot.slane %v2374, 4
        %v2380 = vsel %vm1001, 0.0, %v2379
        %v2382 = vunpack.c.l.s4 1934713408
        %v2383 = vunpack.c.0.s8 %v2382
        %v2384 = vperm.slane %v2374, %v2383
        %v2386 = vunpack.c.l.s4 1934713408
        %v2387 = vunpack.c.0.s8 %v2386
        %v2388 = vperm.slane %v2380, %v2387
        %v2389 = vrot.slane %v2378, 4
        %v2390 = vsel %vm1001, 0.0, %v2389
        %v2392 = vunpack.c.l.s4 1934713408
        %v2393 = vunpack.c.0.s8 %v2392
        %v2394 = vperm.slane %v2378, %v2393
        %v2396 = vunpack.c.l.s4 1934713408
        %v2397 = vunpack.c.0.s8 %v2396
        %v2398 = vperm.slane %v2390, %v2397
        %v2399 = vrot.slane %v2384, 4
        %v2400 = vsel %vm1001, 0.0, %v2399
        %v2401 = vrot.slane %v2388, 4
        %v2402 = vsel %vm1001, 0.0, %v2401
        %v2403 = vrot.slane %v2394, 4
        %v2404 = vsel %vm1001, 0.0, %v2403
        %v2405 = vrot.slane %v2398, 4
        %v2406 = vsel %vm1001, 0.0, %v2405
        %v2407 = vrot.slane %v414, 4
        %v2408 = vsel %vm1001, 0.0, %v2407
        %v2410 = vunpack.c.l.s4 1983009808
        %v2411 = vunpack.c.0.s8 %v2410
        %v2412 = vperm.slane %v414, %v2411
        %v2414 = vunpack.c.l.s4 1983009808
        %v2415 = vunpack.c.0.s8 %v2414
        %v2416 = vperm.slane %v2408, %v2415
        %v2417 = vrot.slane %v2412, 4
        %v2418 = vsel %vm1001, 0.0, %v2417
        %v2420 = vunpack.c.l.s4 1934713408
        %v2421 = vunpack.c.0.s8 %v2420
        %v2422 = vperm.slane %v2412, %v2421
        %v2424 = vunpack.c.l.s4 1934713408
        %v2425 = vunpack.c.0.s8 %v2424
        %v2426 = vperm.slane %v2418, %v2425
        %v2427 = vrot.slane %v2416, 4
        %v2428 = vsel %vm1001, 0.0, %v2427
        %v2430 = vunpack.c.l.s4 1934713408
        %v2431 = vunpack.c.0.s8 %v2430
        %v2432 = vperm.slane %v2416, %v2431
        %v2434 = vunpack.c.l.s4 1934713408
        %v2435 = vunpack.c.0.s8 %v2434
        %v2436 = vperm.slane %v2428, %v2435
        %v2437 = vrot.slane %v2422, 4
        %v2438 = vsel %vm1001, 0.0, %v2437
        %v2439 = vrot.slane %v2426, 4
        %v2440 = vsel %vm1001, 0.0, %v2439
        %v2441 = vrot.slane %v2432, 4
        %v2442 = vsel %vm1001, 0.0, %v2441
        %v2443 = vrot.slane %v2436, 4
        %v2444 = vsel %vm1001, 0.0, %v2443
        %v2445 = vrot.slane %v421, 4
        %v2446 = vsel %vm1001, 0.0, %v2445
        %v2448 = vunpack.c.l.s4 1983009808
        %v2449 = vunpack.c.0.s8 %v2448
        %v2450 = vperm.slane %v421, %v2449
        %v2452 = vunpack.c.l.s4 1983009808
        %v2453 = vunpack.c.0.s8 %v2452
        %v2454 = vperm.slane %v2446, %v2453
        %v2455 = vrot.slane %v2450, 4
        %v2456 = vsel %vm1001, 0.0, %v2455
        %v2458 = vunpack.c.l.s4 1934713408
        %v2459 = vunpack.c.0.s8 %v2458
        %v2460 = vperm.slane %v2450, %v2459
        %v2462 = vunpack.c.l.s4 1934713408
        %v2463 = vunpack.c.0.s8 %v2462
        %v2464 = vperm.slane %v2456, %v2463
        %v2465 = vrot.slane %v2454, 4
        %v2466 = vsel %vm1001, 0.0, %v2465
        %v2468 = vunpack.c.l.s4 1934713408
        %v2469 = vunpack.c.0.s8 %v2468
        %v2470 = vperm.slane %v2454, %v2469
        %v2472 = vunpack.c.l.s4 1934713408
        %v2473 = vunpack.c.0.s8 %v2472
        %v2474 = vperm.slane %v2466, %v2473
        %v2475 = vrot.slane %v2460, 4
        %v2476 = vsel %vm1001, 0.0, %v2475
        %v2477 = vrot.slane %v2464, 4
        %v2478 = vsel %vm1001, 0.0, %v2477
        %v2479 = vrot.slane %v2470, 4
        %v2480 = vsel %vm1001, 0.0, %v2479
        %v2481 = vrot.slane %v2474, 4
        %v2482 = vsel %vm1001, 0.0, %v2481
        %v2483 = vrot.slane %v427, 4
        %v2484 = vsel %vm1001, 0.0, %v2483
        %v2486 = vunpack.c.l.s4 1983009808
        %v2487 = vunpack.c.0.s8 %v2486
        %v2488 = vperm.slane %v427, %v2487
        %v2490 = vunpack.c.l.s4 1983009808
        %v2491 = vunpack.c.0.s8 %v2490
        %v2492 = vperm.slane %v2484, %v2491
        %v2493 = vrot.slane %v2488, 4
        %v2494 = vsel %vm1001, 0.0, %v2493
        %v2496 = vunpack.c.l.s4 1934713408
        %v2497 = vunpack.c.0.s8 %v2496
        %v2498 = vperm.slane %v2488, %v2497
        %v2500 = vunpack.c.l.s4 1934713408
        %v2501 = vunpack.c.0.s8 %v2500
        %v2502 = vperm.slane %v2494, %v2501
        %v2503 = vrot.slane %v2492, 4
        %v2504 = vsel %vm1001, 0.0, %v2503
        %v2506 = vunpack.c.l.s4 1934713408
        %v2507 = vunpack.c.0.s8 %v2506
        %v2508 = vperm.slane %v2492, %v2507
        %v2510 = vunpack.c.l.s4 1934713408
        %v2511 = vunpack.c.0.s8 %v2510
        %v2512 = vperm.slane %v2504, %v2511
        %v2513 = vrot.slane %v2498, 4
        %v2514 = vsel %vm1001, 0.0, %v2513
        %v2515 = vrot.slane %v2502, 4
        %v2516 = vsel %vm1001, 0.0, %v2515
        %v2517 = vrot.slane %v2508, 4
        %v2518 = vsel %vm1001, 0.0, %v2517
        %v2519 = vrot.slane %v2512, 4
        %v2520 = vsel %vm1001, 0.0, %v2519
        %v2521 = vrot.slane %v434, 4
        %v2522 = vsel %vm1001, 0.0, %v2521
        %v2524 = vunpack.c.l.s4 1983009808
        %v2525 = vunpack.c.0.s8 %v2524
        %v2526 = vperm.slane %v434, %v2525
        %v2528 = vunpack.c.l.s4 1983009808
        %v2529 = vunpack.c.0.s8 %v2528
        %v2530 = vperm.slane %v2522, %v2529
        %v2531 = vrot.slane %v2526, 4
        %v2532 = vsel %vm1001, 0.0, %v2531
        %v2534 = vunpack.c.l.s4 1934713408
        %v2535 = vunpack.c.0.s8 %v2534
        %v2536 = vperm.slane %v2526, %v2535
        %v2538 = vunpack.c.l.s4 1934713408
        %v2539 = vunpack.c.0.s8 %v2538
        %v2540 = vperm.slane %v2532, %v2539
        %v2541 = vrot.slane %v2530, 4
        %v2542 = vsel %vm1001, 0.0, %v2541
        %v2544 = vunpack.c.l.s4 1934713408
        %v2545 = vunpack.c.0.s8 %v2544
        %v2546 = vperm.slane %v2530, %v2545
        %v2548 = vunpack.c.l.s4 1934713408
        %v2549 = vunpack.c.0.s8 %v2548
        %v2550 = vperm.slane %v2542, %v2549
        %v2551 = vrot.slane %v2536, 4
        %v2552 = vsel %vm1001, 0.0, %v2551
        %v2553 = vrot.slane %v2540, 4
        %v2554 = vsel %vm1001, 0.0, %v2553
        %v2555 = vrot.slane %v2546, 4
        %v2556 = vsel %vm1001, 0.0, %v2555
        %v2557 = vrot.slane %v2550, 4
        %v2558 = vsel %vm1001, 0.0, %v2557
        %v2559 = vrot.slane %v440, 4
        %v2560 = vsel %vm1001, 0.0, %v2559
        %v2562 = vunpack.c.l.s4 1983009808
        %v2563 = vunpack.c.0.s8 %v2562
        %v2564 = vperm.slane %v440, %v2563
        %v2566 = vunpack.c.l.s4 1983009808
        %v2567 = vunpack.c.0.s8 %v2566
        %v2568 = vperm.slane %v2560, %v2567
        %v2569 = vrot.slane %v2564, 4
        %v2570 = vsel %vm1001, 0.0, %v2569
        %v2572 = vunpack.c.l.s4 1934713408
        %v2573 = vunpack.c.0.s8 %v2572
        %v2574 = vperm.slane %v2564, %v2573
        %v2576 = vunpack.c.l.s4 1934713408
        %v2577 = vunpack.c.0.s8 %v2576
        %v2578 = vperm.slane %v2570, %v2577
        %v2579 = vrot.slane %v2568, 4
        %v2580 = vsel %vm1001, 0.0, %v2579
        %v2582 = vunpack.c.l.s4 1934713408
        %v2583 = vunpack.c.0.s8 %v2582
        %v2584 = vperm.slane %v2568, %v2583
        %v2586 = vunpack.c.l.s4 1934713408
        %v2587 = vunpack.c.0.s8 %v2586
        %v2588 = vperm.slane %v2580, %v2587
        %v2589 = vrot.slane %v2574, 4
        %v2590 = vsel %vm1001, 0.0, %v2589
        %v2591 = vrot.slane %v2578, 4
        %v2592 = vsel %vm1001, 0.0, %v2591
        %v2593 = vrot.slane %v2584, 4
        %v2594 = vsel %vm1001, 0.0, %v2593
        %v2595 = vrot.slane %v2588, 4
        %v2596 = vsel %vm1001, 0.0, %v2595
        %v2597 = vrot.slane %v447, 4
        %v2598 = vsel %vm1001, 0.0, %v2597
        %v2600 = vunpack.c.l.s4 1983009808
        %v2601 = vunpack.c.0.s8 %v2600
        %v2602 = vperm.slane %v447, %v2601
        %v2604 = vunpack.c.l.s4 1983009808
        %v2605 = vunpack.c.0.s8 %v2604
        %v2606 = vperm.slane %v2598, %v2605
        %v2607 = vrot.slane %v2602, 4
        %v2608 = vsel %vm1001, 0.0, %v2607
        %v2610 = vunpack.c.l.s4 1934713408
        %v2611 = vunpack.c.0.s8 %v2610
        %v2612 = vperm.slane %v2602, %v2611
        %v2614 = vunpack.c.l.s4 1934713408
        %v2615 = vunpack.c.0.s8 %v2614
        %v2616 = vperm.slane %v2608, %v2615
        %v2617 = vrot.slane %v2606, 4
        %v2618 = vsel %vm1001, 0.0, %v2617
        %v2620 = vunpack.c.l.s4 1934713408
        %v2621 = vunpack.c.0.s8 %v2620
        %v2622 = vperm.slane %v2606, %v2621
        %v2624 = vunpack.c.l.s4 1934713408
        %v2625 = vunpack.c.0.s8 %v2624
        %v2626 = vperm.slane %v2618, %v2625
        %v2627 = vrot.slane %v2612, 4
        %v2628 = vsel %vm1001, 0.0, %v2627
        %v2629 = vrot.slane %v2616, 4
        %v2630 = vsel %vm1001, 0.0, %v2629
        %v2631 = vrot.slane %v2622, 4
        %v2632 = vsel %vm1001, 0.0, %v2631
        %v2633 = vrot.slane %v2626, 4
        %v2634 = vsel %vm1001, 0.0, %v2633
        %v2635 = vrot.slane %v453, 4
        %v2636 = vsel %vm1001, 0.0, %v2635
        %v2638 = vunpack.c.l.s4 1983009808
        %v2639 = vunpack.c.0.s8 %v2638
        %v2640 = vperm.slane %v453, %v2639
        %v2642 = vunpack.c.l.s4 1983009808
        %v2643 = vunpack.c.0.s8 %v2642
        %v2644 = vperm.slane %v2636, %v2643
        %v2645 = vrot.slane %v2640, 4
        %v2646 = vsel %vm1001, 0.0, %v2645
        %v2648 = vunpack.c.l.s4 1934713408
        %v2649 = vunpack.c.0.s8 %v2648
        %v2650 = vperm.slane %v2640, %v2649
        %v2652 = vunpack.c.l.s4 1934713408
        %v2653 = vunpack.c.0.s8 %v2652
        %v2654 = vperm.slane %v2646, %v2653
        %v2655 = vrot.slane %v2644, 4
        %v2656 = vsel %vm1001, 0.0, %v2655
        %v2658 = vunpack.c.l.s4 1934713408
        %v2659 = vunpack.c.0.s8 %v2658
        %v2660 = vperm.slane %v2644, %v2659
        %v2662 = vunpack.c.l.s4 1934713408
        %v2663 = vunpack.c.0.s8 %v2662
        %v2664 = vperm.slane %v2656, %v2663
        %v2665 = vrot.slane %v2650, 4
        %v2666 = vsel %vm1001, 0.0, %v2665
        %v2667 = vrot.slane %v2654, 4
        %v2668 = vsel %vm1001, 0.0, %v2667
        %v2669 = vrot.slane %v2660, 4
        %v2670 = vsel %vm1001, 0.0, %v2669
        %v2671 = vrot.slane %v2664, 4
        %v2672 = vsel %vm1001, 0.0, %v2671
        %v2673 = vrot.slane %v460, 4
        %v2674 = vsel %vm1001, 0.0, %v2673
        %v2676 = vunpack.c.l.s4 1983009808
        %v2677 = vunpack.c.0.s8 %v2676
        %v2678 = vperm.slane %v460, %v2677
        %v2680 = vunpack.c.l.s4 1983009808
        %v2681 = vunpack.c.0.s8 %v2680
        %v2682 = vperm.slane %v2674, %v2681
        %v2683 = vrot.slane %v2678, 4
        %v2684 = vsel %vm1001, 0.0, %v2683
        %v2686 = vunpack.c.l.s4 1934713408
        %v2687 = vunpack.c.0.s8 %v2686
        %v2688 = vperm.slane %v2678, %v2687
        %v2690 = vunpack.c.l.s4 1934713408
        %v2691 = vunpack.c.0.s8 %v2690
        %v2692 = vperm.slane %v2684, %v2691
        %v2693 = vrot.slane %v2682, 4
        %v2694 = vsel %vm1001, 0.0, %v2693
        %v2696 = vunpack.c.l.s4 1934713408
        %v2697 = vunpack.c.0.s8 %v2696
        %v2698 = vperm.slane %v2682, %v2697
        %v2700 = vunpack.c.l.s4 1934713408
        %v2701 = vunpack.c.0.s8 %v2700
        %v2702 = vperm.slane %v2694, %v2701
        %v2703 = vrot.slane %v2688, 4
        %v2704 = vsel %vm1001, 0.0, %v2703
        %v2705 = vrot.slane %v2692, 4
        %v2706 = vsel %vm1001, 0.0, %v2705
        %v2707 = vrot.slane %v2698, 4
        %v2708 = vsel %vm1001, 0.0, %v2707
        %v2709 = vrot.slane %v2702, 4
        %v2710 = vsel %vm1001, 0.0, %v2709
        %v2711 = vrot.slane %v466, 4
        %v2712 = vsel %vm1001, 0.0, %v2711
        %v2714 = vunpack.c.l.s4 1983009808
        %v2715 = vunpack.c.0.s8 %v2714
        %v2716 = vperm.slane %v466, %v2715
        %v2718 = vunpack.c.l.s4 1983009808
        %v2719 = vunpack.c.0.s8 %v2718
        %v2720 = vperm.slane %v2712, %v2719
        %v2721 = vrot.slane %v2716, 4
        %v2722 = vsel %vm1001, 0.0, %v2721
        %v2724 = vunpack.c.l.s4 1934713408
        %v2725 = vunpack.c.0.s8 %v2724
        %v2726 = vperm.slane %v2716, %v2725
        %v2728 = vunpack.c.l.s4 1934713408
        %v2729 = vunpack.c.0.s8 %v2728
        %v2730 = vperm.slane %v2722, %v2729
        %v2731 = vrot.slane %v2720, 4
        %v2732 = vsel %vm1001, 0.0, %v2731
        %v2734 = vunpack.c.l.s4 1934713408
        %v2735 = vunpack.c.0.s8 %v2734
        %v2736 = vperm.slane %v2720, %v2735
        %v2738 = vunpack.c.l.s4 1934713408
        %v2739 = vunpack.c.0.s8 %v2738
        %v2740 = vperm.slane %v2732, %v2739
        %v2741 = vrot.slane %v2726, 4
        %v2742 = vsel %vm1001, 0.0, %v2741
        %v2743 = vrot.slane %v2730, 4
        %v2744 = vsel %vm1001, 0.0, %v2743
        %v2745 = vrot.slane %v2736, 4
        %v2746 = vsel %vm1001, 0.0, %v2745
        %v2747 = vrot.slane %v2740, 4
        %v2748 = vsel %vm1001, 0.0, %v2747
        %v2749 = vrot.slane %v473, 4
        %v2750 = vsel %vm1001, 0.0, %v2749
        %v2752 = vunpack.c.l.s4 1983009808
        %v2753 = vunpack.c.0.s8 %v2752
        %v2754 = vperm.slane %v473, %v2753
        %v2756 = vunpack.c.l.s4 1983009808
        %v2757 = vunpack.c.0.s8 %v2756
        %v2758 = vperm.slane %v2750, %v2757
        %v2759 = vrot.slane %v2754, 4
        %v2760 = vsel %vm1001, 0.0, %v2759
        %v2762 = vunpack.c.l.s4 1934713408
        %v2763 = vunpack.c.0.s8 %v2762
        %v2764 = vperm.slane %v2754, %v2763
        %v2766 = vunpack.c.l.s4 1934713408
        %v2767 = vunpack.c.0.s8 %v2766
        %v2768 = vperm.slane %v2760, %v2767
        %v2769 = vrot.slane %v2758, 4
        %v2770 = vsel %vm1001, 0.0, %v2769
        %v2772 = vunpack.c.l.s4 1934713408
        %v2773 = vunpack.c.0.s8 %v2772
        %v2774 = vperm.slane %v2758, %v2773
        %v2776 = vunpack.c.l.s4 1934713408
        %v2777 = vunpack.c.0.s8 %v2776
        %v2778 = vperm.slane %v2770, %v2777
        %v2779 = vrot.slane %v2764, 4
        %v2780 = vsel %vm1001, 0.0, %v2779
        %v2781 = vrot.slane %v2768, 4
        %v2782 = vsel %vm1001, 0.0, %v2781
        %v2783 = vrot.slane %v2774, 4
        %v2784 = vsel %vm1001, 0.0, %v2783
        %v2785 = vrot.slane %v2778, 4
        %v2786 = vsel %vm1001, 0.0, %v2785
        %v2787 = vrot.slane %v479, 4
        %v2788 = vsel %vm1001, 0.0, %v2787
        %v2790 = vunpack.c.l.s4 1983009808
        %v2791 = vunpack.c.0.s8 %v2790
        %v2792 = vperm.slane %v479, %v2791
        %v2794 = vunpack.c.l.s4 1983009808
        %v2795 = vunpack.c.0.s8 %v2794
        %v2796 = vperm.slane %v2788, %v2795
        %v2797 = vrot.slane %v2792, 4
        %v2798 = vsel %vm1001, 0.0, %v2797
        %v2800 = vunpack.c.l.s4 1934713408
        %v2801 = vunpack.c.0.s8 %v2800
        %v2802 = vperm.slane %v2792, %v2801
        %v2804 = vunpack.c.l.s4 1934713408
        %v2805 = vunpack.c.0.s8 %v2804
        %v2806 = vperm.slane %v2798, %v2805
        %v2807 = vrot.slane %v2796, 4
        %v2808 = vsel %vm1001, 0.0, %v2807
        %v2810 = vunpack.c.l.s4 1934713408
        %v2811 = vunpack.c.0.s8 %v2810
        %v2812 = vperm.slane %v2796, %v2811
        %v2814 = vunpack.c.l.s4 1934713408
        %v2815 = vunpack.c.0.s8 %v2814
        %v2816 = vperm.slane %v2808, %v2815
        %v2817 = vrot.slane %v2802, 4
        %v2818 = vsel %vm1001, 0.0, %v2817
        %v2819 = vrot.slane %v2806, 4
        %v2820 = vsel %vm1001, 0.0, %v2819
        %v2821 = vrot.slane %v2812, 4
        %v2822 = vsel %vm1001, 0.0, %v2821
        %v2823 = vrot.slane %v2816, 4
        %v2824 = vsel %vm1001, 0.0, %v2823
        %v2825 = vrot.slane %v486, 4
        %v2826 = vsel %vm1001, 0.0, %v2825
        %v2828 = vunpack.c.l.s4 1983009808
        %v2829 = vunpack.c.0.s8 %v2828
        %v2830 = vperm.slane %v486, %v2829
        %v2832 = vunpack.c.l.s4 1983009808
        %v2833 = vunpack.c.0.s8 %v2832
        %v2834 = vperm.slane %v2826, %v2833
        %v2835 = vrot.slane %v2830, 4
        %v2836 = vsel %vm1001, 0.0, %v2835
        %v2838 = vunpack.c.l.s4 1934713408
        %v2839 = vunpack.c.0.s8 %v2838
        %v2840 = vperm.slane %v2830, %v2839
        %v2842 = vunpack.c.l.s4 1934713408
        %v2843 = vunpack.c.0.s8 %v2842
        %v2844 = vperm.slane %v2836, %v2843
        %v2845 = vrot.slane %v2834, 4
        %v2846 = vsel %vm1001, 0.0, %v2845
        %v2848 = vunpack.c.l.s4 1934713408
        %v2849 = vunpack.c.0.s8 %v2848
        %v2850 = vperm.slane %v2834, %v2849
        %v2852 = vunpack.c.l.s4 1934713408
        %v2853 = vunpack.c.0.s8 %v2852
        %v2854 = vperm.slane %v2846, %v2853
        %v2855 = vrot.slane %v2840, 4
        %v2856 = vsel %vm1001, 0.0, %v2855
        %v2857 = vrot.slane %v2844, 4
        %v2858 = vsel %vm1001, 0.0, %v2857
        %v2859 = vrot.slane %v2850, 4
        %v2860 = vsel %vm1001, 0.0, %v2859
        %v2861 = vrot.slane %v2854, 4
        %v2862 = vsel %vm1001, 0.0, %v2861
        %v2863 = vrot.slane %v492, 4
        %v2864 = vsel %vm1001, 0.0, %v2863
        %v2866 = vunpack.c.l.s4 1983009808
        %v2867 = vunpack.c.0.s8 %v2866
        %v2868 = vperm.slane %v492, %v2867
        %v2870 = vunpack.c.l.s4 1983009808
        %v2871 = vunpack.c.0.s8 %v2870
        %v2872 = vperm.slane %v2864, %v2871
        %v2873 = vrot.slane %v2868, 4
        %v2874 = vsel %vm1001, 0.0, %v2873
        %v2876 = vunpack.c.l.s4 1934713408
        %v2877 = vunpack.c.0.s8 %v2876
        %v2878 = vperm.slane %v2868, %v2877
        %v2880 = vunpack.c.l.s4 1934713408
        %v2881 = vunpack.c.0.s8 %v2880
        %v2882 = vperm.slane %v2874, %v2881
        %v2883 = vrot.slane %v2872, 4
        %v2884 = vsel %vm1001, 0.0, %v2883
        %v2886 = vunpack.c.l.s4 1934713408
        %v2887 = vunpack.c.0.s8 %v2886
        %v2888 = vperm.slane %v2872, %v2887
        %v2890 = vunpack.c.l.s4 1934713408
        %v2891 = vunpack.c.0.s8 %v2890
        %v2892 = vperm.slane %v2884, %v2891
        %v2893 = vrot.slane %v2878, 4
        %v2894 = vsel %vm1001, 0.0, %v2893
        %v2895 = vrot.slane %v2882, 4
        %v2896 = vsel %vm1001, 0.0, %v2895
        %v2897 = vrot.slane %v2888, 4
        %v2898 = vsel %vm1001, 0.0, %v2897
        %v2899 = vrot.slane %v2892, 4
        %v2900 = vsel %vm1001, 0.0, %v2899
        %v2901 = vrot.slane %v499, 4
        %v2902 = vsel %vm1001, 0.0, %v2901
        %v2904 = vunpack.c.l.s4 1983009808
        %v2905 = vunpack.c.0.s8 %v2904
        %v2906 = vperm.slane %v499, %v2905
        %v2908 = vunpack.c.l.s4 1983009808
        %v2909 = vunpack.c.0.s8 %v2908
        %v2910 = vperm.slane %v2902, %v2909
        %v2911 = vrot.slane %v2906, 4
        %v2912 = vsel %vm1001, 0.0, %v2911
        %v2914 = vunpack.c.l.s4 1934713408
        %v2915 = vunpack.c.0.s8 %v2914
        %v2916 = vperm.slane %v2906, %v2915
        %v2918 = vunpack.c.l.s4 1934713408
        %v2919 = vunpack.c.0.s8 %v2918
        %v2920 = vperm.slane %v2912, %v2919
        %v2921 = vrot.slane %v2910, 4
        %v2922 = vsel %vm1001, 0.0, %v2921
        %v2924 = vunpack.c.l.s4 1934713408
        %v2925 = vunpack.c.0.s8 %v2924
        %v2926 = vperm.slane %v2910, %v2925
        %v2928 = vunpack.c.l.s4 1934713408
        %v2929 = vunpack.c.0.s8 %v2928
        %v2930 = vperm.slane %v2922, %v2929
        %v2931 = vrot.slane %v2916, 4
        %v2932 = vsel %vm1001, 0.0, %v2931
        %v2933 = vrot.slane %v2920, 4
        %v2934 = vsel %vm1001, 0.0, %v2933
        %v2935 = vrot.slane %v2926, 4
        %v2936 = vsel %vm1001, 0.0, %v2935
        %v2937 = vrot.slane %v2930, 4
        %v2938 = vsel %vm1001, 0.0, %v2937
        %v2939 = vrot.slane %v505, 4
        %v2940 = vsel %vm1001, 0.0, %v2939
        %v2942 = vunpack.c.l.s4 1983009808
        %v2943 = vunpack.c.0.s8 %v2942
        %v2944 = vperm.slane %v505, %v2943
        %v2946 = vunpack.c.l.s4 1983009808
        %v2947 = vunpack.c.0.s8 %v2946
        %v2948 = vperm.slane %v2940, %v2947
        %v2949 = vrot.slane %v2944, 4
        %v2950 = vsel %vm1001, 0.0, %v2949
        %v2952 = vunpack.c.l.s4 1934713408
        %v2953 = vunpack.c.0.s8 %v2952
        %v2954 = vperm.slane %v2944, %v2953
        %v2956 = vunpack.c.l.s4 1934713408
        %v2957 = vunpack.c.0.s8 %v2956
        %v2958 = vperm.slane %v2950, %v2957
        %v2959 = vrot.slane %v2948, 4
        %v2960 = vsel %vm1001, 0.0, %v2959
        %v2962 = vunpack.c.l.s4 1934713408
        %v2963 = vunpack.c.0.s8 %v2962
        %v2964 = vperm.slane %v2948, %v2963
        %v2966 = vunpack.c.l.s4 1934713408
        %v2967 = vunpack.c.0.s8 %v2966
        %v2968 = vperm.slane %v2960, %v2967
        %v2969 = vrot.slane %v2954, 4
        %v2970 = vsel %vm1001, 0.0, %v2969
        %v2971 = vrot.slane %v2958, 4
        %v2972 = vsel %vm1001, 0.0, %v2971
        %v2973 = vrot.slane %v2964, 4
        %v2974 = vsel %vm1001, 0.0, %v2973
        %v2975 = vrot.slane %v2968, 4
        %v2976 = vsel %vm1001, 0.0, %v2975
        %v2977 = vrot.slane %v512, 4
        %v2978 = vsel %vm1001, 0.0, %v2977
        %v2980 = vunpack.c.l.s4 1983009808
        %v2981 = vunpack.c.0.s8 %v2980
        %v2982 = vperm.slane %v512, %v2981
        %v2984 = vunpack.c.l.s4 1983009808
        %v2985 = vunpack.c.0.s8 %v2984
        %v2986 = vperm.slane %v2978, %v2985
        %v2987 = vrot.slane %v2982, 4
        %v2988 = vsel %vm1001, 0.0, %v2987
        %v2990 = vunpack.c.l.s4 1934713408
        %v2991 = vunpack.c.0.s8 %v2990
        %v2992 = vperm.slane %v2982, %v2991
        %v2994 = vunpack.c.l.s4 1934713408
        %v2995 = vunpack.c.0.s8 %v2994
        %v2996 = vperm.slane %v2988, %v2995
        %v2997 = vrot.slane %v2986, 4
        %v2998 = vsel %vm1001, 0.0, %v2997
        %v3000 = vunpack.c.l.s4 1934713408
        %v3001 = vunpack.c.0.s8 %v3000
        %v3002 = vperm.slane %v2986, %v3001
        %v3004 = vunpack.c.l.s4 1934713408
        %v3005 = vunpack.c.0.s8 %v3004
        %v3006 = vperm.slane %v2998, %v3005
        %v3007 = vrot.slane %v2992, 4
        %v3008 = vsel %vm1001, 0.0, %v3007
        %v3009 = vrot.slane %v2996, 4
        %v3010 = vsel %vm1001, 0.0, %v3009
        %v3011 = vrot.slane %v3002, 4
        %v3012 = vsel %vm1001, 0.0, %v3011
        %v3013 = vrot.slane %v3006, 4
        %v3014 = vsel %vm1001, 0.0, %v3013
        %v3015 = vrot.slane %v518, 4
        %v3016 = vsel %vm1001, 0.0, %v3015
        %v3018 = vunpack.c.l.s4 1983009808
        %v3019 = vunpack.c.0.s8 %v3018
        %v3020 = vperm.slane %v518, %v3019
        %v3022 = vunpack.c.l.s4 1983009808
        %v3023 = vunpack.c.0.s8 %v3022
        %v3024 = vperm.slane %v3016, %v3023
        %v3025 = vrot.slane %v3020, 4
        %v3026 = vsel %vm1001, 0.0, %v3025
        %v3028 = vunpack.c.l.s4 1934713408
        %v3029 = vunpack.c.0.s8 %v3028
        %v3030 = vperm.slane %v3020, %v3029
        %v3032 = vunpack.c.l.s4 1934713408
        %v3033 = vunpack.c.0.s8 %v3032
        %v3034 = vperm.slane %v3026, %v3033
        %v3035 = vrot.slane %v3024, 4
        %v3036 = vsel %vm1001, 0.0, %v3035
        %v3038 = vunpack.c.l.s4 1934713408
        %v3039 = vunpack.c.0.s8 %v3038
        %v3040 = vperm.slane %v3024, %v3039
        %v3042 = vunpack.c.l.s4 1934713408
        %v3043 = vunpack.c.0.s8 %v3042
        %v3044 = vperm.slane %v3036, %v3043
        %v3045 = vrot.slane %v3030, 4
        %v3046 = vsel %vm1001, 0.0, %v3045
        %v3047 = vrot.slane %v3034, 4
        %v3048 = vsel %vm1001, 0.0, %v3047
        %v3049 = vrot.slane %v3040, 4
        %v3050 = vsel %vm1001, 0.0, %v3049
        %v3051 = vrot.slane %v3044, 4
        %v3052 = vsel %vm1001, 0.0, %v3051
        %v3053 = vrot.slane %v525, 4
        %v3054 = vsel %vm1001, 0.0, %v3053
        %v3056 = vunpack.c.l.s4 1983009808
        %v3057 = vunpack.c.0.s8 %v3056
        %v3058 = vperm.slane %v525, %v3057
        %v3060 = vunpack.c.l.s4 1983009808
        %v3061 = vunpack.c.0.s8 %v3060
        %v3062 = vperm.slane %v3054, %v3061
        %v3063 = vrot.slane %v3058, 4
        %v3064 = vsel %vm1001, 0.0, %v3063
        %v3066 = vunpack.c.l.s4 1934713408
        %v3067 = vunpack.c.0.s8 %v3066
        %v3068 = vperm.slane %v3058, %v3067
        %v3070 = vunpack.c.l.s4 1934713408
        %v3071 = vunpack.c.0.s8 %v3070
        %v3072 = vperm.slane %v3064, %v3071
        %v3073 = vrot.slane %v3062, 4
        %v3074 = vsel %vm1001, 0.0, %v3073
        %v3076 = vunpack.c.l.s4 1934713408
        %v3077 = vunpack.c.0.s8 %v3076
        %v3078 = vperm.slane %v3062, %v3077
        %v3080 = vunpack.c.l.s4 1934713408
        %v3081 = vunpack.c.0.s8 %v3080
        %v3082 = vperm.slane %v3074, %v3081
        %v3083 = vrot.slane %v3068, 4
        %v3084 = vsel %vm1001, 0.0, %v3083
        %v3085 = vrot.slane %v3072, 4
        %v3086 = vsel %vm1001, 0.0, %v3085
        %v3087 = vrot.slane %v3078, 4
        %v3088 = vsel %vm1001, 0.0, %v3087
        %v3089 = vrot.slane %v3082, 4
        %v3090 = vsel %vm1001, 0.0, %v3089
        %v3091 = vrot.slane %v531, 4
        %v3092 = vsel %vm1001, 0.0, %v3091
        %v3094 = vunpack.c.l.s4 1983009808
        %v3095 = vunpack.c.0.s8 %v3094
        %v3096 = vperm.slane %v531, %v3095
        %v3098 = vunpack.c.l.s4 1983009808
        %v3099 = vunpack.c.0.s8 %v3098
        %v3100 = vperm.slane %v3092, %v3099
        %v3101 = vrot.slane %v3096, 4
        %v3102 = vsel %vm1001, 0.0, %v3101
        %v3104 = vunpack.c.l.s4 1934713408
        %v3105 = vunpack.c.0.s8 %v3104
        %v3106 = vperm.slane %v3096, %v3105
        %v3108 = vunpack.c.l.s4 1934713408
        %v3109 = vunpack.c.0.s8 %v3108
        %v3110 = vperm.slane %v3102, %v3109
        %v3111 = vrot.slane %v3100, 4
        %v3112 = vsel %vm1001, 0.0, %v3111
        %v3114 = vunpack.c.l.s4 1934713408
        %v3115 = vunpack.c.0.s8 %v3114
        %v3116 = vperm.slane %v3100, %v3115
        %v3118 = vunpack.c.l.s4 1934713408
        %v3119 = vunpack.c.0.s8 %v3118
        %v3120 = vperm.slane %v3112, %v3119
        %v3121 = vrot.slane %v3106, 4
        %v3122 = vsel %vm1001, 0.0, %v3121
        %v3123 = vrot.slane %v3110, 4
        %v3124 = vsel %vm1001, 0.0, %v3123
        %v3125 = vrot.slane %v3116, 4
        %v3126 = vsel %vm1001, 0.0, %v3125
        %v3127 = vrot.slane %v3120, 4
        %v3128 = vsel %vm1001, 0.0, %v3127
        %v3129 = vrot.slane %v538, 4
        %v3130 = vsel %vm1001, 0.0, %v3129
        %v3132 = vunpack.c.l.s4 1983009808
        %v3133 = vunpack.c.0.s8 %v3132
        %v3134 = vperm.slane %v538, %v3133
        %v3136 = vunpack.c.l.s4 1983009808
        %v3137 = vunpack.c.0.s8 %v3136
        %v3138 = vperm.slane %v3130, %v3137
        %v3139 = vrot.slane %v3134, 4
        %v3140 = vsel %vm1001, 0.0, %v3139
        %v3142 = vunpack.c.l.s4 1934713408
        %v3143 = vunpack.c.0.s8 %v3142
        %v3144 = vperm.slane %v3134, %v3143
        %v3146 = vunpack.c.l.s4 1934713408
        %v3147 = vunpack.c.0.s8 %v3146
        %v3148 = vperm.slane %v3140, %v3147
        %v3149 = vrot.slane %v3138, 4
        %v3150 = vsel %vm1001, 0.0, %v3149
        %v3152 = vunpack.c.l.s4 1934713408
        %v3153 = vunpack.c.0.s8 %v3152
        %v3154 = vperm.slane %v3138, %v3153
        %v3156 = vunpack.c.l.s4 1934713408
        %v3157 = vunpack.c.0.s8 %v3156
        %v3158 = vperm.slane %v3150, %v3157
        %v3159 = vrot.slane %v3144, 4
        %v3160 = vsel %vm1001, 0.0, %v3159
        %v3161 = vrot.slane %v3148, 4
        %v3162 = vsel %vm1001, 0.0, %v3161
        %v3163 = vrot.slane %v3154, 4
        %v3164 = vsel %vm1001, 0.0, %v3163
        %v3165 = vrot.slane %v3158, 4
        %v3166 = vsel %vm1001, 0.0, %v3165
        %v3167 = vrot.slane %v544, 4
        %v3168 = vsel %vm1001, 0.0, %v3167
        %v3170 = vunpack.c.l.s4 1983009808
        %v3171 = vunpack.c.0.s8 %v3170
        %v3172 = vperm.slane %v544, %v3171
        %v3174 = vunpack.c.l.s4 1983009808
        %v3175 = vunpack.c.0.s8 %v3174
        %v3176 = vperm.slane %v3168, %v3175
        %v3177 = vrot.slane %v3172, 4
        %v3178 = vsel %vm1001, 0.0, %v3177
        %v3180 = vunpack.c.l.s4 1934713408
        %v3181 = vunpack.c.0.s8 %v3180
        %v3182 = vperm.slane %v3172, %v3181
        %v3184 = vunpack.c.l.s4 1934713408
        %v3185 = vunpack.c.0.s8 %v3184
        %v3186 = vperm.slane %v3178, %v3185
        %v3187 = vrot.slane %v3176, 4
        %v3188 = vsel %vm1001, 0.0, %v3187
        %v3190 = vunpack.c.l.s4 1934713408
        %v3191 = vunpack.c.0.s8 %v3190
        %v3192 = vperm.slane %v3176, %v3191
        %v3194 = vunpack.c.l.s4 1934713408
        %v3195 = vunpack.c.0.s8 %v3194
        %v3196 = vperm.slane %v3188, %v3195
        %v3197 = vrot.slane %v3182, 4
        %v3198 = vsel %vm1001, 0.0, %v3197
        %v3199 = vrot.slane %v3186, 4
        %v3200 = vsel %vm1001, 0.0, %v3199
        %v3201 = vrot.slane %v3192, 4
        %v3202 = vsel %vm1001, 0.0, %v3201
        %v3203 = vrot.slane %v3196, 4
        %v3204 = vsel %vm1001, 0.0, %v3203
        %v3205 = vrot.slane %v551, 4
        %v3206 = vsel %vm1001, 0.0, %v3205
        %v3208 = vunpack.c.l.s4 1983009808
        %v3209 = vunpack.c.0.s8 %v3208
        %v3210 = vperm.slane %v551, %v3209
        %v3212 = vunpack.c.l.s4 1983009808
        %v3213 = vunpack.c.0.s8 %v3212
        %v3214 = vperm.slane %v3206, %v3213
        %v3215 = vrot.slane %v3210, 4
        %v3216 = vsel %vm1001, 0.0, %v3215
        %v3218 = vunpack.c.l.s4 1934713408
        %v3219 = vunpack.c.0.s8 %v3218
        %v3220 = vperm.slane %v3210, %v3219
        %v3222 = vunpack.c.l.s4 1934713408
        %v3223 = vunpack.c.0.s8 %v3222
        %v3224 = vperm.slane %v3216, %v3223
        %v3225 = vrot.slane %v3214, 4
        %v3226 = vsel %vm1001, 0.0, %v3225
        %v3228 = vunpack.c.l.s4 1934713408
        %v3229 = vunpack.c.0.s8 %v3228
        %v3230 = vperm.slane %v3214, %v3229
        %v3232 = vunpack.c.l.s4 1934713408
        %v3233 = vunpack.c.0.s8 %v3232
        %v3234 = vperm.slane %v3226, %v3233
        %v3235 = vrot.slane %v3220, 4
        %v3236 = vsel %vm1001, 0.0, %v3235
        %v3237 = vrot.slane %v3224, 4
        %v3238 = vsel %vm1001, 0.0, %v3237
        %v3239 = vrot.slane %v3230, 4
        %v3240 = vsel %vm1001, 0.0, %v3239
        %v3241 = vrot.slane %v3234, 4
        %v3242 = vsel %vm1001, 0.0, %v3241
        %v3243 = vrot.slane %v557, 4
        %v3244 = vsel %vm1001, 0.0, %v3243
        %v3246 = vunpack.c.l.s4 1983009808
        %v3247 = vunpack.c.0.s8 %v3246
        %v3248 = vperm.slane %v557, %v3247
        %v3250 = vunpack.c.l.s4 1983009808
        %v3251 = vunpack.c.0.s8 %v3250
        %v3252 = vperm.slane %v3244, %v3251
        %v3253 = vrot.slane %v3248, 4
        %v3254 = vsel %vm1001, 0.0, %v3253
        %v3256 = vunpack.c.l.s4 1934713408
        %v3257 = vunpack.c.0.s8 %v3256
        %v3258 = vperm.slane %v3248, %v3257
        %v3260 = vunpack.c.l.s4 1934713408
        %v3261 = vunpack.c.0.s8 %v3260
        %v3262 = vperm.slane %v3254, %v3261
        %v3263 = vrot.slane %v3252, 4
        %v3264 = vsel %vm1001, 0.0, %v3263
        %v3266 = vunpack.c.l.s4 1934713408
        %v3267 = vunpack.c.0.s8 %v3266
        %v3268 = vperm.slane %v3252, %v3267
        %v3270 = vunpack.c.l.s4 1934713408
        %v3271 = vunpack.c.0.s8 %v3270
        %v3272 = vperm.slane %v3264, %v3271
        %v3273 = vrot.slane %v3258, 4
        %v3274 = vsel %vm1001, 0.0, %v3273
        %v3275 = vrot.slane %v3262, 4
        %v3276 = vsel %vm1001, 0.0, %v3275
        %v3277 = vrot.slane %v3268, 4
        %v3278 = vsel %vm1001, 0.0, %v3277
        %v3279 = vrot.slane %v3272, 4
        %v3280 = vsel %vm1001, 0.0, %v3279
        %v3281 = vrot.slane %v564, 4
        %v3282 = vsel %vm1001, 0.0, %v3281
        %v3284 = vunpack.c.l.s4 1983009808
        %v3285 = vunpack.c.0.s8 %v3284
        %v3286 = vperm.slane %v564, %v3285
        %v3288 = vunpack.c.l.s4 1983009808
        %v3289 = vunpack.c.0.s8 %v3288
        %v3290 = vperm.slane %v3282, %v3289
        %v3291 = vrot.slane %v3286, 4
        %v3292 = vsel %vm1001, 0.0, %v3291
        %v3294 = vunpack.c.l.s4 1934713408
        %v3295 = vunpack.c.0.s8 %v3294
        %v3296 = vperm.slane %v3286, %v3295
        %v3298 = vunpack.c.l.s4 1934713408
        %v3299 = vunpack.c.0.s8 %v3298
        %v3300 = vperm.slane %v3292, %v3299
        %v3301 = vrot.slane %v3290, 4
        %v3302 = vsel %vm1001, 0.0, %v3301
        %v3304 = vunpack.c.l.s4 1934713408
        %v3305 = vunpack.c.0.s8 %v3304
        %v3306 = vperm.slane %v3290, %v3305
        %v3308 = vunpack.c.l.s4 1934713408
        %v3309 = vunpack.c.0.s8 %v3308
        %v3310 = vperm.slane %v3302, %v3309
        %v3311 = vrot.slane %v3296, 4
        %v3312 = vsel %vm1001, 0.0, %v3311
        %v3313 = vrot.slane %v3300, 4
        %v3314 = vsel %vm1001, 0.0, %v3313
        %v3315 = vrot.slane %v3306, 4
        %v3316 = vsel %vm1001, 0.0, %v3315
        %v3317 = vrot.slane %v3310, 4
        %v3318 = vsel %vm1001, 0.0, %v3317
        %v3319 = vrot.slane %v570, 4
        %v3320 = vsel %vm1001, 0.0, %v3319
        %v3322 = vunpack.c.l.s4 1983009808
        %v3323 = vunpack.c.0.s8 %v3322
        %v3324 = vperm.slane %v570, %v3323
        %v3326 = vunpack.c.l.s4 1983009808
        %v3327 = vunpack.c.0.s8 %v3326
        %v3328 = vperm.slane %v3320, %v3327
        %v3329 = vrot.slane %v3324, 4
        %v3330 = vsel %vm1001, 0.0, %v3329
        %v3332 = vunpack.c.l.s4 1934713408
        %v3333 = vunpack.c.0.s8 %v3332
        %v3334 = vperm.slane %v3324, %v3333
        %v3336 = vunpack.c.l.s4 1934713408
        %v3337 = vunpack.c.0.s8 %v3336
        %v3338 = vperm.slane %v3330, %v3337
        %v3339 = vrot.slane %v3328, 4
        %v3340 = vsel %vm1001, 0.0, %v3339
        %v3342 = vunpack.c.l.s4 1934713408
        %v3343 = vunpack.c.0.s8 %v3342
        %v3344 = vperm.slane %v3328, %v3343
        %v3346 = vunpack.c.l.s4 1934713408
        %v3347 = vunpack.c.0.s8 %v3346
        %v3348 = vperm.slane %v3340, %v3347
        %v3349 = vrot.slane %v3334, 4
        %v3350 = vsel %vm1001, 0.0, %v3349
        %v3351 = vrot.slane %v3338, 4
        %v3352 = vsel %vm1001, 0.0, %v3351
        %v3353 = vrot.slane %v3344, 4
        %v3354 = vsel %vm1001, 0.0, %v3353
        %v3355 = vrot.slane %v3348, 4
        %v3356 = vsel %vm1001, 0.0, %v3355
        %v3357 = vrot.slane %v577, 4
        %v3358 = vsel %vm1001, 0.0, %v3357
        %v3360 = vunpack.c.l.s4 1983009808
        %v3361 = vunpack.c.0.s8 %v3360
        %v3362 = vperm.slane %v577, %v3361
        %v3364 = vunpack.c.l.s4 1983009808
        %v3365 = vunpack.c.0.s8 %v3364
        %v3366 = vperm.slane %v3358, %v3365
        %v3367 = vrot.slane %v3362, 4
        %v3368 = vsel %vm1001, 0.0, %v3367
        %v3370 = vunpack.c.l.s4 1934713408
        %v3371 = vunpack.c.0.s8 %v3370
        %v3372 = vperm.slane %v3362, %v3371
        %v3374 = vunpack.c.l.s4 1934713408
        %v3375 = vunpack.c.0.s8 %v3374
        %v3376 = vperm.slane %v3368, %v3375
        %v3377 = vrot.slane %v3366, 4
        %v3378 = vsel %vm1001, 0.0, %v3377
        %v3380 = vunpack.c.l.s4 1934713408
        %v3381 = vunpack.c.0.s8 %v3380
        %v3382 = vperm.slane %v3366, %v3381
        %v3384 = vunpack.c.l.s4 1934713408
        %v3385 = vunpack.c.0.s8 %v3384
        %v3386 = vperm.slane %v3378, %v3385
        %v3387 = vrot.slane %v3372, 4
        %v3388 = vsel %vm1001, 0.0, %v3387
        %v3389 = vrot.slane %v3376, 4
        %v3390 = vsel %vm1001, 0.0, %v3389
        %v3391 = vrot.slane %v3382, 4
        %v3392 = vsel %vm1001, 0.0, %v3391
        %v3393 = vrot.slane %v3386, 4
        %v3394 = vsel %vm1001, 0.0, %v3393
        %v3395 = vrot.slane %v583, 4
        %v3396 = vsel %vm1001, 0.0, %v3395
        %v3398 = vunpack.c.l.s4 1983009808
        %v3399 = vunpack.c.0.s8 %v3398
        %v3400 = vperm.slane %v583, %v3399
        %v3402 = vunpack.c.l.s4 1983009808
        %v3403 = vunpack.c.0.s8 %v3402
        %v3404 = vperm.slane %v3396, %v3403
        %v3405 = vrot.slane %v3400, 4
        %v3406 = vsel %vm1001, 0.0, %v3405
        %v3408 = vunpack.c.l.s4 1934713408
        %v3409 = vunpack.c.0.s8 %v3408
        %v3410 = vperm.slane %v3400, %v3409
        %v3412 = vunpack.c.l.s4 1934713408
        %v3413 = vunpack.c.0.s8 %v3412
        %v3414 = vperm.slane %v3406, %v3413
        %v3415 = vrot.slane %v3404, 4
        %v3416 = vsel %vm1001, 0.0, %v3415
        %v3418 = vunpack.c.l.s4 1934713408
        %v3419 = vunpack.c.0.s8 %v3418
        %v3420 = vperm.slane %v3404, %v3419
        %v3422 = vunpack.c.l.s4 1934713408
        %v3423 = vunpack.c.0.s8 %v3422
        %v3424 = vperm.slane %v3416, %v3423
        %v3425 = vrot.slane %v3410, 4
        %v3426 = vsel %vm1001, 0.0, %v3425
        %v3427 = vrot.slane %v3414, 4
        %v3428 = vsel %vm1001, 0.0, %v3427
        %v3429 = vrot.slane %v3420, 4
        %v3430 = vsel %vm1001, 0.0, %v3429
        %v3431 = vrot.slane %v3424, 4
        %v3432 = vsel %vm1001, 0.0, %v3431
        %v3433 = vrot.slane %v590, 4
        %v3434 = vsel %vm1001, 0.0, %v3433
        %v3436 = vunpack.c.l.s4 1983009808
        %v3437 = vunpack.c.0.s8 %v3436
        %v3438 = vperm.slane %v590, %v3437
        %v3440 = vunpack.c.l.s4 1983009808
        %v3441 = vunpack.c.0.s8 %v3440
        %v3442 = vperm.slane %v3434, %v3441
        %v3443 = vrot.slane %v3438, 4
        %v3444 = vsel %vm1001, 0.0, %v3443
        %v3446 = vunpack.c.l.s4 1934713408
        %v3447 = vunpack.c.0.s8 %v3446
        %v3448 = vperm.slane %v3438, %v3447
        %v3450 = vunpack.c.l.s4 1934713408
        %v3451 = vunpack.c.0.s8 %v3450
        %v3452 = vperm.slane %v3444, %v3451
        %v3453 = vrot.slane %v3442, 4
        %v3454 = vsel %vm1001, 0.0, %v3453
        %v3456 = vunpack.c.l.s4 1934713408
        %v3457 = vunpack.c.0.s8 %v3456
        %v3458 = vperm.slane %v3442, %v3457
        %v3460 = vunpack.c.l.s4 1934713408
        %v3461 = vunpack.c.0.s8 %v3460
        %v3462 = vperm.slane %v3454, %v3461
        %v3463 = vrot.slane %v3448, 4
        %v3464 = vsel %vm1001, 0.0, %v3463
        %v3465 = vrot.slane %v3452, 4
        %v3466 = vsel %vm1001, 0.0, %v3465
        %v3467 = vrot.slane %v3458, 4
        %v3468 = vsel %vm1001, 0.0, %v3467
        %v3469 = vrot.slane %v3462, 4
        %v3470 = vsel %vm1001, 0.0, %v3469
        %v3471 = vrot.slane %v596, 4
        %v3472 = vsel %vm1001, 0.0, %v3471
        %v3474 = vunpack.c.l.s4 1983009808
        %v3475 = vunpack.c.0.s8 %v3474
        %v3476 = vperm.slane %v596, %v3475
        %v3478 = vunpack.c.l.s4 1983009808
        %v3479 = vunpack.c.0.s8 %v3478
        %v3480 = vperm.slane %v3472, %v3479
        %v3481 = vrot.slane %v3476, 4
        %v3482 = vsel %vm1001, 0.0, %v3481
        %v3484 = vunpack.c.l.s4 1934713408
        %v3485 = vunpack.c.0.s8 %v3484
        %v3486 = vperm.slane %v3476, %v3485
        %v3488 = vunpack.c.l.s4 1934713408
        %v3489 = vunpack.c.0.s8 %v3488
        %v3490 = vperm.slane %v3482, %v3489
        %v3491 = vrot.slane %v3480, 4
        %v3492 = vsel %vm1001, 0.0, %v3491
        %v3494 = vunpack.c.l.s4 1934713408
        %v3495 = vunpack.c.0.s8 %v3494
        %v3496 = vperm.slane %v3480, %v3495
        %v3498 = vunpack.c.l.s4 1934713408
        %v3499 = vunpack.c.0.s8 %v3498
        %v3500 = vperm.slane %v3492, %v3499
        %v3501 = vrot.slane %v3486, 4
        %v3502 = vsel %vm1001, 0.0, %v3501
        %v3503 = vrot.slane %v3490, 4
        %v3504 = vsel %vm1001, 0.0, %v3503
        %v3505 = vrot.slane %v3496, 4
        %v3506 = vsel %vm1001, 0.0, %v3505
        %v3507 = vrot.slane %v3500, 4
        %v3508 = vsel %vm1001, 0.0, %v3507
        %v3509 = vrot.slane %v603, 4
        %v3510 = vsel %vm1001, 0.0, %v3509
        %v3512 = vunpack.c.l.s4 1983009808
        %v3513 = vunpack.c.0.s8 %v3512
        %v3514 = vperm.slane %v603, %v3513
        %v3516 = vunpack.c.l.s4 1983009808
        %v3517 = vunpack.c.0.s8 %v3516
        %v3518 = vperm.slane %v3510, %v3517
        %v3519 = vrot.slane %v3514, 4
        %v3520 = vsel %vm1001, 0.0, %v3519
        %v3522 = vunpack.c.l.s4 1934713408
        %v3523 = vunpack.c.0.s8 %v3522
        %v3524 = vperm.slane %v3514, %v3523
        %v3526 = vunpack.c.l.s4 1934713408
        %v3527 = vunpack.c.0.s8 %v3526
        %v3528 = vperm.slane %v3520, %v3527
        %v3529 = vrot.slane %v3518, 4
        %v3530 = vsel %vm1001, 0.0, %v3529
        %v3532 = vunpack.c.l.s4 1934713408
        %v3533 = vunpack.c.0.s8 %v3532
        %v3534 = vperm.slane %v3518, %v3533
        %v3536 = vunpack.c.l.s4 1934713408
        %v3537 = vunpack.c.0.s8 %v3536
        %v3538 = vperm.slane %v3530, %v3537
        %v3539 = vrot.slane %v3524, 4
        %v3540 = vsel %vm1001, 0.0, %v3539
        %v3541 = vrot.slane %v3528, 4
        %v3542 = vsel %vm1001, 0.0, %v3541
        %v3543 = vrot.slane %v3534, 4
        %v3544 = vsel %vm1001, 0.0, %v3543
        %v3545 = vrot.slane %v3538, 4
        %v3546 = vsel %vm1001, 0.0, %v3545
        %v3547 = vrot.slane %v609, 4
        %v3548 = vsel %vm1001, 0.0, %v3547
        %v3550 = vunpack.c.l.s4 1983009808
        %v3551 = vunpack.c.0.s8 %v3550
        %v3552 = vperm.slane %v609, %v3551
        %v3554 = vunpack.c.l.s4 1983009808
        %v3555 = vunpack.c.0.s8 %v3554
        %v3556 = vperm.slane %v3548, %v3555
        %v3557 = vrot.slane %v3552, 4
        %v3558 = vsel %vm1001, 0.0, %v3557
        %v3560 = vunpack.c.l.s4 1934713408
        %v3561 = vunpack.c.0.s8 %v3560
        %v3562 = vperm.slane %v3552, %v3561
        %v3564 = vunpack.c.l.s4 1934713408
        %v3565 = vunpack.c.0.s8 %v3564
        %v3566 = vperm.slane %v3558, %v3565
        %v3567 = vrot.slane %v3556, 4
        %v3568 = vsel %vm1001, 0.0, %v3567
        %v3570 = vunpack.c.l.s4 1934713408
        %v3571 = vunpack.c.0.s8 %v3570
        %v3572 = vperm.slane %v3556, %v3571
        %v3574 = vunpack.c.l.s4 1934713408
        %v3575 = vunpack.c.0.s8 %v3574
        %v3576 = vperm.slane %v3568, %v3575
        %v3577 = vrot.slane %v3562, 4
        %v3578 = vsel %vm1001, 0.0, %v3577
        %v3579 = vrot.slane %v3566, 4
        %v3580 = vsel %vm1001, 0.0, %v3579
        %v3581 = vrot.slane %v3572, 4
        %v3582 = vsel %vm1001, 0.0, %v3581
        %v3583 = vrot.slane %v3576, 4
        %v3584 = vsel %vm1001, 0.0, %v3583
        %v3585 = vrot.slane %v616, 4
        %v3586 = vsel %vm1001, 0.0, %v3585
        %v3588 = vunpack.c.l.s4 1983009808
        %v3589 = vunpack.c.0.s8 %v3588
        %v3590 = vperm.slane %v616, %v3589
        %v3592 = vunpack.c.l.s4 1983009808
        %v3593 = vunpack.c.0.s8 %v3592
        %v3594 = vperm.slane %v3586, %v3593
        %v3595 = vrot.slane %v3590, 4
        %v3596 = vsel %vm1001, 0.0, %v3595
        %v3598 = vunpack.c.l.s4 1934713408
        %v3599 = vunpack.c.0.s8 %v3598
        %v3600 = vperm.slane %v3590, %v3599
        %v3602 = vunpack.c.l.s4 1934713408
        %v3603 = vunpack.c.0.s8 %v3602
        %v3604 = vperm.slane %v3596, %v3603
        %v3605 = vrot.slane %v3594, 4
        %v3606 = vsel %vm1001, 0.0, %v3605
        %v3608 = vunpack.c.l.s4 1934713408
        %v3609 = vunpack.c.0.s8 %v3608
        %v3610 = vperm.slane %v3594, %v3609
        %v3612 = vunpack.c.l.s4 1934713408
        %v3613 = vunpack.c.0.s8 %v3612
        %v3614 = vperm.slane %v3606, %v3613
        %v3615 = vrot.slane %v3600, 4
        %v3616 = vsel %vm1001, 0.0, %v3615
        %v3617 = vrot.slane %v3604, 4
        %v3618 = vsel %vm1001, 0.0, %v3617
        %v3619 = vrot.slane %v3610, 4
        %v3620 = vsel %vm1001, 0.0, %v3619
        %v3621 = vrot.slane %v3614, 4
        %v3622 = vsel %vm1001, 0.0, %v3621
        %v3623 = vrot.slane %v622, 4
        %v3624 = vsel %vm1001, 0.0, %v3623
        %v3626 = vunpack.c.l.s4 1983009808
        %v3627 = vunpack.c.0.s8 %v3626
        %v3628 = vperm.slane %v622, %v3627
        %v3630 = vunpack.c.l.s4 1983009808
        %v3631 = vunpack.c.0.s8 %v3630
        %v3632 = vperm.slane %v3624, %v3631
        %v3633 = vrot.slane %v3628, 4
        %v3634 = vsel %vm1001, 0.0, %v3633
        %v3636 = vunpack.c.l.s4 1934713408
        %v3637 = vunpack.c.0.s8 %v3636
        %v3638 = vperm.slane %v3628, %v3637
        %v3640 = vunpack.c.l.s4 1934713408
        %v3641 = vunpack.c.0.s8 %v3640
        %v3642 = vperm.slane %v3634, %v3641
        %v3643 = vrot.slane %v3632, 4
        %v3644 = vsel %vm1001, 0.0, %v3643
        %v3646 = vunpack.c.l.s4 1934713408
        %v3647 = vunpack.c.0.s8 %v3646
        %v3648 = vperm.slane %v3632, %v3647
        %v3650 = vunpack.c.l.s4 1934713408
        %v3651 = vunpack.c.0.s8 %v3650
        %v3652 = vperm.slane %v3644, %v3651
        %v3653 = vrot.slane %v3638, 4
        %v3654 = vsel %vm1001, 0.0, %v3653
        %v3655 = vrot.slane %v3642, 4
        %v3656 = vsel %vm1001, 0.0, %v3655
        %v3657 = vrot.slane %v3648, 4
        %v3658 = vsel %vm1001, 0.0, %v3657
        %v3659 = vrot.slane %v3652, 4
        %v3660 = vsel %vm1001, 0.0, %v3659
        %v3661 = vrot.slane %v629, 4
        %v3662 = vsel %vm1001, 0.0, %v3661
        %v3664 = vunpack.c.l.s4 1983009808
        %v3665 = vunpack.c.0.s8 %v3664
        %v3666 = vperm.slane %v629, %v3665
        %v3668 = vunpack.c.l.s4 1983009808
        %v3669 = vunpack.c.0.s8 %v3668
        %v3670 = vperm.slane %v3662, %v3669
        %v3671 = vrot.slane %v3666, 4
        %v3672 = vsel %vm1001, 0.0, %v3671
        %v3674 = vunpack.c.l.s4 1934713408
        %v3675 = vunpack.c.0.s8 %v3674
        %v3676 = vperm.slane %v3666, %v3675
        %v3678 = vunpack.c.l.s4 1934713408
        %v3679 = vunpack.c.0.s8 %v3678
        %v3680 = vperm.slane %v3672, %v3679
        %v3681 = vrot.slane %v3670, 4
        %v3682 = vsel %vm1001, 0.0, %v3681
        %v3684 = vunpack.c.l.s4 1934713408
        %v3685 = vunpack.c.0.s8 %v3684
        %v3686 = vperm.slane %v3670, %v3685
        %v3688 = vunpack.c.l.s4 1934713408
        %v3689 = vunpack.c.0.s8 %v3688
        %v3690 = vperm.slane %v3682, %v3689
        %v3691 = vrot.slane %v3676, 4
        %v3692 = vsel %vm1001, 0.0, %v3691
        %v3693 = vrot.slane %v3680, 4
        %v3694 = vsel %vm1001, 0.0, %v3693
        %v3695 = vrot.slane %v3686, 4
        %v3696 = vsel %vm1001, 0.0, %v3695
        %v3697 = vrot.slane %v3690, 4
        %v3698 = vsel %vm1001, 0.0, %v3697
        %v3699 = vrot.slane %v635, 4
        %v3700 = vsel %vm1001, 0.0, %v3699
        %v3702 = vunpack.c.l.s4 1983009808
        %v3703 = vunpack.c.0.s8 %v3702
        %v3704 = vperm.slane %v635, %v3703
        %v3706 = vunpack.c.l.s4 1983009808
        %v3707 = vunpack.c.0.s8 %v3706
        %v3708 = vperm.slane %v3700, %v3707
        %v3709 = vrot.slane %v3704, 4
        %v3710 = vsel %vm1001, 0.0, %v3709
        %v3712 = vunpack.c.l.s4 1934713408
        %v3713 = vunpack.c.0.s8 %v3712
        %v3714 = vperm.slane %v3704, %v3713
        %v3716 = vunpack.c.l.s4 1934713408
        %v3717 = vunpack.c.0.s8 %v3716
        %v3718 = vperm.slane %v3710, %v3717
        %v3719 = vrot.slane %v3708, 4
        %v3720 = vsel %vm1001, 0.0, %v3719
        %v3722 = vunpack.c.l.s4 1934713408
        %v3723 = vunpack.c.0.s8 %v3722
        %v3724 = vperm.slane %v3708, %v3723
        %v3726 = vunpack.c.l.s4 1934713408
        %v3727 = vunpack.c.0.s8 %v3726
        %v3728 = vperm.slane %v3720, %v3727
        %v3729 = vrot.slane %v3714, 4
        %v3730 = vsel %vm1001, 0.0, %v3729
        %v3731 = vrot.slane %v3718, 4
        %v3732 = vsel %vm1001, 0.0, %v3731
        %v3733 = vrot.slane %v3724, 4
        %v3734 = vsel %vm1001, 0.0, %v3733
        %v3735 = vrot.slane %v3728, 4
        %v3736 = vsel %vm1001, 0.0, %v3735
        %v3737 = vrot.slane %v642, 4
        %v3738 = vsel %vm1001, 0.0, %v3737
        %v3740 = vunpack.c.l.s4 1983009808
        %v3741 = vunpack.c.0.s8 %v3740
        %v3742 = vperm.slane %v642, %v3741
        %v3744 = vunpack.c.l.s4 1983009808
        %v3745 = vunpack.c.0.s8 %v3744
        %v3746 = vperm.slane %v3738, %v3745
        %v3747 = vrot.slane %v3742, 4
        %v3748 = vsel %vm1001, 0.0, %v3747
        %v3750 = vunpack.c.l.s4 1934713408
        %v3751 = vunpack.c.0.s8 %v3750
        %v3752 = vperm.slane %v3742, %v3751
        %v3754 = vunpack.c.l.s4 1934713408
        %v3755 = vunpack.c.0.s8 %v3754
        %v3756 = vperm.slane %v3748, %v3755
        %v3757 = vrot.slane %v3746, 4
        %v3758 = vsel %vm1001, 0.0, %v3757
        %v3760 = vunpack.c.l.s4 1934713408
        %v3761 = vunpack.c.0.s8 %v3760
        %v3762 = vperm.slane %v3746, %v3761
        %v3764 = vunpack.c.l.s4 1934713408
        %v3765 = vunpack.c.0.s8 %v3764
        %v3766 = vperm.slane %v3758, %v3765
        %v3767 = vrot.slane %v3752, 4
        %v3768 = vsel %vm1001, 0.0, %v3767
        %v3769 = vrot.slane %v3756, 4
        %v3770 = vsel %vm1001, 0.0, %v3769
        %v3771 = vrot.slane %v3762, 4
        %v3772 = vsel %vm1001, 0.0, %v3771
        %v3773 = vrot.slane %v3766, 4
        %v3774 = vsel %vm1001, 0.0, %v3773
        %v3775 = vrot.slane %v648, 4
        %v3776 = vsel %vm1001, 0.0, %v3775
        %v3778 = vunpack.c.l.s4 1983009808
        %v3779 = vunpack.c.0.s8 %v3778
        %v3780 = vperm.slane %v648, %v3779
        %v3782 = vunpack.c.l.s4 1983009808
        %v3783 = vunpack.c.0.s8 %v3782
        %v3784 = vperm.slane %v3776, %v3783
        %v3785 = vrot.slane %v3780, 4
        %v3786 = vsel %vm1001, 0.0, %v3785
        %v3788 = vunpack.c.l.s4 1934713408
        %v3789 = vunpack.c.0.s8 %v3788
        %v3790 = vperm.slane %v3780, %v3789
        %v3792 = vunpack.c.l.s4 1934713408
        %v3793 = vunpack.c.0.s8 %v3792
        %v3794 = vperm.slane %v3786, %v3793
        %v3795 = vrot.slane %v3784, 4
        %v3796 = vsel %vm1001, 0.0, %v3795
        %v3798 = vunpack.c.l.s4 1934713408
        %v3799 = vunpack.c.0.s8 %v3798
        %v3800 = vperm.slane %v3784, %v3799
        %v3802 = vunpack.c.l.s4 1934713408
        %v3803 = vunpack.c.0.s8 %v3802
        %v3804 = vperm.slane %v3796, %v3803
        %v3805 = vrot.slane %v3790, 4
        %v3806 = vsel %vm1001, 0.0, %v3805
        %v3807 = vrot.slane %v3794, 4
        %v3808 = vsel %vm1001, 0.0, %v3807
        %v3809 = vrot.slane %v3800, 4
        %v3810 = vsel %vm1001, 0.0, %v3809
        %v3811 = vrot.slane %v3804, 4
        %v3812 = vsel %vm1001, 0.0, %v3811
        %v3813 = vrot.slane %v655, 4
        %v3814 = vsel %vm1001, 0.0, %v3813
        %v3816 = vunpack.c.l.s4 1983009808
        %v3817 = vunpack.c.0.s8 %v3816
        %v3818 = vperm.slane %v655, %v3817
        %v3820 = vunpack.c.l.s4 1983009808
        %v3821 = vunpack.c.0.s8 %v3820
        %v3822 = vperm.slane %v3814, %v3821
        %v3823 = vrot.slane %v3818, 4
        %v3824 = vsel %vm1001, 0.0, %v3823
        %v3826 = vunpack.c.l.s4 1934713408
        %v3827 = vunpack.c.0.s8 %v3826
        %v3828 = vperm.slane %v3818, %v3827
        %v3830 = vunpack.c.l.s4 1934713408
        %v3831 = vunpack.c.0.s8 %v3830
        %v3832 = vperm.slane %v3824, %v3831
        %v3833 = vrot.slane %v3822, 4
        %v3834 = vsel %vm1001, 0.0, %v3833
        %v3836 = vunpack.c.l.s4 1934713408
        %v3837 = vunpack.c.0.s8 %v3836
        %v3838 = vperm.slane %v3822, %v3837
        %v3840 = vunpack.c.l.s4 1934713408
        %v3841 = vunpack.c.0.s8 %v3840
        %v3842 = vperm.slane %v3834, %v3841
        %v3843 = vrot.slane %v3828, 4
        %v3844 = vsel %vm1001, 0.0, %v3843
        %v3845 = vrot.slane %v3832, 4
        %v3846 = vsel %vm1001, 0.0, %v3845
        %v3847 = vrot.slane %v3838, 4
        %v3848 = vsel %vm1001, 0.0, %v3847
        %v3849 = vrot.slane %v3842, 4
        %v3850 = vsel %vm1001, 0.0, %v3849
        %v3851 = vrot.slane %v661, 4
        %v3852 = vsel %vm1001, 0.0, %v3851
        %v3854 = vunpack.c.l.s4 1983009808
        %v3855 = vunpack.c.0.s8 %v3854
        %v3856 = vperm.slane %v661, %v3855
        %v3858 = vunpack.c.l.s4 1983009808
        %v3859 = vunpack.c.0.s8 %v3858
        %v3860 = vperm.slane %v3852, %v3859
        %v3861 = vrot.slane %v3856, 4
        %v3862 = vsel %vm1001, 0.0, %v3861
        %v3864 = vunpack.c.l.s4 1934713408
        %v3865 = vunpack.c.0.s8 %v3864
        %v3866 = vperm.slane %v3856, %v3865
        %v3868 = vunpack.c.l.s4 1934713408
        %v3869 = vunpack.c.0.s8 %v3868
        %v3870 = vperm.slane %v3862, %v3869
        %v3871 = vrot.slane %v3860, 4
        %v3872 = vsel %vm1001, 0.0, %v3871
        %v3874 = vunpack.c.l.s4 1934713408
        %v3875 = vunpack.c.0.s8 %v3874
        %v3876 = vperm.slane %v3860, %v3875
        %v3878 = vunpack.c.l.s4 1934713408
        %v3879 = vunpack.c.0.s8 %v3878
        %v3880 = vperm.slane %v3872, %v3879
        %v3881 = vrot.slane %v3866, 4
        %v3882 = vsel %vm1001, 0.0, %v3881
        %v3883 = vrot.slane %v3870, 4
        %v3884 = vsel %vm1001, 0.0, %v3883
        %v3885 = vrot.slane %v3876, 4
        %v3886 = vsel %vm1001, 0.0, %v3885
        %v3887 = vrot.slane %v3880, 4
        %v3888 = vsel %vm1001, 0.0, %v3887
        %v3889 = vrot.slane %v668, 4
        %v3890 = vsel %vm1001, 0.0, %v3889
        %v3892 = vunpack.c.l.s4 1983009808
        %v3893 = vunpack.c.0.s8 %v3892
        %v3894 = vperm.slane %v668, %v3893
        %v3896 = vunpack.c.l.s4 1983009808
        %v3897 = vunpack.c.0.s8 %v3896
        %v3898 = vperm.slane %v3890, %v3897
        %v3899 = vrot.slane %v3894, 4
        %v3900 = vsel %vm1001, 0.0, %v3899
        %v3902 = vunpack.c.l.s4 1934713408
        %v3903 = vunpack.c.0.s8 %v3902
        %v3904 = vperm.slane %v3894, %v3903
        %v3906 = vunpack.c.l.s4 1934713408
        %v3907 = vunpack.c.0.s8 %v3906
        %v3908 = vperm.slane %v3900, %v3907
        %v3909 = vrot.slane %v3898, 4
        %v3910 = vsel %vm1001, 0.0, %v3909
        %v3912 = vunpack.c.l.s4 1934713408
        %v3913 = vunpack.c.0.s8 %v3912
        %v3914 = vperm.slane %v3898, %v3913
        %v3916 = vunpack.c.l.s4 1934713408
        %v3917 = vunpack.c.0.s8 %v3916
        %v3918 = vperm.slane %v3910, %v3917
        %v3919 = vrot.slane %v3904, 4
        %v3920 = vsel %vm1001, 0.0, %v3919
        %v3921 = vrot.slane %v3908, 4
        %v3922 = vsel %vm1001, 0.0, %v3921
        %v3923 = vrot.slane %v3914, 4
        %v3924 = vsel %vm1001, 0.0, %v3923
        %v3925 = vrot.slane %v3918, 4
        %v3926 = vsel %vm1001, 0.0, %v3925
        %v3927 = vrot.slane %v674, 4
        %v3928 = vsel %vm1001, 0.0, %v3927
        %v3930 = vunpack.c.l.s4 1983009808
        %v3931 = vunpack.c.0.s8 %v3930
        %v3932 = vperm.slane %v674, %v3931
        %v3934 = vunpack.c.l.s4 1983009808
        %v3935 = vunpack.c.0.s8 %v3934
        %v3936 = vperm.slane %v3928, %v3935
        %v3937 = vrot.slane %v3932, 4
        %v3938 = vsel %vm1001, 0.0, %v3937
        %v3940 = vunpack.c.l.s4 1934713408
        %v3941 = vunpack.c.0.s8 %v3940
        %v3942 = vperm.slane %v3932, %v3941
        %v3944 = vunpack.c.l.s4 1934713408
        %v3945 = vunpack.c.0.s8 %v3944
        %v3946 = vperm.slane %v3938, %v3945
        %v3947 = vrot.slane %v3936, 4
        %v3948 = vsel %vm1001, 0.0, %v3947
        %v3950 = vunpack.c.l.s4 1934713408
        %v3951 = vunpack.c.0.s8 %v3950
        %v3952 = vperm.slane %v3936, %v3951
        %v3954 = vunpack.c.l.s4 1934713408
        %v3955 = vunpack.c.0.s8 %v3954
        %v3956 = vperm.slane %v3948, %v3955
        %v3957 = vrot.slane %v3942, 4
        %v3958 = vsel %vm1001, 0.0, %v3957
        %v3959 = vrot.slane %v3946, 4
        %v3960 = vsel %vm1001, 0.0, %v3959
        %v3961 = vrot.slane %v3952, 4
        %v3962 = vsel %vm1001, 0.0, %v3961
        %v3963 = vrot.slane %v3956, 4
        %v3964 = vsel %vm1001, 0.0, %v3963
        %v3965 = vrot.slane %v681, 4
        %v3966 = vsel %vm1001, 0.0, %v3965
        %v3968 = vunpack.c.l.s4 1983009808
        %v3969 = vunpack.c.0.s8 %v3968
        %v3970 = vperm.slane %v681, %v3969
        %v3972 = vunpack.c.l.s4 1983009808
        %v3973 = vunpack.c.0.s8 %v3972
        %v3974 = vperm.slane %v3966, %v3973
        %v3975 = vrot.slane %v3970, 4
        %v3976 = vsel %vm1001, 0.0, %v3975
        %v3978 = vunpack.c.l.s4 1934713408
        %v3979 = vunpack.c.0.s8 %v3978
        %v3980 = vperm.slane %v3970, %v3979
        %v3982 = vunpack.c.l.s4 1934713408
        %v3983 = vunpack.c.0.s8 %v3982
        %v3984 = vperm.slane %v3976, %v3983
        %v3985 = vrot.slane %v3974, 4
        %v3986 = vsel %vm1001, 0.0, %v3985
        %v3988 = vunpack.c.l.s4 1934713408
        %v3989 = vunpack.c.0.s8 %v3988
        %v3990 = vperm.slane %v3974, %v3989
        %v3992 = vunpack.c.l.s4 1934713408
        %v3993 = vunpack.c.0.s8 %v3992
        %v3994 = vperm.slane %v3986, %v3993
        %v3995 = vrot.slane %v3980, 4
        %v3996 = vsel %vm1001, 0.0, %v3995
        %v3997 = vrot.slane %v3984, 4
        %v3998 = vsel %vm1001, 0.0, %v3997
        %v3999 = vrot.slane %v3990, 4
        %v4000 = vsel %vm1001, 0.0, %v3999
        %v4001 = vrot.slane %v3994, 4
        %v4002 = vsel %vm1001, 0.0, %v4001
        %v4003 = vrot.slane %v687, 4
        %v4004 = vsel %vm1001, 0.0, %v4003
        %v4006 = vunpack.c.l.s4 1983009808
        %v4007 = vunpack.c.0.s8 %v4006
        %v4008 = vperm.slane %v687, %v4007
        %v4010 = vunpack.c.l.s4 1983009808
        %v4011 = vunpack.c.0.s8 %v4010
        %v4012 = vperm.slane %v4004, %v4011
        %v4013 = vrot.slane %v4008, 4
        %v4014 = vsel %vm1001, 0.0, %v4013
        %v4016 = vunpack.c.l.s4 1934713408
        %v4017 = vunpack.c.0.s8 %v4016
        %v4018 = vperm.slane %v4008, %v4017
        %v4020 = vunpack.c.l.s4 1934713408
        %v4021 = vunpack.c.0.s8 %v4020
        %v4022 = vperm.slane %v4014, %v4021
        %v4023 = vrot.slane %v4012, 4
        %v4024 = vsel %vm1001, 0.0, %v4023
        %v4026 = vunpack.c.l.s4 1934713408
        %v4027 = vunpack.c.0.s8 %v4026
        %v4028 = vperm.slane %v4012, %v4027
        %v4030 = vunpack.c.l.s4 1934713408
        %v4031 = vunpack.c.0.s8 %v4030
        %v4032 = vperm.slane %v4024, %v4031
        %v4033 = vrot.slane %v4018, 4
        %v4034 = vsel %vm1001, 0.0, %v4033
        %v4035 = vrot.slane %v4022, 4
        %v4036 = vsel %vm1001, 0.0, %v4035
        %v4037 = vrot.slane %v4028, 4
        %v4038 = vsel %vm1001, 0.0, %v4037
        %v4039 = vrot.slane %v4032, 4
        %v4040 = vsel %vm1001, 0.0, %v4039
        %v4041 = vrot.slane %v694, 4
        %v4042 = vsel %vm1001, 0.0, %v4041
        %v4044 = vunpack.c.l.s4 1983009808
        %v4045 = vunpack.c.0.s8 %v4044
        %v4046 = vperm.slane %v694, %v4045
        %v4048 = vunpack.c.l.s4 1983009808
        %v4049 = vunpack.c.0.s8 %v4048
        %v4050 = vperm.slane %v4042, %v4049
        %v4051 = vrot.slane %v4046, 4
        %v4052 = vsel %vm1001, 0.0, %v4051
        %v4054 = vunpack.c.l.s4 1934713408
        %v4055 = vunpack.c.0.s8 %v4054
        %v4056 = vperm.slane %v4046, %v4055
        %v4058 = vunpack.c.l.s4 1934713408
        %v4059 = vunpack.c.0.s8 %v4058
        %v4060 = vperm.slane %v4052, %v4059
        %v4061 = vrot.slane %v4050, 4
        %v4062 = vsel %vm1001, 0.0, %v4061
        %v4064 = vunpack.c.l.s4 1934713408
        %v4065 = vunpack.c.0.s8 %v4064
        %v4066 = vperm.slane %v4050, %v4065
        %v4068 = vunpack.c.l.s4 1934713408
        %v4069 = vunpack.c.0.s8 %v4068
        %v4070 = vperm.slane %v4062, %v4069
        %v4071 = vrot.slane %v4056, 4
        %v4072 = vsel %vm1001, 0.0, %v4071
        %v4073 = vrot.slane %v4060, 4
        %v4074 = vsel %vm1001, 0.0, %v4073
        %v4075 = vrot.slane %v4066, 4
        %v4076 = vsel %vm1001, 0.0, %v4075
        %v4077 = vrot.slane %v4070, 4
        %v4078 = vsel %vm1001, 0.0, %v4077
        %v4079 = vrot.slane %v700, 4
        %v4080 = vsel %vm1001, 0.0, %v4079
        %v4082 = vunpack.c.l.s4 1983009808
        %v4083 = vunpack.c.0.s8 %v4082
        %v4084 = vperm.slane %v700, %v4083
        %v4086 = vunpack.c.l.s4 1983009808
        %v4087 = vunpack.c.0.s8 %v4086
        %v4088 = vperm.slane %v4080, %v4087
        %v4089 = vrot.slane %v4084, 4
        %v4090 = vsel %vm1001, 0.0, %v4089
        %v4092 = vunpack.c.l.s4 1934713408
        %v4093 = vunpack.c.0.s8 %v4092
        %v4094 = vperm.slane %v4084, %v4093
        %v4096 = vunpack.c.l.s4 1934713408
        %v4097 = vunpack.c.0.s8 %v4096
        %v4098 = vperm.slane %v4090, %v4097
        %v4099 = vrot.slane %v4088, 4
        %v4100 = vsel %vm1001, 0.0, %v4099
        %v4102 = vunpack.c.l.s4 1934713408
        %v4103 = vunpack.c.0.s8 %v4102
        %v4104 = vperm.slane %v4088, %v4103
        %v4106 = vunpack.c.l.s4 1934713408
        %v4107 = vunpack.c.0.s8 %v4106
        %v4108 = vperm.slane %v4100, %v4107
        %v4109 = vrot.slane %v4094, 4
        %v4110 = vsel %vm1001, 0.0, %v4109
        %v4111 = vrot.slane %v4098, 4
        %v4112 = vsel %vm1001, 0.0, %v4111
        %v4113 = vrot.slane %v4104, 4
        %v4114 = vsel %vm1001, 0.0, %v4113
        %v4115 = vrot.slane %v4108, 4
        %v4116 = vsel %vm1001, 0.0, %v4115
        %v4117 = vrot.slane %v707, 4
        %v4118 = vsel %vm1001, 0.0, %v4117
        %v4120 = vunpack.c.l.s4 1983009808
        %v4121 = vunpack.c.0.s8 %v4120
        %v4122 = vperm.slane %v707, %v4121
        %v4124 = vunpack.c.l.s4 1983009808
        %v4125 = vunpack.c.0.s8 %v4124
        %v4126 = vperm.slane %v4118, %v4125
        %v4127 = vrot.slane %v4122, 4
        %v4128 = vsel %vm1001, 0.0, %v4127
        %v4130 = vunpack.c.l.s4 1934713408
        %v4131 = vunpack.c.0.s8 %v4130
        %v4132 = vperm.slane %v4122, %v4131
        %v4134 = vunpack.c.l.s4 1934713408
        %v4135 = vunpack.c.0.s8 %v4134
        %v4136 = vperm.slane %v4128, %v4135
        %v4137 = vrot.slane %v4126, 4
        %v4138 = vsel %vm1001, 0.0, %v4137
        %v4140 = vunpack.c.l.s4 1934713408
        %v4141 = vunpack.c.0.s8 %v4140
        %v4142 = vperm.slane %v4126, %v4141
        %v4144 = vunpack.c.l.s4 1934713408
        %v4145 = vunpack.c.0.s8 %v4144
        %v4146 = vperm.slane %v4138, %v4145
        %v4147 = vrot.slane %v4132, 4
        %v4148 = vsel %vm1001, 0.0, %v4147
        %v4149 = vrot.slane %v4136, 4
        %v4150 = vsel %vm1001, 0.0, %v4149
        %v4151 = vrot.slane %v4142, 4
        %v4152 = vsel %vm1001, 0.0, %v4151
        %v4153 = vrot.slane %v4146, 4
        %v4154 = vsel %vm1001, 0.0, %v4153
        %v4155 = vrot.slane %v713, 4
        %v4156 = vsel %vm1001, 0.0, %v4155
        %v4158 = vunpack.c.l.s4 1983009808
        %v4159 = vunpack.c.0.s8 %v4158
        %v4160 = vperm.slane %v713, %v4159
        %v4162 = vunpack.c.l.s4 1983009808
        %v4163 = vunpack.c.0.s8 %v4162
        %v4164 = vperm.slane %v4156, %v4163
        %v4165 = vrot.slane %v4160, 4
        %v4166 = vsel %vm1001, 0.0, %v4165
        %v4168 = vunpack.c.l.s4 1934713408
        %v4169 = vunpack.c.0.s8 %v4168
        %v4170 = vperm.slane %v4160, %v4169
        %v4172 = vunpack.c.l.s4 1934713408
        %v4173 = vunpack.c.0.s8 %v4172
        %v4174 = vperm.slane %v4166, %v4173
        %v4175 = vrot.slane %v4164, 4
        %v4176 = vsel %vm1001, 0.0, %v4175
        %v4178 = vunpack.c.l.s4 1934713408
        %v4179 = vunpack.c.0.s8 %v4178
        %v4180 = vperm.slane %v4164, %v4179
        %v4182 = vunpack.c.l.s4 1934713408
        %v4183 = vunpack.c.0.s8 %v4182
        %v4184 = vperm.slane %v4176, %v4183
        %v4185 = vrot.slane %v4170, 4
        %v4186 = vsel %vm1001, 0.0, %v4185
        %v4187 = vrot.slane %v4174, 4
        %v4188 = vsel %vm1001, 0.0, %v4187
        %v4189 = vrot.slane %v4180, 4
        %v4190 = vsel %vm1001, 0.0, %v4189
        %v4191 = vrot.slane %v4184, 4
        %v4192 = vsel %vm1001, 0.0, %v4191
        %v4193 = vrot.slane %v720, 4
        %v4194 = vsel %vm1001, 0.0, %v4193
        %v4196 = vunpack.c.l.s4 1983009808
        %v4197 = vunpack.c.0.s8 %v4196
        %v4198 = vperm.slane %v720, %v4197
        %v4200 = vunpack.c.l.s4 1983009808
        %v4201 = vunpack.c.0.s8 %v4200
        %v4202 = vperm.slane %v4194, %v4201
        %v4203 = vrot.slane %v4198, 4
        %v4204 = vsel %vm1001, 0.0, %v4203
        %v4206 = vunpack.c.l.s4 1934713408
        %v4207 = vunpack.c.0.s8 %v4206
        %v4208 = vperm.slane %v4198, %v4207
        %v4210 = vunpack.c.l.s4 1934713408
        %v4211 = vunpack.c.0.s8 %v4210
        %v4212 = vperm.slane %v4204, %v4211
        %v4213 = vrot.slane %v4202, 4
        %v4214 = vsel %vm1001, 0.0, %v4213
        %v4216 = vunpack.c.l.s4 1934713408
        %v4217 = vunpack.c.0.s8 %v4216
        %v4218 = vperm.slane %v4202, %v4217
        %v4220 = vunpack.c.l.s4 1934713408
        %v4221 = vunpack.c.0.s8 %v4220
        %v4222 = vperm.slane %v4214, %v4221
        %v4223 = vrot.slane %v4208, 4
        %v4224 = vsel %vm1001, 0.0, %v4223
        %v4225 = vrot.slane %v4212, 4
        %v4226 = vsel %vm1001, 0.0, %v4225
        %v4227 = vrot.slane %v4218, 4
        %v4228 = vsel %vm1001, 0.0, %v4227
        %v4229 = vrot.slane %v4222, 4
        %v4230 = vsel %vm1001, 0.0, %v4229
        %v4231 = vrot.slane %v726, 4
        %v4232 = vsel %vm1001, 0.0, %v4231
        %v4234 = vunpack.c.l.s4 1983009808
        %v4235 = vunpack.c.0.s8 %v4234
        %v4236 = vperm.slane %v726, %v4235
        %v4238 = vunpack.c.l.s4 1983009808
        %v4239 = vunpack.c.0.s8 %v4238
        %v4240 = vperm.slane %v4232, %v4239
        %v4241 = vrot.slane %v4236, 4
        %v4242 = vsel %vm1001, 0.0, %v4241
        %v4244 = vunpack.c.l.s4 1934713408
        %v4245 = vunpack.c.0.s8 %v4244
        %v4246 = vperm.slane %v4236, %v4245
        %v4248 = vunpack.c.l.s4 1934713408
        %v4249 = vunpack.c.0.s8 %v4248
        %v4250 = vperm.slane %v4242, %v4249
        %v4251 = vrot.slane %v4240, 4
        %v4252 = vsel %vm1001, 0.0, %v4251
        %v4254 = vunpack.c.l.s4 1934713408
        %v4255 = vunpack.c.0.s8 %v4254
        %v4256 = vperm.slane %v4240, %v4255
        %v4258 = vunpack.c.l.s4 1934713408
        %v4259 = vunpack.c.0.s8 %v4258
        %v4260 = vperm.slane %v4252, %v4259
        %v4261 = vrot.slane %v4246, 4
        %v4262 = vsel %vm1001, 0.0, %v4261
        %v4263 = vrot.slane %v4250, 4
        %v4264 = vsel %vm1001, 0.0, %v4263
        %v4265 = vrot.slane %v4256, 4
        %v4266 = vsel %vm1001, 0.0, %v4265
        %v4267 = vrot.slane %v4260, 4
        %v4268 = vsel %vm1001, 0.0, %v4267
        %v4269 = vrot.slane %v733, 4
        %v4270 = vsel %vm1001, 0.0, %v4269
        %v4272 = vunpack.c.l.s4 1983009808
        %v4273 = vunpack.c.0.s8 %v4272
        %v4274 = vperm.slane %v733, %v4273
        %v4276 = vunpack.c.l.s4 1983009808
        %v4277 = vunpack.c.0.s8 %v4276
        %v4278 = vperm.slane %v4270, %v4277
        %v4279 = vrot.slane %v4274, 4
        %v4280 = vsel %vm1001, 0.0, %v4279
        %v4282 = vunpack.c.l.s4 1934713408
        %v4283 = vunpack.c.0.s8 %v4282
        %v4284 = vperm.slane %v4274, %v4283
        %v4286 = vunpack.c.l.s4 1934713408
        %v4287 = vunpack.c.0.s8 %v4286
        %v4288 = vperm.slane %v4280, %v4287
        %v4289 = vrot.slane %v4278, 4
        %v4290 = vsel %vm1001, 0.0, %v4289
        %v4292 = vunpack.c.l.s4 1934713408
        %v4293 = vunpack.c.0.s8 %v4292
        %v4294 = vperm.slane %v4278, %v4293
        %v4296 = vunpack.c.l.s4 1934713408
        %v4297 = vunpack.c.0.s8 %v4296
        %v4298 = vperm.slane %v4290, %v4297
        %v4299 = vrot.slane %v4284, 4
        %v4300 = vsel %vm1001, 0.0, %v4299
        %v4301 = vrot.slane %v4288, 4
        %v4302 = vsel %vm1001, 0.0, %v4301
        %v4303 = vrot.slane %v4294, 4
        %v4304 = vsel %vm1001, 0.0, %v4303
        %v4305 = vrot.slane %v4298, 4
        %v4306 = vsel %vm1001, 0.0, %v4305
        %v4307 = vrot.slane %v739, 4
        %v4308 = vsel %vm1001, 0.0, %v4307
        %v4310 = vunpack.c.l.s4 1983009808
        %v4311 = vunpack.c.0.s8 %v4310
        %v4312 = vperm.slane %v739, %v4311
        %v4314 = vunpack.c.l.s4 1983009808
        %v4315 = vunpack.c.0.s8 %v4314
        %v4316 = vperm.slane %v4308, %v4315
        %v4317 = vrot.slane %v4312, 4
        %v4318 = vsel %vm1001, 0.0, %v4317
        %v4320 = vunpack.c.l.s4 1934713408
        %v4321 = vunpack.c.0.s8 %v4320
        %v4322 = vperm.slane %v4312, %v4321
        %v4324 = vunpack.c.l.s4 1934713408
        %v4325 = vunpack.c.0.s8 %v4324
        %v4326 = vperm.slane %v4318, %v4325
        %v4327 = vrot.slane %v4316, 4
        %v4328 = vsel %vm1001, 0.0, %v4327
        %v4330 = vunpack.c.l.s4 1934713408
        %v4331 = vunpack.c.0.s8 %v4330
        %v4332 = vperm.slane %v4316, %v4331
        %v4334 = vunpack.c.l.s4 1934713408
        %v4335 = vunpack.c.0.s8 %v4334
        %v4336 = vperm.slane %v4328, %v4335
        %v4337 = vrot.slane %v4322, 4
        %v4338 = vsel %vm1001, 0.0, %v4337
        %v4339 = vrot.slane %v4326, 4
        %v4340 = vsel %vm1001, 0.0, %v4339
        %v4341 = vrot.slane %v4332, 4
        %v4342 = vsel %vm1001, 0.0, %v4341
        %v4343 = vrot.slane %v4336, 4
        %v4344 = vsel %vm1001, 0.0, %v4343
        %v4345 = vrot.slane %v746, 4
        %v4346 = vsel %vm1001, 0.0, %v4345
        %v4348 = vunpack.c.l.s4 1983009808
        %v4349 = vunpack.c.0.s8 %v4348
        %v4350 = vperm.slane %v746, %v4349
        %v4352 = vunpack.c.l.s4 1983009808
        %v4353 = vunpack.c.0.s8 %v4352
        %v4354 = vperm.slane %v4346, %v4353
        %v4355 = vrot.slane %v4350, 4
        %v4356 = vsel %vm1001, 0.0, %v4355
        %v4358 = vunpack.c.l.s4 1934713408
        %v4359 = vunpack.c.0.s8 %v4358
        %v4360 = vperm.slane %v4350, %v4359
        %v4362 = vunpack.c.l.s4 1934713408
        %v4363 = vunpack.c.0.s8 %v4362
        %v4364 = vperm.slane %v4356, %v4363
        %v4365 = vrot.slane %v4354, 4
        %v4366 = vsel %vm1001, 0.0, %v4365
        %v4368 = vunpack.c.l.s4 1934713408
        %v4369 = vunpack.c.0.s8 %v4368
        %v4370 = vperm.slane %v4354, %v4369
        %v4372 = vunpack.c.l.s4 1934713408
        %v4373 = vunpack.c.0.s8 %v4372
        %v4374 = vperm.slane %v4366, %v4373
        %v4375 = vrot.slane %v4360, 4
        %v4376 = vsel %vm1001, 0.0, %v4375
        %v4377 = vrot.slane %v4364, 4
        %v4378 = vsel %vm1001, 0.0, %v4377
        %v4379 = vrot.slane %v4370, 4
        %v4380 = vsel %vm1001, 0.0, %v4379
        %v4381 = vrot.slane %v4374, 4
        %v4382 = vsel %vm1001, 0.0, %v4381
        %v4383 = vrot.slane %v752, 4
        %v4384 = vsel %vm1001, 0.0, %v4383
        %v4386 = vunpack.c.l.s4 1983009808
        %v4387 = vunpack.c.0.s8 %v4386
        %v4388 = vperm.slane %v752, %v4387
        %v4390 = vunpack.c.l.s4 1983009808
        %v4391 = vunpack.c.0.s8 %v4390
        %v4392 = vperm.slane %v4384, %v4391
        %v4393 = vrot.slane %v4388, 4
        %v4394 = vsel %vm1001, 0.0, %v4393
        %v4396 = vunpack.c.l.s4 1934713408
        %v4397 = vunpack.c.0.s8 %v4396
        %v4398 = vperm.slane %v4388, %v4397
        %v4400 = vunpack.c.l.s4 1934713408
        %v4401 = vunpack.c.0.s8 %v4400
        %v4402 = vperm.slane %v4394, %v4401
        %v4403 = vrot.slane %v4392, 4
        %v4404 = vsel %vm1001, 0.0, %v4403
        %v4406 = vunpack.c.l.s4 1934713408
        %v4407 = vunpack.c.0.s8 %v4406
        %v4408 = vperm.slane %v4392, %v4407
        %v4410 = vunpack.c.l.s4 1934713408
        %v4411 = vunpack.c.0.s8 %v4410
        %v4412 = vperm.slane %v4404, %v4411
        %v4413 = vrot.slane %v4398, 4
        %v4414 = vsel %vm1001, 0.0, %v4413
        %v4415 = vrot.slane %v4402, 4
        %v4416 = vsel %vm1001, 0.0, %v4415
        %v4417 = vrot.slane %v4408, 4
        %v4418 = vsel %vm1001, 0.0, %v4417
        %v4419 = vrot.slane %v4412, 4
        %v4420 = vsel %vm1001, 0.0, %v4419
        %v4421 = vrot.slane %v759, 4
        %v4422 = vsel %vm1001, 0.0, %v4421
        %v4424 = vunpack.c.l.s4 1983009808
        %v4425 = vunpack.c.0.s8 %v4424
        %v4426 = vperm.slane %v759, %v4425
        %v4428 = vunpack.c.l.s4 1983009808
        %v4429 = vunpack.c.0.s8 %v4428
        %v4430 = vperm.slane %v4422, %v4429
        %v4431 = vrot.slane %v4426, 4
        %v4432 = vsel %vm1001, 0.0, %v4431
        %v4434 = vunpack.c.l.s4 1934713408
        %v4435 = vunpack.c.0.s8 %v4434
        %v4436 = vperm.slane %v4426, %v4435
        %v4438 = vunpack.c.l.s4 1934713408
        %v4439 = vunpack.c.0.s8 %v4438
        %v4440 = vperm.slane %v4432, %v4439
        %v4441 = vrot.slane %v4430, 4
        %v4442 = vsel %vm1001, 0.0, %v4441
        %v4444 = vunpack.c.l.s4 1934713408
        %v4445 = vunpack.c.0.s8 %v4444
        %v4446 = vperm.slane %v4430, %v4445
        %v4448 = vunpack.c.l.s4 1934713408
        %v4449 = vunpack.c.0.s8 %v4448
        %v4450 = vperm.slane %v4442, %v4449
        %v4451 = vrot.slane %v4436, 4
        %v4452 = vsel %vm1001, 0.0, %v4451
        %v4453 = vrot.slane %v4440, 4
        %v4454 = vsel %vm1001, 0.0, %v4453
        %v4455 = vrot.slane %v4446, 4
        %v4456 = vsel %vm1001, 0.0, %v4455
        %v4457 = vrot.slane %v4450, 4
        %v4458 = vsel %vm1001, 0.0, %v4457
        %v4459 = vrot.slane %v765, 4
        %v4460 = vsel %vm1001, 0.0, %v4459
        %v4462 = vunpack.c.l.s4 1983009808
        %v4463 = vunpack.c.0.s8 %v4462
        %v4464 = vperm.slane %v765, %v4463
        %v4466 = vunpack.c.l.s4 1983009808
        %v4467 = vunpack.c.0.s8 %v4466
        %v4468 = vperm.slane %v4460, %v4467
        %v4469 = vrot.slane %v4464, 4
        %v4470 = vsel %vm1001, 0.0, %v4469
        %v4472 = vunpack.c.l.s4 1934713408
        %v4473 = vunpack.c.0.s8 %v4472
        %v4474 = vperm.slane %v4464, %v4473
        %v4476 = vunpack.c.l.s4 1934713408
        %v4477 = vunpack.c.0.s8 %v4476
        %v4478 = vperm.slane %v4470, %v4477
        %v4479 = vrot.slane %v4468, 4
        %v4480 = vsel %vm1001, 0.0, %v4479
        %v4482 = vunpack.c.l.s4 1934713408
        %v4483 = vunpack.c.0.s8 %v4482
        %v4484 = vperm.slane %v4468, %v4483
        %v4486 = vunpack.c.l.s4 1934713408
        %v4487 = vunpack.c.0.s8 %v4486
        %v4488 = vperm.slane %v4480, %v4487
        %v4489 = vrot.slane %v4474, 4
        %v4490 = vsel %vm1001, 0.0, %v4489
        %v4491 = vrot.slane %v4478, 4
        %v4492 = vsel %vm1001, 0.0, %v4491
        %v4493 = vrot.slane %v4484, 4
        %v4494 = vsel %vm1001, 0.0, %v4493
        %v4495 = vrot.slane %v4488, 4
        %v4496 = vsel %vm1001, 0.0, %v4495
        %v4497 = vrot.slane %v772, 4
        %v4498 = vsel %vm1001, 0.0, %v4497
        %v4500 = vunpack.c.l.s4 1983009808
        %v4501 = vunpack.c.0.s8 %v4500
        %v4502 = vperm.slane %v772, %v4501
        %v4504 = vunpack.c.l.s4 1983009808
        %v4505 = vunpack.c.0.s8 %v4504
        %v4506 = vperm.slane %v4498, %v4505
        %v4507 = vrot.slane %v4502, 4
        %v4508 = vsel %vm1001, 0.0, %v4507
        %v4510 = vunpack.c.l.s4 1934713408
        %v4511 = vunpack.c.0.s8 %v4510
        %v4512 = vperm.slane %v4502, %v4511
        %v4514 = vunpack.c.l.s4 1934713408
        %v4515 = vunpack.c.0.s8 %v4514
        %v4516 = vperm.slane %v4508, %v4515
        %v4517 = vrot.slane %v4506, 4
        %v4518 = vsel %vm1001, 0.0, %v4517
        %v4520 = vunpack.c.l.s4 1934713408
        %v4521 = vunpack.c.0.s8 %v4520
        %v4522 = vperm.slane %v4506, %v4521
        %v4524 = vunpack.c.l.s4 1934713408
        %v4525 = vunpack.c.0.s8 %v4524
        %v4526 = vperm.slane %v4518, %v4525
        %v4527 = vrot.slane %v4512, 4
        %v4528 = vsel %vm1001, 0.0, %v4527
        %v4529 = vrot.slane %v4516, 4
        %v4530 = vsel %vm1001, 0.0, %v4529
        %v4531 = vrot.slane %v4522, 4
        %v4532 = vsel %vm1001, 0.0, %v4531
        %v4533 = vrot.slane %v4526, 4
        %v4534 = vsel %vm1001, 0.0, %v4533
        %v4535 = vrot.slane %v778, 4
        %v4536 = vsel %vm1001, 0.0, %v4535
        %v4538 = vunpack.c.l.s4 1983009808
        %v4539 = vunpack.c.0.s8 %v4538
        %v4540 = vperm.slane %v778, %v4539
        %v4542 = vunpack.c.l.s4 1983009808
        %v4543 = vunpack.c.0.s8 %v4542
        %v4544 = vperm.slane %v4536, %v4543
        %v4545 = vrot.slane %v4540, 4
        %v4546 = vsel %vm1001, 0.0, %v4545
        %v4548 = vunpack.c.l.s4 1934713408
        %v4549 = vunpack.c.0.s8 %v4548
        %v4550 = vperm.slane %v4540, %v4549
        %v4552 = vunpack.c.l.s4 1934713408
        %v4553 = vunpack.c.0.s8 %v4552
        %v4554 = vperm.slane %v4546, %v4553
        %v4555 = vrot.slane %v4544, 4
        %v4556 = vsel %vm1001, 0.0, %v4555
        %v4558 = vunpack.c.l.s4 1934713408
        %v4559 = vunpack.c.0.s8 %v4558
        %v4560 = vperm.slane %v4544, %v4559
        %v4562 = vunpack.c.l.s4 1934713408
        %v4563 = vunpack.c.0.s8 %v4562
        %v4564 = vperm.slane %v4556, %v4563
        %v4565 = vrot.slane %v4550, 4
        %v4566 = vsel %vm1001, 0.0, %v4565
        %v4567 = vrot.slane %v4554, 4
        %v4568 = vsel %vm1001, 0.0, %v4567
        %v4569 = vrot.slane %v4560, 4
        %v4570 = vsel %vm1001, 0.0, %v4569
        %v4571 = vrot.slane %v4564, 4
        %v4572 = vsel %vm1001, 0.0, %v4571
        %v4573 = vrot.slane %v785, 4
        %v4574 = vsel %vm1001, 0.0, %v4573
        %v4576 = vunpack.c.l.s4 1983009808
        %v4577 = vunpack.c.0.s8 %v4576
        %v4578 = vperm.slane %v785, %v4577
        %v4580 = vunpack.c.l.s4 1983009808
        %v4581 = vunpack.c.0.s8 %v4580
        %v4582 = vperm.slane %v4574, %v4581
        %v4583 = vrot.slane %v4578, 4
        %v4584 = vsel %vm1001, 0.0, %v4583
        %v4586 = vunpack.c.l.s4 1934713408
        %v4587 = vunpack.c.0.s8 %v4586
        %v4588 = vperm.slane %v4578, %v4587
        %v4590 = vunpack.c.l.s4 1934713408
        %v4591 = vunpack.c.0.s8 %v4590
        %v4592 = vperm.slane %v4584, %v4591
        %v4593 = vrot.slane %v4582, 4
        %v4594 = vsel %vm1001, 0.0, %v4593
        %v4596 = vunpack.c.l.s4 1934713408
        %v4597 = vunpack.c.0.s8 %v4596
        %v4598 = vperm.slane %v4582, %v4597
        %v4600 = vunpack.c.l.s4 1934713408
        %v4601 = vunpack.c.0.s8 %v4600
        %v4602 = vperm.slane %v4594, %v4601
        %v4603 = vrot.slane %v4588, 4
        %v4604 = vsel %vm1001, 0.0, %v4603
        %v4605 = vrot.slane %v4592, 4
        %v4606 = vsel %vm1001, 0.0, %v4605
        %v4607 = vrot.slane %v4598, 4
        %v4608 = vsel %vm1001, 0.0, %v4607
        %v4609 = vrot.slane %v4602, 4
        %v4610 = vsel %vm1001, 0.0, %v4609
        %v4611 = vrot.slane %v791, 4
        %v4612 = vsel %vm1001, 0.0, %v4611
        %v4614 = vunpack.c.l.s4 1983009808
        %v4615 = vunpack.c.0.s8 %v4614
        %v4616 = vperm.slane %v791, %v4615
        %v4618 = vunpack.c.l.s4 1983009808
        %v4619 = vunpack.c.0.s8 %v4618
        %v4620 = vperm.slane %v4612, %v4619
        %v4621 = vrot.slane %v4616, 4
        %v4622 = vsel %vm1001, 0.0, %v4621
        %v4624 = vunpack.c.l.s4 1934713408
        %v4625 = vunpack.c.0.s8 %v4624
        %v4626 = vperm.slane %v4616, %v4625
        %v4628 = vunpack.c.l.s4 1934713408
        %v4629 = vunpack.c.0.s8 %v4628
        %v4630 = vperm.slane %v4622, %v4629
        %v4631 = vrot.slane %v4620, 4
        %v4632 = vsel %vm1001, 0.0, %v4631
        %v4634 = vunpack.c.l.s4 1934713408
        %v4635 = vunpack.c.0.s8 %v4634
        %v4636 = vperm.slane %v4620, %v4635
        %v4638 = vunpack.c.l.s4 1934713408
        %v4639 = vunpack.c.0.s8 %v4638
        %v4640 = vperm.slane %v4632, %v4639
        %v4641 = vrot.slane %v4626, 4
        %v4642 = vsel %vm1001, 0.0, %v4641
        %v4643 = vrot.slane %v4630, 4
        %v4644 = vsel %vm1001, 0.0, %v4643
        %v4645 = vrot.slane %v4636, 4
        %v4646 = vsel %vm1001, 0.0, %v4645
        %v4647 = vrot.slane %v4640, 4
        %v4648 = vsel %vm1001, 0.0, %v4647
        %v4649 = vrot.slane %v798, 4
        %v4650 = vsel %vm1001, 0.0, %v4649
        %v4652 = vunpack.c.l.s4 1983009808
        %v4653 = vunpack.c.0.s8 %v4652
        %v4654 = vperm.slane %v798, %v4653
        %v4656 = vunpack.c.l.s4 1983009808
        %v4657 = vunpack.c.0.s8 %v4656
        %v4658 = vperm.slane %v4650, %v4657
        %v4659 = vrot.slane %v4654, 4
        %v4660 = vsel %vm1001, 0.0, %v4659
        %v4662 = vunpack.c.l.s4 1934713408
        %v4663 = vunpack.c.0.s8 %v4662
        %v4664 = vperm.slane %v4654, %v4663
        %v4666 = vunpack.c.l.s4 1934713408
        %v4667 = vunpack.c.0.s8 %v4666
        %v4668 = vperm.slane %v4660, %v4667
        %v4669 = vrot.slane %v4658, 4
        %v4670 = vsel %vm1001, 0.0, %v4669
        %v4672 = vunpack.c.l.s4 1934713408
        %v4673 = vunpack.c.0.s8 %v4672
        %v4674 = vperm.slane %v4658, %v4673
        %v4676 = vunpack.c.l.s4 1934713408
        %v4677 = vunpack.c.0.s8 %v4676
        %v4678 = vperm.slane %v4670, %v4677
        %v4679 = vrot.slane %v4664, 4
        %v4680 = vsel %vm1001, 0.0, %v4679
        %v4681 = vrot.slane %v4668, 4
        %v4682 = vsel %vm1001, 0.0, %v4681
        %v4683 = vrot.slane %v4674, 4
        %v4684 = vsel %vm1001, 0.0, %v4683
        %v4685 = vrot.slane %v4678, 4
        %v4686 = vsel %vm1001, 0.0, %v4685
        %v4687 = vrot.slane %v804, 4
        %v4688 = vsel %vm1001, 0.0, %v4687
        %v4690 = vunpack.c.l.s4 1983009808
        %v4691 = vunpack.c.0.s8 %v4690
        %v4692 = vperm.slane %v804, %v4691
        %v4694 = vunpack.c.l.s4 1983009808
        %v4695 = vunpack.c.0.s8 %v4694
        %v4696 = vperm.slane %v4688, %v4695
        %v4697 = vrot.slane %v4692, 4
        %v4698 = vsel %vm1001, 0.0, %v4697
        %v4700 = vunpack.c.l.s4 1934713408
        %v4701 = vunpack.c.0.s8 %v4700
        %v4702 = vperm.slane %v4692, %v4701
        %v4704 = vunpack.c.l.s4 1934713408
        %v4705 = vunpack.c.0.s8 %v4704
        %v4706 = vperm.slane %v4698, %v4705
        %v4707 = vrot.slane %v4696, 4
        %v4708 = vsel %vm1001, 0.0, %v4707
        %v4710 = vunpack.c.l.s4 1934713408
        %v4711 = vunpack.c.0.s8 %v4710
        %v4712 = vperm.slane %v4696, %v4711
        %v4714 = vunpack.c.l.s4 1934713408
        %v4715 = vunpack.c.0.s8 %v4714
        %v4716 = vperm.slane %v4708, %v4715
        %v4717 = vrot.slane %v4702, 4
        %v4718 = vsel %vm1001, 0.0, %v4717
        %v4719 = vrot.slane %v4706, 4
        %v4720 = vsel %vm1001, 0.0, %v4719
        %v4721 = vrot.slane %v4712, 4
        %v4722 = vsel %vm1001, 0.0, %v4721
        %v4723 = vrot.slane %v4716, 4
        %v4724 = vsel %vm1001, 0.0, %v4723
        %v4725 = vrot.slane %v811, 4
        %v4726 = vsel %vm1001, 0.0, %v4725
        %v4728 = vunpack.c.l.s4 1983009808
        %v4729 = vunpack.c.0.s8 %v4728
        %v4730 = vperm.slane %v811, %v4729
        %v4732 = vunpack.c.l.s4 1983009808
        %v4733 = vunpack.c.0.s8 %v4732
        %v4734 = vperm.slane %v4726, %v4733
        %v4735 = vrot.slane %v4730, 4
        %v4736 = vsel %vm1001, 0.0, %v4735
        %v4738 = vunpack.c.l.s4 1934713408
        %v4739 = vunpack.c.0.s8 %v4738
        %v4740 = vperm.slane %v4730, %v4739
        %v4742 = vunpack.c.l.s4 1934713408
        %v4743 = vunpack.c.0.s8 %v4742
        %v4744 = vperm.slane %v4736, %v4743
        %v4745 = vrot.slane %v4734, 4
        %v4746 = vsel %vm1001, 0.0, %v4745
        %v4748 = vunpack.c.l.s4 1934713408
        %v4749 = vunpack.c.0.s8 %v4748
        %v4750 = vperm.slane %v4734, %v4749
        %v4752 = vunpack.c.l.s4 1934713408
        %v4753 = vunpack.c.0.s8 %v4752
        %v4754 = vperm.slane %v4746, %v4753
        %v4755 = vrot.slane %v4740, 4
        %v4756 = vsel %vm1001, 0.0, %v4755
        %v4757 = vrot.slane %v4744, 4
        %v4758 = vsel %vm1001, 0.0, %v4757
        %v4759 = vrot.slane %v4750, 4
        %v4760 = vsel %vm1001, 0.0, %v4759
        %v4761 = vrot.slane %v4754, 4
        %v4762 = vsel %vm1001, 0.0, %v4761
        %v4763 = vrot.slane %v817, 4
        %v4764 = vsel %vm1001, 0.0, %v4763
        %v4766 = vunpack.c.l.s4 1983009808
        %v4767 = vunpack.c.0.s8 %v4766
        %v4768 = vperm.slane %v817, %v4767
        %v4770 = vunpack.c.l.s4 1983009808
        %v4771 = vunpack.c.0.s8 %v4770
        %v4772 = vperm.slane %v4764, %v4771
        %v4773 = vrot.slane %v4768, 4
        %v4774 = vsel %vm1001, 0.0, %v4773
        %v4776 = vunpack.c.l.s4 1934713408
        %v4777 = vunpack.c.0.s8 %v4776
        %v4778 = vperm.slane %v4768, %v4777
        %v4780 = vunpack.c.l.s4 1934713408
        %v4781 = vunpack.c.0.s8 %v4780
        %v4782 = vperm.slane %v4774, %v4781
        %v4783 = vrot.slane %v4772, 4
        %v4784 = vsel %vm1001, 0.0, %v4783
        %v4786 = vunpack.c.l.s4 1934713408
        %v4787 = vunpack.c.0.s8 %v4786
        %v4788 = vperm.slane %v4772, %v4787
        %v4790 = vunpack.c.l.s4 1934713408
        %v4791 = vunpack.c.0.s8 %v4790
        %v4792 = vperm.slane %v4784, %v4791
        %v4793 = vrot.slane %v4778, 4
        %v4794 = vsel %vm1001, 0.0, %v4793
        %v4795 = vrot.slane %v4782, 4
        %v4796 = vsel %vm1001, 0.0, %v4795
        %v4797 = vrot.slane %v4788, 4
        %v4798 = vsel %vm1001, 0.0, %v4797
        %v4799 = vrot.slane %v4792, 4
        %v4800 = vsel %vm1001, 0.0, %v4799
        %v4801 = vrot.slane %v824, 4
        %v4802 = vsel %vm1001, 0.0, %v4801
        %v4804 = vunpack.c.l.s4 1983009808
        %v4805 = vunpack.c.0.s8 %v4804
        %v4806 = vperm.slane %v824, %v4805
        %v4808 = vunpack.c.l.s4 1983009808
        %v4809 = vunpack.c.0.s8 %v4808
        %v4810 = vperm.slane %v4802, %v4809
        %v4811 = vrot.slane %v4806, 4
        %v4812 = vsel %vm1001, 0.0, %v4811
        %v4814 = vunpack.c.l.s4 1934713408
        %v4815 = vunpack.c.0.s8 %v4814
        %v4816 = vperm.slane %v4806, %v4815
        %v4818 = vunpack.c.l.s4 1934713408
        %v4819 = vunpack.c.0.s8 %v4818
        %v4820 = vperm.slane %v4812, %v4819
        %v4821 = vrot.slane %v4810, 4
        %v4822 = vsel %vm1001, 0.0, %v4821
        %v4824 = vunpack.c.l.s4 1934713408
        %v4825 = vunpack.c.0.s8 %v4824
        %v4826 = vperm.slane %v4810, %v4825
        %v4828 = vunpack.c.l.s4 1934713408
        %v4829 = vunpack.c.0.s8 %v4828
        %v4830 = vperm.slane %v4822, %v4829
        %v4831 = vrot.slane %v4816, 4
        %v4832 = vsel %vm1001, 0.0, %v4831
        %v4833 = vrot.slane %v4820, 4
        %v4834 = vsel %vm1001, 0.0, %v4833
        %v4835 = vrot.slane %v4826, 4
        %v4836 = vsel %vm1001, 0.0, %v4835
        %v4837 = vrot.slane %v4830, 4
        %v4838 = vsel %vm1001, 0.0, %v4837
        %v4839 = vrot.slane %v830, 4
        %v4840 = vsel %vm1001, 0.0, %v4839
        %v4842 = vunpack.c.l.s4 1983009808
        %v4843 = vunpack.c.0.s8 %v4842
        %v4844 = vperm.slane %v830, %v4843
        %v4846 = vunpack.c.l.s4 1983009808
        %v4847 = vunpack.c.0.s8 %v4846
        %v4848 = vperm.slane %v4840, %v4847
        %v4849 = vrot.slane %v4844, 4
        %v4850 = vsel %vm1001, 0.0, %v4849
        %v4852 = vunpack.c.l.s4 1934713408
        %v4853 = vunpack.c.0.s8 %v4852
        %v4854 = vperm.slane %v4844, %v4853
        %v4856 = vunpack.c.l.s4 1934713408
        %v4857 = vunpack.c.0.s8 %v4856
        %v4858 = vperm.slane %v4850, %v4857
        %v4859 = vrot.slane %v4848, 4
        %v4860 = vsel %vm1001, 0.0, %v4859
        %v4862 = vunpack.c.l.s4 1934713408
        %v4863 = vunpack.c.0.s8 %v4862
        %v4864 = vperm.slane %v4848, %v4863
        %v4866 = vunpack.c.l.s4 1934713408
        %v4867 = vunpack.c.0.s8 %v4866
        %v4868 = vperm.slane %v4860, %v4867
        %v4869 = vrot.slane %v4854, 4
        %v4870 = vsel %vm1001, 0.0, %v4869
        %v4871 = vrot.slane %v4858, 4
        %v4872 = vsel %vm1001, 0.0, %v4871
        %v4873 = vrot.slane %v4864, 4
        %v4874 = vsel %vm1001, 0.0, %v4873
        %v4875 = vrot.slane %v4868, 4
        %v4876 = vsel %vm1001, 0.0, %v4875
        %v4877 = vrot.slane %v837, 4
        %v4878 = vsel %vm1001, 0.0, %v4877
        %v4880 = vunpack.c.l.s4 1983009808
        %v4881 = vunpack.c.0.s8 %v4880
        %v4882 = vperm.slane %v837, %v4881
        %v4884 = vunpack.c.l.s4 1983009808
        %v4885 = vunpack.c.0.s8 %v4884
        %v4886 = vperm.slane %v4878, %v4885
        %v4887 = vrot.slane %v4882, 4
        %v4888 = vsel %vm1001, 0.0, %v4887
        %v4890 = vunpack.c.l.s4 1934713408
        %v4891 = vunpack.c.0.s8 %v4890
        %v4892 = vperm.slane %v4882, %v4891
        %v4894 = vunpack.c.l.s4 1934713408
        %v4895 = vunpack.c.0.s8 %v4894
        %v4896 = vperm.slane %v4888, %v4895
        %v4897 = vrot.slane %v4886, 4
        %v4898 = vsel %vm1001, 0.0, %v4897
        %v4900 = vunpack.c.l.s4 1934713408
        %v4901 = vunpack.c.0.s8 %v4900
        %v4902 = vperm.slane %v4886, %v4901
        %v4904 = vunpack.c.l.s4 1934713408
        %v4905 = vunpack.c.0.s8 %v4904
        %v4906 = vperm.slane %v4898, %v4905
        %v4907 = vrot.slane %v4892, 4
        %v4908 = vsel %vm1001, 0.0, %v4907
        %v4909 = vrot.slane %v4896, 4
        %v4910 = vsel %vm1001, 0.0, %v4909
        %v4911 = vrot.slane %v4902, 4
        %v4912 = vsel %vm1001, 0.0, %v4911
        %v4913 = vrot.slane %v4906, 4
        %v4914 = vsel %vm1001, 0.0, %v4913
        %v4915 = vrot.slane %v843, 4
        %v4916 = vsel %vm1001, 0.0, %v4915
        %v4918 = vunpack.c.l.s4 1983009808
        %v4919 = vunpack.c.0.s8 %v4918
        %v4920 = vperm.slane %v843, %v4919
        %v4922 = vunpack.c.l.s4 1983009808
        %v4923 = vunpack.c.0.s8 %v4922
        %v4924 = vperm.slane %v4916, %v4923
        %v4925 = vrot.slane %v4920, 4
        %v4926 = vsel %vm1001, 0.0, %v4925
        %v4928 = vunpack.c.l.s4 1934713408
        %v4929 = vunpack.c.0.s8 %v4928
        %v4930 = vperm.slane %v4920, %v4929
        %v4932 = vunpack.c.l.s4 1934713408
        %v4933 = vunpack.c.0.s8 %v4932
        %v4934 = vperm.slane %v4926, %v4933
        %v4935 = vrot.slane %v4924, 4
        %v4936 = vsel %vm1001, 0.0, %v4935
        %v4938 = vunpack.c.l.s4 1934713408
        %v4939 = vunpack.c.0.s8 %v4938
        %v4940 = vperm.slane %v4924, %v4939
        %v4942 = vunpack.c.l.s4 1934713408
        %v4943 = vunpack.c.0.s8 %v4942
        %v4944 = vperm.slane %v4936, %v4943
        %v4945 = vrot.slane %v4930, 4
        %v4946 = vsel %vm1001, 0.0, %v4945
        %v4947 = vrot.slane %v4934, 4
        %v4948 = vsel %vm1001, 0.0, %v4947
        %v4949 = vrot.slane %v4940, 4
        %v4950 = vsel %vm1001, 0.0, %v4949
        %v4951 = vrot.slane %v4944, 4
        %v4952 = vsel %vm1001, 0.0, %v4951
        %v4953 = vrot.slane %v850, 4
        %v4954 = vsel %vm1001, 0.0, %v4953
        %v4956 = vunpack.c.l.s4 1983009808
        %v4957 = vunpack.c.0.s8 %v4956
        %v4958 = vperm.slane %v850, %v4957
        %v4960 = vunpack.c.l.s4 1983009808
        %v4961 = vunpack.c.0.s8 %v4960
        %v4962 = vperm.slane %v4954, %v4961
        %v4963 = vrot.slane %v4958, 4
        %v4964 = vsel %vm1001, 0.0, %v4963
        %v4966 = vunpack.c.l.s4 1934713408
        %v4967 = vunpack.c.0.s8 %v4966
        %v4968 = vperm.slane %v4958, %v4967
        %v4970 = vunpack.c.l.s4 1934713408
        %v4971 = vunpack.c.0.s8 %v4970
        %v4972 = vperm.slane %v4964, %v4971
        %v4973 = vrot.slane %v4962, 4
        %v4974 = vsel %vm1001, 0.0, %v4973
        %v4976 = vunpack.c.l.s4 1934713408
        %v4977 = vunpack.c.0.s8 %v4976
        %v4978 = vperm.slane %v4962, %v4977
        %v4980 = vunpack.c.l.s4 1934713408
        %v4981 = vunpack.c.0.s8 %v4980
        %v4982 = vperm.slane %v4974, %v4981
        %v4983 = vrot.slane %v4968, 4
        %v4984 = vsel %vm1001, 0.0, %v4983
        %v4985 = vrot.slane %v4972, 4
        %v4986 = vsel %vm1001, 0.0, %v4985
        %v4987 = vrot.slane %v4978, 4
        %v4988 = vsel %vm1001, 0.0, %v4987
        %v4989 = vrot.slane %v4982, 4
        %v4990 = vsel %vm1001, 0.0, %v4989
        %v4991 = vrot.slane %v856, 4
        %v4992 = vsel %vm1001, 0.0, %v4991
        %v4994 = vunpack.c.l.s4 1983009808
        %v4995 = vunpack.c.0.s8 %v4994
        %v4996 = vperm.slane %v856, %v4995
        %v4998 = vunpack.c.l.s4 1983009808
        %v4999 = vunpack.c.0.s8 %v4998
        %v5000 = vperm.slane %v4992, %v4999
        %v5001 = vrot.slane %v4996, 4
        %v5002 = vsel %vm1001, 0.0, %v5001
        %v5004 = vunpack.c.l.s4 1934713408
        %v5005 = vunpack.c.0.s8 %v5004
        %v5006 = vperm.slane %v4996, %v5005
        %v5008 = vunpack.c.l.s4 1934713408
        %v5009 = vunpack.c.0.s8 %v5008
        %v5010 = vperm.slane %v5002, %v5009
        %v5011 = vrot.slane %v5000, 4
        %v5012 = vsel %vm1001, 0.0, %v5011
        %v5014 = vunpack.c.l.s4 1934713408
        %v5015 = vunpack.c.0.s8 %v5014
        %v5016 = vperm.slane %v5000, %v5015
        %v5018 = vunpack.c.l.s4 1934713408
        %v5019 = vunpack.c.0.s8 %v5018
        %v5020 = vperm.slane %v5012, %v5019
        %v5021 = vrot.slane %v5006, 4
        %v5022 = vsel %vm1001, 0.0, %v5021
        %v5023 = vrot.slane %v5010, 4
        %v5024 = vsel %vm1001, 0.0, %v5023
        %v5025 = vrot.slane %v5016, 4
        %v5026 = vsel %vm1001, 0.0, %v5025
        %v5027 = vrot.slane %v5020, 4
        %v5028 = vsel %vm1001, 0.0, %v5027
        %v5029 = vrot.slane %v863, 4
        %v5030 = vsel %vm1001, 0.0, %v5029
        %v5032 = vunpack.c.l.s4 1983009808
        %v5033 = vunpack.c.0.s8 %v5032
        %v5034 = vperm.slane %v863, %v5033
        %v5036 = vunpack.c.l.s4 1983009808
        %v5037 = vunpack.c.0.s8 %v5036
        %v5038 = vperm.slane %v5030, %v5037
        %v5039 = vrot.slane %v5034, 4
        %v5040 = vsel %vm1001, 0.0, %v5039
        %v5042 = vunpack.c.l.s4 1934713408
        %v5043 = vunpack.c.0.s8 %v5042
        %v5044 = vperm.slane %v5034, %v5043
        %v5046 = vunpack.c.l.s4 1934713408
        %v5047 = vunpack.c.0.s8 %v5046
        %v5048 = vperm.slane %v5040, %v5047
        %v5049 = vrot.slane %v5038, 4
        %v5050 = vsel %vm1001, 0.0, %v5049
        %v5052 = vunpack.c.l.s4 1934713408
        %v5053 = vunpack.c.0.s8 %v5052
        %v5054 = vperm.slane %v5038, %v5053
        %v5056 = vunpack.c.l.s4 1934713408
        %v5057 = vunpack.c.0.s8 %v5056
        %v5058 = vperm.slane %v5050, %v5057
        %v5059 = vrot.slane %v5044, 4
        %v5060 = vsel %vm1001, 0.0, %v5059
        %v5061 = vrot.slane %v5048, 4
        %v5062 = vsel %vm1001, 0.0, %v5061
        %v5063 = vrot.slane %v5054, 4
        %v5064 = vsel %vm1001, 0.0, %v5063
        %v5065 = vrot.slane %v5058, 4
        %v5066 = vsel %vm1001, 0.0, %v5065
        %v5067 = vrot.slane %v869, 4
        %v5068 = vsel %vm1001, 0.0, %v5067
        %v5070 = vunpack.c.l.s4 1983009808
        %v5071 = vunpack.c.0.s8 %v5070
        %v5072 = vperm.slane %v869, %v5071
        %v5074 = vunpack.c.l.s4 1983009808
        %v5075 = vunpack.c.0.s8 %v5074
        %v5076 = vperm.slane %v5068, %v5075
        %v5077 = vrot.slane %v5072, 4
        %v5078 = vsel %vm1001, 0.0, %v5077
        %v5080 = vunpack.c.l.s4 1934713408
        %v5081 = vunpack.c.0.s8 %v5080
        %v5082 = vperm.slane %v5072, %v5081
        %v5084 = vunpack.c.l.s4 1934713408
        %v5085 = vunpack.c.0.s8 %v5084
        %v5086 = vperm.slane %v5078, %v5085
        %v5087 = vrot.slane %v5076, 4
        %v5088 = vsel %vm1001, 0.0, %v5087
        %v5090 = vunpack.c.l.s4 1934713408
        %v5091 = vunpack.c.0.s8 %v5090
        %v5092 = vperm.slane %v5076, %v5091
        %v5094 = vunpack.c.l.s4 1934713408
        %v5095 = vunpack.c.0.s8 %v5094
        %v5096 = vperm.slane %v5088, %v5095
        %v5097 = vrot.slane %v5082, 4
        %v5098 = vsel %vm1001, 0.0, %v5097
        %v5099 = vrot.slane %v5086, 4
        %v5100 = vsel %vm1001, 0.0, %v5099
        %v5101 = vrot.slane %v5092, 4
        %v5102 = vsel %vm1001, 0.0, %v5101
        %v5103 = vrot.slane %v5096, 4
        %v5104 = vsel %vm1001, 0.0, %v5103
        %v5105 = vrot.slane %v876, 4
        %v5106 = vsel %vm1001, 0.0, %v5105
        %v5108 = vunpack.c.l.s4 1983009808
        %v5109 = vunpack.c.0.s8 %v5108
        %v5110 = vperm.slane %v876, %v5109
        %v5112 = vunpack.c.l.s4 1983009808
        %v5113 = vunpack.c.0.s8 %v5112
        %v5114 = vperm.slane %v5106, %v5113
        %v5115 = vrot.slane %v5110, 4
        %v5116 = vsel %vm1001, 0.0, %v5115
        %v5118 = vunpack.c.l.s4 1934713408
        %v5119 = vunpack.c.0.s8 %v5118
        %v5120 = vperm.slane %v5110, %v5119
        %v5122 = vunpack.c.l.s4 1934713408
        %v5123 = vunpack.c.0.s8 %v5122
        %v5124 = vperm.slane %v5116, %v5123
        %v5125 = vrot.slane %v5114, 4
        %v5126 = vsel %vm1001, 0.0, %v5125
        %v5128 = vunpack.c.l.s4 1934713408
        %v5129 = vunpack.c.0.s8 %v5128
        %v5130 = vperm.slane %v5114, %v5129
        %v5132 = vunpack.c.l.s4 1934713408
        %v5133 = vunpack.c.0.s8 %v5132
        %v5134 = vperm.slane %v5126, %v5133
        %v5135 = vrot.slane %v5120, 4
        %v5136 = vsel %vm1001, 0.0, %v5135
        %v5137 = vrot.slane %v5124, 4
        %v5138 = vsel %vm1001, 0.0, %v5137
        %v5139 = vrot.slane %v5130, 4
        %v5140 = vsel %vm1001, 0.0, %v5139
        %v5141 = vrot.slane %v5134, 4
        %v5142 = vsel %vm1001, 0.0, %v5141
        %v5143 = vrot.slane %v882, 4
        %v5144 = vsel %vm1001, 0.0, %v5143
        %v5146 = vunpack.c.l.s4 1983009808
        %v5147 = vunpack.c.0.s8 %v5146
        %v5148 = vperm.slane %v882, %v5147
        %v5150 = vunpack.c.l.s4 1983009808
        %v5151 = vunpack.c.0.s8 %v5150
        %v5152 = vperm.slane %v5144, %v5151
        %v5153 = vrot.slane %v5148, 4
        %v5154 = vsel %vm1001, 0.0, %v5153
        %v5156 = vunpack.c.l.s4 1934713408
        %v5157 = vunpack.c.0.s8 %v5156
        %v5158 = vperm.slane %v5148, %v5157
        %v5160 = vunpack.c.l.s4 1934713408
        %v5161 = vunpack.c.0.s8 %v5160
        %v5162 = vperm.slane %v5154, %v5161
        %v5163 = vrot.slane %v5152, 4
        %v5164 = vsel %vm1001, 0.0, %v5163
        %v5166 = vunpack.c.l.s4 1934713408
        %v5167 = vunpack.c.0.s8 %v5166
        %v5168 = vperm.slane %v5152, %v5167
        %v5170 = vunpack.c.l.s4 1934713408
        %v5171 = vunpack.c.0.s8 %v5170
        %v5172 = vperm.slane %v5164, %v5171
        %v5173 = vrot.slane %v5158, 4
        %v5174 = vsel %vm1001, 0.0, %v5173
        %v5175 = vrot.slane %v5162, 4
        %v5176 = vsel %vm1001, 0.0, %v5175
        %v5177 = vrot.slane %v5168, 4
        %v5178 = vsel %vm1001, 0.0, %v5177
        %v5179 = vrot.slane %v5172, 4
        %v5180 = vsel %vm1001, 0.0, %v5179
        %v5181 = vrot.slane %v889, 4
        %v5182 = vsel %vm1001, 0.0, %v5181
        %v5184 = vunpack.c.l.s4 1983009808
        %v5185 = vunpack.c.0.s8 %v5184
        %v5186 = vperm.slane %v889, %v5185
        %v5188 = vunpack.c.l.s4 1983009808
        %v5189 = vunpack.c.0.s8 %v5188
        %v5190 = vperm.slane %v5182, %v5189
        %v5191 = vrot.slane %v5186, 4
        %v5192 = vsel %vm1001, 0.0, %v5191
        %v5194 = vunpack.c.l.s4 1934713408
        %v5195 = vunpack.c.0.s8 %v5194
        %v5196 = vperm.slane %v5186, %v5195
        %v5198 = vunpack.c.l.s4 1934713408
        %v5199 = vunpack.c.0.s8 %v5198
        %v5200 = vperm.slane %v5192, %v5199
        %v5201 = vrot.slane %v5190, 4
        %v5202 = vsel %vm1001, 0.0, %v5201
        %v5204 = vunpack.c.l.s4 1934713408
        %v5205 = vunpack.c.0.s8 %v5204
        %v5206 = vperm.slane %v5190, %v5205
        %v5208 = vunpack.c.l.s4 1934713408
        %v5209 = vunpack.c.0.s8 %v5208
        %v5210 = vperm.slane %v5202, %v5209
        %v5211 = vrot.slane %v5196, 4
        %v5212 = vsel %vm1001, 0.0, %v5211
        %v5213 = vrot.slane %v5200, 4
        %v5214 = vsel %vm1001, 0.0, %v5213
        %v5215 = vrot.slane %v5206, 4
        %v5216 = vsel %vm1001, 0.0, %v5215
        %v5217 = vrot.slane %v5210, 4
        %v5218 = vsel %vm1001, 0.0, %v5217
        %v5219 = vrot.slane %v895, 4
        %v5220 = vsel %vm1001, 0.0, %v5219
        %v5222 = vunpack.c.l.s4 1983009808
        %v5223 = vunpack.c.0.s8 %v5222
        %v5224 = vperm.slane %v895, %v5223
        %v5226 = vunpack.c.l.s4 1983009808
        %v5227 = vunpack.c.0.s8 %v5226
        %v5228 = vperm.slane %v5220, %v5227
        %v5229 = vrot.slane %v5224, 4
        %v5230 = vsel %vm1001, 0.0, %v5229
        %v5232 = vunpack.c.l.s4 1934713408
        %v5233 = vunpack.c.0.s8 %v5232
        %v5234 = vperm.slane %v5224, %v5233
        %v5236 = vunpack.c.l.s4 1934713408
        %v5237 = vunpack.c.0.s8 %v5236
        %v5238 = vperm.slane %v5230, %v5237
        %v5239 = vrot.slane %v5228, 4
        %v5240 = vsel %vm1001, 0.0, %v5239
        %v5242 = vunpack.c.l.s4 1934713408
        %v5243 = vunpack.c.0.s8 %v5242
        %v5244 = vperm.slane %v5228, %v5243
        %v5246 = vunpack.c.l.s4 1934713408
        %v5247 = vunpack.c.0.s8 %v5246
        %v5248 = vperm.slane %v5240, %v5247
        %v5249 = vrot.slane %v5234, 4
        %v5250 = vsel %vm1001, 0.0, %v5249
        %v5251 = vrot.slane %v5238, 4
        %v5252 = vsel %vm1001, 0.0, %v5251
        %v5253 = vrot.slane %v5244, 4
        %v5254 = vsel %vm1001, 0.0, %v5253
        %v5255 = vrot.slane %v5248, 4
        %v5256 = vsel %vm1001, 0.0, %v5255
        %v5257 = vrot.slane %v902, 4
        %v5258 = vsel %vm1001, 0.0, %v5257
        %v5260 = vunpack.c.l.s4 1983009808
        %v5261 = vunpack.c.0.s8 %v5260
        %v5262 = vperm.slane %v902, %v5261
        %v5264 = vunpack.c.l.s4 1983009808
        %v5265 = vunpack.c.0.s8 %v5264
        %v5266 = vperm.slane %v5258, %v5265
        %v5267 = vrot.slane %v5262, 4
        %v5268 = vsel %vm1001, 0.0, %v5267
        %v5270 = vunpack.c.l.s4 1934713408
        %v5271 = vunpack.c.0.s8 %v5270
        %v5272 = vperm.slane %v5262, %v5271
        %v5274 = vunpack.c.l.s4 1934713408
        %v5275 = vunpack.c.0.s8 %v5274
        %v5276 = vperm.slane %v5268, %v5275
        %v5277 = vrot.slane %v5266, 4
        %v5278 = vsel %vm1001, 0.0, %v5277
        %v5280 = vunpack.c.l.s4 1934713408
        %v5281 = vunpack.c.0.s8 %v5280
        %v5282 = vperm.slane %v5266, %v5281
        %v5284 = vunpack.c.l.s4 1934713408
        %v5285 = vunpack.c.0.s8 %v5284
        %v5286 = vperm.slane %v5278, %v5285
        %v5287 = vrot.slane %v5272, 4
        %v5288 = vsel %vm1001, 0.0, %v5287
        %v5289 = vrot.slane %v5276, 4
        %v5290 = vsel %vm1001, 0.0, %v5289
        %v5291 = vrot.slane %v5282, 4
        %v5292 = vsel %vm1001, 0.0, %v5291
        %v5293 = vrot.slane %v5286, 4
        %v5294 = vsel %vm1001, 0.0, %v5293
        %v5295 = vrot.slane %v908, 4
        %v5296 = vsel %vm1001, 0.0, %v5295
        %v5298 = vunpack.c.l.s4 1983009808
        %v5299 = vunpack.c.0.s8 %v5298
        %v5300 = vperm.slane %v908, %v5299
        %v5302 = vunpack.c.l.s4 1983009808
        %v5303 = vunpack.c.0.s8 %v5302
        %v5304 = vperm.slane %v5296, %v5303
        %v5305 = vrot.slane %v5300, 4
        %v5306 = vsel %vm1001, 0.0, %v5305
        %v5308 = vunpack.c.l.s4 1934713408
        %v5309 = vunpack.c.0.s8 %v5308
        %v5310 = vperm.slane %v5300, %v5309
        %v5312 = vunpack.c.l.s4 1934713408
        %v5313 = vunpack.c.0.s8 %v5312
        %v5314 = vperm.slane %v5306, %v5313
        %v5315 = vrot.slane %v5304, 4
        %v5316 = vsel %vm1001, 0.0, %v5315
        %v5318 = vunpack.c.l.s4 1934713408
        %v5319 = vunpack.c.0.s8 %v5318
        %v5320 = vperm.slane %v5304, %v5319
        %v5322 = vunpack.c.l.s4 1934713408
        %v5323 = vunpack.c.0.s8 %v5322
        %v5324 = vperm.slane %v5316, %v5323
        %v5325 = vrot.slane %v5310, 4
        %v5326 = vsel %vm1001, 0.0, %v5325
        %v5327 = vrot.slane %v5314, 4
        %v5328 = vsel %vm1001, 0.0, %v5327
        %v5329 = vrot.slane %v5320, 4
        %v5330 = vsel %vm1001, 0.0, %v5329
        %v5331 = vrot.slane %v5324, 4
        %v5332 = vsel %vm1001, 0.0, %v5331
        %v5333 = vrot.slane %v915, 4
        %v5334 = vsel %vm1001, 0.0, %v5333
        %v5336 = vunpack.c.l.s4 1983009808
        %v5337 = vunpack.c.0.s8 %v5336
        %v5338 = vperm.slane %v915, %v5337
        %v5340 = vunpack.c.l.s4 1983009808
        %v5341 = vunpack.c.0.s8 %v5340
        %v5342 = vperm.slane %v5334, %v5341
        %v5343 = vrot.slane %v5338, 4
        %v5344 = vsel %vm1001, 0.0, %v5343
        %v5346 = vunpack.c.l.s4 1934713408
        %v5347 = vunpack.c.0.s8 %v5346
        %v5348 = vperm.slane %v5338, %v5347
        %v5350 = vunpack.c.l.s4 1934713408
        %v5351 = vunpack.c.0.s8 %v5350
        %v5352 = vperm.slane %v5344, %v5351
        %v5353 = vrot.slane %v5342, 4
        %v5354 = vsel %vm1001, 0.0, %v5353
        %v5356 = vunpack.c.l.s4 1934713408
        %v5357 = vunpack.c.0.s8 %v5356
        %v5358 = vperm.slane %v5342, %v5357
        %v5360 = vunpack.c.l.s4 1934713408
        %v5361 = vunpack.c.0.s8 %v5360
        %v5362 = vperm.slane %v5354, %v5361
        %v5363 = vrot.slane %v5348, 4
        %v5364 = vsel %vm1001, 0.0, %v5363
        %v5365 = vrot.slane %v5352, 4
        %v5366 = vsel %vm1001, 0.0, %v5365
        %v5367 = vrot.slane %v5358, 4
        %v5368 = vsel %vm1001, 0.0, %v5367
        %v5369 = vrot.slane %v5362, 4
        %v5370 = vsel %vm1001, 0.0, %v5369
        %v5371 = vrot.slane %v921, 4
        %v5372 = vsel %vm1001, 0.0, %v5371
        %v5374 = vunpack.c.l.s4 1983009808
        %v5375 = vunpack.c.0.s8 %v5374
        %v5376 = vperm.slane %v921, %v5375
        %v5378 = vunpack.c.l.s4 1983009808
        %v5379 = vunpack.c.0.s8 %v5378
        %v5380 = vperm.slane %v5372, %v5379
        %v5381 = vrot.slane %v5376, 4
        %v5382 = vsel %vm1001, 0.0, %v5381
        %v5384 = vunpack.c.l.s4 1934713408
        %v5385 = vunpack.c.0.s8 %v5384
        %v5386 = vperm.slane %v5376, %v5385
        %v5388 = vunpack.c.l.s4 1934713408
        %v5389 = vunpack.c.0.s8 %v5388
        %v5390 = vperm.slane %v5382, %v5389
        %v5391 = vrot.slane %v5380, 4
        %v5392 = vsel %vm1001, 0.0, %v5391
        %v5394 = vunpack.c.l.s4 1934713408
        %v5395 = vunpack.c.0.s8 %v5394
        %v5396 = vperm.slane %v5380, %v5395
        %v5398 = vunpack.c.l.s4 1934713408
        %v5399 = vunpack.c.0.s8 %v5398
        %v5400 = vperm.slane %v5392, %v5399
        %v5401 = vrot.slane %v5386, 4
        %v5402 = vsel %vm1001, 0.0, %v5401
        %v5403 = vrot.slane %v5390, 4
        %v5404 = vsel %vm1001, 0.0, %v5403
        %v5405 = vrot.slane %v5396, 4
        %v5406 = vsel %vm1001, 0.0, %v5405
        %v5407 = vrot.slane %v5400, 4
        %v5408 = vsel %vm1001, 0.0, %v5407
        %v5409 = vrot.slane %v928, 4
        %v5410 = vsel %vm1001, 0.0, %v5409
        %v5412 = vunpack.c.l.s4 1983009808
        %v5413 = vunpack.c.0.s8 %v5412
        %v5414 = vperm.slane %v928, %v5413
        %v5416 = vunpack.c.l.s4 1983009808
        %v5417 = vunpack.c.0.s8 %v5416
        %v5418 = vperm.slane %v5410, %v5417
        %v5419 = vrot.slane %v5414, 4
        %v5420 = vsel %vm1001, 0.0, %v5419
        %v5422 = vunpack.c.l.s4 1934713408
        %v5423 = vunpack.c.0.s8 %v5422
        %v5424 = vperm.slane %v5414, %v5423
        %v5426 = vunpack.c.l.s4 1934713408
        %v5427 = vunpack.c.0.s8 %v5426
        %v5428 = vperm.slane %v5420, %v5427
        %v5429 = vrot.slane %v5418, 4
        %v5430 = vsel %vm1001, 0.0, %v5429
        %v5432 = vunpack.c.l.s4 1934713408
        %v5433 = vunpack.c.0.s8 %v5432
        %v5434 = vperm.slane %v5418, %v5433
        %v5436 = vunpack.c.l.s4 1934713408
        %v5437 = vunpack.c.0.s8 %v5436
        %v5438 = vperm.slane %v5430, %v5437
        %v5439 = vrot.slane %v5424, 4
        %v5440 = vsel %vm1001, 0.0, %v5439
        %v5441 = vrot.slane %v5428, 4
        %v5442 = vsel %vm1001, 0.0, %v5441
        %v5443 = vrot.slane %v5434, 4
        %v5444 = vsel %vm1001, 0.0, %v5443
        %v5445 = vrot.slane %v5438, 4
        %v5446 = vsel %vm1001, 0.0, %v5445
        %v5447 = vrot.slane %v934, 4
        %v5448 = vsel %vm1001, 0.0, %v5447
        %v5450 = vunpack.c.l.s4 1983009808
        %v5451 = vunpack.c.0.s8 %v5450
        %v5452 = vperm.slane %v934, %v5451
        %v5454 = vunpack.c.l.s4 1983009808
        %v5455 = vunpack.c.0.s8 %v5454
        %v5456 = vperm.slane %v5448, %v5455
        %v5457 = vrot.slane %v5452, 4
        %v5458 = vsel %vm1001, 0.0, %v5457
        %v5460 = vunpack.c.l.s4 1934713408
        %v5461 = vunpack.c.0.s8 %v5460
        %v5462 = vperm.slane %v5452, %v5461
        %v5464 = vunpack.c.l.s4 1934713408
        %v5465 = vunpack.c.0.s8 %v5464
        %v5466 = vperm.slane %v5458, %v5465
        %v5467 = vrot.slane %v5456, 4
        %v5468 = vsel %vm1001, 0.0, %v5467
        %v5470 = vunpack.c.l.s4 1934713408
        %v5471 = vunpack.c.0.s8 %v5470
        %v5472 = vperm.slane %v5456, %v5471
        %v5474 = vunpack.c.l.s4 1934713408
        %v5475 = vunpack.c.0.s8 %v5474
        %v5476 = vperm.slane %v5468, %v5475
        %v5477 = vrot.slane %v5462, 4
        %v5478 = vsel %vm1001, 0.0, %v5477
        %v5479 = vrot.slane %v5466, 4
        %v5480 = vsel %vm1001, 0.0, %v5479
        %v5481 = vrot.slane %v5472, 4
        %v5482 = vsel %vm1001, 0.0, %v5481
        %v5483 = vrot.slane %v5476, 4
        %v5484 = vsel %vm1001, 0.0, %v5483
        %v5485 = vrot.slane %v941, 4
        %v5486 = vsel %vm1001, 0.0, %v5485
        %v5488 = vunpack.c.l.s4 1983009808
        %v5489 = vunpack.c.0.s8 %v5488
        %v5490 = vperm.slane %v941, %v5489
        %v5492 = vunpack.c.l.s4 1983009808
        %v5493 = vunpack.c.0.s8 %v5492
        %v5494 = vperm.slane %v5486, %v5493
        %v5495 = vrot.slane %v5490, 4
        %v5496 = vsel %vm1001, 0.0, %v5495
        %v5498 = vunpack.c.l.s4 1934713408
        %v5499 = vunpack.c.0.s8 %v5498
        %v5500 = vperm.slane %v5490, %v5499
        %v5502 = vunpack.c.l.s4 1934713408
        %v5503 = vunpack.c.0.s8 %v5502
        %v5504 = vperm.slane %v5496, %v5503
        %v5505 = vrot.slane %v5494, 4
        %v5506 = vsel %vm1001, 0.0, %v5505
        %v5508 = vunpack.c.l.s4 1934713408
        %v5509 = vunpack.c.0.s8 %v5508
        %v5510 = vperm.slane %v5494, %v5509
        %v5512 = vunpack.c.l.s4 1934713408
        %v5513 = vunpack.c.0.s8 %v5512
        %v5514 = vperm.slane %v5506, %v5513
        %v5515 = vrot.slane %v5500, 4
        %v5516 = vsel %vm1001, 0.0, %v5515
        %v5517 = vrot.slane %v5504, 4
        %v5518 = vsel %vm1001, 0.0, %v5517
        %v5519 = vrot.slane %v5510, 4
        %v5520 = vsel %vm1001, 0.0, %v5519
        %v5521 = vrot.slane %v5514, 4
        %v5522 = vsel %vm1001, 0.0, %v5521
        %v5523 = vrot.slane %v947, 4
        %v5524 = vsel %vm1001, 0.0, %v5523
        %v5526 = vunpack.c.l.s4 1983009808
        %v5527 = vunpack.c.0.s8 %v5526
        %v5528 = vperm.slane %v947, %v5527
        %v5530 = vunpack.c.l.s4 1983009808
        %v5531 = vunpack.c.0.s8 %v5530
        %v5532 = vperm.slane %v5524, %v5531
        %v5533 = vrot.slane %v5528, 4
        %v5534 = vsel %vm1001, 0.0, %v5533
        %v5536 = vunpack.c.l.s4 1934713408
        %v5537 = vunpack.c.0.s8 %v5536
        %v5538 = vperm.slane %v5528, %v5537
        %v5540 = vunpack.c.l.s4 1934713408
        %v5541 = vunpack.c.0.s8 %v5540
        %v5542 = vperm.slane %v5534, %v5541
        %v5543 = vrot.slane %v5532, 4
        %v5544 = vsel %vm1001, 0.0, %v5543
        %v5546 = vunpack.c.l.s4 1934713408
        %v5547 = vunpack.c.0.s8 %v5546
        %v5548 = vperm.slane %v5532, %v5547
        %v5550 = vunpack.c.l.s4 1934713408
        %v5551 = vunpack.c.0.s8 %v5550
        %v5552 = vperm.slane %v5544, %v5551
        %v5553 = vrot.slane %v5538, 4
        %v5554 = vsel %vm1001, 0.0, %v5553
        %v5555 = vrot.slane %v5542, 4
        %v5556 = vsel %vm1001, 0.0, %v5555
        %v5557 = vrot.slane %v5548, 4
        %v5558 = vsel %vm1001, 0.0, %v5557
        %v5559 = vrot.slane %v5552, 4
        %v5560 = vsel %vm1001, 0.0, %v5559
        %v5561 = vrot.slane %v954, 4
        %v5562 = vsel %vm1001, 0.0, %v5561
        %v5564 = vunpack.c.l.s4 1983009808
        %v5565 = vunpack.c.0.s8 %v5564
        %v5566 = vperm.slane %v954, %v5565
        %v5568 = vunpack.c.l.s4 1983009808
        %v5569 = vunpack.c.0.s8 %v5568
        %v5570 = vperm.slane %v5562, %v5569
        %v5571 = vrot.slane %v5566, 4
        %v5572 = vsel %vm1001, 0.0, %v5571
        %v5574 = vunpack.c.l.s4 1934713408
        %v5575 = vunpack.c.0.s8 %v5574
        %v5576 = vperm.slane %v5566, %v5575
        %v5578 = vunpack.c.l.s4 1934713408
        %v5579 = vunpack.c.0.s8 %v5578
        %v5580 = vperm.slane %v5572, %v5579
        %v5581 = vrot.slane %v5570, 4
        %v5582 = vsel %vm1001, 0.0, %v5581
        %v5584 = vunpack.c.l.s4 1934713408
        %v5585 = vunpack.c.0.s8 %v5584
        %v5586 = vperm.slane %v5570, %v5585
        %v5588 = vunpack.c.l.s4 1934713408
        %v5589 = vunpack.c.0.s8 %v5588
        %v5590 = vperm.slane %v5582, %v5589
        %v5591 = vrot.slane %v5576, 4
        %v5592 = vsel %vm1001, 0.0, %v5591
        %v5593 = vrot.slane %v5580, 4
        %v5594 = vsel %vm1001, 0.0, %v5593
        %v5595 = vrot.slane %v5586, 4
        %v5596 = vsel %vm1001, 0.0, %v5595
        %v5597 = vrot.slane %v5590, 4
        %v5598 = vsel %vm1001, 0.0, %v5597
        %v5599 = vrot.slane %v960, 4
        %v5600 = vsel %vm1001, 0.0, %v5599
        %v5602 = vunpack.c.l.s4 1983009808
        %v5603 = vunpack.c.0.s8 %v5602
        %v5604 = vperm.slane %v960, %v5603
        %v5606 = vunpack.c.l.s4 1983009808
        %v5607 = vunpack.c.0.s8 %v5606
        %v5608 = vperm.slane %v5600, %v5607
        %v5609 = vrot.slane %v5604, 4
        %v5610 = vsel %vm1001, 0.0, %v5609
        %v5612 = vunpack.c.l.s4 1934713408
        %v5613 = vunpack.c.0.s8 %v5612
        %v5614 = vperm.slane %v5604, %v5613
        %v5616 = vunpack.c.l.s4 1934713408
        %v5617 = vunpack.c.0.s8 %v5616
        %v5618 = vperm.slane %v5610, %v5617
        %v5619 = vrot.slane %v5608, 4
        %v5620 = vsel %vm1001, 0.0, %v5619
        %v5622 = vunpack.c.l.s4 1934713408
        %v5623 = vunpack.c.0.s8 %v5622
        %v5624 = vperm.slane %v5608, %v5623
        %v5626 = vunpack.c.l.s4 1934713408
        %v5627 = vunpack.c.0.s8 %v5626
        %v5628 = vperm.slane %v5620, %v5627
        %v5629 = vrot.slane %v5614, 4
        %v5630 = vsel %vm1001, 0.0, %v5629
        %v5631 = vrot.slane %v5618, 4
        %v5632 = vsel %vm1001, 0.0, %v5631
        %v5633 = vrot.slane %v5624, 4
        %v5634 = vsel %vm1001, 0.0, %v5633
        %v5635 = vrot.slane %v5628, 4
        %v5636 = vsel %vm1001, 0.0, %v5635
        %v5637 = vrot.slane %v967, 4
        %v5638 = vsel %vm1001, 0.0, %v5637
        %v5640 = vunpack.c.l.s4 1983009808
        %v5641 = vunpack.c.0.s8 %v5640
        %v5642 = vperm.slane %v967, %v5641
        %v5644 = vunpack.c.l.s4 1983009808
        %v5645 = vunpack.c.0.s8 %v5644
        %v5646 = vperm.slane %v5638, %v5645
        %v5647 = vrot.slane %v5642, 4
        %v5648 = vsel %vm1001, 0.0, %v5647
        %v5650 = vunpack.c.l.s4 1934713408
        %v5651 = vunpack.c.0.s8 %v5650
        %v5652 = vperm.slane %v5642, %v5651
        %v5654 = vunpack.c.l.s4 1934713408
        %v5655 = vunpack.c.0.s8 %v5654
        %v5656 = vperm.slane %v5648, %v5655
        %v5657 = vrot.slane %v5646, 4
        %v5658 = vsel %vm1001, 0.0, %v5657
        %v5660 = vunpack.c.l.s4 1934713408
        %v5661 = vunpack.c.0.s8 %v5660
        %v5662 = vperm.slane %v5646, %v5661
        %v5664 = vunpack.c.l.s4 1934713408
        %v5665 = vunpack.c.0.s8 %v5664
        %v5666 = vperm.slane %v5658, %v5665
        %v5667 = vrot.slane %v5652, 4
        %v5668 = vsel %vm1001, 0.0, %v5667
        %v5669 = vrot.slane %v5656, 4
        %v5670 = vsel %vm1001, 0.0, %v5669
        %v5671 = vrot.slane %v5662, 4
        %v5672 = vsel %vm1001, 0.0, %v5671
        %v5673 = vrot.slane %v5666, 4
        %v5674 = vsel %vm1001, 0.0, %v5673
        %v5675 = vrot.slane %v973, 4
        %v5676 = vsel %vm1001, 0.0, %v5675
        %v5678 = vunpack.c.l.s4 1983009808
        %v5679 = vunpack.c.0.s8 %v5678
        %v5680 = vperm.slane %v973, %v5679
        %v5682 = vunpack.c.l.s4 1983009808
        %v5683 = vunpack.c.0.s8 %v5682
        %v5684 = vperm.slane %v5676, %v5683
        %v5685 = vrot.slane %v5680, 4
        %v5686 = vsel %vm1001, 0.0, %v5685
        %v5688 = vunpack.c.l.s4 1934713408
        %v5689 = vunpack.c.0.s8 %v5688
        %v5690 = vperm.slane %v5680, %v5689
        %v5692 = vunpack.c.l.s4 1934713408
        %v5693 = vunpack.c.0.s8 %v5692
        %v5694 = vperm.slane %v5686, %v5693
        %v5695 = vrot.slane %v5684, 4
        %v5696 = vsel %vm1001, 0.0, %v5695
        %v5698 = vunpack.c.l.s4 1934713408
        %v5699 = vunpack.c.0.s8 %v5698
        %v5700 = vperm.slane %v5684, %v5699
        %v5702 = vunpack.c.l.s4 1934713408
        %v5703 = vunpack.c.0.s8 %v5702
        %v5704 = vperm.slane %v5696, %v5703
        %v5705 = vrot.slane %v5690, 4
        %v5706 = vsel %vm1001, 0.0, %v5705
        %v5707 = vrot.slane %v5694, 4
        %v5708 = vsel %vm1001, 0.0, %v5707
        %v5709 = vrot.slane %v5700, 4
        %v5710 = vsel %vm1001, 0.0, %v5709
        %v5711 = vrot.slane %v5704, 4
        %v5712 = vsel %vm1001, 0.0, %v5711
        %v5713 = vrot.slane %v980, 4
        %v5714 = vsel %vm1001, 0.0, %v5713
        %v5716 = vunpack.c.l.s4 1983009808
        %v5717 = vunpack.c.0.s8 %v5716
        %v5718 = vperm.slane %v980, %v5717
        %v5720 = vunpack.c.l.s4 1983009808
        %v5721 = vunpack.c.0.s8 %v5720
        %v5722 = vperm.slane %v5714, %v5721
        %v5723 = vrot.slane %v5718, 4
        %v5724 = vsel %vm1001, 0.0, %v5723
        %v5726 = vunpack.c.l.s4 1934713408
        %v5727 = vunpack.c.0.s8 %v5726
        %v5728 = vperm.slane %v5718, %v5727
        %v5730 = vunpack.c.l.s4 1934713408
        %v5731 = vunpack.c.0.s8 %v5730
        %v5732 = vperm.slane %v5724, %v5731
        %v5733 = vrot.slane %v5722, 4
        %v5734 = vsel %vm1001, 0.0, %v5733
        %v5736 = vunpack.c.l.s4 1934713408
        %v5737 = vunpack.c.0.s8 %v5736
        %v5738 = vperm.slane %v5722, %v5737
        %v5740 = vunpack.c.l.s4 1934713408
        %v5741 = vunpack.c.0.s8 %v5740
        %v5742 = vperm.slane %v5734, %v5741
        %v5743 = vrot.slane %v5728, 4
        %v5744 = vsel %vm1001, 0.0, %v5743
        %v5745 = vrot.slane %v5732, 4
        %v5746 = vsel %vm1001, 0.0, %v5745
        %v5747 = vrot.slane %v5738, 4
        %v5748 = vsel %vm1001, 0.0, %v5747
        %v5749 = vrot.slane %v5742, 4
        %v5750 = vsel %vm1001, 0.0, %v5749
        %v5751 = vrot.slane %v986, 4
        %v5752 = vsel %vm1001, 0.0, %v5751
        %v5754 = vunpack.c.l.s4 1983009808
        %v5755 = vunpack.c.0.s8 %v5754
        %v5756 = vperm.slane %v986, %v5755
        %v5758 = vunpack.c.l.s4 1983009808
        %v5759 = vunpack.c.0.s8 %v5758
        %v5760 = vperm.slane %v5752, %v5759
        %v5761 = vrot.slane %v5756, 4
        %v5762 = vsel %vm1001, 0.0, %v5761
        %v5764 = vunpack.c.l.s4 1934713408
        %v5765 = vunpack.c.0.s8 %v5764
        %v5766 = vperm.slane %v5756, %v5765
        %v5768 = vunpack.c.l.s4 1934713408
        %v5769 = vunpack.c.0.s8 %v5768
        %v5770 = vperm.slane %v5762, %v5769
        %v5771 = vrot.slane %v5760, 4
        %v5772 = vsel %vm1001, 0.0, %v5771
        %v5774 = vunpack.c.l.s4 1934713408
        %v5775 = vunpack.c.0.s8 %v5774
        %v5776 = vperm.slane %v5760, %v5775
        %v5778 = vunpack.c.l.s4 1934713408
        %v5779 = vunpack.c.0.s8 %v5778
        %v5780 = vperm.slane %v5772, %v5779
        %v5781 = vrot.slane %v5766, 4
        %v5782 = vsel %vm1001, 0.0, %v5781
        %v5783 = vrot.slane %v5770, 4
        %v5784 = vsel %vm1001, 0.0, %v5783
        %v5785 = vrot.slane %v5776, 4
        %v5786 = vsel %vm1001, 0.0, %v5785
        %v5787 = vrot.slane %v5780, 4
        %v5788 = vsel %vm1001, 0.0, %v5787
        %v5789 = vrot.slane %v993, 4
        %v5790 = vsel %vm1001, 0.0, %v5789
        %v5792 = vunpack.c.l.s4 1983009808
        %v5793 = vunpack.c.0.s8 %v5792
        %v5794 = vperm.slane %v993, %v5793
        %v5796 = vunpack.c.l.s4 1983009808
        %v5797 = vunpack.c.0.s8 %v5796
        %v5798 = vperm.slane %v5790, %v5797
        %v5799 = vrot.slane %v5794, 4
        %v5800 = vsel %vm1001, 0.0, %v5799
        %v5802 = vunpack.c.l.s4 1934713408
        %v5803 = vunpack.c.0.s8 %v5802
        %v5804 = vperm.slane %v5794, %v5803
        %v5806 = vunpack.c.l.s4 1934713408
        %v5807 = vunpack.c.0.s8 %v5806
        %v5808 = vperm.slane %v5800, %v5807
        %v5809 = vrot.slane %v5798, 4
        %v5810 = vsel %vm1001, 0.0, %v5809
        %v5812 = vunpack.c.l.s4 1934713408
        %v5813 = vunpack.c.0.s8 %v5812
        %v5814 = vperm.slane %v5798, %v5813
        %v5816 = vunpack.c.l.s4 1934713408
        %v5817 = vunpack.c.0.s8 %v5816
        %v5818 = vperm.slane %v5810, %v5817
        %v5819 = vrot.slane %v5804, 4
        %v5820 = vsel %vm1001, 0.0, %v5819
        %v5821 = vrot.slane %v5808, 4
        %v5822 = vsel %vm1001, 0.0, %v5821
        %v5823 = vrot.slane %v5814, 4
        %v5824 = vsel %vm1001, 0.0, %v5823
        %v5825 = vrot.slane %v5818, 4
        %v5826 = vsel %vm1001, 0.0, %v5825
        %v5827 = vrot.slane %v999, 4
        %v5828 = vsel %vm1001, 0.0, %v5827
        %v5830 = vunpack.c.l.s4 1983009808
        %v5831 = vunpack.c.0.s8 %v5830
        %v5832 = vperm.slane %v999, %v5831
        %v5834 = vunpack.c.l.s4 1983009808
        %v5835 = vunpack.c.0.s8 %v5834
        %v5836 = vperm.slane %v5828, %v5835
        %v5837 = vrot.slane %v5832, 4
        %v5838 = vsel %vm1001, 0.0, %v5837
        %v5840 = vunpack.c.l.s4 1934713408
        %v5841 = vunpack.c.0.s8 %v5840
        %v5842 = vperm.slane %v5832, %v5841
        %v5844 = vunpack.c.l.s4 1934713408
        %v5845 = vunpack.c.0.s8 %v5844
        %v5846 = vperm.slane %v5838, %v5845
        %v5847 = vrot.slane %v5836, 4
        %v5848 = vsel %vm1001, 0.0, %v5847
        %v5850 = vunpack.c.l.s4 1934713408
        %v5851 = vunpack.c.0.s8 %v5850
        %v5852 = vperm.slane %v5836, %v5851
        %v5854 = vunpack.c.l.s4 1934713408
        %v5855 = vunpack.c.0.s8 %v5854
        %v5856 = vperm.slane %v5848, %v5855
        %v5857 = vrot.slane %v5842, 4
        %v5858 = vsel %vm1001, 0.0, %v5857
        %v5859 = vrot.slane %v5846, 4
        %v5860 = vsel %vm1001, 0.0, %v5859
        %v5861 = vrot.slane %v5852, 4
        %v5862 = vsel %vm1001, 0.0, %v5861
        %v5863 = vrot.slane %v5856, 4
        %v5864 = vsel %vm1001, 0.0, %v5863
        %5929 = vrot.lane.b32.xlu0 %v1032, 2
        %v5930 = vpop.permute.xlu0 %5929
        %5931 = vrot.lane.b32.xlu0 %v1108, 2
        %v5932 = vpop.permute.xlu0 %5931
        %5933 = vrot.lane.b32.xlu0 %v1184, 2
        %v5934 = vpop.permute.xlu0 %5933
        %5935 = vrot.lane.b32.xlu0 %v1260, 2
        %v5936 = vpop.permute.xlu0 %5935
        %5937 = vrot.lane.b32.xlu0 %v1336, 2
        %v5938 = vpop.permute.xlu0 %5937
        %5939 = vrot.lane.b32.xlu0 %v1412, 2
        %v5940 = vpop.permute.xlu0 %5939
        %5941 = vrot.lane.b32.xlu0 %v1488, 2
        %v5942 = vpop.permute.xlu0 %5941
        %5943 = vrot.lane.b32.xlu0 %v1564, 2
        %v5944 = vpop.permute.xlu0 %5943
        %5945 = vrot.lane.b32.xlu0 %v1640, 2
        %v5946 = vpop.permute.xlu0 %5945
        %5947 = vrot.lane.b32.xlu0 %v1716, 2
        %v5948 = vpop.permute.xlu0 %5947
        %5949 = vrot.lane.b32.xlu0 %v1792, 2
        %v5950 = vpop.permute.xlu0 %5949
        %5951 = vrot.lane.b32.xlu0 %v1868, 2
        %v5952 = vpop.permute.xlu0 %5951
        %5953 = vrot.lane.b32.xlu0 %v1944, 2
        %v5954 = vpop.permute.xlu0 %5953
        %5955 = vrot.lane.b32.xlu0 %v2020, 2
        %v5956 = vpop.permute.xlu0 %5955
        %5957 = vrot.lane.b32.xlu0 %v2096, 2
        %v5958 = vpop.permute.xlu0 %5957
        %5959 = vrot.lane.b32.xlu0 %v2172, 2
        %v5960 = vpop.permute.xlu0 %5959
        %5961 = vrot.lane.b32.xlu0 %v2248, 2
        %v5962 = vpop.permute.xlu0 %5961
        %5963 = vrot.lane.b32.xlu0 %v2324, 2
        %v5964 = vpop.permute.xlu0 %5963
        %5965 = vrot.lane.b32.xlu0 %v2400, 2
        %v5966 = vpop.permute.xlu0 %5965
        %5967 = vrot.lane.b32.xlu0 %v2476, 2
        %v5968 = vpop.permute.xlu0 %5967
        %5969 = vrot.lane.b32.xlu0 %v2552, 2
        %v5970 = vpop.permute.xlu0 %5969
        %5971 = vrot.lane.b32.xlu0 %v2628, 2
        %v5972 = vpop.permute.xlu0 %5971
        %5973 = vrot.lane.b32.xlu0 %v2704, 2
        %v5974 = vpop.permute.xlu0 %5973
        %5975 = vrot.lane.b32.xlu0 %v2780, 2
        %v5976 = vpop.permute.xlu0 %5975
        %5977 = vrot.lane.b32.xlu0 %v2856, 2
        %v5978 = vpop.permute.xlu0 %5977
        %5979 = vrot.lane.b32.xlu0 %v2932, 2
        %v5980 = vpop.permute.xlu0 %5979
        %5981 = vrot.lane.b32.xlu0 %v3008, 2
        %v5982 = vpop.permute.xlu0 %5981
        %5983 = vrot.lane.b32.xlu0 %v3084, 2
        %v5984 = vpop.permute.xlu0 %5983
        %5985 = vrot.lane.b32.xlu0 %v3160, 2
        %v5986 = vpop.permute.xlu0 %5985
        %5987 = vrot.lane.b32.xlu0 %v3236, 2
        %v5988 = vpop.permute.xlu0 %5987
        %5989 = vrot.lane.b32.xlu0 %v3312, 2
        %v5990 = vpop.permute.xlu0 %5989
        %5991 = vrot.lane.b32.xlu0 %v3388, 2
        %v5992 = vpop.permute.xlu0 %5991
        %5993 = vrot.lane.b32.xlu0 %v3464, 2
        %v5994 = vpop.permute.xlu0 %5993
        %5995 = vrot.lane.b32.xlu0 %v3540, 2
        %v5996 = vpop.permute.xlu0 %5995
        %5997 = vrot.lane.b32.xlu0 %v3616, 2
        %v5998 = vpop.permute.xlu0 %5997
        %5999 = vrot.lane.b32.xlu0 %v3692, 2
        %v6000 = vpop.permute.xlu0 %5999
        %6001 = vrot.lane.b32.xlu0 %v3768, 2
        %v6002 = vpop.permute.xlu0 %6001
        %6003 = vrot.lane.b32.xlu0 %v3844, 2
        %v6004 = vpop.permute.xlu0 %6003
        %6005 = vrot.lane.b32.xlu0 %v3920, 2
        %v6006 = vpop.permute.xlu0 %6005
        %6007 = vrot.lane.b32.xlu0 %v3996, 2
        %v6008 = vpop.permute.xlu0 %6007
        %6009 = vrot.lane.b32.xlu0 %v4072, 2
        %v6010 = vpop.permute.xlu0 %6009
        %6011 = vrot.lane.b32.xlu0 %v4148, 2
        %v6012 = vpop.permute.xlu0 %6011
        %6013 = vrot.lane.b32.xlu0 %v4224, 2
        %v6014 = vpop.permute.xlu0 %6013
        %6015 = vrot.lane.b32.xlu0 %v4300, 2
        %v6016 = vpop.permute.xlu0 %6015
        %6017 = vrot.lane.b32.xlu0 %v4376, 2
        %v6018 = vpop.permute.xlu0 %6017
        %6019 = vrot.lane.b32.xlu0 %v4452, 2
        %v6020 = vpop.permute.xlu0 %6019
        %6021 = vrot.lane.b32.xlu0 %v4528, 2
        %v6022 = vpop.permute.xlu0 %6021
        %6023 = vrot.lane.b32.xlu0 %v4604, 2
        %v6024 = vpop.permute.xlu0 %6023
        %6025 = vrot.lane.b32.xlu0 %v4680, 2
        %v6026 = vpop.permute.xlu0 %6025
        %6027 = vrot.lane.b32.xlu0 %v4756, 2
        %v6028 = vpop.permute.xlu0 %6027
        %6029 = vrot.lane.b32.xlu0 %v4832, 2
        %v6030 = vpop.permute.xlu0 %6029
        %6031 = vrot.lane.b32.xlu0 %v4908, 2
        %v6032 = vpop.permute.xlu0 %6031
        %6033 = vrot.lane.b32.xlu0 %v4984, 2
        %v6034 = vpop.permute.xlu0 %6033
        %6035 = vrot.lane.b32.xlu0 %v5060, 2
        %v6036 = vpop.permute.xlu0 %6035
        %6037 = vrot.lane.b32.xlu0 %v5136, 2
        %v6038 = vpop.permute.xlu0 %6037
        %6039 = vrot.lane.b32.xlu0 %v5212, 2
        %v6040 = vpop.permute.xlu0 %6039
        %6041 = vrot.lane.b32.xlu0 %v5288, 2
        %v6042 = vpop.permute.xlu0 %6041
        %6043 = vrot.lane.b32.xlu0 %v5364, 2
        %v6044 = vpop.permute.xlu0 %6043
        %6045 = vrot.lane.b32.xlu0 %v5440, 2
        %v6046 = vpop.permute.xlu0 %6045
        %6047 = vrot.lane.b32.xlu0 %v5516, 2
        %v6048 = vpop.permute.xlu0 %6047
        %6049 = vrot.lane.b32.xlu0 %v5592, 2
        %v6050 = vpop.permute.xlu0 %6049
        %6051 = vrot.lane.b32.xlu0 %v5668, 2
        %v6052 = vpop.permute.xlu0 %6051
        %6053 = vrot.lane.b32.xlu0 %v5744, 2
        %v6054 = vpop.permute.xlu0 %6053
        %6055 = vrot.lane.b32.xlu0 %v5820, 2
        %v6056 = vpop.permute.xlu0 %6055
        %6185 = vrot.lane.b32.xlu0 %v1020, 4
        %v6186 = vpop.permute.xlu0 %6185
        %6187 = vrot.lane.b32.xlu0 %v1096, 4
        %v6188 = vpop.permute.xlu0 %6187
        %6189 = vrot.lane.b32.xlu0 %v1172, 4
        %v6190 = vpop.permute.xlu0 %6189
        %6191 = vrot.lane.b32.xlu0 %v1248, 4
        %v6192 = vpop.permute.xlu0 %6191
        %6193 = vrot.lane.b32.xlu0 %v1324, 4
        %v6194 = vpop.permute.xlu0 %6193
        %6195 = vrot.lane.b32.xlu0 %v1400, 4
        %v6196 = vpop.permute.xlu0 %6195
        %6197 = vrot.lane.b32.xlu0 %v1476, 4
        %v6198 = vpop.permute.xlu0 %6197
        %6199 = vrot.lane.b32.xlu0 %v1552, 4
        %v6200 = vpop.permute.xlu0 %6199
        %6201 = vrot.lane.b32.xlu0 %v1628, 4
        %v6202 = vpop.permute.xlu0 %6201
        %6203 = vrot.lane.b32.xlu0 %v1704, 4
        %v6204 = vpop.permute.xlu0 %6203
        %6205 = vrot.lane.b32.xlu0 %v1780, 4
        %v6206 = vpop.permute.xlu0 %6205
        %6207 = vrot.lane.b32.xlu0 %v1856, 4
        %v6208 = vpop.permute.xlu0 %6207
        %6209 = vrot.lane.b32.xlu0 %v1932, 4
        %v6210 = vpop.permute.xlu0 %6209
        %6211 = vrot.lane.b32.xlu0 %v2008, 4
        %v6212 = vpop.permute.xlu0 %6211
        %6213 = vrot.lane.b32.xlu0 %v2084, 4
        %v6214 = vpop.permute.xlu0 %6213
        %6215 = vrot.lane.b32.xlu0 %v2160, 4
        %v6216 = vpop.permute.xlu0 %6215
        %6217 = vrot.lane.b32.xlu0 %v2236, 4
        %v6218 = vpop.permute.xlu0 %6217
        %6219 = vrot.lane.b32.xlu0 %v2312, 4
        %v6220 = vpop.permute.xlu0 %6219
        %6221 = vrot.lane.b32.xlu0 %v2388, 4
        %v6222 = vpop.permute.xlu0 %6221
        %6223 = vrot.lane.b32.xlu0 %v2464, 4
        %v6224 = vpop.permute.xlu0 %6223
        %6225 = vrot.lane.b32.xlu0 %v2540, 4
        %v6226 = vpop.permute.xlu0 %6225
        %6227 = vrot.lane.b32.xlu0 %v2616, 4
        %v6228 = vpop.permute.xlu0 %6227
        %6229 = vrot.lane.b32.xlu0 %v2692, 4
        %v6230 = vpop.permute.xlu0 %6229
        %6231 = vrot.lane.b32.xlu0 %v2768, 4
        %v6232 = vpop.permute.xlu0 %6231
        %6233 = vrot.lane.b32.xlu0 %v2844, 4
        %v6234 = vpop.permute.xlu0 %6233
        %6235 = vrot.lane.b32.xlu0 %v2920, 4
        %v6236 = vpop.permute.xlu0 %6235
        %6237 = vrot.lane.b32.xlu0 %v2996, 4
        %v6238 = vpop.permute.xlu0 %6237
        %6239 = vrot.lane.b32.xlu0 %v3072, 4
        %v6240 = vpop.permute.xlu0 %6239
        %6241 = vrot.lane.b32.xlu0 %v3148, 4
        %v6242 = vpop.permute.xlu0 %6241
        %6243 = vrot.lane.b32.xlu0 %v3224, 4
        %v6244 = vpop.permute.xlu0 %6243
        %6245 = vrot.lane.b32.xlu0 %v3300, 4
        %v6246 = vpop.permute.xlu0 %6245
        %6247 = vrot.lane.b32.xlu0 %v3376, 4
        %v6248 = vpop.permute.xlu0 %6247
        %6249 = vrot.lane.b32.xlu0 %v3452, 4
        %v6250 = vpop.permute.xlu0 %6249
        %6251 = vrot.lane.b32.xlu0 %v3528, 4
        %v6252 = vpop.permute.xlu0 %6251
        %6253 = vrot.lane.b32.xlu0 %v3604, 4
        %v6254 = vpop.permute.xlu0 %6253
        %6255 = vrot.lane.b32.xlu0 %v3680, 4
        %v6256 = vpop.permute.xlu0 %6255
        %6257 = vrot.lane.b32.xlu0 %v3756, 4
        %v6258 = vpop.permute.xlu0 %6257
        %6259 = vrot.lane.b32.xlu0 %v3832, 4
        %v6260 = vpop.permute.xlu0 %6259
        %6261 = vrot.lane.b32.xlu0 %v3908, 4
        %v6262 = vpop.permute.xlu0 %6261
        %6263 = vrot.lane.b32.xlu0 %v3984, 4
        %v6264 = vpop.permute.xlu0 %6263
        %6265 = vrot.lane.b32.xlu0 %v4060, 4
        %v6266 = vpop.permute.xlu0 %6265
        %6267 = vrot.lane.b32.xlu0 %v4136, 4
        %v6268 = vpop.permute.xlu0 %6267
        %6269 = vrot.lane.b32.xlu0 %v4212, 4
        %v6270 = vpop.permute.xlu0 %6269
        %6271 = vrot.lane.b32.xlu0 %v4288, 4
        %v6272 = vpop.permute.xlu0 %6271
        %6273 = vrot.lane.b32.xlu0 %v4364, 4
        %v6274 = vpop.permute.xlu0 %6273
        %6275 = vrot.lane.b32.xlu0 %v4440, 4
        %v6276 = vpop.permute.xlu0 %6275
        %6277 = vrot.lane.b32.xlu0 %v4516, 4
        %v6278 = vpop.permute.xlu0 %6277
        %6279 = vrot.lane.b32.xlu0 %v4592, 4
        %v6280 = vpop.permute.xlu0 %6279
        %6281 = vrot.lane.b32.xlu0 %v4668, 4
        %v6282 = vpop.permute.xlu0 %6281
        %6283 = vrot.lane.b32.xlu0 %v4744, 4
        %v6284 = vpop.permute.xlu0 %6283
        %6285 = vrot.lane.b32.xlu0 %v4820, 4
        %v6286 = vpop.permute.xlu0 %6285
        %6287 = vrot.lane.b32.xlu0 %v4896, 4
        %v6288 = vpop.permute.xlu0 %6287
        %6289 = vrot.lane.b32.xlu0 %v4972, 4
        %v6290 = vpop.permute.xlu0 %6289
        %6291 = vrot.lane.b32.xlu0 %v5048, 4
        %v6292 = vpop.permute.xlu0 %6291
        %6293 = vrot.lane.b32.xlu0 %v5124, 4
        %v6294 = vpop.permute.xlu0 %6293
        %6295 = vrot.lane.b32.xlu0 %v5200, 4
        %v6296 = vpop.permute.xlu0 %6295
        %6297 = vrot.lane.b32.xlu0 %v5276, 4
        %v6298 = vpop.permute.xlu0 %6297
        %6299 = vrot.lane.b32.xlu0 %v5352, 4
        %v6300 = vpop.permute.xlu0 %6299
        %6301 = vrot.lane.b32.xlu0 %v5428, 4
        %v6302 = vpop.permute.xlu0 %6301
        %6303 = vrot.lane.b32.xlu0 %v5504, 4
        %v6304 = vpop.permute.xlu0 %6303
        %6305 = vrot.lane.b32.xlu0 %v5580, 4
        %v6306 = vpop.permute.xlu0 %6305
        %6307 = vrot.lane.b32.xlu0 %v5656, 4
        %v6308 = vpop.permute.xlu0 %6307
        %6309 = vrot.lane.b32.xlu0 %v5732, 4
        %v6310 = vpop.permute.xlu0 %6309
        %6311 = vrot.lane.b32.xlu0 %v5808, 4
        %v6312 = vpop.permute.xlu0 %6311
        %6441 = vrot.lane.b32.xlu0 %v1034, 6
        %v6442 = vpop.permute.xlu0 %6441
        %6443 = vrot.lane.b32.xlu0 %v1110, 6
        %v6444 = vpop.permute.xlu0 %6443
        %6445 = vrot.lane.b32.xlu0 %v1186, 6
        %v6446 = vpop.permute.xlu0 %6445
        %6447 = vrot.lane.b32.xlu0 %v1262, 6
        %v6448 = vpop.permute.xlu0 %6447
        %6449 = vrot.lane.b32.xlu0 %v1338, 6
        %v6450 = vpop.permute.xlu0 %6449
        %6451 = vrot.lane.b32.xlu0 %v1414, 6
        %v6452 = vpop.permute.xlu0 %6451
        %6453 = vrot.lane.b32.xlu0 %v1490, 6
        %v6454 = vpop.permute.xlu0 %6453
        %6455 = vrot.lane.b32.xlu0 %v1566, 6
        %v6456 = vpop.permute.xlu0 %6455
        %6457 = vrot.lane.b32.xlu0 %v1642, 6
        %v6458 = vpop.permute.xlu0 %6457
        %6459 = vrot.lane.b32.xlu0 %v1718, 6
        %v6460 = vpop.permute.xlu0 %6459
        %6461 = vrot.lane.b32.xlu0 %v1794, 6
        %v6462 = vpop.permute.xlu0 %6461
        %6463 = vrot.lane.b32.xlu0 %v1870, 6
        %v6464 = vpop.permute.xlu0 %6463
        %6465 = vrot.lane.b32.xlu0 %v1946, 6
        %v6466 = vpop.permute.xlu0 %6465
        %6467 = vrot.lane.b32.xlu0 %v2022, 6
        %v6468 = vpop.permute.xlu0 %6467
        %6469 = vrot.lane.b32.xlu0 %v2098, 6
        %v6470 = vpop.permute.xlu0 %6469
        %6471 = vrot.lane.b32.xlu0 %v2174, 6
        %v6472 = vpop.permute.xlu0 %6471
        %6473 = vrot.lane.b32.xlu0 %v2250, 6
        %v6474 = vpop.permute.xlu0 %6473
        %6475 = vrot.lane.b32.xlu0 %v2326, 6
        %v6476 = vpop.permute.xlu0 %6475
        %6477 = vrot.lane.b32.xlu0 %v2402, 6
        %v6478 = vpop.permute.xlu0 %6477
        %6479 = vrot.lane.b32.xlu0 %v2478, 6
        %v6480 = vpop.permute.xlu0 %6479
        %6481 = vrot.lane.b32.xlu0 %v2554, 6
        %v6482 = vpop.permute.xlu0 %6481
        %6483 = vrot.lane.b32.xlu0 %v2630, 6
        %v6484 = vpop.permute.xlu0 %6483
        %6485 = vrot.lane.b32.xlu0 %v2706, 6
        %v6486 = vpop.permute.xlu0 %6485
        %6487 = vrot.lane.b32.xlu0 %v2782, 6
        %v6488 = vpop.permute.xlu0 %6487
        %6489 = vrot.lane.b32.xlu0 %v2858, 6
        %v6490 = vpop.permute.xlu0 %6489
        %6491 = vrot.lane.b32.xlu0 %v2934, 6
        %v6492 = vpop.permute.xlu0 %6491
        %6493 = vrot.lane.b32.xlu0 %v3010, 6
        %v6494 = vpop.permute.xlu0 %6493
        %6495 = vrot.lane.b32.xlu0 %v3086, 6
        %v6496 = vpop.permute.xlu0 %6495
        %6497 = vrot.lane.b32.xlu0 %v3162, 6
        %v6498 = vpop.permute.xlu0 %6497
        %6499 = vrot.lane.b32.xlu0 %v3238, 6
        %v6500 = vpop.permute.xlu0 %6499
        %6501 = vrot.lane.b32.xlu0 %v3314, 6
        %v6502 = vpop.permute.xlu0 %6501
        %6503 = vrot.lane.b32.xlu0 %v3390, 6
        %v6504 = vpop.permute.xlu0 %6503
        %6505 = vrot.lane.b32.xlu0 %v3466, 6
        %v6506 = vpop.permute.xlu0 %6505
        %6507 = vrot.lane.b32.xlu0 %v3542, 6
        %v6508 = vpop.permute.xlu0 %6507
        %6509 = vrot.lane.b32.xlu0 %v3618, 6
        %v6510 = vpop.permute.xlu0 %6509
        %6511 = vrot.lane.b32.xlu0 %v3694, 6
        %v6512 = vpop.permute.xlu0 %6511
        %6513 = vrot.lane.b32.xlu0 %v3770, 6
        %v6514 = vpop.permute.xlu0 %6513
        %6515 = vrot.lane.b32.xlu0 %v3846, 6
        %v6516 = vpop.permute.xlu0 %6515
        %6517 = vrot.lane.b32.xlu0 %v3922, 6
        %v6518 = vpop.permute.xlu0 %6517
        %6519 = vrot.lane.b32.xlu0 %v3998, 6
        %v6520 = vpop.permute.xlu0 %6519
        %6521 = vrot.lane.b32.xlu0 %v4074, 6
        %v6522 = vpop.permute.xlu0 %6521
        %6523 = vrot.lane.b32.xlu0 %v4150, 6
        %v6524 = vpop.permute.xlu0 %6523
        %6525 = vrot.lane.b32.xlu0 %v4226, 6
        %v6526 = vpop.permute.xlu0 %6525
        %6527 = vrot.lane.b32.xlu0 %v4302, 6
        %v6528 = vpop.permute.xlu0 %6527
        %6529 = vrot.lane.b32.xlu0 %v4378, 6
        %v6530 = vpop.permute.xlu0 %6529
        %6531 = vrot.lane.b32.xlu0 %v4454, 6
        %v6532 = vpop.permute.xlu0 %6531
        %6533 = vrot.lane.b32.xlu0 %v4530, 6
        %v6534 = vpop.permute.xlu0 %6533
        %6535 = vrot.lane.b32.xlu0 %v4606, 6
        %v6536 = vpop.permute.xlu0 %6535
        %6537 = vrot.lane.b32.xlu0 %v4682, 6
        %v6538 = vpop.permute.xlu0 %6537
        %6539 = vrot.lane.b32.xlu0 %v4758, 6
        %v6540 = vpop.permute.xlu0 %6539
        %6541 = vrot.lane.b32.xlu0 %v4834, 6
        %v6542 = vpop.permute.xlu0 %6541
        %6543 = vrot.lane.b32.xlu0 %v4910, 6
        %v6544 = vpop.permute.xlu0 %6543
        %6545 = vrot.lane.b32.xlu0 %v4986, 6
        %v6546 = vpop.permute.xlu0 %6545
        %6547 = vrot.lane.b32.xlu0 %v5062, 6
        %v6548 = vpop.permute.xlu0 %6547
        %6549 = vrot.lane.b32.xlu0 %v5138, 6
        %v6550 = vpop.permute.xlu0 %6549
        %6551 = vrot.lane.b32.xlu0 %v5214, 6
        %v6552 = vpop.permute.xlu0 %6551
        %6553 = vrot.lane.b32.xlu0 %v5290, 6
        %v6554 = vpop.permute.xlu0 %6553
        %6555 = vrot.lane.b32.xlu0 %v5366, 6
        %v6556 = vpop.permute.xlu0 %6555
        %6557 = vrot.lane.b32.xlu0 %v5442, 6
        %v6558 = vpop.permute.xlu0 %6557
        %6559 = vrot.lane.b32.xlu0 %v5518, 6
        %v6560 = vpop.permute.xlu0 %6559
        %6561 = vrot.lane.b32.xlu0 %v5594, 6
        %v6562 = vpop.permute.xlu0 %6561
        %6563 = vrot.lane.b32.xlu0 %v5670, 6
        %v6564 = vpop.permute.xlu0 %6563
        %6565 = vrot.lane.b32.xlu0 %v5746, 6
        %v6566 = vpop.permute.xlu0 %6565
        %6567 = vrot.lane.b32.xlu0 %v5822, 6
        %v6568 = vpop.permute.xlu0 %6567
        %6697 = vrot.lane.b32.xlu0 %v1026, 8
        %v6698 = vpop.permute.xlu0 %6697
        %6699 = vrot.lane.b32.xlu0 %v1102, 8
        %v6700 = vpop.permute.xlu0 %6699
        %6701 = vrot.lane.b32.xlu0 %v1178, 8
        %v6702 = vpop.permute.xlu0 %6701
        %6703 = vrot.lane.b32.xlu0 %v1254, 8
        %v6704 = vpop.permute.xlu0 %6703
        %6705 = vrot.lane.b32.xlu0 %v1330, 8
        %v6706 = vpop.permute.xlu0 %6705
        %6707 = vrot.lane.b32.xlu0 %v1406, 8
        %v6708 = vpop.permute.xlu0 %6707
        %6709 = vrot.lane.b32.xlu0 %v1482, 8
        %v6710 = vpop.permute.xlu0 %6709
        %6711 = vrot.lane.b32.xlu0 %v1558, 8
        %v6712 = vpop.permute.xlu0 %6711
        %6713 = vrot.lane.b32.xlu0 %v1634, 8
        %v6714 = vpop.permute.xlu0 %6713
        %6715 = vrot.lane.b32.xlu0 %v1710, 8
        %v6716 = vpop.permute.xlu0 %6715
        %6717 = vrot.lane.b32.xlu0 %v1786, 8
        %v6718 = vpop.permute.xlu0 %6717
        %6719 = vrot.lane.b32.xlu0 %v1862, 8
        %v6720 = vpop.permute.xlu0 %6719
        %6721 = vrot.lane.b32.xlu0 %v1938, 8
        %v6722 = vpop.permute.xlu0 %6721
        %6723 = vrot.lane.b32.xlu0 %v2014, 8
        %v6724 = vpop.permute.xlu0 %6723
        %6725 = vrot.lane.b32.xlu0 %v2090, 8
        %v6726 = vpop.permute.xlu0 %6725
        %6727 = vrot.lane.b32.xlu0 %v2166, 8
        %v6728 = vpop.permute.xlu0 %6727
        %6729 = vrot.lane.b32.xlu0 %v2242, 8
        %v6730 = vpop.permute.xlu0 %6729
        %6731 = vrot.lane.b32.xlu0 %v2318, 8
        %v6732 = vpop.permute.xlu0 %6731
        %6733 = vrot.lane.b32.xlu0 %v2394, 8
        %v6734 = vpop.permute.xlu0 %6733
        %6735 = vrot.lane.b32.xlu0 %v2470, 8
        %v6736 = vpop.permute.xlu0 %6735
        %6737 = vrot.lane.b32.xlu0 %v2546, 8
        %v6738 = vpop.permute.xlu0 %6737
        %6739 = vrot.lane.b32.xlu0 %v2622, 8
        %v6740 = vpop.permute.xlu0 %6739
        %6741 = vrot.lane.b32.xlu0 %v2698, 8
        %v6742 = vpop.permute.xlu0 %6741
        %6743 = vrot.lane.b32.xlu0 %v2774, 8
        %v6744 = vpop.permute.xlu0 %6743
        %6745 = vrot.lane.b32.xlu0 %v2850, 8
        %v6746 = vpop.permute.xlu0 %6745
        %6747 = vrot.lane.b32.xlu0 %v2926, 8
        %v6748 = vpop.permute.xlu0 %6747
        %6749 = vrot.lane.b32.xlu0 %v3002, 8
        %v6750 = vpop.permute.xlu0 %6749
        %6751 = vrot.lane.b32.xlu0 %v3078, 8
        %v6752 = vpop.permute.xlu0 %6751
        %6753 = vrot.lane.b32.xlu0 %v3154, 8
        %v6754 = vpop.permute.xlu0 %6753
        %6755 = vrot.lane.b32.xlu0 %v3230, 8
        %v6756 = vpop.permute.xlu0 %6755
        %6757 = vrot.lane.b32.xlu0 %v3306, 8
        %v6758 = vpop.permute.xlu0 %6757
        %6759 = vrot.lane.b32.xlu0 %v3382, 8
        %v6760 = vpop.permute.xlu0 %6759
        %6761 = vrot.lane.b32.xlu0 %v3458, 8
        %v6762 = vpop.permute.xlu0 %6761
        %6763 = vrot.lane.b32.xlu0 %v3534, 8
        %v6764 = vpop.permute.xlu0 %6763
        %6765 = vrot.lane.b32.xlu0 %v3610, 8
        %v6766 = vpop.permute.xlu0 %6765
        %6767 = vrot.lane.b32.xlu0 %v3686, 8
        %v6768 = vpop.permute.xlu0 %6767
        %6769 = vrot.lane.b32.xlu0 %v3762, 8
        %v6770 = vpop.permute.xlu0 %6769
        %6771 = vrot.lane.b32.xlu0 %v3838, 8
        %v6772 = vpop.permute.xlu0 %6771
        %6773 = vrot.lane.b32.xlu0 %v3914, 8
        %v6774 = vpop.permute.xlu0 %6773
        %6775 = vrot.lane.b32.xlu0 %v3990, 8
        %v6776 = vpop.permute.xlu0 %6775
        %6777 = vrot.lane.b32.xlu0 %v4066, 8
        %v6778 = vpop.permute.xlu0 %6777
        %6779 = vrot.lane.b32.xlu0 %v4142, 8
        %v6780 = vpop.permute.xlu0 %6779
        %6781 = vrot.lane.b32.xlu0 %v4218, 8
        %v6782 = vpop.permute.xlu0 %6781
        %6783 = vrot.lane.b32.xlu0 %v4294, 8
        %v6784 = vpop.permute.xlu0 %6783
        %6785 = vrot.lane.b32.xlu0 %v4370, 8
        %v6786 = vpop.permute.xlu0 %6785
        %6787 = vrot.lane.b32.xlu0 %v4446, 8
        %v6788 = vpop.permute.xlu0 %6787
        %6789 = vrot.lane.b32.xlu0 %v4522, 8
        %v6790 = vpop.permute.xlu0 %6789
        %6791 = vrot.lane.b32.xlu0 %v4598, 8
        %v6792 = vpop.permute.xlu0 %6791
        %6793 = vrot.lane.b32.xlu0 %v4674, 8
        %v6794 = vpop.permute.xlu0 %6793
        %6795 = vrot.lane.b32.xlu0 %v4750, 8
        %v6796 = vpop.permute.xlu0 %6795
        %6797 = vrot.lane.b32.xlu0 %v4826, 8
        %v6798 = vpop.permute.xlu0 %6797
        %6799 = vrot.lane.b32.xlu0 %v4902, 8
        %v6800 = vpop.permute.xlu0 %6799
        %6801 = vrot.lane.b32.xlu0 %v4978, 8
        %v6802 = vpop.permute.xlu0 %6801
        %6803 = vrot.lane.b32.xlu0 %v5054, 8
        %v6804 = vpop.permute.xlu0 %6803
        %6805 = vrot.lane.b32.xlu0 %v5130, 8
        %v6806 = vpop.permute.xlu0 %6805
        %6807 = vrot.lane.b32.xlu0 %v5206, 8
        %v6808 = vpop.permute.xlu0 %6807
        %6809 = vrot.lane.b32.xlu0 %v5282, 8
        %v6810 = vpop.permute.xlu0 %6809
        %6811 = vrot.lane.b32.xlu0 %v5358, 8
        %v6812 = vpop.permute.xlu0 %6811
        %6813 = vrot.lane.b32.xlu0 %v5434, 8
        %v6814 = vpop.permute.xlu0 %6813
        %6815 = vrot.lane.b32.xlu0 %v5510, 8
        %v6816 = vpop.permute.xlu0 %6815
        %6817 = vrot.lane.b32.xlu0 %v5586, 8
        %v6818 = vpop.permute.xlu0 %6817
        %6819 = vrot.lane.b32.xlu0 %v5662, 8
        %v6820 = vpop.permute.xlu0 %6819
        %6821 = vrot.lane.b32.xlu0 %v5738, 8
        %v6822 = vpop.permute.xlu0 %6821
        %6823 = vrot.lane.b32.xlu0 %v5814, 8
        %v6824 = vpop.permute.xlu0 %6823
        %6953 = vrot.lane.b32.xlu0 %v1036, 10
        %v6954 = vpop.permute.xlu0 %6953
        %6955 = vrot.lane.b32.xlu0 %v1112, 10
        %v6956 = vpop.permute.xlu0 %6955
        %6957 = vrot.lane.b32.xlu0 %v1188, 10
        %v6958 = vpop.permute.xlu0 %6957
        %6959 = vrot.lane.b32.xlu0 %v1264, 10
        %v6960 = vpop.permute.xlu0 %6959
        %6961 = vrot.lane.b32.xlu0 %v1340, 10
        %v6962 = vpop.permute.xlu0 %6961
        %6963 = vrot.lane.b32.xlu0 %v1416, 10
        %v6964 = vpop.permute.xlu0 %6963
        %6965 = vrot.lane.b32.xlu0 %v1492, 10
        %v6966 = vpop.permute.xlu0 %6965
        %6967 = vrot.lane.b32.xlu0 %v1568, 10
        %v6968 = vpop.permute.xlu0 %6967
        %6969 = vrot.lane.b32.xlu0 %v1644, 10
        %v6970 = vpop.permute.xlu0 %6969
        %6971 = vrot.lane.b32.xlu0 %v1720, 10
        %v6972 = vpop.permute.xlu0 %6971
        %6973 = vrot.lane.b32.xlu0 %v1796, 10
        %v6974 = vpop.permute.xlu0 %6973
        %6975 = vrot.lane.b32.xlu0 %v1872, 10
        %v6976 = vpop.permute.xlu0 %6975
        %6977 = vrot.lane.b32.xlu0 %v1948, 10
        %v6978 = vpop.permute.xlu0 %6977
        %6979 = vrot.lane.b32.xlu0 %v2024, 10
        %v6980 = vpop.permute.xlu0 %6979
        %6981 = vrot.lane.b32.xlu0 %v2100, 10
        %v6982 = vpop.permute.xlu0 %6981
        %6983 = vrot.lane.b32.xlu0 %v2176, 10
        %v6984 = vpop.permute.xlu0 %6983
        %6985 = vrot.lane.b32.xlu0 %v2252, 10
        %v6986 = vpop.permute.xlu0 %6985
        %6987 = vrot.lane.b32.xlu0 %v2328, 10
        %v6988 = vpop.permute.xlu0 %6987
        %6989 = vrot.lane.b32.xlu0 %v2404, 10
        %v6990 = vpop.permute.xlu0 %6989
        %6991 = vrot.lane.b32.xlu0 %v2480, 10
        %v6992 = vpop.permute.xlu0 %6991
        %6993 = vrot.lane.b32.xlu0 %v2556, 10
        %v6994 = vpop.permute.xlu0 %6993
        %6995 = vrot.lane.b32.xlu0 %v2632, 10
        %v6996 = vpop.permute.xlu0 %6995
        %6997 = vrot.lane.b32.xlu0 %v2708, 10
        %v6998 = vpop.permute.xlu0 %6997
        %6999 = vrot.lane.b32.xlu0 %v2784, 10
        %v7000 = vpop.permute.xlu0 %6999
        %7001 = vrot.lane.b32.xlu0 %v2860, 10
        %v7002 = vpop.permute.xlu0 %7001
        %7003 = vrot.lane.b32.xlu0 %v2936, 10
        %v7004 = vpop.permute.xlu0 %7003
        %7005 = vrot.lane.b32.xlu0 %v3012, 10
        %v7006 = vpop.permute.xlu0 %7005
        %7007 = vrot.lane.b32.xlu0 %v3088, 10
        %v7008 = vpop.permute.xlu0 %7007
        %7009 = vrot.lane.b32.xlu0 %v3164, 10
        %v7010 = vpop.permute.xlu0 %7009
        %7011 = vrot.lane.b32.xlu0 %v3240, 10
        %v7012 = vpop.permute.xlu0 %7011
        %7013 = vrot.lane.b32.xlu0 %v3316, 10
        %v7014 = vpop.permute.xlu0 %7013
        %7015 = vrot.lane.b32.xlu0 %v3392, 10
        %v7016 = vpop.permute.xlu0 %7015
        %7017 = vrot.lane.b32.xlu0 %v3468, 10
        %v7018 = vpop.permute.xlu0 %7017
        %7019 = vrot.lane.b32.xlu0 %v3544, 10
        %v7020 = vpop.permute.xlu0 %7019
        %7021 = vrot.lane.b32.xlu0 %v3620, 10
        %v7022 = vpop.permute.xlu0 %7021
        %7023 = vrot.lane.b32.xlu0 %v3696, 10
        %v7024 = vpop.permute.xlu0 %7023
        %7025 = vrot.lane.b32.xlu0 %v3772, 10
        %v7026 = vpop.permute.xlu0 %7025
        %7027 = vrot.lane.b32.xlu0 %v3848, 10
        %v7028 = vpop.permute.xlu0 %7027
        %7029 = vrot.lane.b32.xlu0 %v3924, 10
        %v7030 = vpop.permute.xlu0 %7029
        %7031 = vrot.lane.b32.xlu0 %v4000, 10
        %v7032 = vpop.permute.xlu0 %7031
        %7033 = vrot.lane.b32.xlu0 %v4076, 10
        %v7034 = vpop.permute.xlu0 %7033
        %7035 = vrot.lane.b32.xlu0 %v4152, 10
        %v7036 = vpop.permute.xlu0 %7035
        %7037 = vrot.lane.b32.xlu0 %v4228, 10
        %v7038 = vpop.permute.xlu0 %7037
        %7039 = vrot.lane.b32.xlu0 %v4304, 10
        %v7040 = vpop.permute.xlu0 %7039
        %7041 = vrot.lane.b32.xlu0 %v4380, 10
        %v7042 = vpop.permute.xlu0 %7041
        %7043 = vrot.lane.b32.xlu0 %v4456, 10
        %v7044 = vpop.permute.xlu0 %7043
        %7045 = vrot.lane.b32.xlu0 %v4532, 10
        %v7046 = vpop.permute.xlu0 %7045
        %7047 = vrot.lane.b32.xlu0 %v4608, 10
        %v7048 = vpop.permute.xlu0 %7047
        %7049 = vrot.lane.b32.xlu0 %v4684, 10
        %v7050 = vpop.permute.xlu0 %7049
        %7051 = vrot.lane.b32.xlu0 %v4760, 10
        %v7052 = vpop.permute.xlu0 %7051
        %7053 = vrot.lane.b32.xlu0 %v4836, 10
        %v7054 = vpop.permute.xlu0 %7053
        %7055 = vrot.lane.b32.xlu0 %v4912, 10
        %v7056 = vpop.permute.xlu0 %7055
        %7057 = vrot.lane.b32.xlu0 %v4988, 10
        %v7058 = vpop.permute.xlu0 %7057
        %7059 = vrot.lane.b32.xlu0 %v5064, 10
        %v7060 = vpop.permute.xlu0 %7059
        %7061 = vrot.lane.b32.xlu0 %v5140, 10
        %v7062 = vpop.permute.xlu0 %7061
        %7063 = vrot.lane.b32.xlu0 %v5216, 10
        %v7064 = vpop.permute.xlu0 %7063
        %7065 = vrot.lane.b32.xlu0 %v5292, 10
        %v7066 = vpop.permute.xlu0 %7065
        %7067 = vrot.lane.b32.xlu0 %v5368, 10
        %v7068 = vpop.permute.xlu0 %7067
        %7069 = vrot.lane.b32.xlu0 %v5444, 10
        %v7070 = vpop.permute.xlu0 %7069
        %7071 = vrot.lane.b32.xlu0 %v5520, 10
        %v7072 = vpop.permute.xlu0 %7071
        %7073 = vrot.lane.b32.xlu0 %v5596, 10
        %v7074 = vpop.permute.xlu0 %7073
        %7075 = vrot.lane.b32.xlu0 %v5672, 10
        %v7076 = vpop.permute.xlu0 %7075
        %7077 = vrot.lane.b32.xlu0 %v5748, 10
        %v7078 = vpop.permute.xlu0 %7077
        %7079 = vrot.lane.b32.xlu0 %v5824, 10
        %v7080 = vpop.permute.xlu0 %7079
        %7209 = vrot.lane.b32.xlu0 %v1030, 12
        %v7210 = vpop.permute.xlu0 %7209
        %7211 = vrot.lane.b32.xlu0 %v1106, 12
        %v7212 = vpop.permute.xlu0 %7211
        %7213 = vrot.lane.b32.xlu0 %v1182, 12
        %v7214 = vpop.permute.xlu0 %7213
        %7215 = vrot.lane.b32.xlu0 %v1258, 12
        %v7216 = vpop.permute.xlu0 %7215
        %7217 = vrot.lane.b32.xlu0 %v1334, 12
        %v7218 = vpop.permute.xlu0 %7217
        %7219 = vrot.lane.b32.xlu0 %v1410, 12
        %v7220 = vpop.permute.xlu0 %7219
        %7221 = vrot.lane.b32.xlu0 %v1486, 12
        %v7222 = vpop.permute.xlu0 %7221
        %7223 = vrot.lane.b32.xlu0 %v1562, 12
        %v7224 = vpop.permute.xlu0 %7223
        %7225 = vrot.lane.b32.xlu0 %v1638, 12
        %v7226 = vpop.permute.xlu0 %7225
        %7227 = vrot.lane.b32.xlu0 %v1714, 12
        %v7228 = vpop.permute.xlu0 %7227
        %7229 = vrot.lane.b32.xlu0 %v1790, 12
        %v7230 = vpop.permute.xlu0 %7229
        %7231 = vrot.lane.b32.xlu0 %v1866, 12
        %v7232 = vpop.permute.xlu0 %7231
        %7233 = vrot.lane.b32.xlu0 %v1942, 12
        %v7234 = vpop.permute.xlu0 %7233
        %7235 = vrot.lane.b32.xlu0 %v2018, 12
        %v7236 = vpop.permute.xlu0 %7235
        %7237 = vrot.lane.b32.xlu0 %v2094, 12
        %v7238 = vpop.permute.xlu0 %7237
        %7239 = vrot.lane.b32.xlu0 %v2170, 12
        %v7240 = vpop.permute.xlu0 %7239
        %7241 = vrot.lane.b32.xlu0 %v2246, 12
        %v7242 = vpop.permute.xlu0 %7241
        %7243 = vrot.lane.b32.xlu0 %v2322, 12
        %v7244 = vpop.permute.xlu0 %7243
        %7245 = vrot.lane.b32.xlu0 %v2398, 12
        %v7246 = vpop.permute.xlu0 %7245
        %7247 = vrot.lane.b32.xlu0 %v2474, 12
        %v7248 = vpop.permute.xlu0 %7247
        %7249 = vrot.lane.b32.xlu0 %v2550, 12
        %v7250 = vpop.permute.xlu0 %7249
        %7251 = vrot.lane.b32.xlu0 %v2626, 12
        %v7252 = vpop.permute.xlu0 %7251
        %7253 = vrot.lane.b32.xlu0 %v2702, 12
        %v7254 = vpop.permute.xlu0 %7253
        %7255 = vrot.lane.b32.xlu0 %v2778, 12
        %v7256 = vpop.permute.xlu0 %7255
        %7257 = vrot.lane.b32.xlu0 %v2854, 12
        %v7258 = vpop.permute.xlu0 %7257
        %7259 = vrot.lane.b32.xlu0 %v2930, 12
        %v7260 = vpop.permute.xlu0 %7259
        %7261 = vrot.lane.b32.xlu0 %v3006, 12
        %v7262 = vpop.permute.xlu0 %7261
        %7263 = vrot.lane.b32.xlu0 %v3082, 12
        %v7264 = vpop.permute.xlu0 %7263
        %7265 = vrot.lane.b32.xlu0 %v3158, 12
        %v7266 = vpop.permute.xlu0 %7265
        %7267 = vrot.lane.b32.xlu0 %v3234, 12
        %v7268 = vpop.permute.xlu0 %7267
        %7269 = vrot.lane.b32.xlu0 %v3310, 12
        %v7270 = vpop.permute.xlu0 %7269
        %7271 = vrot.lane.b32.xlu0 %v3386, 12
        %v7272 = vpop.permute.xlu0 %7271
        %7273 = vrot.lane.b32.xlu0 %v3462, 12
        %v7274 = vpop.permute.xlu0 %7273
        %7275 = vrot.lane.b32.xlu0 %v3538, 12
        %v7276 = vpop.permute.xlu0 %7275
        %7277 = vrot.lane.b32.xlu0 %v3614, 12
        %v7278 = vpop.permute.xlu0 %7277
        %7279 = vrot.lane.b32.xlu0 %v3690, 12
        %v7280 = vpop.permute.xlu0 %7279
        %7281 = vrot.lane.b32.xlu0 %v3766, 12
        %v7282 = vpop.permute.xlu0 %7281
        %7283 = vrot.lane.b32.xlu0 %v3842, 12
        %v7284 = vpop.permute.xlu0 %7283
        %7285 = vrot.lane.b32.xlu0 %v3918, 12
        %v7286 = vpop.permute.xlu0 %7285
        %7287 = vrot.lane.b32.xlu0 %v3994, 12
        %v7288 = vpop.permute.xlu0 %7287
        %7289 = vrot.lane.b32.xlu0 %v4070, 12
        %v7290 = vpop.permute.xlu0 %7289
        %7291 = vrot.lane.b32.xlu0 %v4146, 12
        %v7292 = vpop.permute.xlu0 %7291
        %7293 = vrot.lane.b32.xlu0 %v4222, 12
        %v7294 = vpop.permute.xlu0 %7293
        %7295 = vrot.lane.b32.xlu0 %v4298, 12
        %v7296 = vpop.permute.xlu0 %7295
        %7297 = vrot.lane.b32.xlu0 %v4374, 12
        %v7298 = vpop.permute.xlu0 %7297
        %7299 = vrot.lane.b32.xlu0 %v4450, 12
        %v7300 = vpop.permute.xlu0 %7299
        %7301 = vrot.lane.b32.xlu0 %v4526, 12
        %v7302 = vpop.permute.xlu0 %7301
        %7303 = vrot.lane.b32.xlu0 %v4602, 12
        %v7304 = vpop.permute.xlu0 %7303
        %7305 = vrot.lane.b32.xlu0 %v4678, 12
        %v7306 = vpop.permute.xlu0 %7305
        %7307 = vrot.lane.b32.xlu0 %v4754, 12
        %v7308 = vpop.permute.xlu0 %7307
        %7309 = vrot.lane.b32.xlu0 %v4830, 12
        %v7310 = vpop.permute.xlu0 %7309
        %7311 = vrot.lane.b32.xlu0 %v4906, 12
        %v7312 = vpop.permute.xlu0 %7311
        %7313 = vrot.lane.b32.xlu0 %v4982, 12
        %v7314 = vpop.permute.xlu0 %7313
        %7315 = vrot.lane.b32.xlu0 %v5058, 12
        %v7316 = vpop.permute.xlu0 %7315
        %7317 = vrot.lane.b32.xlu0 %v5134, 12
        %v7318 = vpop.permute.xlu0 %7317
        %7319 = vrot.lane.b32.xlu0 %v5210, 12
        %v7320 = vpop.permute.xlu0 %7319
        %7321 = vrot.lane.b32.xlu0 %v5286, 12
        %v7322 = vpop.permute.xlu0 %7321
        %7323 = vrot.lane.b32.xlu0 %v5362, 12
        %v7324 = vpop.permute.xlu0 %7323
        %7325 = vrot.lane.b32.xlu0 %v5438, 12
        %v7326 = vpop.permute.xlu0 %7325
        %7327 = vrot.lane.b32.xlu0 %v5514, 12
        %v7328 = vpop.permute.xlu0 %7327
        %7329 = vrot.lane.b32.xlu0 %v5590, 12
        %v7330 = vpop.permute.xlu0 %7329
        %7331 = vrot.lane.b32.xlu0 %v5666, 12
        %v7332 = vpop.permute.xlu0 %7331
        %7333 = vrot.lane.b32.xlu0 %v5742, 12
        %v7334 = vpop.permute.xlu0 %7333
        %7335 = vrot.lane.b32.xlu0 %v5818, 12
        %v7336 = vpop.permute.xlu0 %7335
        %7465 = vrot.lane.b32.xlu0 %v1038, 14
        %v7466 = vpop.permute.xlu0 %7465
        %7467 = vrot.lane.b32.xlu0 %v1114, 14
        %v7468 = vpop.permute.xlu0 %7467
        %7469 = vrot.lane.b32.xlu0 %v1190, 14
        %v7470 = vpop.permute.xlu0 %7469
        %7471 = vrot.lane.b32.xlu0 %v1266, 14
        %v7472 = vpop.permute.xlu0 %7471
        %7473 = vrot.lane.b32.xlu0 %v1342, 14
        %v7474 = vpop.permute.xlu0 %7473
        %7475 = vrot.lane.b32.xlu0 %v1418, 14
        %v7476 = vpop.permute.xlu0 %7475
        %7477 = vrot.lane.b32.xlu0 %v1494, 14
        %v7478 = vpop.permute.xlu0 %7477
        %7479 = vrot.lane.b32.xlu0 %v1570, 14
        %v7480 = vpop.permute.xlu0 %7479
        %7481 = vrot.lane.b32.xlu0 %v1646, 14
        %v7482 = vpop.permute.xlu0 %7481
        %7483 = vrot.lane.b32.xlu0 %v1722, 14
        %v7484 = vpop.permute.xlu0 %7483
        %7485 = vrot.lane.b32.xlu0 %v1798, 14
        %v7486 = vpop.permute.xlu0 %7485
        %7487 = vrot.lane.b32.xlu0 %v1874, 14
        %v7488 = vpop.permute.xlu0 %7487
        %7489 = vrot.lane.b32.xlu0 %v1950, 14
        %v7490 = vpop.permute.xlu0 %7489
        %7491 = vrot.lane.b32.xlu0 %v2026, 14
        %v7492 = vpop.permute.xlu0 %7491
        %7493 = vrot.lane.b32.xlu0 %v2102, 14
        %v7494 = vpop.permute.xlu0 %7493
        %7495 = vrot.lane.b32.xlu0 %v2178, 14
        %v7496 = vpop.permute.xlu0 %7495
        %7497 = vrot.lane.b32.xlu0 %v2254, 14
        %v7498 = vpop.permute.xlu0 %7497
        %7499 = vrot.lane.b32.xlu0 %v2330, 14
        %v7500 = vpop.permute.xlu0 %7499
        %7501 = vrot.lane.b32.xlu0 %v2406, 14
        %v7502 = vpop.permute.xlu0 %7501
        %7503 = vrot.lane.b32.xlu0 %v2482, 14
        %v7504 = vpop.permute.xlu0 %7503
        %7505 = vrot.lane.b32.xlu0 %v2558, 14
        %v7506 = vpop.permute.xlu0 %7505
        %7507 = vrot.lane.b32.xlu0 %v2634, 14
        %v7508 = vpop.permute.xlu0 %7507
        %7509 = vrot.lane.b32.xlu0 %v2710, 14
        %v7510 = vpop.permute.xlu0 %7509
        %7511 = vrot.lane.b32.xlu0 %v2786, 14
        %v7512 = vpop.permute.xlu0 %7511
        %7513 = vrot.lane.b32.xlu0 %v2862, 14
        %v7514 = vpop.permute.xlu0 %7513
        %7515 = vrot.lane.b32.xlu0 %v2938, 14
        %v7516 = vpop.permute.xlu0 %7515
        %7517 = vrot.lane.b32.xlu0 %v3014, 14
        %v7518 = vpop.permute.xlu0 %7517
        %7519 = vrot.lane.b32.xlu0 %v3090, 14
        %v7520 = vpop.permute.xlu0 %7519
        %7521 = vrot.lane.b32.xlu0 %v3166, 14
        %v7522 = vpop.permute.xlu0 %7521
        %7523 = vrot.lane.b32.xlu0 %v3242, 14
        %v7524 = vpop.permute.xlu0 %7523
        %7525 = vrot.lane.b32.xlu0 %v3318, 14
        %v7526 = vpop.permute.xlu0 %7525
        %7527 = vrot.lane.b32.xlu0 %v3394, 14
        %v7528 = vpop.permute.xlu0 %7527
        %7529 = vrot.lane.b32.xlu0 %v3470, 14
        %v7530 = vpop.permute.xlu0 %7529
        %7531 = vrot.lane.b32.xlu0 %v3546, 14
        %v7532 = vpop.permute.xlu0 %7531
        %7533 = vrot.lane.b32.xlu0 %v3622, 14
        %v7534 = vpop.permute.xlu0 %7533
        %7535 = vrot.lane.b32.xlu0 %v3698, 14
        %v7536 = vpop.permute.xlu0 %7535
        %7537 = vrot.lane.b32.xlu0 %v3774, 14
        %v7538 = vpop.permute.xlu0 %7537
        %7539 = vrot.lane.b32.xlu0 %v3850, 14
        %v7540 = vpop.permute.xlu0 %7539
        %7541 = vrot.lane.b32.xlu0 %v3926, 14
        %v7542 = vpop.permute.xlu0 %7541
        %7543 = vrot.lane.b32.xlu0 %v4002, 14
        %v7544 = vpop.permute.xlu0 %7543
        %7545 = vrot.lane.b32.xlu0 %v4078, 14
        %v7546 = vpop.permute.xlu0 %7545
        %7547 = vrot.lane.b32.xlu0 %v4154, 14
        %v7548 = vpop.permute.xlu0 %7547
        %7549 = vrot.lane.b32.xlu0 %v4230, 14
        %v7550 = vpop.permute.xlu0 %7549
        %7551 = vrot.lane.b32.xlu0 %v4306, 14
        %v7552 = vpop.permute.xlu0 %7551
        %7553 = vrot.lane.b32.xlu0 %v4382, 14
        %v7554 = vpop.permute.xlu0 %7553
        %7555 = vrot.lane.b32.xlu0 %v4458, 14
        %v7556 = vpop.permute.xlu0 %7555
        %7557 = vrot.lane.b32.xlu0 %v4534, 14
        %v7558 = vpop.permute.xlu0 %7557
        %7559 = vrot.lane.b32.xlu0 %v4610, 14
        %v7560 = vpop.permute.xlu0 %7559
        %7561 = vrot.lane.b32.xlu0 %v4686, 14
        %v7562 = vpop.permute.xlu0 %7561
        %7563 = vrot.lane.b32.xlu0 %v4762, 14
        %v7564 = vpop.permute.xlu0 %7563
        %7565 = vrot.lane.b32.xlu0 %v4838, 14
        %v7566 = vpop.permute.xlu0 %7565
        %7567 = vrot.lane.b32.xlu0 %v4914, 14
        %v7568 = vpop.permute.xlu0 %7567
        %7569 = vrot.lane.b32.xlu0 %v4990, 14
        %v7570 = vpop.permute.xlu0 %7569
        %7571 = vrot.lane.b32.xlu0 %v5066, 14
        %v7572 = vpop.permute.xlu0 %7571
        %7573 = vrot.lane.b32.xlu0 %v5142, 14
        %v7574 = vpop.permute.xlu0 %7573
        %7575 = vrot.lane.b32.xlu0 %v5218, 14
        %v7576 = vpop.permute.xlu0 %7575
        %7577 = vrot.lane.b32.xlu0 %v5294, 14
        %v7578 = vpop.permute.xlu0 %7577
        %7579 = vrot.lane.b32.xlu0 %v5370, 14
        %v7580 = vpop.permute.xlu0 %7579
        %7581 = vrot.lane.b32.xlu0 %v5446, 14
        %v7582 = vpop.permute.xlu0 %7581
        %7583 = vrot.lane.b32.xlu0 %v5522, 14
        %v7584 = vpop.permute.xlu0 %7583
        %7585 = vrot.lane.b32.xlu0 %v5598, 14
        %v7586 = vpop.permute.xlu0 %7585
        %7587 = vrot.lane.b32.xlu0 %v5674, 14
        %v7588 = vpop.permute.xlu0 %7587
        %7589 = vrot.lane.b32.xlu0 %v5750, 14
        %v7590 = vpop.permute.xlu0 %7589
        %7591 = vrot.lane.b32.xlu0 %v5826, 14
        %v7592 = vpop.permute.xlu0 %7591
        %7721 = vrot.lane.b32.xlu0 %v1054, 16
        %v7722 = vpop.permute.xlu0 %7721
        %7723 = vrot.lane.b32.xlu0 %v1130, 16
        %v7724 = vpop.permute.xlu0 %7723
        %7725 = vrot.lane.b32.xlu0 %v1206, 16
        %v7726 = vpop.permute.xlu0 %7725
        %7727 = vrot.lane.b32.xlu0 %v1282, 16
        %v7728 = vpop.permute.xlu0 %7727
        %7729 = vrot.lane.b32.xlu0 %v1358, 16
        %v7730 = vpop.permute.xlu0 %7729
        %7731 = vrot.lane.b32.xlu0 %v1434, 16
        %v7732 = vpop.permute.xlu0 %7731
        %7733 = vrot.lane.b32.xlu0 %v1510, 16
        %v7734 = vpop.permute.xlu0 %7733
        %7735 = vrot.lane.b32.xlu0 %v1586, 16
        %v7736 = vpop.permute.xlu0 %7735
        %7737 = vrot.lane.b32.xlu0 %v1662, 16
        %v7738 = vpop.permute.xlu0 %7737
        %7739 = vrot.lane.b32.xlu0 %v1738, 16
        %v7740 = vpop.permute.xlu0 %7739
        %7741 = vrot.lane.b32.xlu0 %v1814, 16
        %v7742 = vpop.permute.xlu0 %7741
        %7743 = vrot.lane.b32.xlu0 %v1890, 16
        %v7744 = vpop.permute.xlu0 %7743
        %7745 = vrot.lane.b32.xlu0 %v1966, 16
        %v7746 = vpop.permute.xlu0 %7745
        %7747 = vrot.lane.b32.xlu0 %v2042, 16
        %v7748 = vpop.permute.xlu0 %7747
        %7749 = vrot.lane.b32.xlu0 %v2118, 16
        %v7750 = vpop.permute.xlu0 %7749
        %7751 = vrot.lane.b32.xlu0 %v2194, 16
        %v7752 = vpop.permute.xlu0 %7751
        %7753 = vrot.lane.b32.xlu0 %v2270, 16
        %v7754 = vpop.permute.xlu0 %7753
        %7755 = vrot.lane.b32.xlu0 %v2346, 16
        %v7756 = vpop.permute.xlu0 %7755
        %7757 = vrot.lane.b32.xlu0 %v2422, 16
        %v7758 = vpop.permute.xlu0 %7757
        %7759 = vrot.lane.b32.xlu0 %v2498, 16
        %v7760 = vpop.permute.xlu0 %7759
        %7761 = vrot.lane.b32.xlu0 %v2574, 16
        %v7762 = vpop.permute.xlu0 %7761
        %7763 = vrot.lane.b32.xlu0 %v2650, 16
        %v7764 = vpop.permute.xlu0 %7763
        %7765 = vrot.lane.b32.xlu0 %v2726, 16
        %v7766 = vpop.permute.xlu0 %7765
        %7767 = vrot.lane.b32.xlu0 %v2802, 16
        %v7768 = vpop.permute.xlu0 %7767
        %7769 = vrot.lane.b32.xlu0 %v2878, 16
        %v7770 = vpop.permute.xlu0 %7769
        %7771 = vrot.lane.b32.xlu0 %v2954, 16
        %v7772 = vpop.permute.xlu0 %7771
        %7773 = vrot.lane.b32.xlu0 %v3030, 16
        %v7774 = vpop.permute.xlu0 %7773
        %7775 = vrot.lane.b32.xlu0 %v3106, 16
        %v7776 = vpop.permute.xlu0 %7775
        %7777 = vrot.lane.b32.xlu0 %v3182, 16
        %v7778 = vpop.permute.xlu0 %7777
        %7779 = vrot.lane.b32.xlu0 %v3258, 16
        %v7780 = vpop.permute.xlu0 %7779
        %7781 = vrot.lane.b32.xlu0 %v3334, 16
        %v7782 = vpop.permute.xlu0 %7781
        %7783 = vrot.lane.b32.xlu0 %v3410, 16
        %v7784 = vpop.permute.xlu0 %7783
        %7785 = vrot.lane.b32.xlu0 %v3486, 16
        %v7786 = vpop.permute.xlu0 %7785
        %7787 = vrot.lane.b32.xlu0 %v3562, 16
        %v7788 = vpop.permute.xlu0 %7787
        %7789 = vrot.lane.b32.xlu0 %v3638, 16
        %v7790 = vpop.permute.xlu0 %7789
        %7791 = vrot.lane.b32.xlu0 %v3714, 16
        %v7792 = vpop.permute.xlu0 %7791
        %7793 = vrot.lane.b32.xlu0 %v3790, 16
        %v7794 = vpop.permute.xlu0 %7793
        %7795 = vrot.lane.b32.xlu0 %v3866, 16
        %v7796 = vpop.permute.xlu0 %7795
        %7797 = vrot.lane.b32.xlu0 %v3942, 16
        %v7798 = vpop.permute.xlu0 %7797
        %7799 = vrot.lane.b32.xlu0 %v4018, 16
        %v7800 = vpop.permute.xlu0 %7799
        %7801 = vrot.lane.b32.xlu0 %v4094, 16
        %v7802 = vpop.permute.xlu0 %7801
        %7803 = vrot.lane.b32.xlu0 %v4170, 16
        %v7804 = vpop.permute.xlu0 %7803
        %7805 = vrot.lane.b32.xlu0 %v4246, 16
        %v7806 = vpop.permute.xlu0 %7805
        %7807 = vrot.lane.b32.xlu0 %v4322, 16
        %v7808 = vpop.permute.xlu0 %7807
        %7809 = vrot.lane.b32.xlu0 %v4398, 16
        %v7810 = vpop.permute.xlu0 %7809
        %7811 = vrot.lane.b32.xlu0 %v4474, 16
        %v7812 = vpop.permute.xlu0 %7811
        %7813 = vrot.lane.b32.xlu0 %v4550, 16
        %v7814 = vpop.permute.xlu0 %7813
        %7815 = vrot.lane.b32.xlu0 %v4626, 16
        %v7816 = vpop.permute.xlu0 %7815
        %7817 = vrot.lane.b32.xlu0 %v4702, 16
        %v7818 = vpop.permute.xlu0 %7817
        %7819 = vrot.lane.b32.xlu0 %v4778, 16
        %v7820 = vpop.permute.xlu0 %7819
        %7821 = vrot.lane.b32.xlu0 %v4854, 16
        %v7822 = vpop.permute.xlu0 %7821
        %7823 = vrot.lane.b32.xlu0 %v4930, 16
        %v7824 = vpop.permute.xlu0 %7823
        %7825 = vrot.lane.b32.xlu0 %v5006, 16
        %v7826 = vpop.permute.xlu0 %7825
        %7827 = vrot.lane.b32.xlu0 %v5082, 16
        %v7828 = vpop.permute.xlu0 %7827
        %7829 = vrot.lane.b32.xlu0 %v5158, 16
        %v7830 = vpop.permute.xlu0 %7829
        %7831 = vrot.lane.b32.xlu0 %v5234, 16
        %v7832 = vpop.permute.xlu0 %7831
        %7833 = vrot.lane.b32.xlu0 %v5310, 16
        %v7834 = vpop.permute.xlu0 %7833
        %7835 = vrot.lane.b32.xlu0 %v5386, 16
        %v7836 = vpop.permute.xlu0 %7835
        %7837 = vrot.lane.b32.xlu0 %v5462, 16
        %v7838 = vpop.permute.xlu0 %7837
        %7839 = vrot.lane.b32.xlu0 %v5538, 16
        %v7840 = vpop.permute.xlu0 %7839
        %7841 = vrot.lane.b32.xlu0 %v5614, 16
        %v7842 = vpop.permute.xlu0 %7841
        %7843 = vrot.lane.b32.xlu0 %v5690, 16
        %v7844 = vpop.permute.xlu0 %7843
        %7845 = vrot.lane.b32.xlu0 %v5766, 16
        %v7846 = vpop.permute.xlu0 %7845
        %7847 = vrot.lane.b32.xlu0 %v5842, 16
        %v7848 = vpop.permute.xlu0 %7847
        %7977 = vrot.lane.b32.xlu0 %v1070, 18
        %v7978 = vpop.permute.xlu0 %7977
        %7979 = vrot.lane.b32.xlu0 %v1146, 18
        %v7980 = vpop.permute.xlu0 %7979
        %7981 = vrot.lane.b32.xlu0 %v1222, 18
        %v7982 = vpop.permute.xlu0 %7981
        %7983 = vrot.lane.b32.xlu0 %v1298, 18
        %v7984 = vpop.permute.xlu0 %7983
        %7985 = vrot.lane.b32.xlu0 %v1374, 18
        %v7986 = vpop.permute.xlu0 %7985
        %7987 = vrot.lane.b32.xlu0 %v1450, 18
        %v7988 = vpop.permute.xlu0 %7987
        %7989 = vrot.lane.b32.xlu0 %v1526, 18
        %v7990 = vpop.permute.xlu0 %7989
        %7991 = vrot.lane.b32.xlu0 %v1602, 18
        %v7992 = vpop.permute.xlu0 %7991
        %7993 = vrot.lane.b32.xlu0 %v1678, 18
        %v7994 = vpop.permute.xlu0 %7993
        %7995 = vrot.lane.b32.xlu0 %v1754, 18
        %v7996 = vpop.permute.xlu0 %7995
        %7997 = vrot.lane.b32.xlu0 %v1830, 18
        %v7998 = vpop.permute.xlu0 %7997
        %7999 = vrot.lane.b32.xlu0 %v1906, 18
        %v8000 = vpop.permute.xlu0 %7999
        %8001 = vrot.lane.b32.xlu0 %v1982, 18
        %v8002 = vpop.permute.xlu0 %8001
        %8003 = vrot.lane.b32.xlu0 %v2058, 18
        %v8004 = vpop.permute.xlu0 %8003
        %8005 = vrot.lane.b32.xlu0 %v2134, 18
        %v8006 = vpop.permute.xlu0 %8005
        %8007 = vrot.lane.b32.xlu0 %v2210, 18
        %v8008 = vpop.permute.xlu0 %8007
        %8009 = vrot.lane.b32.xlu0 %v2286, 18
        %v8010 = vpop.permute.xlu0 %8009
        %8011 = vrot.lane.b32.xlu0 %v2362, 18
        %v8012 = vpop.permute.xlu0 %8011
        %8013 = vrot.lane.b32.xlu0 %v2438, 18
        %v8014 = vpop.permute.xlu0 %8013
        %8015 = vrot.lane.b32.xlu0 %v2514, 18
        %v8016 = vpop.permute.xlu0 %8015
        %8017 = vrot.lane.b32.xlu0 %v2590, 18
        %v8018 = vpop.permute.xlu0 %8017
        %8019 = vrot.lane.b32.xlu0 %v2666, 18
        %v8020 = vpop.permute.xlu0 %8019
        %8021 = vrot.lane.b32.xlu0 %v2742, 18
        %v8022 = vpop.permute.xlu0 %8021
        %8023 = vrot.lane.b32.xlu0 %v2818, 18
        %v8024 = vpop.permute.xlu0 %8023
        %8025 = vrot.lane.b32.xlu0 %v2894, 18
        %v8026 = vpop.permute.xlu0 %8025
        %8027 = vrot.lane.b32.xlu0 %v2970, 18
        %v8028 = vpop.permute.xlu0 %8027
        %8029 = vrot.lane.b32.xlu0 %v3046, 18
        %v8030 = vpop.permute.xlu0 %8029
        %8031 = vrot.lane.b32.xlu0 %v3122, 18
        %v8032 = vpop.permute.xlu0 %8031
        %8033 = vrot.lane.b32.xlu0 %v3198, 18
        %v8034 = vpop.permute.xlu0 %8033
        %8035 = vrot.lane.b32.xlu0 %v3274, 18
        %v8036 = vpop.permute.xlu0 %8035
        %8037 = vrot.lane.b32.xlu0 %v3350, 18
        %v8038 = vpop.permute.xlu0 %8037
        %8039 = vrot.lane.b32.xlu0 %v3426, 18
        %v8040 = vpop.permute.xlu0 %8039
        %8041 = vrot.lane.b32.xlu0 %v3502, 18
        %v8042 = vpop.permute.xlu0 %8041
        %8043 = vrot.lane.b32.xlu0 %v3578, 18
        %v8044 = vpop.permute.xlu0 %8043
        %8045 = vrot.lane.b32.xlu0 %v3654, 18
        %v8046 = vpop.permute.xlu0 %8045
        %8047 = vrot.lane.b32.xlu0 %v3730, 18
        %v8048 = vpop.permute.xlu0 %8047
        %8049 = vrot.lane.b32.xlu0 %v3806, 18
        %v8050 = vpop.permute.xlu0 %8049
        %8051 = vrot.lane.b32.xlu0 %v3882, 18
        %v8052 = vpop.permute.xlu0 %8051
        %8053 = vrot.lane.b32.xlu0 %v3958, 18
        %v8054 = vpop.permute.xlu0 %8053
        %8055 = vrot.lane.b32.xlu0 %v4034, 18
        %v8056 = vpop.permute.xlu0 %8055
        %8057 = vrot.lane.b32.xlu0 %v4110, 18
        %v8058 = vpop.permute.xlu0 %8057
        %8059 = vrot.lane.b32.xlu0 %v4186, 18
        %v8060 = vpop.permute.xlu0 %8059
        %8061 = vrot.lane.b32.xlu0 %v4262, 18
        %v8062 = vpop.permute.xlu0 %8061
        %8063 = vrot.lane.b32.xlu0 %v4338, 18
        %v8064 = vpop.permute.xlu0 %8063
        %8065 = vrot.lane.b32.xlu0 %v4414, 18
        %v8066 = vpop.permute.xlu0 %8065
        %8067 = vrot.lane.b32.xlu0 %v4490, 18
        %v8068 = vpop.permute.xlu0 %8067
        %8069 = vrot.lane.b32.xlu0 %v4566, 18
        %v8070 = vpop.permute.xlu0 %8069
        %8071 = vrot.lane.b32.xlu0 %v4642, 18
        %v8072 = vpop.permute.xlu0 %8071
        %8073 = vrot.lane.b32.xlu0 %v4718, 18
        %v8074 = vpop.permute.xlu0 %8073
        %8075 = vrot.lane.b32.xlu0 %v4794, 18
        %v8076 = vpop.permute.xlu0 %8075
        %8077 = vrot.lane.b32.xlu0 %v4870, 18
        %v8078 = vpop.permute.xlu0 %8077
        %8079 = vrot.lane.b32.xlu0 %v4946, 18
        %v8080 = vpop.permute.xlu0 %8079
        %8081 = vrot.lane.b32.xlu0 %v5022, 18
        %v8082 = vpop.permute.xlu0 %8081
        %8083 = vrot.lane.b32.xlu0 %v5098, 18
        %v8084 = vpop.permute.xlu0 %8083
        %8085 = vrot.lane.b32.xlu0 %v5174, 18
        %v8086 = vpop.permute.xlu0 %8085
        %8087 = vrot.lane.b32.xlu0 %v5250, 18
        %v8088 = vpop.permute.xlu0 %8087
        %8089 = vrot.lane.b32.xlu0 %v5326, 18
        %v8090 = vpop.permute.xlu0 %8089
        %8091 = vrot.lane.b32.xlu0 %v5402, 18
        %v8092 = vpop.permute.xlu0 %8091
        %8093 = vrot.lane.b32.xlu0 %v5478, 18
        %v8094 = vpop.permute.xlu0 %8093
        %8095 = vrot.lane.b32.xlu0 %v5554, 18
        %v8096 = vpop.permute.xlu0 %8095
        %8097 = vrot.lane.b32.xlu0 %v5630, 18
        %v8098 = vpop.permute.xlu0 %8097
        %8099 = vrot.lane.b32.xlu0 %v5706, 18
        %v8100 = vpop.permute.xlu0 %8099
        %8101 = vrot.lane.b32.xlu0 %v5782, 18
        %v8102 = vpop.permute.xlu0 %8101
        %8103 = vrot.lane.b32.xlu0 %v5858, 18
        %v8104 = vpop.permute.xlu0 %8103
        %8233 = vrot.lane.b32.xlu0 %v1058, 20
        %v8234 = vpop.permute.xlu0 %8233
        %8235 = vrot.lane.b32.xlu0 %v1134, 20
        %v8236 = vpop.permute.xlu0 %8235
        %8237 = vrot.lane.b32.xlu0 %v1210, 20
        %v8238 = vpop.permute.xlu0 %8237
        %8239 = vrot.lane.b32.xlu0 %v1286, 20
        %v8240 = vpop.permute.xlu0 %8239
        %8241 = vrot.lane.b32.xlu0 %v1362, 20
        %v8242 = vpop.permute.xlu0 %8241
        %8243 = vrot.lane.b32.xlu0 %v1438, 20
        %v8244 = vpop.permute.xlu0 %8243
        %8245 = vrot.lane.b32.xlu0 %v1514, 20
        %v8246 = vpop.permute.xlu0 %8245
        %8247 = vrot.lane.b32.xlu0 %v1590, 20
        %v8248 = vpop.permute.xlu0 %8247
        %8249 = vrot.lane.b32.xlu0 %v1666, 20
        %v8250 = vpop.permute.xlu0 %8249
        %8251 = vrot.lane.b32.xlu0 %v1742, 20
        %v8252 = vpop.permute.xlu0 %8251
        %8253 = vrot.lane.b32.xlu0 %v1818, 20
        %v8254 = vpop.permute.xlu0 %8253
        %8255 = vrot.lane.b32.xlu0 %v1894, 20
        %v8256 = vpop.permute.xlu0 %8255
        %8257 = vrot.lane.b32.xlu0 %v1970, 20
        %v8258 = vpop.permute.xlu0 %8257
        %8259 = vrot.lane.b32.xlu0 %v2046, 20
        %v8260 = vpop.permute.xlu0 %8259
        %8261 = vrot.lane.b32.xlu0 %v2122, 20
        %v8262 = vpop.permute.xlu0 %8261
        %8263 = vrot.lane.b32.xlu0 %v2198, 20
        %v8264 = vpop.permute.xlu0 %8263
        %8265 = vrot.lane.b32.xlu0 %v2274, 20
        %v8266 = vpop.permute.xlu0 %8265
        %8267 = vrot.lane.b32.xlu0 %v2350, 20
        %v8268 = vpop.permute.xlu0 %8267
        %8269 = vrot.lane.b32.xlu0 %v2426, 20
        %v8270 = vpop.permute.xlu0 %8269
        %8271 = vrot.lane.b32.xlu0 %v2502, 20
        %v8272 = vpop.permute.xlu0 %8271
        %8273 = vrot.lane.b32.xlu0 %v2578, 20
        %v8274 = vpop.permute.xlu0 %8273
        %8275 = vrot.lane.b32.xlu0 %v2654, 20
        %v8276 = vpop.permute.xlu0 %8275
        %8277 = vrot.lane.b32.xlu0 %v2730, 20
        %v8278 = vpop.permute.xlu0 %8277
        %8279 = vrot.lane.b32.xlu0 %v2806, 20
        %v8280 = vpop.permute.xlu0 %8279
        %8281 = vrot.lane.b32.xlu0 %v2882, 20
        %v8282 = vpop.permute.xlu0 %8281
        %8283 = vrot.lane.b32.xlu0 %v2958, 20
        %v8284 = vpop.permute.xlu0 %8283
        %8285 = vrot.lane.b32.xlu0 %v3034, 20
        %v8286 = vpop.permute.xlu0 %8285
        %8287 = vrot.lane.b32.xlu0 %v3110, 20
        %v8288 = vpop.permute.xlu0 %8287
        %8289 = vrot.lane.b32.xlu0 %v3186, 20
        %v8290 = vpop.permute.xlu0 %8289
        %8291 = vrot.lane.b32.xlu0 %v3262, 20
        %v8292 = vpop.permute.xlu0 %8291
        %8293 = vrot.lane.b32.xlu0 %v3338, 20
        %v8294 = vpop.permute.xlu0 %8293
        %8295 = vrot.lane.b32.xlu0 %v3414, 20
        %v8296 = vpop.permute.xlu0 %8295
        %8297 = vrot.lane.b32.xlu0 %v3490, 20
        %v8298 = vpop.permute.xlu0 %8297
        %8299 = vrot.lane.b32.xlu0 %v3566, 20
        %v8300 = vpop.permute.xlu0 %8299
        %8301 = vrot.lane.b32.xlu0 %v3642, 20
        %v8302 = vpop.permute.xlu0 %8301
        %8303 = vrot.lane.b32.xlu0 %v3718, 20
        %v8304 = vpop.permute.xlu0 %8303
        %8305 = vrot.lane.b32.xlu0 %v3794, 20
        %v8306 = vpop.permute.xlu0 %8305
        %8307 = vrot.lane.b32.xlu0 %v3870, 20
        %v8308 = vpop.permute.xlu0 %8307
        %8309 = vrot.lane.b32.xlu0 %v3946, 20
        %v8310 = vpop.permute.xlu0 %8309
        %8311 = vrot.lane.b32.xlu0 %v4022, 20
        %v8312 = vpop.permute.xlu0 %8311
        %8313 = vrot.lane.b32.xlu0 %v4098, 20
        %v8314 = vpop.permute.xlu0 %8313
        %8315 = vrot.lane.b32.xlu0 %v4174, 20
        %v8316 = vpop.permute.xlu0 %8315
        %8317 = vrot.lane.b32.xlu0 %v4250, 20
        %v8318 = vpop.permute.xlu0 %8317
        %8319 = vrot.lane.b32.xlu0 %v4326, 20
        %v8320 = vpop.permute.xlu0 %8319
        %8321 = vrot.lane.b32.xlu0 %v4402, 20
        %v8322 = vpop.permute.xlu0 %8321
        %8323 = vrot.lane.b32.xlu0 %v4478, 20
        %v8324 = vpop.permute.xlu0 %8323
        %8325 = vrot.lane.b32.xlu0 %v4554, 20
        %v8326 = vpop.permute.xlu0 %8325
        %8327 = vrot.lane.b32.xlu0 %v4630, 20
        %v8328 = vpop.permute.xlu0 %8327
        %8329 = vrot.lane.b32.xlu0 %v4706, 20
        %v8330 = vpop.permute.xlu0 %8329
        %8331 = vrot.lane.b32.xlu0 %v4782, 20
        %v8332 = vpop.permute.xlu0 %8331
        %8333 = vrot.lane.b32.xlu0 %v4858, 20
        %v8334 = vpop.permute.xlu0 %8333
        %8335 = vrot.lane.b32.xlu0 %v4934, 20
        %v8336 = vpop.permute.xlu0 %8335
        %8337 = vrot.lane.b32.xlu0 %v5010, 20
        %v8338 = vpop.permute.xlu0 %8337
        %8339 = vrot.lane.b32.xlu0 %v5086, 20
        %v8340 = vpop.permute.xlu0 %8339
        %8341 = vrot.lane.b32.xlu0 %v5162, 20
        %v8342 = vpop.permute.xlu0 %8341
        %8343 = vrot.lane.b32.xlu0 %v5238, 20
        %v8344 = vpop.permute.xlu0 %8343
        %8345 = vrot.lane.b32.xlu0 %v5314, 20
        %v8346 = vpop.permute.xlu0 %8345
        %8347 = vrot.lane.b32.xlu0 %v5390, 20
        %v8348 = vpop.permute.xlu0 %8347
        %8349 = vrot.lane.b32.xlu0 %v5466, 20
        %v8350 = vpop.permute.xlu0 %8349
        %8351 = vrot.lane.b32.xlu0 %v5542, 20
        %v8352 = vpop.permute.xlu0 %8351
        %8353 = vrot.lane.b32.xlu0 %v5618, 20
        %v8354 = vpop.permute.xlu0 %8353
        %8355 = vrot.lane.b32.xlu0 %v5694, 20
        %v8356 = vpop.permute.xlu0 %8355
        %8357 = vrot.lane.b32.xlu0 %v5770, 20
        %v8358 = vpop.permute.xlu0 %8357
        %8359 = vrot.lane.b32.xlu0 %v5846, 20
        %v8360 = vpop.permute.xlu0 %8359
        %8489 = vrot.lane.b32.xlu0 %v1072, 22
        %v8490 = vpop.permute.xlu0 %8489
        %8491 = vrot.lane.b32.xlu0 %v1148, 22
        %v8492 = vpop.permute.xlu0 %8491
        %8493 = vrot.lane.b32.xlu0 %v1224, 22
        %v8494 = vpop.permute.xlu0 %8493
        %8495 = vrot.lane.b32.xlu0 %v1300, 22
        %v8496 = vpop.permute.xlu0 %8495
        %8497 = vrot.lane.b32.xlu0 %v1376, 22
        %v8498 = vpop.permute.xlu0 %8497
        %8499 = vrot.lane.b32.xlu0 %v1452, 22
        %v8500 = vpop.permute.xlu0 %8499
        %8501 = vrot.lane.b32.xlu0 %v1528, 22
        %v8502 = vpop.permute.xlu0 %8501
        %8503 = vrot.lane.b32.xlu0 %v1604, 22
        %v8504 = vpop.permute.xlu0 %8503
        %8505 = vrot.lane.b32.xlu0 %v1680, 22
        %v8506 = vpop.permute.xlu0 %8505
        %8507 = vrot.lane.b32.xlu0 %v1756, 22
        %v8508 = vpop.permute.xlu0 %8507
        %8509 = vrot.lane.b32.xlu0 %v1832, 22
        %v8510 = vpop.permute.xlu0 %8509
        %8511 = vrot.lane.b32.xlu0 %v1908, 22
        %v8512 = vpop.permute.xlu0 %8511
        %8513 = vrot.lane.b32.xlu0 %v1984, 22
        %v8514 = vpop.permute.xlu0 %8513
        %8515 = vrot.lane.b32.xlu0 %v2060, 22
        %v8516 = vpop.permute.xlu0 %8515
        %8517 = vrot.lane.b32.xlu0 %v2136, 22
        %v8518 = vpop.permute.xlu0 %8517
        %8519 = vrot.lane.b32.xlu0 %v2212, 22
        %v8520 = vpop.permute.xlu0 %8519
        %8521 = vrot.lane.b32.xlu0 %v2288, 22
        %v8522 = vpop.permute.xlu0 %8521
        %8523 = vrot.lane.b32.xlu0 %v2364, 22
        %v8524 = vpop.permute.xlu0 %8523
        %8525 = vrot.lane.b32.xlu0 %v2440, 22
        %v8526 = vpop.permute.xlu0 %8525
        %8527 = vrot.lane.b32.xlu0 %v2516, 22
        %v8528 = vpop.permute.xlu0 %8527
        %8529 = vrot.lane.b32.xlu0 %v2592, 22
        %v8530 = vpop.permute.xlu0 %8529
        %8531 = vrot.lane.b32.xlu0 %v2668, 22
        %v8532 = vpop.permute.xlu0 %8531
        %8533 = vrot.lane.b32.xlu0 %v2744, 22
        %v8534 = vpop.permute.xlu0 %8533
        %8535 = vrot.lane.b32.xlu0 %v2820, 22
        %v8536 = vpop.permute.xlu0 %8535
        %8537 = vrot.lane.b32.xlu0 %v2896, 22
        %v8538 = vpop.permute.xlu0 %8537
        %8539 = vrot.lane.b32.xlu0 %v2972, 22
        %v8540 = vpop.permute.xlu0 %8539
        %8541 = vrot.lane.b32.xlu0 %v3048, 22
        %v8542 = vpop.permute.xlu0 %8541
        %8543 = vrot.lane.b32.xlu0 %v3124, 22
        %v8544 = vpop.permute.xlu0 %8543
        %8545 = vrot.lane.b32.xlu0 %v3200, 22
        %v8546 = vpop.permute.xlu0 %8545
        %8547 = vrot.lane.b32.xlu0 %v3276, 22
        %v8548 = vpop.permute.xlu0 %8547
        %8549 = vrot.lane.b32.xlu0 %v3352, 22
        %v8550 = vpop.permute.xlu0 %8549
        %8551 = vrot.lane.b32.xlu0 %v3428, 22
        %v8552 = vpop.permute.xlu0 %8551
        %8553 = vrot.lane.b32.xlu0 %v3504, 22
        %v8554 = vpop.permute.xlu0 %8553
        %8555 = vrot.lane.b32.xlu0 %v3580, 22
        %v8556 = vpop.permute.xlu0 %8555
        %8557 = vrot.lane.b32.xlu0 %v3656, 22
        %v8558 = vpop.permute.xlu0 %8557
        %8559 = vrot.lane.b32.xlu0 %v3732, 22
        %v8560 = vpop.permute.xlu0 %8559
        %8561 = vrot.lane.b32.xlu0 %v3808, 22
        %v8562 = vpop.permute.xlu0 %8561
        %8563 = vrot.lane.b32.xlu0 %v3884, 22
        %v8564 = vpop.permute.xlu0 %8563
        %8565 = vrot.lane.b32.xlu0 %v3960, 22
        %v8566 = vpop.permute.xlu0 %8565
        %8567 = vrot.lane.b32.xlu0 %v4036, 22
        %v8568 = vpop.permute.xlu0 %8567
        %8569 = vrot.lane.b32.xlu0 %v4112, 22
        %v8570 = vpop.permute.xlu0 %8569
        %8571 = vrot.lane.b32.xlu0 %v4188, 22
        %v8572 = vpop.permute.xlu0 %8571
        %8573 = vrot.lane.b32.xlu0 %v4264, 22
        %v8574 = vpop.permute.xlu0 %8573
        %8575 = vrot.lane.b32.xlu0 %v4340, 22
        %v8576 = vpop.permute.xlu0 %8575
        %8577 = vrot.lane.b32.xlu0 %v4416, 22
        %v8578 = vpop.permute.xlu0 %8577
        %8579 = vrot.lane.b32.xlu0 %v4492, 22
        %v8580 = vpop.permute.xlu0 %8579
        %8581 = vrot.lane.b32.xlu0 %v4568, 22
        %v8582 = vpop.permute.xlu0 %8581
        %8583 = vrot.lane.b32.xlu0 %v4644, 22
        %v8584 = vpop.permute.xlu0 %8583
        %8585 = vrot.lane.b32.xlu0 %v4720, 22
        %v8586 = vpop.permute.xlu0 %8585
        %8587 = vrot.lane.b32.xlu0 %v4796, 22
        %v8588 = vpop.permute.xlu0 %8587
        %8589 = vrot.lane.b32.xlu0 %v4872, 22
        %v8590 = vpop.permute.xlu0 %8589
        %8591 = vrot.lane.b32.xlu0 %v4948, 22
        %v8592 = vpop.permute.xlu0 %8591
        %8593 = vrot.lane.b32.xlu0 %v5024, 22
        %v8594 = vpop.permute.xlu0 %8593
        %8595 = vrot.lane.b32.xlu0 %v5100, 22
        %v8596 = vpop.permute.xlu0 %8595
        %8597 = vrot.lane.b32.xlu0 %v5176, 22
        %v8598 = vpop.permute.xlu0 %8597
        %8599 = vrot.lane.b32.xlu0 %v5252, 22
        %v8600 = vpop.permute.xlu0 %8599
        %8601 = vrot.lane.b32.xlu0 %v5328, 22
        %v8602 = vpop.permute.xlu0 %8601
        %8603 = vrot.lane.b32.xlu0 %v5404, 22
        %v8604 = vpop.permute.xlu0 %8603
        %8605 = vrot.lane.b32.xlu0 %v5480, 22
        %v8606 = vpop.permute.xlu0 %8605
        %8607 = vrot.lane.b32.xlu0 %v5556, 22
        %v8608 = vpop.permute.xlu0 %8607
        %8609 = vrot.lane.b32.xlu0 %v5632, 22
        %v8610 = vpop.permute.xlu0 %8609
        %8611 = vrot.lane.b32.xlu0 %v5708, 22
        %v8612 = vpop.permute.xlu0 %8611
        %8613 = vrot.lane.b32.xlu0 %v5784, 22
        %v8614 = vpop.permute.xlu0 %8613
        %8615 = vrot.lane.b32.xlu0 %v5860, 22
        %v8616 = vpop.permute.xlu0 %8615
        %8745 = vrot.lane.b32.xlu0 %v1064, 24
        %v8746 = vpop.permute.xlu0 %8745
        %8747 = vrot.lane.b32.xlu0 %v1140, 24
        %v8748 = vpop.permute.xlu0 %8747
        %8749 = vrot.lane.b32.xlu0 %v1216, 24
        %v8750 = vpop.permute.xlu0 %8749
        %8751 = vrot.lane.b32.xlu0 %v1292, 24
        %v8752 = vpop.permute.xlu0 %8751
        %8753 = vrot.lane.b32.xlu0 %v1368, 24
        %v8754 = vpop.permute.xlu0 %8753
        %8755 = vrot.lane.b32.xlu0 %v1444, 24
        %v8756 = vpop.permute.xlu0 %8755
        %8757 = vrot.lane.b32.xlu0 %v1520, 24
        %v8758 = vpop.permute.xlu0 %8757
        %8759 = vrot.lane.b32.xlu0 %v1596, 24
        %v8760 = vpop.permute.xlu0 %8759
        %8761 = vrot.lane.b32.xlu0 %v1672, 24
        %v8762 = vpop.permute.xlu0 %8761
        %8763 = vrot.lane.b32.xlu0 %v1748, 24
        %v8764 = vpop.permute.xlu0 %8763
        %8765 = vrot.lane.b32.xlu0 %v1824, 24
        %v8766 = vpop.permute.xlu0 %8765
        %8767 = vrot.lane.b32.xlu0 %v1900, 24
        %v8768 = vpop.permute.xlu0 %8767
        %8769 = vrot.lane.b32.xlu0 %v1976, 24
        %v8770 = vpop.permute.xlu0 %8769
        %8771 = vrot.lane.b32.xlu0 %v2052, 24
        %v8772 = vpop.permute.xlu0 %8771
        %8773 = vrot.lane.b32.xlu0 %v2128, 24
        %v8774 = vpop.permute.xlu0 %8773
        %8775 = vrot.lane.b32.xlu0 %v2204, 24
        %v8776 = vpop.permute.xlu0 %8775
        %8777 = vrot.lane.b32.xlu0 %v2280, 24
        %v8778 = vpop.permute.xlu0 %8777
        %8779 = vrot.lane.b32.xlu0 %v2356, 24
        %v8780 = vpop.permute.xlu0 %8779
        %8781 = vrot.lane.b32.xlu0 %v2432, 24
        %v8782 = vpop.permute.xlu0 %8781
        %8783 = vrot.lane.b32.xlu0 %v2508, 24
        %v8784 = vpop.permute.xlu0 %8783
        %8785 = vrot.lane.b32.xlu0 %v2584, 24
        %v8786 = vpop.permute.xlu0 %8785
        %8787 = vrot.lane.b32.xlu0 %v2660, 24
        %v8788 = vpop.permute.xlu0 %8787
        %8789 = vrot.lane.b32.xlu0 %v2736, 24
        %v8790 = vpop.permute.xlu0 %8789
        %8791 = vrot.lane.b32.xlu0 %v2812, 24
        %v8792 = vpop.permute.xlu0 %8791
        %8793 = vrot.lane.b32.xlu0 %v2888, 24
        %v8794 = vpop.permute.xlu0 %8793
        %8795 = vrot.lane.b32.xlu0 %v2964, 24
        %v8796 = vpop.permute.xlu0 %8795
        %8797 = vrot.lane.b32.xlu0 %v3040, 24
        %v8798 = vpop.permute.xlu0 %8797
        %8799 = vrot.lane.b32.xlu0 %v3116, 24
        %v8800 = vpop.permute.xlu0 %8799
        %8801 = vrot.lane.b32.xlu0 %v3192, 24
        %v8802 = vpop.permute.xlu0 %8801
        %8803 = vrot.lane.b32.xlu0 %v3268, 24
        %v8804 = vpop.permute.xlu0 %8803
        %8805 = vrot.lane.b32.xlu0 %v3344, 24
        %v8806 = vpop.permute.xlu0 %8805
        %8807 = vrot.lane.b32.xlu0 %v3420, 24
        %v8808 = vpop.permute.xlu0 %8807
        %8809 = vrot.lane.b32.xlu0 %v3496, 24
        %v8810 = vpop.permute.xlu0 %8809
        %8811 = vrot.lane.b32.xlu0 %v3572, 24
        %v8812 = vpop.permute.xlu0 %8811
        %8813 = vrot.lane.b32.xlu0 %v3648, 24
        %v8814 = vpop.permute.xlu0 %8813
        %8815 = vrot.lane.b32.xlu0 %v3724, 24
        %v8816 = vpop.permute.xlu0 %8815
        %8817 = vrot.lane.b32.xlu0 %v3800, 24
        %v8818 = vpop.permute.xlu0 %8817
        %8819 = vrot.lane.b32.xlu0 %v3876, 24
        %v8820 = vpop.permute.xlu0 %8819
        %8821 = vrot.lane.b32.xlu0 %v3952, 24
        %v8822 = vpop.permute.xlu0 %8821
        %8823 = vrot.lane.b32.xlu0 %v4028, 24
        %v8824 = vpop.permute.xlu0 %8823
        %8825 = vrot.lane.b32.xlu0 %v4104, 24
        %v8826 = vpop.permute.xlu0 %8825
        %8827 = vrot.lane.b32.xlu0 %v4180, 24
        %v8828 = vpop.permute.xlu0 %8827
        %8829 = vrot.lane.b32.xlu0 %v4256, 24
        %v8830 = vpop.permute.xlu0 %8829
        %8831 = vrot.lane.b32.xlu0 %v4332, 24
        %v8832 = vpop.permute.xlu0 %8831
        %8833 = vrot.lane.b32.xlu0 %v4408, 24
        %v8834 = vpop.permute.xlu0 %8833
        %8835 = vrot.lane.b32.xlu0 %v4484, 24
        %v8836 = vpop.permute.xlu0 %8835
        %8837 = vrot.lane.b32.xlu0 %v4560, 24
        %v8838 = vpop.permute.xlu0 %8837
        %8839 = vrot.lane.b32.xlu0 %v4636, 24
        %v8840 = vpop.permute.xlu0 %8839
        %8841 = vrot.lane.b32.xlu0 %v4712, 24
        %v8842 = vpop.permute.xlu0 %8841
        %8843 = vrot.lane.b32.xlu0 %v4788, 24
        %v8844 = vpop.permute.xlu0 %8843
        %8845 = vrot.lane.b32.xlu0 %v4864, 24
        %v8846 = vpop.permute.xlu0 %8845
        %8847 = vrot.lane.b32.xlu0 %v4940, 24
        %v8848 = vpop.permute.xlu0 %8847
        %8849 = vrot.lane.b32.xlu0 %v5016, 24
        %v8850 = vpop.permute.xlu0 %8849
        %8851 = vrot.lane.b32.xlu0 %v5092, 24
        %v8852 = vpop.permute.xlu0 %8851
        %8853 = vrot.lane.b32.xlu0 %v5168, 24
        %v8854 = vpop.permute.xlu0 %8853
        %8855 = vrot.lane.b32.xlu0 %v5244, 24
        %v8856 = vpop.permute.xlu0 %8855
        %8857 = vrot.lane.b32.xlu0 %v5320, 24
        %v8858 = vpop.permute.xlu0 %8857
        %8859 = vrot.lane.b32.xlu0 %v5396, 24
        %v8860 = vpop.permute.xlu0 %8859
        %8861 = vrot.lane.b32.xlu0 %v5472, 24
        %v8862 = vpop.permute.xlu0 %8861
        %8863 = vrot.lane.b32.xlu0 %v5548, 24
        %v8864 = vpop.permute.xlu0 %8863
        %8865 = vrot.lane.b32.xlu0 %v5624, 24
        %v8866 = vpop.permute.xlu0 %8865
        %8867 = vrot.lane.b32.xlu0 %v5700, 24
        %v8868 = vpop.permute.xlu0 %8867
        %8869 = vrot.lane.b32.xlu0 %v5776, 24
        %v8870 = vpop.permute.xlu0 %8869
        %8871 = vrot.lane.b32.xlu0 %v5852, 24
        %v8872 = vpop.permute.xlu0 %8871
        %9001 = vrot.lane.b32.xlu0 %v1074, 26
        %v9002 = vpop.permute.xlu0 %9001
        %9003 = vrot.lane.b32.xlu0 %v1150, 26
        %v9004 = vpop.permute.xlu0 %9003
        %9005 = vrot.lane.b32.xlu0 %v1226, 26
        %v9006 = vpop.permute.xlu0 %9005
        %9007 = vrot.lane.b32.xlu0 %v1302, 26
        %v9008 = vpop.permute.xlu0 %9007
        %9009 = vrot.lane.b32.xlu0 %v1378, 26
        %v9010 = vpop.permute.xlu0 %9009
        %9011 = vrot.lane.b32.xlu0 %v1454, 26
        %v9012 = vpop.permute.xlu0 %9011
        %9013 = vrot.lane.b32.xlu0 %v1530, 26
        %v9014 = vpop.permute.xlu0 %9013
        %9015 = vrot.lane.b32.xlu0 %v1606, 26
        %v9016 = vpop.permute.xlu0 %9015
        %9017 = vrot.lane.b32.xlu0 %v1682, 26
        %v9018 = vpop.permute.xlu0 %9017
        %9019 = vrot.lane.b32.xlu0 %v1758, 26
        %v9020 = vpop.permute.xlu0 %9019
        %9021 = vrot.lane.b32.xlu0 %v1834, 26
        %v9022 = vpop.permute.xlu0 %9021
        %9023 = vrot.lane.b32.xlu0 %v1910, 26
        %v9024 = vpop.permute.xlu0 %9023
        %9025 = vrot.lane.b32.xlu0 %v1986, 26
        %v9026 = vpop.permute.xlu0 %9025
        %9027 = vrot.lane.b32.xlu0 %v2062, 26
        %v9028 = vpop.permute.xlu0 %9027
        %9029 = vrot.lane.b32.xlu0 %v2138, 26
        %v9030 = vpop.permute.xlu0 %9029
        %9031 = vrot.lane.b32.xlu0 %v2214, 26
        %v9032 = vpop.permute.xlu0 %9031
        %9033 = vrot.lane.b32.xlu0 %v2290, 26
        %v9034 = vpop.permute.xlu0 %9033
        %9035 = vrot.lane.b32.xlu0 %v2366, 26
        %v9036 = vpop.permute.xlu0 %9035
        %9037 = vrot.lane.b32.xlu0 %v2442, 26
        %v9038 = vpop.permute.xlu0 %9037
        %9039 = vrot.lane.b32.xlu0 %v2518, 26
        %v9040 = vpop.permute.xlu0 %9039
        %9041 = vrot.lane.b32.xlu0 %v2594, 26
        %v9042 = vpop.permute.xlu0 %9041
        %9043 = vrot.lane.b32.xlu0 %v2670, 26
        %v9044 = vpop.permute.xlu0 %9043
        %9045 = vrot.lane.b32.xlu0 %v2746, 26
        %v9046 = vpop.permute.xlu0 %9045
        %9047 = vrot.lane.b32.xlu0 %v2822, 26
        %v9048 = vpop.permute.xlu0 %9047
        %9049 = vrot.lane.b32.xlu0 %v2898, 26
        %v9050 = vpop.permute.xlu0 %9049
        %9051 = vrot.lane.b32.xlu0 %v2974, 26
        %v9052 = vpop.permute.xlu0 %9051
        %9053 = vrot.lane.b32.xlu0 %v3050, 26
        %v9054 = vpop.permute.xlu0 %9053
        %9055 = vrot.lane.b32.xlu0 %v3126, 26
        %v9056 = vpop.permute.xlu0 %9055
        %9057 = vrot.lane.b32.xlu0 %v3202, 26
        %v9058 = vpop.permute.xlu0 %9057
        %9059 = vrot.lane.b32.xlu0 %v3278, 26
        %v9060 = vpop.permute.xlu0 %9059
        %9061 = vrot.lane.b32.xlu0 %v3354, 26
        %v9062 = vpop.permute.xlu0 %9061
        %9063 = vrot.lane.b32.xlu0 %v3430, 26
        %v9064 = vpop.permute.xlu0 %9063
        %9065 = vrot.lane.b32.xlu0 %v3506, 26
        %v9066 = vpop.permute.xlu0 %9065
        %9067 = vrot.lane.b32.xlu0 %v3582, 26
        %v9068 = vpop.permute.xlu0 %9067
        %9069 = vrot.lane.b32.xlu0 %v3658, 26
        %v9070 = vpop.permute.xlu0 %9069
        %9071 = vrot.lane.b32.xlu0 %v3734, 26
        %v9072 = vpop.permute.xlu0 %9071
        %9073 = vrot.lane.b32.xlu0 %v3810, 26
        %v9074 = vpop.permute.xlu0 %9073
        %9075 = vrot.lane.b32.xlu0 %v3886, 26
        %v9076 = vpop.permute.xlu0 %9075
        %9077 = vrot.lane.b32.xlu0 %v3962, 26
        %v9078 = vpop.permute.xlu0 %9077
        %9079 = vrot.lane.b32.xlu0 %v4038, 26
        %v9080 = vpop.permute.xlu0 %9079
        %9081 = vrot.lane.b32.xlu0 %v4114, 26
        %v9082 = vpop.permute.xlu0 %9081
        %9083 = vrot.lane.b32.xlu0 %v4190, 26
        %v9084 = vpop.permute.xlu0 %9083
        %9085 = vrot.lane.b32.xlu0 %v4266, 26
        %v9086 = vpop.permute.xlu0 %9085
        %9087 = vrot.lane.b32.xlu0 %v4342, 26
        %v9088 = vpop.permute.xlu0 %9087
        %9089 = vrot.lane.b32.xlu0 %v4418, 26
        %v9090 = vpop.permute.xlu0 %9089
        %9091 = vrot.lane.b32.xlu0 %v4494, 26
        %v9092 = vpop.permute.xlu0 %9091
        %9093 = vrot.lane.b32.xlu0 %v4570, 26
        %v9094 = vpop.permute.xlu0 %9093
        %9095 = vrot.lane.b32.xlu0 %v4646, 26
        %v9096 = vpop.permute.xlu0 %9095
        %9097 = vrot.lane.b32.xlu0 %v4722, 26
        %v9098 = vpop.permute.xlu0 %9097
        %9099 = vrot.lane.b32.xlu0 %v4798, 26
        %v9100 = vpop.permute.xlu0 %9099
        %9101 = vrot.lane.b32.xlu0 %v4874, 26
        %v9102 = vpop.permute.xlu0 %9101
        %9103 = vrot.lane.b32.xlu0 %v4950, 26
        %v9104 = vpop.permute.xlu0 %9103
        %9105 = vrot.lane.b32.xlu0 %v5026, 26
        %v9106 = vpop.permute.xlu0 %9105
        %9107 = vrot.lane.b32.xlu0 %v5102, 26
        %v9108 = vpop.permute.xlu0 %9107
        %9109 = vrot.lane.b32.xlu0 %v5178, 26
        %v9110 = vpop.permute.xlu0 %9109
        %9111 = vrot.lane.b32.xlu0 %v5254, 26
        %v9112 = vpop.permute.xlu0 %9111
        %9113 = vrot.lane.b32.xlu0 %v5330, 26
        %v9114 = vpop.permute.xlu0 %9113
        %9115 = vrot.lane.b32.xlu0 %v5406, 26
        %v9116 = vpop.permute.xlu0 %9115
        %9117 = vrot.lane.b32.xlu0 %v5482, 26
        %v9118 = vpop.permute.xlu0 %9117
        %9119 = vrot.lane.b32.xlu0 %v5558, 26
        %v9120 = vpop.permute.xlu0 %9119
        %9121 = vrot.lane.b32.xlu0 %v5634, 26
        %v9122 = vpop.permute.xlu0 %9121
        %9123 = vrot.lane.b32.xlu0 %v5710, 26
        %v9124 = vpop.permute.xlu0 %9123
        %9125 = vrot.lane.b32.xlu0 %v5786, 26
        %v9126 = vpop.permute.xlu0 %9125
        %9127 = vrot.lane.b32.xlu0 %v5862, 26
        %v9128 = vpop.permute.xlu0 %9127
        %9257 = vrot.lane.b32.xlu0 %v1068, 28
        %v9258 = vpop.permute.xlu0 %9257
        %9259 = vrot.lane.b32.xlu0 %v1144, 28
        %v9260 = vpop.permute.xlu0 %9259
        %9261 = vrot.lane.b32.xlu0 %v1220, 28
        %v9262 = vpop.permute.xlu0 %9261
        %9263 = vrot.lane.b32.xlu0 %v1296, 28
        %v9264 = vpop.permute.xlu0 %9263
        %9265 = vrot.lane.b32.xlu0 %v1372, 28
        %v9266 = vpop.permute.xlu0 %9265
        %9267 = vrot.lane.b32.xlu0 %v1448, 28
        %v9268 = vpop.permute.xlu0 %9267
        %9269 = vrot.lane.b32.xlu0 %v1524, 28
        %v9270 = vpop.permute.xlu0 %9269
        %9271 = vrot.lane.b32.xlu0 %v1600, 28
        %v9272 = vpop.permute.xlu0 %9271
        %9273 = vrot.lane.b32.xlu0 %v1676, 28
        %v9274 = vpop.permute.xlu0 %9273
        %9275 = vrot.lane.b32.xlu0 %v1752, 28
        %v9276 = vpop.permute.xlu0 %9275
        %9277 = vrot.lane.b32.xlu0 %v1828, 28
        %v9278 = vpop.permute.xlu0 %9277
        %9279 = vrot.lane.b32.xlu0 %v1904, 28
        %v9280 = vpop.permute.xlu0 %9279
        %9281 = vrot.lane.b32.xlu0 %v1980, 28
        %v9282 = vpop.permute.xlu0 %9281
        %9283 = vrot.lane.b32.xlu0 %v2056, 28
        %v9284 = vpop.permute.xlu0 %9283
        %9285 = vrot.lane.b32.xlu0 %v2132, 28
        %v9286 = vpop.permute.xlu0 %9285
        %9287 = vrot.lane.b32.xlu0 %v2208, 28
        %v9288 = vpop.permute.xlu0 %9287
        %9289 = vrot.lane.b32.xlu0 %v2284, 28
        %v9290 = vpop.permute.xlu0 %9289
        %9291 = vrot.lane.b32.xlu0 %v2360, 28
        %v9292 = vpop.permute.xlu0 %9291
        %9293 = vrot.lane.b32.xlu0 %v2436, 28
        %v9294 = vpop.permute.xlu0 %9293
        %9295 = vrot.lane.b32.xlu0 %v2512, 28
        %v9296 = vpop.permute.xlu0 %9295
        %9297 = vrot.lane.b32.xlu0 %v2588, 28
        %v9298 = vpop.permute.xlu0 %9297
        %9299 = vrot.lane.b32.xlu0 %v2664, 28
        %v9300 = vpop.permute.xlu0 %9299
        %9301 = vrot.lane.b32.xlu0 %v2740, 28
        %v9302 = vpop.permute.xlu0 %9301
        %9303 = vrot.lane.b32.xlu0 %v2816, 28
        %v9304 = vpop.permute.xlu0 %9303
        %9305 = vrot.lane.b32.xlu0 %v2892, 28
        %v9306 = vpop.permute.xlu0 %9305
        %9307 = vrot.lane.b32.xlu0 %v2968, 28
        %v9308 = vpop.permute.xlu0 %9307
        %9309 = vrot.lane.b32.xlu0 %v3044, 28
        %v9310 = vpop.permute.xlu0 %9309
        %9311 = vrot.lane.b32.xlu0 %v3120, 28
        %v9312 = vpop.permute.xlu0 %9311
        %9313 = vrot.lane.b32.xlu0 %v3196, 28
        %v9314 = vpop.permute.xlu0 %9313
        %9315 = vrot.lane.b32.xlu0 %v3272, 28
        %v9316 = vpop.permute.xlu0 %9315
        %9317 = vrot.lane.b32.xlu0 %v3348, 28
        %v9318 = vpop.permute.xlu0 %9317
        %9319 = vrot.lane.b32.xlu0 %v3424, 28
        %v9320 = vpop.permute.xlu0 %9319
        %9321 = vrot.lane.b32.xlu0 %v3500, 28
        %v9322 = vpop.permute.xlu0 %9321
        %9323 = vrot.lane.b32.xlu0 %v3576, 28
        %v9324 = vpop.permute.xlu0 %9323
        %9325 = vrot.lane.b32.xlu0 %v3652, 28
        %v9326 = vpop.permute.xlu0 %9325
        %9327 = vrot.lane.b32.xlu0 %v3728, 28
        %v9328 = vpop.permute.xlu0 %9327
        %9329 = vrot.lane.b32.xlu0 %v3804, 28
        %v9330 = vpop.permute.xlu0 %9329
        %9331 = vrot.lane.b32.xlu0 %v3880, 28
        %v9332 = vpop.permute.xlu0 %9331
        %9333 = vrot.lane.b32.xlu0 %v3956, 28
        %v9334 = vpop.permute.xlu0 %9333
        %9335 = vrot.lane.b32.xlu0 %v4032, 28
        %v9336 = vpop.permute.xlu0 %9335
        %9337 = vrot.lane.b32.xlu0 %v4108, 28
        %v9338 = vpop.permute.xlu0 %9337
        %9339 = vrot.lane.b32.xlu0 %v4184, 28
        %v9340 = vpop.permute.xlu0 %9339
        %9341 = vrot.lane.b32.xlu0 %v4260, 28
        %v9342 = vpop.permute.xlu0 %9341
        %9343 = vrot.lane.b32.xlu0 %v4336, 28
        %v9344 = vpop.permute.xlu0 %9343
        %9345 = vrot.lane.b32.xlu0 %v4412, 28
        %v9346 = vpop.permute.xlu0 %9345
        %9347 = vrot.lane.b32.xlu0 %v4488, 28
        %v9348 = vpop.permute.xlu0 %9347
        %9349 = vrot.lane.b32.xlu0 %v4564, 28
        %v9350 = vpop.permute.xlu0 %9349
        %9351 = vrot.lane.b32.xlu0 %v4640, 28
        %v9352 = vpop.permute.xlu0 %9351
        %9353 = vrot.lane.b32.xlu0 %v4716, 28
        %v9354 = vpop.permute.xlu0 %9353
        %9355 = vrot.lane.b32.xlu0 %v4792, 28
        %v9356 = vpop.permute.xlu0 %9355
        %9357 = vrot.lane.b32.xlu0 %v4868, 28
        %v9358 = vpop.permute.xlu0 %9357
        %9359 = vrot.lane.b32.xlu0 %v4944, 28
        %v9360 = vpop.permute.xlu0 %9359
        %9361 = vrot.lane.b32.xlu0 %v5020, 28
        %v9362 = vpop.permute.xlu0 %9361
        %9363 = vrot.lane.b32.xlu0 %v5096, 28
        %v9364 = vpop.permute.xlu0 %9363
        %9365 = vrot.lane.b32.xlu0 %v5172, 28
        %v9366 = vpop.permute.xlu0 %9365
        %9367 = vrot.lane.b32.xlu0 %v5248, 28
        %v9368 = vpop.permute.xlu0 %9367
        %9369 = vrot.lane.b32.xlu0 %v5324, 28
        %v9370 = vpop.permute.xlu0 %9369
        %9371 = vrot.lane.b32.xlu0 %v5400, 28
        %v9372 = vpop.permute.xlu0 %9371
        %9373 = vrot.lane.b32.xlu0 %v5476, 28
        %v9374 = vpop.permute.xlu0 %9373
        %9375 = vrot.lane.b32.xlu0 %v5552, 28
        %v9376 = vpop.permute.xlu0 %9375
        %9377 = vrot.lane.b32.xlu0 %v5628, 28
        %v9378 = vpop.permute.xlu0 %9377
        %9379 = vrot.lane.b32.xlu0 %v5704, 28
        %v9380 = vpop.permute.xlu0 %9379
        %9381 = vrot.lane.b32.xlu0 %v5780, 28
        %v9382 = vpop.permute.xlu0 %9381
        %9383 = vrot.lane.b32.xlu0 %v5856, 28
        %v9384 = vpop.permute.xlu0 %9383
        %9513 = vrot.lane.b32.xlu0 %v1076, 30
        %v9514 = vpop.permute.xlu0 %9513
        %9515 = vrot.lane.b32.xlu0 %v1152, 30
        %v9516 = vpop.permute.xlu0 %9515
        %9517 = vrot.lane.b32.xlu0 %v1228, 30
        %v9518 = vpop.permute.xlu0 %9517
        %9519 = vrot.lane.b32.xlu0 %v1304, 30
        %v9520 = vpop.permute.xlu0 %9519
        %9521 = vrot.lane.b32.xlu0 %v1380, 30
        %v9522 = vpop.permute.xlu0 %9521
        %9523 = vrot.lane.b32.xlu0 %v1456, 30
        %v9524 = vpop.permute.xlu0 %9523
        %9525 = vrot.lane.b32.xlu0 %v1532, 30
        %v9526 = vpop.permute.xlu0 %9525
        %9527 = vrot.lane.b32.xlu0 %v1608, 30
        %v9528 = vpop.permute.xlu0 %9527
        %9529 = vrot.lane.b32.xlu0 %v1684, 30
        %v9530 = vpop.permute.xlu0 %9529
        %9531 = vrot.lane.b32.xlu0 %v1760, 30
        %v9532 = vpop.permute.xlu0 %9531
        %9533 = vrot.lane.b32.xlu0 %v1836, 30
        %v9534 = vpop.permute.xlu0 %9533
        %9535 = vrot.lane.b32.xlu0 %v1912, 30
        %v9536 = vpop.permute.xlu0 %9535
        %9537 = vrot.lane.b32.xlu0 %v1988, 30
        %v9538 = vpop.permute.xlu0 %9537
        %9539 = vrot.lane.b32.xlu0 %v2064, 30
        %v9540 = vpop.permute.xlu0 %9539
        %9541 = vrot.lane.b32.xlu0 %v2140, 30
        %v9542 = vpop.permute.xlu0 %9541
        %9543 = vrot.lane.b32.xlu0 %v2216, 30
        %v9544 = vpop.permute.xlu0 %9543
        %9545 = vrot.lane.b32.xlu0 %v2292, 30
        %v9546 = vpop.permute.xlu0 %9545
        %9547 = vrot.lane.b32.xlu0 %v2368, 30
        %v9548 = vpop.permute.xlu0 %9547
        %9549 = vrot.lane.b32.xlu0 %v2444, 30
        %v9550 = vpop.permute.xlu0 %9549
        %9551 = vrot.lane.b32.xlu0 %v2520, 30
        %v9552 = vpop.permute.xlu0 %9551
        %9553 = vrot.lane.b32.xlu0 %v2596, 30
        %v9554 = vpop.permute.xlu0 %9553
        %9555 = vrot.lane.b32.xlu0 %v2672, 30
        %v9556 = vpop.permute.xlu0 %9555
        %9557 = vrot.lane.b32.xlu0 %v2748, 30
        %v9558 = vpop.permute.xlu0 %9557
        %9559 = vrot.lane.b32.xlu0 %v2824, 30
        %v9560 = vpop.permute.xlu0 %9559
        %9561 = vrot.lane.b32.xlu0 %v2900, 30
        %v9562 = vpop.permute.xlu0 %9561
        %9563 = vrot.lane.b32.xlu0 %v2976, 30
        %v9564 = vpop.permute.xlu0 %9563
        %9565 = vrot.lane.b32.xlu0 %v3052, 30
        %v9566 = vpop.permute.xlu0 %9565
        %9567 = vrot.lane.b32.xlu0 %v3128, 30
        %v9568 = vpop.permute.xlu0 %9567
        %9569 = vrot.lane.b32.xlu0 %v3204, 30
        %v9570 = vpop.permute.xlu0 %9569
        %9571 = vrot.lane.b32.xlu0 %v3280, 30
        %v9572 = vpop.permute.xlu0 %9571
        %9573 = vrot.lane.b32.xlu0 %v3356, 30
        %v9574 = vpop.permute.xlu0 %9573
        %9575 = vrot.lane.b32.xlu0 %v3432, 30
        %v9576 = vpop.permute.xlu0 %9575
        %9577 = vrot.lane.b32.xlu0 %v3508, 30
        %v9578 = vpop.permute.xlu0 %9577
        %9579 = vrot.lane.b32.xlu0 %v3584, 30
        %v9580 = vpop.permute.xlu0 %9579
        %9581 = vrot.lane.b32.xlu0 %v3660, 30
        %v9582 = vpop.permute.xlu0 %9581
        %9583 = vrot.lane.b32.xlu0 %v3736, 30
        %v9584 = vpop.permute.xlu0 %9583
        %9585 = vrot.lane.b32.xlu0 %v3812, 30
        %v9586 = vpop.permute.xlu0 %9585
        %9587 = vrot.lane.b32.xlu0 %v3888, 30
        %v9588 = vpop.permute.xlu0 %9587
        %9589 = vrot.lane.b32.xlu0 %v3964, 30
        %v9590 = vpop.permute.xlu0 %9589
        %9591 = vrot.lane.b32.xlu0 %v4040, 30
        %v9592 = vpop.permute.xlu0 %9591
        %9593 = vrot.lane.b32.xlu0 %v4116, 30
        %v9594 = vpop.permute.xlu0 %9593
        %9595 = vrot.lane.b32.xlu0 %v4192, 30
        %v9596 = vpop.permute.xlu0 %9595
        %9597 = vrot.lane.b32.xlu0 %v4268, 30
        %v9598 = vpop.permute.xlu0 %9597
        %9599 = vrot.lane.b32.xlu0 %v4344, 30
        %v9600 = vpop.permute.xlu0 %9599
        %9601 = vrot.lane.b32.xlu0 %v4420, 30
        %v9602 = vpop.permute.xlu0 %9601
        %9603 = vrot.lane.b32.xlu0 %v4496, 30
        %v9604 = vpop.permute.xlu0 %9603
        %9605 = vrot.lane.b32.xlu0 %v4572, 30
        %v9606 = vpop.permute.xlu0 %9605
        %9607 = vrot.lane.b32.xlu0 %v4648, 30
        %v9608 = vpop.permute.xlu0 %9607
        %9609 = vrot.lane.b32.xlu0 %v4724, 30
        %v9610 = vpop.permute.xlu0 %9609
        %9611 = vrot.lane.b32.xlu0 %v4800, 30
        %v9612 = vpop.permute.xlu0 %9611
        %9613 = vrot.lane.b32.xlu0 %v4876, 30
        %v9614 = vpop.permute.xlu0 %9613
        %9615 = vrot.lane.b32.xlu0 %v4952, 30
        %v9616 = vpop.permute.xlu0 %9615
        %9617 = vrot.lane.b32.xlu0 %v5028, 30
        %v9618 = vpop.permute.xlu0 %9617
        %9619 = vrot.lane.b32.xlu0 %v5104, 30
        %v9620 = vpop.permute.xlu0 %9619
        %9621 = vrot.lane.b32.xlu0 %v5180, 30
        %v9622 = vpop.permute.xlu0 %9621
        %9623 = vrot.lane.b32.xlu0 %v5256, 30
        %v9624 = vpop.permute.xlu0 %9623
        %9625 = vrot.lane.b32.xlu0 %v5332, 30
        %v9626 = vpop.permute.xlu0 %9625
        %9627 = vrot.lane.b32.xlu0 %v5408, 30
        %v9628 = vpop.permute.xlu0 %9627
        %9629 = vrot.lane.b32.xlu0 %v5484, 30
        %v9630 = vpop.permute.xlu0 %9629
        %9631 = vrot.lane.b32.xlu0 %v5560, 30
        %v9632 = vpop.permute.xlu0 %9631
        %9633 = vrot.lane.b32.xlu0 %v5636, 30
        %v9634 = vpop.permute.xlu0 %9633
        %9635 = vrot.lane.b32.xlu0 %v5712, 30
        %v9636 = vpop.permute.xlu0 %9635
        %9637 = vrot.lane.b32.xlu0 %v5788, 30
        %v9638 = vpop.permute.xlu0 %9637
        %9639 = vrot.lane.b32.xlu0 %v5864, 30
        %v9640 = vpop.permute.xlu0 %9639
        %vm9705 = vcmask 15360
        %v9706 = vsel %vm9705, %v1016, %v5930
        %v9707 = vsel %vm9705, %v1092, %v5932
        %v9708 = vsel %vm9705, %v1168, %v5934
        %v9709 = vsel %vm9705, %v1244, %v5936
        %v9710 = vsel %vm9705, %v1320, %v5938
        %v9711 = vsel %vm9705, %v1396, %v5940
        %v9712 = vsel %vm9705, %v1472, %v5942
        %v9713 = vsel %vm9705, %v1548, %v5944
        %v9714 = vsel %vm9705, %v1624, %v5946
        %v9715 = vsel %vm9705, %v1700, %v5948
        %v9716 = vsel %vm9705, %v1776, %v5950
        %v9717 = vsel %vm9705, %v1852, %v5952
        %v9718 = vsel %vm9705, %v1928, %v5954
        %v9719 = vsel %vm9705, %v2004, %v5956
        %v9720 = vsel %vm9705, %v2080, %v5958
        %v9721 = vsel %vm9705, %v2156, %v5960
        %v9722 = vsel %vm9705, %v2232, %v5962
        %v9723 = vsel %vm9705, %v2308, %v5964
        %v9724 = vsel %vm9705, %v2384, %v5966
        %v9725 = vsel %vm9705, %v2460, %v5968
        %v9726 = vsel %vm9705, %v2536, %v5970
        %v9727 = vsel %vm9705, %v2612, %v5972
        %v9728 = vsel %vm9705, %v2688, %v5974
        %v9729 = vsel %vm9705, %v2764, %v5976
        %v9730 = vsel %vm9705, %v2840, %v5978
        %v9731 = vsel %vm9705, %v2916, %v5980
        %v9732 = vsel %vm9705, %v2992, %v5982
        %v9733 = vsel %vm9705, %v3068, %v5984
        %v9734 = vsel %vm9705, %v3144, %v5986
        %v9735 = vsel %vm9705, %v3220, %v5988
        %v9736 = vsel %vm9705, %v3296, %v5990
        %v9737 = vsel %vm9705, %v3372, %v5992
        %v9738 = vsel %vm9705, %v3448, %v5994
        %v9739 = vsel %vm9705, %v3524, %v5996
        %v9740 = vsel %vm9705, %v3600, %v5998
        %v9741 = vsel %vm9705, %v3676, %v6000
        %v9742 = vsel %vm9705, %v3752, %v6002
        %v9743 = vsel %vm9705, %v3828, %v6004
        %v9744 = vsel %vm9705, %v3904, %v6006
        %v9745 = vsel %vm9705, %v3980, %v6008
        %v9746 = vsel %vm9705, %v4056, %v6010
        %v9747 = vsel %vm9705, %v4132, %v6012
        %v9748 = vsel %vm9705, %v4208, %v6014
        %v9749 = vsel %vm9705, %v4284, %v6016
        %v9750 = vsel %vm9705, %v4360, %v6018
        %v9751 = vsel %vm9705, %v4436, %v6020
        %v9752 = vsel %vm9705, %v4512, %v6022
        %v9753 = vsel %vm9705, %v4588, %v6024
        %v9754 = vsel %vm9705, %v4664, %v6026
        %v9755 = vsel %vm9705, %v4740, %v6028
        %v9756 = vsel %vm9705, %v4816, %v6030
        %v9757 = vsel %vm9705, %v4892, %v6032
        %v9758 = vsel %vm9705, %v4968, %v6034
        %v9759 = vsel %vm9705, %v5044, %v6036
        %v9760 = vsel %vm9705, %v5120, %v6038
        %v9761 = vsel %vm9705, %v5196, %v6040
        %v9762 = vsel %vm9705, %v5272, %v6042
        %v9763 = vsel %vm9705, %v5348, %v6044
        %v9764 = vsel %vm9705, %v5424, %v6046
        %v9765 = vsel %vm9705, %v5500, %v6048
        %v9766 = vsel %vm9705, %v5576, %v6050
        %v9767 = vsel %vm9705, %v5652, %v6052
        %v9768 = vsel %vm9705, %v5728, %v6054
        %v9769 = vsel %vm9705, %v5804, %v6056
        %vm9770 = vcmask 31744
        %v9771 = vsel %vm9770, %v9706, %v6186
        %v9772 = vsel %vm9770, %v9707, %v6188
        %v9773 = vsel %vm9770, %v9708, %v6190
        %v9774 = vsel %vm9770, %v9709, %v6192
        %v9775 = vsel %vm9770, %v9710, %v6194
        %v9776 = vsel %vm9770, %v9711, %v6196
        %v9777 = vsel %vm9770, %v9712, %v6198
        %v9778 = vsel %vm9770, %v9713, %v6200
        %v9779 = vsel %vm9770, %v9714, %v6202
        %v9780 = vsel %vm9770, %v9715, %v6204
        %v9781 = vsel %vm9770, %v9716, %v6206
        %v9782 = vsel %vm9770, %v9717, %v6208
        %v9783 = vsel %vm9770, %v9718, %v6210
        %v9784 = vsel %vm9770, %v9719, %v6212
        %v9785 = vsel %vm9770, %v9720, %v6214
        %v9786 = vsel %vm9770, %v9721, %v6216
        %v9787 = vsel %vm9770, %v9722, %v6218
        %v9788 = vsel %vm9770, %v9723, %v6220
        %v9789 = vsel %vm9770, %v9724, %v6222
        %v9790 = vsel %vm9770, %v9725, %v6224
        %v9791 = vsel %vm9770, %v9726, %v6226
        %v9792 = vsel %vm9770, %v9727, %v6228
        %v9793 = vsel %vm9770, %v9728, %v6230
        %v9794 = vsel %vm9770, %v9729, %v6232
        %v9795 = vsel %vm9770, %v9730, %v6234
        %v9796 = vsel %vm9770, %v9731, %v6236
        %v9797 = vsel %vm9770, %v9732, %v6238
        %v9798 = vsel %vm9770, %v9733, %v6240
        %v9799 = vsel %vm9770, %v9734, %v6242
        %v9800 = vsel %vm9770, %v9735, %v6244
        %v9801 = vsel %vm9770, %v9736, %v6246
        %v9802 = vsel %vm9770, %v9737, %v6248
        %v9803 = vsel %vm9770, %v9738, %v6250
        %v9804 = vsel %vm9770, %v9739, %v6252
        %v9805 = vsel %vm9770, %v9740, %v6254
        %v9806 = vsel %vm9770, %v9741, %v6256
        %v9807 = vsel %vm9770, %v9742, %v6258
        %v9808 = vsel %vm9770, %v9743, %v6260
        %v9809 = vsel %vm9770, %v9744, %v6262
        %v9810 = vsel %vm9770, %v9745, %v6264
        %v9811 = vsel %vm9770, %v9746, %v6266
        %v9812 = vsel %vm9770, %v9747, %v6268
        %v9813 = vsel %vm9770, %v9748, %v6270
        %v9814 = vsel %vm9770, %v9749, %v6272
        %v9815 = vsel %vm9770, %v9750, %v6274
        %v9816 = vsel %vm9770, %v9751, %v6276
        %v9817 = vsel %vm9770, %v9752, %v6278
        %v9818 = vsel %vm9770, %v9753, %v6280
        %v9819 = vsel %vm9770, %v9754, %v6282
        %v9820 = vsel %vm9770, %v9755, %v6284
        %v9821 = vsel %vm9770, %v9756, %v6286
        %v9822 = vsel %vm9770, %v9757, %v6288
        %v9823 = vsel %vm9770, %v9758, %v6290
        %v9824 = vsel %vm9770, %v9759, %v6292
        %v9825 = vsel %vm9770, %v9760, %v6294
        %v9826 = vsel %vm9770, %v9761, %v6296
        %v9827 = vsel %vm9770, %v9762, %v6298
        %v9828 = vsel %vm9770, %v9763, %v6300
        %v9829 = vsel %vm9770, %v9764, %v6302
        %v9830 = vsel %vm9770, %v9765, %v6304
        %v9831 = vsel %vm9770, %v9766, %v6306
        %v9832 = vsel %vm9770, %v9767, %v6308
        %v9833 = vsel %vm9770, %v9768, %v6310
        %v9834 = vsel %vm9770, %v9769, %v6312
        %vm9835 = vcmask 48128
        %v9836 = vsel %vm9835, %v9771, %v6442
        %v9837 = vsel %vm9835, %v9772, %v6444
        %v9838 = vsel %vm9835, %v9773, %v6446
        %v9839 = vsel %vm9835, %v9774, %v6448
        %v9840 = vsel %vm9835, %v9775, %v6450
        %v9841 = vsel %vm9835, %v9776, %v6452
        %v9842 = vsel %vm9835, %v9777, %v6454
        %v9843 = vsel %vm9835, %v9778, %v6456
        %v9844 = vsel %vm9835, %v9779, %v6458
        %v9845 = vsel %vm9835, %v9780, %v6460
        %v9846 = vsel %vm9835, %v9781, %v6462
        %v9847 = vsel %vm9835, %v9782, %v6464
        %v9848 = vsel %vm9835, %v9783, %v6466
        %v9849 = vsel %vm9835, %v9784, %v6468
        %v9850 = vsel %vm9835, %v9785, %v6470
        %v9851 = vsel %vm9835, %v9786, %v6472
        %v9852 = vsel %vm9835, %v9787, %v6474
        %v9853 = vsel %vm9835, %v9788, %v6476
        %v9854 = vsel %vm9835, %v9789, %v6478
        %v9855 = vsel %vm9835, %v9790, %v6480
        %v9856 = vsel %vm9835, %v9791, %v6482
        %v9857 = vsel %vm9835, %v9792, %v6484
        %v9858 = vsel %vm9835, %v9793, %v6486
        %v9859 = vsel %vm9835, %v9794, %v6488
        %v9860 = vsel %vm9835, %v9795, %v6490
        %v9861 = vsel %vm9835, %v9796, %v6492
        %v9862 = vsel %vm9835, %v9797, %v6494
        %v9863 = vsel %vm9835, %v9798, %v6496
        %v9864 = vsel %vm9835, %v9799, %v6498
        %v9865 = vsel %vm9835, %v9800, %v6500
        %v9866 = vsel %vm9835, %v9801, %v6502
        %v9867 = vsel %vm9835, %v9802, %v6504
        %v9868 = vsel %vm9835, %v9803, %v6506
        %v9869 = vsel %vm9835, %v9804, %v6508
        %v9870 = vsel %vm9835, %v9805, %v6510
        %v9871 = vsel %vm9835, %v9806, %v6512
        %v9872 = vsel %vm9835, %v9807, %v6514
        %v9873 = vsel %vm9835, %v9808, %v6516
        %v9874 = vsel %vm9835, %v9809, %v6518
        %v9875 = vsel %vm9835, %v9810, %v6520
        %v9876 = vsel %vm9835, %v9811, %v6522
        %v9877 = vsel %vm9835, %v9812, %v6524
        %v9878 = vsel %vm9835, %v9813, %v6526
        %v9879 = vsel %vm9835, %v9814, %v6528
        %v9880 = vsel %vm9835, %v9815, %v6530
        %v9881 = vsel %vm9835, %v9816, %v6532
        %v9882 = vsel %vm9835, %v9817, %v6534
        %v9883 = vsel %vm9835, %v9818, %v6536
        %v9884 = vsel %vm9835, %v9819, %v6538
        %v9885 = vsel %vm9835, %v9820, %v6540
        %v9886 = vsel %vm9835, %v9821, %v6542
        %v9887 = vsel %vm9835, %v9822, %v6544
        %v9888 = vsel %vm9835, %v9823, %v6546
        %v9889 = vsel %vm9835, %v9824, %v6548
        %v9890 = vsel %vm9835, %v9825, %v6550
        %v9891 = vsel %vm9835, %v9826, %v6552
        %v9892 = vsel %vm9835, %v9827, %v6554
        %v9893 = vsel %vm9835, %v9828, %v6556
        %v9894 = vsel %vm9835, %v9829, %v6558
        %v9895 = vsel %vm9835, %v9830, %v6560
        %v9896 = vsel %vm9835, %v9831, %v6562
        %v9897 = vsel %vm9835, %v9832, %v6564
        %v9898 = vsel %vm9835, %v9833, %v6566
        %v9899 = vsel %vm9835, %v9834, %v6568
        %vm9900 = vcmask 64512
        %v9901 = vsel %vm9900, %v9836, %v6698
        %v9902 = vsel %vm9900, %v9837, %v6700
        %v9903 = vsel %vm9900, %v9838, %v6702
        %v9904 = vsel %vm9900, %v9839, %v6704
        %v9905 = vsel %vm9900, %v9840, %v6706
        %v9906 = vsel %vm9900, %v9841, %v6708
        %v9907 = vsel %vm9900, %v9842, %v6710
        %v9908 = vsel %vm9900, %v9843, %v6712
        %v9909 = vsel %vm9900, %v9844, %v6714
        %v9910 = vsel %vm9900, %v9845, %v6716
        %v9911 = vsel %vm9900, %v9846, %v6718
        %v9912 = vsel %vm9900, %v9847, %v6720
        %v9913 = vsel %vm9900, %v9848, %v6722
        %v9914 = vsel %vm9900, %v9849, %v6724
        %v9915 = vsel %vm9900, %v9850, %v6726
        %v9916 = vsel %vm9900, %v9851, %v6728
        %v9917 = vsel %vm9900, %v9852, %v6730
        %v9918 = vsel %vm9900, %v9853, %v6732
        %v9919 = vsel %vm9900, %v9854, %v6734
        %v9920 = vsel %vm9900, %v9855, %v6736
        %v9921 = vsel %vm9900, %v9856, %v6738
        %v9922 = vsel %vm9900, %v9857, %v6740
        %v9923 = vsel %vm9900, %v9858, %v6742
        %v9924 = vsel %vm9900, %v9859, %v6744
        %v9925 = vsel %vm9900, %v9860, %v6746
        %v9926 = vsel %vm9900, %v9861, %v6748
        %v9927 = vsel %vm9900, %v9862, %v6750
        %v9928 = vsel %vm9900, %v9863, %v6752
        %v9929 = vsel %vm9900, %v9864, %v6754
        %v9930 = vsel %vm9900, %v9865, %v6756
        %v9931 = vsel %vm9900, %v9866, %v6758
        %v9932 = vsel %vm9900, %v9867, %v6760
        %v9933 = vsel %vm9900, %v9868, %v6762
        %v9934 = vsel %vm9900, %v9869, %v6764
        %v9935 = vsel %vm9900, %v9870, %v6766
        %v9936 = vsel %vm9900, %v9871, %v6768
        %v9937 = vsel %vm9900, %v9872, %v6770
        %v9938 = vsel %vm9900, %v9873, %v6772
        %v9939 = vsel %vm9900, %v9874, %v6774
        %v9940 = vsel %vm9900, %v9875, %v6776
        %v9941 = vsel %vm9900, %v9876, %v6778
        %v9942 = vsel %vm9900, %v9877, %v6780
        %v9943 = vsel %vm9900, %v9878, %v6782
        %v9944 = vsel %vm9900, %v9879, %v6784
        %v9945 = vsel %vm9900, %v9880, %v6786
        %v9946 = vsel %vm9900, %v9881, %v6788
        %v9947 = vsel %vm9900, %v9882, %v6790
        %v9948 = vsel %vm9900, %v9883, %v6792
        %v9949 = vsel %vm9900, %v9884, %v6794
        %v9950 = vsel %vm9900, %v9885, %v6796
        %v9951 = vsel %vm9900, %v9886, %v6798
        %v9952 = vsel %vm9900, %v9887, %v6800
        %v9953 = vsel %vm9900, %v9888, %v6802
        %v9954 = vsel %vm9900, %v9889, %v6804
        %v9955 = vsel %vm9900, %v9890, %v6806
        %v9956 = vsel %vm9900, %v9891, %v6808
        %v9957 = vsel %vm9900, %v9892, %v6810
        %v9958 = vsel %vm9900, %v9893, %v6812
        %v9959 = vsel %vm9900, %v9894, %v6814
        %v9960 = vsel %vm9900, %v9895, %v6816
        %v9961 = vsel %vm9900, %v9896, %v6818
        %v9962 = vsel %vm9900, %v9897, %v6820
        %v9963 = vsel %vm9900, %v9898, %v6822
        %v9964 = vsel %vm9900, %v9899, %v6824
        %vm9965 = vcmask 80896
        %v9966 = vsel %vm9965, %v9901, %v6954
        %v9967 = vsel %vm9965, %v9902, %v6956
        %v9968 = vsel %vm9965, %v9903, %v6958
        %v9969 = vsel %vm9965, %v9904, %v6960
        %v9970 = vsel %vm9965, %v9905, %v6962
        %v9971 = vsel %vm9965, %v9906, %v6964
        %v9972 = vsel %vm9965, %v9907, %v6966
        %v9973 = vsel %vm9965, %v9908, %v6968
        %v9974 = vsel %vm9965, %v9909, %v6970
        %v9975 = vsel %vm9965, %v9910, %v6972
        %v9976 = vsel %vm9965, %v9911, %v6974
        %v9977 = vsel %vm9965, %v9912, %v6976
        %v9978 = vsel %vm9965, %v9913, %v6978
        %v9979 = vsel %vm9965, %v9914, %v6980
        %v9980 = vsel %vm9965, %v9915, %v6982
        %v9981 = vsel %vm9965, %v9916, %v6984
        %v9982 = vsel %vm9965, %v9917, %v6986
        %v9983 = vsel %vm9965, %v9918, %v6988
        %v9984 = vsel %vm9965, %v9919, %v6990
        %v9985 = vsel %vm9965, %v9920, %v6992
        %v9986 = vsel %vm9965, %v9921, %v6994
        %v9987 = vsel %vm9965, %v9922, %v6996
        %v9988 = vsel %vm9965, %v9923, %v6998
        %v9989 = vsel %vm9965, %v9924, %v7000
        %v9990 = vsel %vm9965, %v9925, %v7002
        %v9991 = vsel %vm9965, %v9926, %v7004
        %v9992 = vsel %vm9965, %v9927, %v7006
        %v9993 = vsel %vm9965, %v9928, %v7008
        %v9994 = vsel %vm9965, %v9929, %v7010
        %v9995 = vsel %vm9965, %v9930, %v7012
        %v9996 = vsel %vm9965, %v9931, %v7014
        %v9997 = vsel %vm9965, %v9932, %v7016
        %v9998 = vsel %vm9965, %v9933, %v7018
        %v9999 = vsel %vm9965, %v9934, %v7020
        %v10000 = vsel %vm9965, %v9935, %v7022
        %v10001 = vsel %vm9965, %v9936, %v7024
        %v10002 = vsel %vm9965, %v9937, %v7026
        %v10003 = vsel %vm9965, %v9938, %v7028
        %v10004 = vsel %vm9965, %v9939, %v7030
        %v10005 = vsel %vm9965, %v9940, %v7032
        %v10006 = vsel %vm9965, %v9941, %v7034
        %v10007 = vsel %vm9965, %v9942, %v7036
        %v10008 = vsel %vm9965, %v9943, %v7038
        %v10009 = vsel %vm9965, %v9944, %v7040
        %v10010 = vsel %vm9965, %v9945, %v7042
        %v10011 = vsel %vm9965, %v9946, %v7044
        %v10012 = vsel %vm9965, %v9947, %v7046
        %v10013 = vsel %vm9965, %v9948, %v7048
        %v10014 = vsel %vm9965, %v9949, %v7050
        %v10015 = vsel %vm9965, %v9950, %v7052
        %v10016 = vsel %vm9965, %v9951, %v7054
        %v10017 = vsel %vm9965, %v9952, %v7056
        %v10018 = vsel %vm9965, %v9953, %v7058
        %v10019 = vsel %vm9965, %v9954, %v7060
        %v10020 = vsel %vm9965, %v9955, %v7062
        %v10021 = vsel %vm9965, %v9956, %v7064
        %v10022 = vsel %vm9965, %v9957, %v7066
        %v10023 = vsel %vm9965, %v9958, %v7068
        %v10024 = vsel %vm9965, %v9959, %v7070
        %v10025 = vsel %vm9965, %v9960, %v7072
        %v10026 = vsel %vm9965, %v9961, %v7074
        %v10027 = vsel %vm9965, %v9962, %v7076
        %v10028 = vsel %vm9965, %v9963, %v7078
        %v10029 = vsel %vm9965, %v9964, %v7080
        %vm10030 = vcmask 97280
        %v10031 = vsel %vm10030, %v9966, %v7210
        %v10032 = vsel %vm10030, %v9967, %v7212
        %v10033 = vsel %vm10030, %v9968, %v7214
        %v10034 = vsel %vm10030, %v9969, %v7216
        %v10035 = vsel %vm10030, %v9970, %v7218
        %v10036 = vsel %vm10030, %v9971, %v7220
        %v10037 = vsel %vm10030, %v9972, %v7222
        %v10038 = vsel %vm10030, %v9973, %v7224
        %v10039 = vsel %vm10030, %v9974, %v7226
        %v10040 = vsel %vm10030, %v9975, %v7228
        %v10041 = vsel %vm10030, %v9976, %v7230
        %v10042 = vsel %vm10030, %v9977, %v7232
        %v10043 = vsel %vm10030, %v9978, %v7234
        %v10044 = vsel %vm10030, %v9979, %v7236
        %v10045 = vsel %vm10030, %v9980, %v7238
        %v10046 = vsel %vm10030, %v9981, %v7240
        %v10047 = vsel %vm10030, %v9982, %v7242
        %v10048 = vsel %vm10030, %v9983, %v7244
        %v10049 = vsel %vm10030, %v9984, %v7246
        %v10050 = vsel %vm10030, %v9985, %v7248
        %v10051 = vsel %vm10030, %v9986, %v7250
        %v10052 = vsel %vm10030, %v9987, %v7252
        %v10053 = vsel %vm10030, %v9988, %v7254
        %v10054 = vsel %vm10030, %v9989, %v7256
        %v10055 = vsel %vm10030, %v9990, %v7258
        %v10056 = vsel %vm10030, %v9991, %v7260
        %v10057 = vsel %vm10030, %v9992, %v7262
        %v10058 = vsel %vm10030, %v9993, %v7264
        %v10059 = vsel %vm10030, %v9994, %v7266
        %v10060 = vsel %vm10030, %v9995, %v7268
        %v10061 = vsel %vm10030, %v9996, %v7270
        %v10062 = vsel %vm10030, %v9997, %v7272
        %v10063 = vsel %vm10030, %v9998, %v7274
        %v10064 = vsel %vm10030, %v9999, %v7276
        %v10065 = vsel %vm10030, %v10000, %v7278
        %v10066 = vsel %vm10030, %v10001, %v7280
        %v10067 = vsel %vm10030, %v10002, %v7282
        %v10068 = vsel %vm10030, %v10003, %v7284
        %v10069 = vsel %vm10030, %v10004, %v7286
        %v10070 = vsel %vm10030, %v10005, %v7288
        %v10071 = vsel %vm10030, %v10006, %v7290
        %v10072 = vsel %vm10030, %v10007, %v7292
        %v10073 = vsel %vm10030, %v10008, %v7294
        %v10074 = vsel %vm10030, %v10009, %v7296
        %v10075 = vsel %vm10030, %v10010, %v7298
        %v10076 = vsel %vm10030, %v10011, %v7300
        %v10077 = vsel %vm10030, %v10012, %v7302
        %v10078 = vsel %vm10030, %v10013, %v7304
        %v10079 = vsel %vm10030, %v10014, %v7306
        %v10080 = vsel %vm10030, %v10015, %v7308
        %v10081 = vsel %vm10030, %v10016, %v7310
        %v10082 = vsel %vm10030, %v10017, %v7312
        %v10083 = vsel %vm10030, %v10018, %v7314
        %v10084 = vsel %vm10030, %v10019, %v7316
        %v10085 = vsel %vm10030, %v10020, %v7318
        %v10086 = vsel %vm10030, %v10021, %v7320
        %v10087 = vsel %vm10030, %v10022, %v7322
        %v10088 = vsel %vm10030, %v10023, %v7324
        %v10089 = vsel %vm10030, %v10024, %v7326
        %v10090 = vsel %vm10030, %v10025, %v7328
        %v10091 = vsel %vm10030, %v10026, %v7330
        %v10092 = vsel %vm10030, %v10027, %v7332
        %v10093 = vsel %vm10030, %v10028, %v7334
        %v10094 = vsel %vm10030, %v10029, %v7336
        %vm10095 = vcmask 113664
        %v10096 = vsel %vm10095, %v10031, %v7466
        %v10097 = vsel %vm10095, %v10032, %v7468
        %v10098 = vsel %vm10095, %v10033, %v7470
        %v10099 = vsel %vm10095, %v10034, %v7472
        %v10100 = vsel %vm10095, %v10035, %v7474
        %v10101 = vsel %vm10095, %v10036, %v7476
        %v10102 = vsel %vm10095, %v10037, %v7478
        %v10103 = vsel %vm10095, %v10038, %v7480
        %v10104 = vsel %vm10095, %v10039, %v7482
        %v10105 = vsel %vm10095, %v10040, %v7484
        %v10106 = vsel %vm10095, %v10041, %v7486
        %v10107 = vsel %vm10095, %v10042, %v7488
        %v10108 = vsel %vm10095, %v10043, %v7490
        %v10109 = vsel %vm10095, %v10044, %v7492
        %v10110 = vsel %vm10095, %v10045, %v7494
        %v10111 = vsel %vm10095, %v10046, %v7496
        %v10112 = vsel %vm10095, %v10047, %v7498
        %v10113 = vsel %vm10095, %v10048, %v7500
        %v10114 = vsel %vm10095, %v10049, %v7502
        %v10115 = vsel %vm10095, %v10050, %v7504
        %v10116 = vsel %vm10095, %v10051, %v7506
        %v10117 = vsel %vm10095, %v10052, %v7508
        %v10118 = vsel %vm10095, %v10053, %v7510
        %v10119 = vsel %vm10095, %v10054, %v7512
        %v10120 = vsel %vm10095, %v10055, %v7514
        %v10121 = vsel %vm10095, %v10056, %v7516
        %v10122 = vsel %vm10095, %v10057, %v7518
        %v10123 = vsel %vm10095, %v10058, %v7520
        %v10124 = vsel %vm10095, %v10059, %v7522
        %v10125 = vsel %vm10095, %v10060, %v7524
        %v10126 = vsel %vm10095, %v10061, %v7526
        %v10127 = vsel %vm10095, %v10062, %v7528
        %v10128 = vsel %vm10095, %v10063, %v7530
        %v10129 = vsel %vm10095, %v10064, %v7532
        %v10130 = vsel %vm10095, %v10065, %v7534
        %v10131 = vsel %vm10095, %v10066, %v7536
        %v10132 = vsel %vm10095, %v10067, %v7538
        %v10133 = vsel %vm10095, %v10068, %v7540
        %v10134 = vsel %vm10095, %v10069, %v7542
        %v10135 = vsel %vm10095, %v10070, %v7544
        %v10136 = vsel %vm10095, %v10071, %v7546
        %v10137 = vsel %vm10095, %v10072, %v7548
        %v10138 = vsel %vm10095, %v10073, %v7550
        %v10139 = vsel %vm10095, %v10074, %v7552
        %v10140 = vsel %vm10095, %v10075, %v7554
        %v10141 = vsel %vm10095, %v10076, %v7556
        %v10142 = vsel %vm10095, %v10077, %v7558
        %v10143 = vsel %vm10095, %v10078, %v7560
        %v10144 = vsel %vm10095, %v10079, %v7562
        %v10145 = vsel %vm10095, %v10080, %v7564
        %v10146 = vsel %vm10095, %v10081, %v7566
        %v10147 = vsel %vm10095, %v10082, %v7568
        %v10148 = vsel %vm10095, %v10083, %v7570
        %v10149 = vsel %vm10095, %v10084, %v7572
        %v10150 = vsel %vm10095, %v10085, %v7574
        %v10151 = vsel %vm10095, %v10086, %v7576
        %v10152 = vsel %vm10095, %v10087, %v7578
        %v10153 = vsel %vm10095, %v10088, %v7580
        %v10154 = vsel %vm10095, %v10089, %v7582
        %v10155 = vsel %vm10095, %v10090, %v7584
        %v10156 = vsel %vm10095, %v10091, %v7586
        %v10157 = vsel %vm10095, %v10092, %v7588
        %v10158 = vsel %vm10095, %v10093, %v7590
        %v10159 = vsel %vm10095, %v10094, %v7592
        %vm10160 = vcmask 130048
        %v10161 = vsel %vm10160, %v10096, %v7722
        %v10162 = vsel %vm10160, %v10097, %v7724
        %v10163 = vsel %vm10160, %v10098, %v7726
        %v10164 = vsel %vm10160, %v10099, %v7728
        %v10165 = vsel %vm10160, %v10100, %v7730
        %v10166 = vsel %vm10160, %v10101, %v7732
        %v10167 = vsel %vm10160, %v10102, %v7734
        %v10168 = vsel %vm10160, %v10103, %v7736
        %v10169 = vsel %vm10160, %v10104, %v7738
        %v10170 = vsel %vm10160, %v10105, %v7740
        %v10171 = vsel %vm10160, %v10106, %v7742
        %v10172 = vsel %vm10160, %v10107, %v7744
        %v10173 = vsel %vm10160, %v10108, %v7746
        %v10174 = vsel %vm10160, %v10109, %v7748
        %v10175 = vsel %vm10160, %v10110, %v7750
        %v10176 = vsel %vm10160, %v10111, %v7752
        %v10177 = vsel %vm10160, %v10112, %v7754
        %v10178 = vsel %vm10160, %v10113, %v7756
        %v10179 = vsel %vm10160, %v10114, %v7758
        %v10180 = vsel %vm10160, %v10115, %v7760
        %v10181 = vsel %vm10160, %v10116, %v7762
        %v10182 = vsel %vm10160, %v10117, %v7764
        %v10183 = vsel %vm10160, %v10118, %v7766
        %v10184 = vsel %vm10160, %v10119, %v7768
        %v10185 = vsel %vm10160, %v10120, %v7770
        %v10186 = vsel %vm10160, %v10121, %v7772
        %v10187 = vsel %vm10160, %v10122, %v7774
        %v10188 = vsel %vm10160, %v10123, %v7776
        %v10189 = vsel %vm10160, %v10124, %v7778
        %v10190 = vsel %vm10160, %v10125, %v7780
        %v10191 = vsel %vm10160, %v10126, %v7782
        %v10192 = vsel %vm10160, %v10127, %v7784
        %v10193 = vsel %vm10160, %v10128, %v7786
        %v10194 = vsel %vm10160, %v10129, %v7788
        %v10195 = vsel %vm10160, %v10130, %v7790
        %v10196 = vsel %vm10160, %v10131, %v7792
        %v10197 = vsel %vm10160, %v10132, %v7794
        %v10198 = vsel %vm10160, %v10133, %v7796
        %v10199 = vsel %vm10160, %v10134, %v7798
        %v10200 = vsel %vm10160, %v10135, %v7800
        %v10201 = vsel %vm10160, %v10136, %v7802
        %v10202 = vsel %vm10160, %v10137, %v7804
        %v10203 = vsel %vm10160, %v10138, %v7806
        %v10204 = vsel %vm10160, %v10139, %v7808
        %v10205 = vsel %vm10160, %v10140, %v7810
        %v10206 = vsel %vm10160, %v10141, %v7812
        %v10207 = vsel %vm10160, %v10142, %v7814
        %v10208 = vsel %vm10160, %v10143, %v7816
        %v10209 = vsel %vm10160, %v10144, %v7818
        %v10210 = vsel %vm10160, %v10145, %v7820
        %v10211 = vsel %vm10160, %v10146, %v7822
        %v10212 = vsel %vm10160, %v10147, %v7824
        %v10213 = vsel %vm10160, %v10148, %v7826
        %v10214 = vsel %vm10160, %v10149, %v7828
        %v10215 = vsel %vm10160, %v10150, %v7830
        %v10216 = vsel %vm10160, %v10151, %v7832
        %v10217 = vsel %vm10160, %v10152, %v7834
        %v10218 = vsel %vm10160, %v10153, %v7836
        %v10219 = vsel %vm10160, %v10154, %v7838
        %v10220 = vsel %vm10160, %v10155, %v7840
        %v10221 = vsel %vm10160, %v10156, %v7842
        %v10222 = vsel %vm10160, %v10157, %v7844
        %v10223 = vsel %vm10160, %v10158, %v7846
        %v10224 = vsel %vm10160, %v10159, %v7848
        %vm10225 = vcmask 146432
        %v10226 = vsel %vm10225, %v10161, %v7978
        %v10227 = vsel %vm10225, %v10162, %v7980
        %v10228 = vsel %vm10225, %v10163, %v7982
        %v10229 = vsel %vm10225, %v10164, %v7984
        %v10230 = vsel %vm10225, %v10165, %v7986
        %v10231 = vsel %vm10225, %v10166, %v7988
        %v10232 = vsel %vm10225, %v10167, %v7990
        %v10233 = vsel %vm10225, %v10168, %v7992
        %v10234 = vsel %vm10225, %v10169, %v7994
        %v10235 = vsel %vm10225, %v10170, %v7996
        %v10236 = vsel %vm10225, %v10171, %v7998
        %v10237 = vsel %vm10225, %v10172, %v8000
        %v10238 = vsel %vm10225, %v10173, %v8002
        %v10239 = vsel %vm10225, %v10174, %v8004
        %v10240 = vsel %vm10225, %v10175, %v8006
        %v10241 = vsel %vm10225, %v10176, %v8008
        %v10242 = vsel %vm10225, %v10177, %v8010
        %v10243 = vsel %vm10225, %v10178, %v8012
        %v10244 = vsel %vm10225, %v10179, %v8014
        %v10245 = vsel %vm10225, %v10180, %v8016
        %v10246 = vsel %vm10225, %v10181, %v8018
        %v10247 = vsel %vm10225, %v10182, %v8020
        %v10248 = vsel %vm10225, %v10183, %v8022
        %v10249 = vsel %vm10225, %v10184, %v8024
        %v10250 = vsel %vm10225, %v10185, %v8026
        %v10251 = vsel %vm10225, %v10186, %v8028
        %v10252 = vsel %vm10225, %v10187, %v8030
        %v10253 = vsel %vm10225, %v10188, %v8032
        %v10254 = vsel %vm10225, %v10189, %v8034
        %v10255 = vsel %vm10225, %v10190, %v8036
        %v10256 = vsel %vm10225, %v10191, %v8038
        %v10257 = vsel %vm10225, %v10192, %v8040
        %v10258 = vsel %vm10225, %v10193, %v8042
        %v10259 = vsel %vm10225, %v10194, %v8044
        %v10260 = vsel %vm10225, %v10195, %v8046
        %v10261 = vsel %vm10225, %v10196, %v8048
        %v10262 = vsel %vm10225, %v10197, %v8050
        %v10263 = vsel %vm10225, %v10198, %v8052
        %v10264 = vsel %vm10225, %v10199, %v8054
        %v10265 = vsel %vm10225, %v10200, %v8056
        %v10266 = vsel %vm10225, %v10201, %v8058
        %v10267 = vsel %vm10225, %v10202, %v8060
        %v10268 = vsel %vm10225, %v10203, %v8062
        %v10269 = vsel %vm10225, %v10204, %v8064
        %v10270 = vsel %vm10225, %v10205, %v8066
        %v10271 = vsel %vm10225, %v10206, %v8068
        %v10272 = vsel %vm10225, %v10207, %v8070
        %v10273 = vsel %vm10225, %v10208, %v8072
        %v10274 = vsel %vm10225, %v10209, %v8074
        %v10275 = vsel %vm10225, %v10210, %v8076
        %v10276 = vsel %vm10225, %v10211, %v8078
        %v10277 = vsel %vm10225, %v10212, %v8080
        %v10278 = vsel %vm10225, %v10213, %v8082
        %v10279 = vsel %vm10225, %v10214, %v8084
        %v10280 = vsel %vm10225, %v10215, %v8086
        %v10281 = vsel %vm10225, %v10216, %v8088
        %v10282 = vsel %vm10225, %v10217, %v8090
        %v10283 = vsel %vm10225, %v10218, %v8092
        %v10284 = vsel %vm10225, %v10219, %v8094
        %v10285 = vsel %vm10225, %v10220, %v8096
        %v10286 = vsel %vm10225, %v10221, %v8098
        %v10287 = vsel %vm10225, %v10222, %v8100
        %v10288 = vsel %vm10225, %v10223, %v8102
        %v10289 = vsel %vm10225, %v10224, %v8104
        %vm10290 = vcmask 162816
        %v10291 = vsel %vm10290, %v10226, %v8234
        %v10292 = vsel %vm10290, %v10227, %v8236
        %v10293 = vsel %vm10290, %v10228, %v8238
        %v10294 = vsel %vm10290, %v10229, %v8240
        %v10295 = vsel %vm10290, %v10230, %v8242
        %v10296 = vsel %vm10290, %v10231, %v8244
        %v10297 = vsel %vm10290, %v10232, %v8246
        %v10298 = vsel %vm10290, %v10233, %v8248
        %v10299 = vsel %vm10290, %v10234, %v8250
        %v10300 = vsel %vm10290, %v10235, %v8252
        %v10301 = vsel %vm10290, %v10236, %v8254
        %v10302 = vsel %vm10290, %v10237, %v8256
        %v10303 = vsel %vm10290, %v10238, %v8258
        %v10304 = vsel %vm10290, %v10239, %v8260
        %v10305 = vsel %vm10290, %v10240, %v8262
        %v10306 = vsel %vm10290, %v10241, %v8264
        %v10307 = vsel %vm10290, %v10242, %v8266
        %v10308 = vsel %vm10290, %v10243, %v8268
        %v10309 = vsel %vm10290, %v10244, %v8270
        %v10310 = vsel %vm10290, %v10245, %v8272
        %v10311 = vsel %vm10290, %v10246, %v8274
        %v10312 = vsel %vm10290, %v10247, %v8276
        %v10313 = vsel %vm10290, %v10248, %v8278
        %v10314 = vsel %vm10290, %v10249, %v8280
        %v10315 = vsel %vm10290, %v10250, %v8282
        %v10316 = vsel %vm10290, %v10251, %v8284
        %v10317 = vsel %vm10290, %v10252, %v8286
        %v10318 = vsel %vm10290, %v10253, %v8288
        %v10319 = vsel %vm10290, %v10254, %v8290
        %v10320 = vsel %vm10290, %v10255, %v8292
        %v10321 = vsel %vm10290, %v10256, %v8294
        %v10322 = vsel %vm10290, %v10257, %v8296
        %v10323 = vsel %vm10290, %v10258, %v8298
        %v10324 = vsel %vm10290, %v10259, %v8300
        %v10325 = vsel %vm10290, %v10260, %v8302
        %v10326 = vsel %vm10290, %v10261, %v8304
        %v10327 = vsel %vm10290, %v10262, %v8306
        %v10328 = vsel %vm10290, %v10263, %v8308
        %v10329 = vsel %vm10290, %v10264, %v8310
        %v10330 = vsel %vm10290, %v10265, %v8312
        %v10331 = vsel %vm10290, %v10266, %v8314
        %v10332 = vsel %vm10290, %v10267, %v8316
        %v10333 = vsel %vm10290, %v10268, %v8318
        %v10334 = vsel %vm10290, %v10269, %v8320
        %v10335 = vsel %vm10290, %v10270, %v8322
        %v10336 = vsel %vm10290, %v10271, %v8324
        %v10337 = vsel %vm10290, %v10272, %v8326
        %v10338 = vsel %vm10290, %v10273, %v8328
        %v10339 = vsel %vm10290, %v10274, %v8330
        %v10340 = vsel %vm10290, %v10275, %v8332
        %v10341 = vsel %vm10290, %v10276, %v8334
        %v10342 = vsel %vm10290, %v10277, %v8336
        %v10343 = vsel %vm10290, %v10278, %v8338
        %v10344 = vsel %vm10290, %v10279, %v8340
        %v10345 = vsel %vm10290, %v10280, %v8342
        %v10346 = vsel %vm10290, %v10281, %v8344
        %v10347 = vsel %vm10290, %v10282, %v8346
        %v10348 = vsel %vm10290, %v10283, %v8348
        %v10349 = vsel %vm10290, %v10284, %v8350
        %v10350 = vsel %vm10290, %v10285, %v8352
        %v10351 = vsel %vm10290, %v10286, %v8354
        %v10352 = vsel %vm10290, %v10287, %v8356
        %v10353 = vsel %vm10290, %v10288, %v8358
        %v10354 = vsel %vm10290, %v10289, %v8360
        %vm10355 = vcmask 179200
        %v10356 = vsel %vm10355, %v10291, %v8490
        %v10357 = vsel %vm10355, %v10292, %v8492
        %v10358 = vsel %vm10355, %v10293, %v8494
        %v10359 = vsel %vm10355, %v10294, %v8496
        %v10360 = vsel %vm10355, %v10295, %v8498
        %v10361 = vsel %vm10355, %v10296, %v8500
        %v10362 = vsel %vm10355, %v10297, %v8502
        %v10363 = vsel %vm10355, %v10298, %v8504
        %v10364 = vsel %vm10355, %v10299, %v8506
        %v10365 = vsel %vm10355, %v10300, %v8508
        %v10366 = vsel %vm10355, %v10301, %v8510
        %v10367 = vsel %vm10355, %v10302, %v8512
        %v10368 = vsel %vm10355, %v10303, %v8514
        %v10369 = vsel %vm10355, %v10304, %v8516
        %v10370 = vsel %vm10355, %v10305, %v8518
        %v10371 = vsel %vm10355, %v10306, %v8520
        %v10372 = vsel %vm10355, %v10307, %v8522
        %v10373 = vsel %vm10355, %v10308, %v8524
        %v10374 = vsel %vm10355, %v10309, %v8526
        %v10375 = vsel %vm10355, %v10310, %v8528
        %v10376 = vsel %vm10355, %v10311, %v8530
        %v10377 = vsel %vm10355, %v10312, %v8532
        %v10378 = vsel %vm10355, %v10313, %v8534
        %v10379 = vsel %vm10355, %v10314, %v8536
        %v10380 = vsel %vm10355, %v10315, %v8538
        %v10381 = vsel %vm10355, %v10316, %v8540
        %v10382 = vsel %vm10355, %v10317, %v8542
        %v10383 = vsel %vm10355, %v10318, %v8544
        %v10384 = vsel %vm10355, %v10319, %v8546
        %v10385 = vsel %vm10355, %v10320, %v8548
        %v10386 = vsel %vm10355, %v10321, %v8550
        %v10387 = vsel %vm10355, %v10322, %v8552
        %v10388 = vsel %vm10355, %v10323, %v8554
        %v10389 = vsel %vm10355, %v10324, %v8556
        %v10390 = vsel %vm10355, %v10325, %v8558
        %v10391 = vsel %vm10355, %v10326, %v8560
        %v10392 = vsel %vm10355, %v10327, %v8562
        %v10393 = vsel %vm10355, %v10328, %v8564
        %v10394 = vsel %vm10355, %v10329, %v8566
        %v10395 = vsel %vm10355, %v10330, %v8568
        %v10396 = vsel %vm10355, %v10331, %v8570
        %v10397 = vsel %vm10355, %v10332, %v8572
        %v10398 = vsel %vm10355, %v10333, %v8574
        %v10399 = vsel %vm10355, %v10334, %v8576
        %v10400 = vsel %vm10355, %v10335, %v8578
        %v10401 = vsel %vm10355, %v10336, %v8580
        %v10402 = vsel %vm10355, %v10337, %v8582
        %v10403 = vsel %vm10355, %v10338, %v8584
        %v10404 = vsel %vm10355, %v10339, %v8586
        %v10405 = vsel %vm10355, %v10340, %v8588
        %v10406 = vsel %vm10355, %v10341, %v8590
        %v10407 = vsel %vm10355, %v10342, %v8592
        %v10408 = vsel %vm10355, %v10343, %v8594
        %v10409 = vsel %vm10355, %v10344, %v8596
        %v10410 = vsel %vm10355, %v10345, %v8598
        %v10411 = vsel %vm10355, %v10346, %v8600
        %v10412 = vsel %vm10355, %v10347, %v8602
        %v10413 = vsel %vm10355, %v10348, %v8604
        %v10414 = vsel %vm10355, %v10349, %v8606
        %v10415 = vsel %vm10355, %v10350, %v8608
        %v10416 = vsel %vm10355, %v10351, %v8610
        %v10417 = vsel %vm10355, %v10352, %v8612
        %v10418 = vsel %vm10355, %v10353, %v8614
        %v10419 = vsel %vm10355, %v10354, %v8616
        %vm10420 = vcmask 195584
        %v10421 = vsel %vm10420, %v10356, %v8746
        %v10422 = vsel %vm10420, %v10357, %v8748
        %v10423 = vsel %vm10420, %v10358, %v8750
        %v10424 = vsel %vm10420, %v10359, %v8752
        %v10425 = vsel %vm10420, %v10360, %v8754
        %v10426 = vsel %vm10420, %v10361, %v8756
        %v10427 = vsel %vm10420, %v10362, %v8758
        %v10428 = vsel %vm10420, %v10363, %v8760
        %v10429 = vsel %vm10420, %v10364, %v8762
        %v10430 = vsel %vm10420, %v10365, %v8764
        %v10431 = vsel %vm10420, %v10366, %v8766
        %v10432 = vsel %vm10420, %v10367, %v8768
        %v10433 = vsel %vm10420, %v10368, %v8770
        %v10434 = vsel %vm10420, %v10369, %v8772
        %v10435 = vsel %vm10420, %v10370, %v8774
        %v10436 = vsel %vm10420, %v10371, %v8776
        %v10437 = vsel %vm10420, %v10372, %v8778
        %v10438 = vsel %vm10420, %v10373, %v8780
        %v10439 = vsel %vm10420, %v10374, %v8782
        %v10440 = vsel %vm10420, %v10375, %v8784
        %v10441 = vsel %vm10420, %v10376, %v8786
        %v10442 = vsel %vm10420, %v10377, %v8788
        %v10443 = vsel %vm10420, %v10378, %v8790
        %v10444 = vsel %vm10420, %v10379, %v8792
        %v10445 = vsel %vm10420, %v10380, %v8794
        %v10446 = vsel %vm10420, %v10381, %v8796
        %v10447 = vsel %vm10420, %v10382, %v8798
        %v10448 = vsel %vm10420, %v10383, %v8800
        %v10449 = vsel %vm10420, %v10384, %v8802
        %v10450 = vsel %vm10420, %v10385, %v8804
        %v10451 = vsel %vm10420, %v10386, %v8806
        %v10452 = vsel %vm10420, %v10387, %v8808
        %v10453 = vsel %vm10420, %v10388, %v8810
        %v10454 = vsel %vm10420, %v10389, %v8812
        %v10455 = vsel %vm10420, %v10390, %v8814
        %v10456 = vsel %vm10420, %v10391, %v8816
        %v10457 = vsel %vm10420, %v10392, %v8818
        %v10458 = vsel %vm10420, %v10393, %v8820
        %v10459 = vsel %vm10420, %v10394, %v8822
        %v10460 = vsel %vm10420, %v10395, %v8824
        %v10461 = vsel %vm10420, %v10396, %v8826
        %v10462 = vsel %vm10420, %v10397, %v8828
        %v10463 = vsel %vm10420, %v10398, %v8830
        %v10464 = vsel %vm10420, %v10399, %v8832
        %v10465 = vsel %vm10420, %v10400, %v8834
        %v10466 = vsel %vm10420, %v10401, %v8836
        %v10467 = vsel %vm10420, %v10402, %v8838
        %v10468 = vsel %vm10420, %v10403, %v8840
        %v10469 = vsel %vm10420, %v10404, %v8842
        %v10470 = vsel %vm10420, %v10405, %v8844
        %v10471 = vsel %vm10420, %v10406, %v8846
        %v10472 = vsel %vm10420, %v10407, %v8848
        %v10473 = vsel %vm10420, %v10408, %v8850
        %v10474 = vsel %vm10420, %v10409, %v8852
        %v10475 = vsel %vm10420, %v10410, %v8854
        %v10476 = vsel %vm10420, %v10411, %v8856
        %v10477 = vsel %vm10420, %v10412, %v8858
        %v10478 = vsel %vm10420, %v10413, %v8860
        %v10479 = vsel %vm10420, %v10414, %v8862
        %v10480 = vsel %vm10420, %v10415, %v8864
        %v10481 = vsel %vm10420, %v10416, %v8866
        %v10482 = vsel %vm10420, %v10417, %v8868
        %v10483 = vsel %vm10420, %v10418, %v8870
        %v10484 = vsel %vm10420, %v10419, %v8872
        %vm10485 = vcmask 211968
        %v10486 = vsel %vm10485, %v10421, %v9002
        %v10487 = vsel %vm10485, %v10422, %v9004
        %v10488 = vsel %vm10485, %v10423, %v9006
        %v10489 = vsel %vm10485, %v10424, %v9008
        %v10490 = vsel %vm10485, %v10425, %v9010
        %v10491 = vsel %vm10485, %v10426, %v9012
        %v10492 = vsel %vm10485, %v10427, %v9014
        %v10493 = vsel %vm10485, %v10428, %v9016
        %v10494 = vsel %vm10485, %v10429, %v9018
        %v10495 = vsel %vm10485, %v10430, %v9020
        %v10496 = vsel %vm10485, %v10431, %v9022
        %v10497 = vsel %vm10485, %v10432, %v9024
        %v10498 = vsel %vm10485, %v10433, %v9026
        %v10499 = vsel %vm10485, %v10434, %v9028
        %v10500 = vsel %vm10485, %v10435, %v9030
        %v10501 = vsel %vm10485, %v10436, %v9032
        %v10502 = vsel %vm10485, %v10437, %v9034
        %v10503 = vsel %vm10485, %v10438, %v9036
        %v10504 = vsel %vm10485, %v10439, %v9038
        %v10505 = vsel %vm10485, %v10440, %v9040
        %v10506 = vsel %vm10485, %v10441, %v9042
        %v10507 = vsel %vm10485, %v10442, %v9044
        %v10508 = vsel %vm10485, %v10443, %v9046
        %v10509 = vsel %vm10485, %v10444, %v9048
        %v10510 = vsel %vm10485, %v10445, %v9050
        %v10511 = vsel %vm10485, %v10446, %v9052
        %v10512 = vsel %vm10485, %v10447, %v9054
        %v10513 = vsel %vm10485, %v10448, %v9056
        %v10514 = vsel %vm10485, %v10449, %v9058
        %v10515 = vsel %vm10485, %v10450, %v9060
        %v10516 = vsel %vm10485, %v10451, %v9062
        %v10517 = vsel %vm10485, %v10452, %v9064
        %v10518 = vsel %vm10485, %v10453, %v9066
        %v10519 = vsel %vm10485, %v10454, %v9068
        %v10520 = vsel %vm10485, %v10455, %v9070
        %v10521 = vsel %vm10485, %v10456, %v9072
        %v10522 = vsel %vm10485, %v10457, %v9074
        %v10523 = vsel %vm10485, %v10458, %v9076
        %v10524 = vsel %vm10485, %v10459, %v9078
        %v10525 = vsel %vm10485, %v10460, %v9080
        %v10526 = vsel %vm10485, %v10461, %v9082
        %v10527 = vsel %vm10485, %v10462, %v9084
        %v10528 = vsel %vm10485, %v10463, %v9086
        %v10529 = vsel %vm10485, %v10464, %v9088
        %v10530 = vsel %vm10485, %v10465, %v9090
        %v10531 = vsel %vm10485, %v10466, %v9092
        %v10532 = vsel %vm10485, %v10467, %v9094
        %v10533 = vsel %vm10485, %v10468, %v9096
        %v10534 = vsel %vm10485, %v10469, %v9098
        %v10535 = vsel %vm10485, %v10470, %v9100
        %v10536 = vsel %vm10485, %v10471, %v9102
        %v10537 = vsel %vm10485, %v10472, %v9104
        %v10538 = vsel %vm10485, %v10473, %v9106
        %v10539 = vsel %vm10485, %v10474, %v9108
        %v10540 = vsel %vm10485, %v10475, %v9110
        %v10541 = vsel %vm10485, %v10476, %v9112
        %v10542 = vsel %vm10485, %v10477, %v9114
        %v10543 = vsel %vm10485, %v10478, %v9116
        %v10544 = vsel %vm10485, %v10479, %v9118
        %v10545 = vsel %vm10485, %v10480, %v9120
        %v10546 = vsel %vm10485, %v10481, %v9122
        %v10547 = vsel %vm10485, %v10482, %v9124
        %v10548 = vsel %vm10485, %v10483, %v9126
        %v10549 = vsel %vm10485, %v10484, %v9128
        %vm10550 = vcmask 228352
        %v10551 = vsel %vm10550, %v10486, %v9258
        %v10552 = vsel %vm10550, %v10487, %v9260
        %v10553 = vsel %vm10550, %v10488, %v9262
        %v10554 = vsel %vm10550, %v10489, %v9264
        %v10555 = vsel %vm10550, %v10490, %v9266
        %v10556 = vsel %vm10550, %v10491, %v9268
        %v10557 = vsel %vm10550, %v10492, %v9270
        %v10558 = vsel %vm10550, %v10493, %v9272
        %v10559 = vsel %vm10550, %v10494, %v9274
        %v10560 = vsel %vm10550, %v10495, %v9276
        %v10561 = vsel %vm10550, %v10496, %v9278
        %v10562 = vsel %vm10550, %v10497, %v9280
        %v10563 = vsel %vm10550, %v10498, %v9282
        %v10564 = vsel %vm10550, %v10499, %v9284
        %v10565 = vsel %vm10550, %v10500, %v9286
        %v10566 = vsel %vm10550, %v10501, %v9288
        %v10567 = vsel %vm10550, %v10502, %v9290
        %v10568 = vsel %vm10550, %v10503, %v9292
        %v10569 = vsel %vm10550, %v10504, %v9294
        %v10570 = vsel %vm10550, %v10505, %v9296
        %v10571 = vsel %vm10550, %v10506, %v9298
        %v10572 = vsel %vm10550, %v10507, %v9300
        %v10573 = vsel %vm10550, %v10508, %v9302
        %v10574 = vsel %vm10550, %v10509, %v9304
        %v10575 = vsel %vm10550, %v10510, %v9306
        %v10576 = vsel %vm10550, %v10511, %v9308
        %v10577 = vsel %vm10550, %v10512, %v9310
        %v10578 = vsel %vm10550, %v10513, %v9312
        %v10579 = vsel %vm10550, %v10514, %v9314
        %v10580 = vsel %vm10550, %v10515, %v9316
        %v10581 = vsel %vm10550, %v10516, %v9318
        %v10582 = vsel %vm10550, %v10517, %v9320
        %v10583 = vsel %vm10550, %v10518, %v9322
        %v10584 = vsel %vm10550, %v10519, %v9324
        %v10585 = vsel %vm10550, %v10520, %v9326
        %v10586 = vsel %vm10550, %v10521, %v9328
        %v10587 = vsel %vm10550, %v10522, %v9330
        %v10588 = vsel %vm10550, %v10523, %v9332
        %v10589 = vsel %vm10550, %v10524, %v9334
        %v10590 = vsel %vm10550, %v10525, %v9336
        %v10591 = vsel %vm10550, %v10526, %v9338
        %v10592 = vsel %vm10550, %v10527, %v9340
        %v10593 = vsel %vm10550, %v10528, %v9342
        %v10594 = vsel %vm10550, %v10529, %v9344
        %v10595 = vsel %vm10550, %v10530, %v9346
        %v10596 = vsel %vm10550, %v10531, %v9348
        %v10597 = vsel %vm10550, %v10532, %v9350
        %v10598 = vsel %vm10550, %v10533, %v9352
        %v10599 = vsel %vm10550, %v10534, %v9354
        %v10600 = vsel %vm10550, %v10535, %v9356
        %v10601 = vsel %vm10550, %v10536, %v9358
        %v10602 = vsel %vm10550, %v10537, %v9360
        %v10603 = vsel %vm10550, %v10538, %v9362
        %v10604 = vsel %vm10550, %v10539, %v9364
        %v10605 = vsel %vm10550, %v10540, %v9366
        %v10606 = vsel %vm10550, %v10541, %v9368
        %v10607 = vsel %vm10550, %v10542, %v9370
        %v10608 = vsel %vm10550, %v10543, %v9372
        %v10609 = vsel %vm10550, %v10544, %v9374
        %v10610 = vsel %vm10550, %v10545, %v9376
        %v10611 = vsel %vm10550, %v10546, %v9378
        %v10612 = vsel %vm10550, %v10547, %v9380
        %v10613 = vsel %vm10550, %v10548, %v9382
        %v10614 = vsel %vm10550, %v10549, %v9384
        %vm10615 = vcmask 244736
        %v10616 = vsel %vm10615, %v10551, %v9514
        %v10617 = vsel %vm10615, %v10552, %v9516
        %v10618 = vsel %vm10615, %v10553, %v9518
        %v10619 = vsel %vm10615, %v10554, %v9520
        %v10620 = vsel %vm10615, %v10555, %v9522
        %v10621 = vsel %vm10615, %v10556, %v9524
        %v10622 = vsel %vm10615, %v10557, %v9526
        %v10623 = vsel %vm10615, %v10558, %v9528
        %v10624 = vsel %vm10615, %v10559, %v9530
        %v10625 = vsel %vm10615, %v10560, %v9532
        %v10626 = vsel %vm10615, %v10561, %v9534
        %v10627 = vsel %vm10615, %v10562, %v9536
        %v10628 = vsel %vm10615, %v10563, %v9538
        %v10629 = vsel %vm10615, %v10564, %v9540
        %v10630 = vsel %vm10615, %v10565, %v9542
        %v10631 = vsel %vm10615, %v10566, %v9544
        %v10632 = vsel %vm10615, %v10567, %v9546
        %v10633 = vsel %vm10615, %v10568, %v9548
        %v10634 = vsel %vm10615, %v10569, %v9550
        %v10635 = vsel %vm10615, %v10570, %v9552
        %v10636 = vsel %vm10615, %v10571, %v9554
        %v10637 = vsel %vm10615, %v10572, %v9556
        %v10638 = vsel %vm10615, %v10573, %v9558
        %v10639 = vsel %vm10615, %v10574, %v9560
        %v10640 = vsel %vm10615, %v10575, %v9562
        %v10641 = vsel %vm10615, %v10576, %v9564
        %v10642 = vsel %vm10615, %v10577, %v9566
        %v10643 = vsel %vm10615, %v10578, %v9568
        %v10644 = vsel %vm10615, %v10579, %v9570
        %v10645 = vsel %vm10615, %v10580, %v9572
        %v10646 = vsel %vm10615, %v10581, %v9574
        %v10647 = vsel %vm10615, %v10582, %v9576
        %v10648 = vsel %vm10615, %v10583, %v9578
        %v10649 = vsel %vm10615, %v10584, %v9580
        %v10650 = vsel %vm10615, %v10585, %v9582
        %v10651 = vsel %vm10615, %v10586, %v9584
        %v10652 = vsel %vm10615, %v10587, %v9586
        %v10653 = vsel %vm10615, %v10588, %v9588
        %v10654 = vsel %vm10615, %v10589, %v9590
        %v10655 = vsel %vm10615, %v10590, %v9592
        %v10656 = vsel %vm10615, %v10591, %v9594
        %v10657 = vsel %vm10615, %v10592, %v9596
        %v10658 = vsel %vm10615, %v10593, %v9598
        %v10659 = vsel %vm10615, %v10594, %v9600
        %v10660 = vsel %vm10615, %v10595, %v9602
        %v10661 = vsel %vm10615, %v10596, %v9604
        %v10662 = vsel %vm10615, %v10597, %v9606
        %v10663 = vsel %vm10615, %v10598, %v9608
        %v10664 = vsel %vm10615, %v10599, %v9610
        %v10665 = vsel %vm10615, %v10600, %v9612
        %v10666 = vsel %vm10615, %v10601, %v9614
        %v10667 = vsel %vm10615, %v10602, %v9616
        %v10668 = vsel %vm10615, %v10603, %v9618
        %v10669 = vsel %vm10615, %v10604, %v9620
        %v10670 = vsel %vm10615, %v10605, %v9622
        %v10671 = vsel %vm10615, %v10606, %v9624
        %v10672 = vsel %vm10615, %v10607, %v9626
        %v10673 = vsel %vm10615, %v10608, %v9628
        %v10674 = vsel %vm10615, %v10609, %v9630
        %v10675 = vsel %vm10615, %v10610, %v9632
        %v10676 = vsel %vm10615, %v10611, %v9634
        %v10677 = vsel %vm10615, %v10612, %v9636
        %v10678 = vsel %vm10615, %v10613, %v9638
        %v10679 = vsel %vm10615, %v10614, %v9640
        %v10680 = vperm.slane %v10616, 0
        %v10681 = vperm.slane %v10617, 0
        %v10682 = vperm.slane %v10618, 0
        %v10683 = vperm.slane %v10619, 0
        %v10684 = vperm.slane %v10620, 0
        %v10685 = vperm.slane %v10621, 0
        %v10686 = vperm.slane %v10622, 0
        %v10687 = vperm.slane %v10623, 0
        %v10688 = vperm.slane %v10624, 0
        %v10689 = vperm.slane %v10625, 0
        %v10690 = vperm.slane %v10626, 0
        %v10691 = vperm.slane %v10627, 0
        %v10692 = vperm.slane %v10628, 0
        %v10693 = vperm.slane %v10629, 0
        %v10694 = vperm.slane %v10630, 0
        %v10695 = vperm.slane %v10631, 0
        %v10696 = vperm.slane %v10632, 0
        %v10697 = vperm.slane %v10633, 0
        %v10698 = vperm.slane %v10634, 0
        %v10699 = vperm.slane %v10635, 0
        %v10700 = vperm.slane %v10636, 0
        %v10701 = vperm.slane %v10637, 0
        %v10702 = vperm.slane %v10638, 0
        %v10703 = vperm.slane %v10639, 0
        %v10704 = vperm.slane %v10640, 0
        %v10705 = vperm.slane %v10641, 0
        %v10706 = vperm.slane %v10642, 0
        %v10707 = vperm.slane %v10643, 0
        %v10708 = vperm.slane %v10644, 0
        %v10709 = vperm.slane %v10645, 0
        %v10710 = vperm.slane %v10646, 0
        %v10711 = vperm.slane %v10647, 0
        %v10712 = vperm.slane %v10648, 0
        %v10713 = vperm.slane %v10649, 0
        %v10714 = vperm.slane %v10650, 0
        %v10715 = vperm.slane %v10651, 0
        %v10716 = vperm.slane %v10652, 0
        %v10717 = vperm.slane %v10653, 0
        %v10718 = vperm.slane %v10654, 0
        %v10719 = vperm.slane %v10655, 0
        %v10720 = vperm.slane %v10656, 0
        %v10721 = vperm.slane %v10657, 0
        %v10722 = vperm.slane %v10658, 0
        %v10723 = vperm.slane %v10659, 0
        %v10724 = vperm.slane %v10660, 0
        %v10725 = vperm.slane %v10661, 0
        %v10726 = vperm.slane %v10662, 0
        %v10727 = vperm.slane %v10663, 0
        %v10728 = vperm.slane %v10664, 0
        %v10729 = vperm.slane %v10665, 0
        %v10730 = vperm.slane %v10666, 0
        %v10731 = vperm.slane %v10667, 0
        %v10732 = vperm.slane %v10668, 0
        %v10733 = vperm.slane %v10669, 0
        %v10734 = vperm.slane %v10670, 0
        %v10735 = vperm.slane %v10671, 0
        %v10736 = vperm.slane %v10672, 0
        %v10737 = vperm.slane %v10673, 0
        %v10738 = vperm.slane %v10674, 0
        %v10739 = vperm.slane %v10675, 0
        %v10740 = vperm.slane %v10676, 0
        %v10741 = vperm.slane %v10677, 0
        %v10742 = vperm.slane %v10678, 0
        %v10743 = vperm.slane %v10679, 0
        %10808 = vst [vmem:[#allocation1] ss:$4 sm:$0xff] %v10680
        %s10809 = scalar_lea.vmem [#allocation1], 1
        %10810 = vst [vmem:[%s10809] ss:$4 sm:$0xff] %v10681
        %s10811 = scalar_lea.vmem [#allocation1], 2
        %10812 = vst [vmem:[%s10811] ss:$4 sm:$0xff] %v10682
        %s10813 = scalar_lea.vmem [#allocation1], 3
        %10814 = vst [vmem:[%s10813] ss:$4 sm:$0xff] %v10683
        %s10815 = scalar_lea.vmem [#allocation1], 32
        %10816 = vst [vmem:[%s10815] ss:$4 sm:$0xff] %v10684
        %s10817 = scalar_lea.vmem [#allocation1], 33
        %10818 = vst [vmem:[%s10817] ss:$4 sm:$0xff] %v10685
        %s10819 = scalar_lea.vmem [#allocation1], 34
        %10820 = vst [vmem:[%s10819] ss:$4 sm:$0xff] %v10686
        %s10821 = scalar_lea.vmem [#allocation1], 35
        %10822 = vst [vmem:[%s10821] ss:$4 sm:$0xff] %v10687
        %v10823 = vld.sshfl [vmem:[#allocation1] sm:$0xff pattern:$0x73625140]
        %v10824 = vld.sshfl [vmem:[#allocation1 + $0x20] sm:$0xff pattern:$0x73625140]
        %10825 = vst [vmem:[#allocation1] ss:$4 sm:$0xff] %v10688
        %10826 = vst [vmem:[%s10809] ss:$4 sm:$0xff] %v10689
        %10827 = vst [vmem:[%s10811] ss:$4 sm:$0xff] %v10690
        %10828 = vst [vmem:[%s10813] ss:$4 sm:$0xff] %v10691
        %10829 = vst [vmem:[%s10815] ss:$4 sm:$0xff] %v10692
        %10830 = vst [vmem:[%s10817] ss:$4 sm:$0xff] %v10693
        %10831 = vst [vmem:[%s10819] ss:$4 sm:$0xff] %v10694
        %10832 = vst [vmem:[%s10821] ss:$4 sm:$0xff] %v10695
        %v10833 = vld.sshfl [vmem:[#allocation1] sm:$0xff pattern:$0x73625140]
        %v10834 = vld.sshfl [vmem:[#allocation1 + $0x20] sm:$0xff pattern:$0x73625140]
        %10835 = vst [vmem:[#allocation1] ss:$4 sm:$0xff] %v10696
        %10836 = vst [vmem:[%s10809] ss:$4 sm:$0xff] %v10697
        %10837 = vst [vmem:[%s10811] ss:$4 sm:$0xff] %v10698
        %10838 = vst [vmem:[%s10813] ss:$4 sm:$0xff] %v10699
        %10839 = vst [vmem:[%s10815] ss:$4 sm:$0xff] %v10700
        %10840 = vst [vmem:[%s10817] ss:$4 sm:$0xff] %v10701
        %10841 = vst [vmem:[%s10819] ss:$4 sm:$0xff] %v10702
        %10842 = vst [vmem:[%s10821] ss:$4 sm:$0xff] %v10703
        %v10843 = vld.sshfl [vmem:[#allocation1] sm:$0xff pattern:$0x73625140]
        %v10844 = vld.sshfl [vmem:[#allocation1 + $0x20] sm:$0xff pattern:$0x73625140]
        %10845 = vst [vmem:[#allocation1] ss:$4 sm:$0xff] %v10704
        %10846 = vst [vmem:[%s10809] ss:$4 sm:$0xff] %v10705
        %10847 = vst [vmem:[%s10811] ss:$4 sm:$0xff] %v10706
        %10848 = vst [vmem:[%s10813] ss:$4 sm:$0xff] %v10707
        %10849 = vst [vmem:[%s10815] ss:$4 sm:$0xff] %v10708
        %10850 = vst [vmem:[%s10817] ss:$4 sm:$0xff] %v10709
        %10851 = vst [vmem:[%s10819] ss:$4 sm:$0xff] %v10710
        %10852 = vst [vmem:[%s10821] ss:$4 sm:$0xff] %v10711
        %v10853 = vld.sshfl [vmem:[#allocation1] sm:$0xff pattern:$0x73625140]
        %v10854 = vld.sshfl [vmem:[#allocation1 + $0x20] sm:$0xff pattern:$0x73625140]
        %10855 = vst [vmem:[#allocation1] ss:$4 sm:$0xff] %v10712
        %10856 = vst [vmem:[%s10809] ss:$4 sm:$0xff] %v10713
        %10857 = vst [vmem:[%s10811] ss:$4 sm:$0xff] %v10714
        %10858 = vst [vmem:[%s10813] ss:$4 sm:$0xff] %v10715
        %10859 = vst [vmem:[%s10815] ss:$4 sm:$0xff] %v10716
        %10860 = vst [vmem:[%s10817] ss:$4 sm:$0xff] %v10717
        %10861 = vst [vmem:[%s10819] ss:$4 sm:$0xff] %v10718
        %10862 = vst [vmem:[%s10821] ss:$4 sm:$0xff] %v10719
        %v10863 = vld.sshfl [vmem:[#allocation1] sm:$0xff pattern:$0x73625140]
        %v10864 = vld.sshfl [vmem:[#allocation1 + $0x20] sm:$0xff pattern:$0x73625140]
        %10865 = vst [vmem:[#allocation1] ss:$4 sm:$0xff] %v10720
        %10866 = vst [vmem:[%s10809] ss:$4 sm:$0xff] %v10721
        %10867 = vst [vmem:[%s10811] ss:$4 sm:$0xff] %v10722
        %10868 = vst [vmem:[%s10813] ss:$4 sm:$0xff] %v10723
        %10869 = vst [vmem:[%s10815] ss:$4 sm:$0xff] %v10724
        %10870 = vst [vmem:[%s10817] ss:$4 sm:$0xff] %v10725
        %10871 = vst [vmem:[%s10819] ss:$4 sm:$0xff] %v10726
        %10872 = vst [vmem:[%s10821] ss:$4 sm:$0xff] %v10727
        %v10873 = vld.sshfl [vmem:[#allocation1] sm:$0xff pattern:$0x73625140]
        %v10874 = vld.sshfl [vmem:[#allocation1 + $0x20] sm:$0xff pattern:$0x73625140]
        %10875 = vst [vmem:[#allocation1] ss:$4 sm:$0xff] %v10728
        %10876 = vst [vmem:[%s10809] ss:$4 sm:$0xff] %v10729
        %10877 = vst [vmem:[%s10811] ss:$4 sm:$0xff] %v10730
        %10878 = vst [vmem:[%s10813] ss:$4 sm:$0xff] %v10731
        %10879 = vst [vmem:[%s10815] ss:$4 sm:$0xff] %v10732
        %10880 = vst [vmem:[%s10817] ss:$4 sm:$0xff] %v10733
        %10881 = vst [vmem:[%s10819] ss:$4 sm:$0xff] %v10734
        %10882 = vst [vmem:[%s10821] ss:$4 sm:$0xff] %v10735
        %v10883 = vld.sshfl [vmem:[#allocation1] sm:$0xff pattern:$0x73625140]
        %v10884 = vld.sshfl [vmem:[#allocation1 + $0x20] sm:$0xff pattern:$0x73625140]
        %10885 = vst [vmem:[#allocation1] ss:$4 sm:$0xff] %v10736
        %10886 = vst [vmem:[%s10809] ss:$4 sm:$0xff] %v10737
        %10887 = vst [vmem:[%s10811] ss:$4 sm:$0xff] %v10738
        %10888 = vst [vmem:[%s10813] ss:$4 sm:$0xff] %v10739
        %10889 = vst [vmem:[%s10815] ss:$4 sm:$0xff] %v10740
        %10890 = vst [vmem:[%s10817] ss:$4 sm:$0xff] %v10741
        %10891 = vst [vmem:[%s10819] ss:$4 sm:$0xff] %v10742
        %10892 = vst [vmem:[%s10821] ss:$4 sm:$0xff] %v10743
        %v10893 = vld.sshfl [vmem:[#allocation1] sm:$0xff pattern:$0x73625140]
        %v10894 = vld.sshfl [vmem:[#allocation1 + $0x20] sm:$0xff pattern:$0x73625140]
        %vm10911 = vcmask 261120
        %10912 = vst.msk [vmem:[%s155] sm:$0xff] %vm10911, %v10823
        %10913 = vst.msk [vmem:[%s155 + $0x8] sm:$0xff] %vm10911, %v10824
        %10914 = vst.msk [vmem:[%s155 + $0x10] sm:$0xff] %vm10911, %v10833
        %10915 = vst.msk [vmem:[%s155 + $0x18] sm:$0xff] %vm10911, %v10834
        %10916 = vst.msk [vmem:[%s155 + $0x20] sm:$0xff] %vm10911, %v10843
        %10917 = vst.msk [vmem:[%s155 + $0x28] sm:$0xff] %vm10911, %v10844
        %10918 = vst.msk [vmem:[%s155 + $0x30] sm:$0xff] %vm10911, %v10853
        %10919 = vst.msk [vmem:[%s155 + $0x38] sm:$0xff] %vm10911, %v10854
        %10920 = vst.msk [vmem:[%s155 + $0x40] sm:$0xff] %vm10911, %v10863
        %10921 = vst.msk [vmem:[%s155 + $0x48] sm:$0xff] %vm10911, %v10864
        %10922 = vst.msk [vmem:[%s155 + $0x50] sm:$0xff] %vm10911, %v10873
        %10923 = vst.msk [vmem:[%s155 + $0x58] sm:$0xff] %vm10911, %v10874
        %10924 = vst.msk [vmem:[%s155 + $0x60] sm:$0xff] %vm10911, %v10883
        %10925 = vst.msk [vmem:[%s155 + $0x68] sm:$0xff] %vm10911, %v10884
        %10926 = vst.msk [vmem:[%s155 + $0x70] sm:$0xff] %vm10911, %v10893
        %10927 = vst.msk [vmem:[%s155 + $0x78] sm:$0xff] %vm10911, %v10894
        %s10928 = sand.u32 %s68, 1
        %s10929 = scalar_lea.sflag [#allocation4], %s10928
        %s10930 = sand.u32 %s68, 1
        %s10931 = smul.addr %s10930, 128
        %s10932 = scalar_lea.vmem [#allocation5], %s10931
        // Predicated region
        $region29: #{upsample_nearest.1} parent=23 // pred_check
          %p10933 = pneg %p78
        $region30: #{upsample_nearest.1} parent=23 // pred_check_branch
          %10935 = sbr.rel (%p10933) target = $region32
        $region31: #{upsample_nearest.1} parent=23 // pred_region
          %s10936 = smul.u32 4, %s22
          %s10937 = smul.u32 4, %s23
          %10939 = vsyncadd %s10929, 0
          %s10940 = smul.addr %s10936, 4
          %s10941 = sadd.s32 %s10937, %s10940
          %s10942 = smul.addr %s10941, 8
          %s10943 = scalar_lea.hbm %s1, %s10942
          %s10944 = sshll.u32 %s10932, 4
          %s10945 = int_to_ptr.vmem [resolvable:$true] %s10944
          %s10946 = sshll.u32 %s10943, 4
          %s10947 = int_to_ptr.hbm [resolvable:$true] %s10946
          %10952 = dma.vmem_to_hbm [thread:$0]  %s10945, 2048, %s10947, %s10929, 128, 128, 8
        $region32: #{upsample_nearest.1} parent=23 // pred_fallthru
          _
      $region24: #{upsample_nearest.1} parent=5 // pred_fallthru
        _
      %p10953 = scmp.le.s32.totalorder 2, %s13
      // Predicated region
      $region33: #{upsample_nearest.1} parent=5 // pred_check
        %p10954 = pneg %p10953
      $region34: #{upsample_nearest.1} parent=5 // pred_check_branch
        %10956 = sbr.rel (%p10954) target = $region36
      $region35: #{upsample_nearest.1} parent=5 // pred_region
        %s10957 = ssub.s32 %s13, 2
        // Predicated region
        $region37: #{upsample_nearest.1} parent=35 // pred_check
          %p10958 = pneg %p84
        $region38: #{upsample_nearest.1} parent=35 // pred_check_branch
          %10960 = sbr.rel (%p10958) target = $region40
        $region39: #{upsample_nearest.1} parent=35 // pred_region
          %s10961 = sand.u32 %s69, 1
          %s10962 = scalar_lea.sflag [#allocation4], %s10961
          %s10963 = sand.u32 %s69, 1
          %s10964 = smul.addr %s10963, 128
          %s10965 = scalar_lea.vmem [#allocation5], %s10964
          %10967 = dma.done %s10962, 2048
        $region40: #{upsample_nearest.1} parent=35 // pred_fallthru
          _
      $region36: #{upsample_nearest.1} parent=5 // pred_fallthru
        _
    $region6: #{upsample_nearest.1} parent=1 // loop_footer
      %s17 = sadd.s32 1, %s13
    $region7: #{upsample_nearest.1} parent=1 // loop_footer_branch
      %12 = sbr.rel target = $region3
    $region8: #{upsample_nearest.1} parent=1 // loop_exit
      _
    %10968 = vsyncpa [#allocation3], 1
    %s10969 = scalar_lea.sflag [#allocation3], 1
    %10970 = vsyncpa %s10969, 1
    %10971 = vsyncpa [#allocation4], 1
    %s10972 = scalar_lea.sflag [#allocation4], 1
    %10973 = vsyncpa %s10972, 1

</llo_original>
